<compile_context>
chip_gen: v7x
topology: tpu7x:2x2x1
jax: 0.10.0
libtpu: 0.0.40
codegen_flags: <defaults>
</compile_context>

<pallas_src>
import functools

import jax
import jax.numpy as jnp
from jax.experimental import pallas as pl
from jax.experimental.pallas import tpu as pltpu

LN_EPS = 1e-5  # PyTorch nn.LayerNorm default


def _layernorm(x, gamma, beta):
    mu = jnp.mean(x, axis=-1, keepdims=True)
    var = jnp.mean((x - mu) ** 2, axis=-1, keepdims=True)  # biased, like torch
    return (x - mu) * jax.lax.rsqrt(var + LN_EPS) * gamma + beta


def encoder_block_kernel(
    x_ref,
    w_in_ref, b_in_ref,          # attention in_proj  (C, 3C) bf16, (1, 3C) f32
    w_out_ref, b_out_ref,        # attention out_proj (C, C) bf16,  (1, C) f32
    g1_ref, be1_ref,             # ln_1 gamma/beta    (1, C) f32
    w_f1_ref, b_f1_ref,          # ffd linear 1       (C, 4C) bf16, (1, 4C) f32
    w_f2_ref, b_f2_ref,          # ffd linear 2       (4C, C) bf16, (1, C) f32
    g2_ref, be2_ref,             # ln_2 gamma/beta    (1, C) f32
    o_ref,
    attn_ref,                    # VMEM scratch (BB*T, C) f32 — per-head output slab
    *, n_heads, head_dim,
):
    BB, T, C = x_ref.shape
    M = BB * T

    x = x_ref[...].astype(jnp.float32).reshape(M, C)     # (M, C) f32
    xb = x.astype(jnp.bfloat16)

    # ---- multi-head self-attention -------------------------------------
    # (1/sqrt(head_dim) is already folded into the q columns of w_in/b_in,
    #  matching torch's softmax(qkT * scale).)
    qkv = jnp.dot(xb, w_in_ref[...], preferred_element_type=jnp.float32) + b_in_ref[...]
    q = qkv[:, 0 * C:1 * C].astype(jnp.bfloat16).reshape(BB, T, C)
    k = qkv[:, 1 * C:2 * C].astype(jnp.bfloat16).reshape(BB, T, C)
    v = qkv[:, 2 * C:3 * C].astype(jnp.bfloat16).reshape(BB, T, C)

    # Per head: batched (over BB) einsums; write each head's output directly
    # into the scratch slab at its column offset (no concatenate).
    for h in range(n_heads):
        lo = h * head_dim
        hi = lo + head_dim
        qh = q[:, :, lo:hi]                               # (BB, T, hd) bf16
        kh = k[:, :, lo:hi]
        vh = v[:, :, lo:hi]
        s = jnp.einsum("bqd,bkd->bqk", qh, kh,
                       preferred_element_type=jnp.float32)        # (BB, T, T) f32
        s = s - jnp.max(s, axis=-1, keepdims=True)
        p = jnp.exp(s)
        inv = pl.reciprocal(jnp.sum(p, axis=-1, keepdims=True), approx=True)
        oh = jnp.einsum("bqk,bkd->bqd", p.astype(jnp.bfloat16), vh,
                        preferred_element_type=jnp.float32) * inv  # (BB, T, hd) f32
        attn_ref[:, lo:hi] = oh.reshape(M, head_dim)

    attn = jnp.dot(attn_ref[...].astype(jnp.bfloat16), w_out_ref[...],
                   preferred_element_type=jnp.float32) + b_out_ref[...]

    # residual + LayerNorm 1 (f32); attn_dropout / mlp_dropout = identity (eval)
    x = _layernorm(x + attn, g1_ref[...], be1_ref[...])

    # ---- feed-forward ----------------------------------------------------
    h1 = jnp.dot(x.astype(jnp.bfloat16), w_f1_ref[...],
                 preferred_element_type=jnp.float32) + b_f1_ref[...]
    h1 = jnp.maximum(h1, 0.0)                              # ReLU
    ff = jnp.dot(h1.astype(jnp.bfloat16), w_f2_ref[...],
                 preferred_element_type=jnp.float32) + b_f2_ref[...]

    # residual + LayerNorm 2 (f32)
    x = _layernorm(x + ff, g2_ref[...], be2_ref[...])

    o_ref[...] = x.reshape(BB, T, C).astype(o_ref.dtype)


def _pick_block_batch(B, T, target_rows=256, max_rows=1024):
    """Smallest divisor BB of B with BB*T >= target_rows (capped), else largest fit."""
    bb = 1
    for cand in range(1, B + 1):
        if B % cand:
            continue
        if cand * T > max_rows and cand > 1:
            break
        bb = cand
        if cand * T >= target_rows:
            break
    return bb


def encoder_block(x, params, n_heads, *, block_batch=None):
    B, T, C = x.shape
    assert C % n_heads == 0
    head_dim = C // n_heads
    BB = _pick_block_batch(B, T) if block_batch is None else block_batch
    assert B % BB == 0

    kernel = functools.partial(encoder_block_kernel, n_heads=n_heads, head_dim=head_dim)

    def const_spec(a):
        nd = a.ndim
        # weight/bias block index never changes -> single-buffer it.
        return pl.BlockSpec(a.shape, lambda i, _nd=nd: (0,) * _nd,
                            pipeline_mode=pl.Buffered(1))

    in_specs = [pl.BlockSpec((BB, T, C), lambda i: (i, 0, 0))] + [const_spec(p) for p in params]
    out_spec = pl.BlockSpec((BB, T, C), lambda i: (i, 0, 0))

    return pl.pallas_call(
        kernel,
        out_shape=jax.ShapeDtypeStruct((B, T, C), x.dtype),
        grid=(B // BB,),
        in_specs=in_specs,
        out_specs=out_spec,
        scratch_shapes=[pltpu.VMEM((BB * T, C), jnp.float32)],
        compiler_params=pltpu.CompilerParams(
            dimension_semantics=("parallel",),
            vmem_limit_bytes=48 * 1024 * 1024,
        ),
    )(x, *params)


def init_params(key, dim):
    """Deterministic synthetic parameters (same shapes as the PyTorch module), f32."""
    ks = jax.random.split(key, 8)
    s = 0.05
    w_in = jax.random.normal(ks[0], (dim, 3 * dim), jnp.float32) * s
    b_in = jax.random.normal(ks[1], (1, 3 * dim), jnp.float32) * s
    w_out = jax.random.normal(ks[2], (dim, dim), jnp.float32) * s
    b_out = jax.random.normal(ks[3], (1, dim), jnp.float32) * s
    g1 = jnp.ones((1, dim), jnp.float32)
    be1 = jnp.zeros((1, dim), jnp.float32)
    w_f1 = jax.random.normal(ks[4], (dim, 4 * dim), jnp.float32) * s
    b_f1 = jax.random.normal(ks[5], (1, 4 * dim), jnp.float32) * s
    w_f2 = jax.random.normal(ks[6], (4 * dim, dim), jnp.float32) * s
    b_f2 = jax.random.normal(ks[7], (1, dim), jnp.float32) * s
    g2 = jnp.ones((1, dim), jnp.float32)
    be2 = jnp.zeros((1, dim), jnp.float32)
    return (w_in, b_in, w_out, b_out, g1, be1, w_f1, b_f1, w_f2, b_f2, g2, be2)


def prepare_params(params, n_heads):
    """Fold 1/sqrt(head_dim) into q columns of in_proj and cast weights to bf16."""
    (w_in, b_in, w_out, b_out, g1, be1, w_f1, b_f1, w_f2, b_f2, g2, be2) = params
    C = w_out.shape[0]
    hd = C // n_heads
    scale = hd ** -0.5
    col_scale = jnp.concatenate(
        [jnp.full((C,), scale, jnp.float32), jnp.ones((2 * C,), jnp.float32)])
    w_in_s = w_in * col_scale[None, :]
    b_in_s = b_in * col_scale[None, :]
    bf = lambda w: w.astype(jnp.bfloat16)
    return (bf(w_in_s), b_in_s, bf(w_out), b_out, g1, be1,
            bf(w_f1), b_f1, bf(w_f2), b_f2, g2, be2)


def encoder_block_ref(x, params, n_heads):
    """Pure-JAX f32 reference mirroring the PyTorch forward (eval mode)."""
    (w_in, b_in, w_out, b_out, g1, be1, w_f1, b_f1, w_f2, b_f2, g2, be2) = params
    B, T, C = x.shape
    hd = C // n_heads
    scale = hd ** -0.5

    qkv = x @ w_in + b_in
    q, k, v = jnp.split(qkv, 3, axis=-1)
    q = q.reshape(B, T, n_heads, hd).transpose(0, 2, 1, 3)
    k = k.reshape(B, T, n_heads, hd).transpose(0, 2, 1, 3)
    v = v.reshape(B, T, n_heads, hd).transpose(0, 2, 1, 3)
    s = jnp.einsum("bhqd,bhkd->bhqk", q, k) * scale
    p = jax.nn.softmax(s, axis=-1)
    a = jnp.einsum("bhqk,bhkd->bhqd", p, v).transpose(0, 2, 1, 3).reshape(B, T, C)
    a = a @ w_out + b_out

    def ln(y, g, b):
        mu = jnp.mean(y, -1, keepdims=True)
        var = jnp.mean((y - mu) ** 2, -1, keepdims=True)
        return (y - mu) * jax.lax.rsqrt(var + LN_EPS) * g + b

    x = ln(x + a, g1, be1)
    h = jnp.maximum(x @ w_f1 + b_f1, 0.0)
    x = ln(x + (h @ w_f2 + b_f2), g2, be2)
    return x


if __name__ == "__main__":
    B, T, C, H = 8, 64, 128, 4
    key = jax.random.PRNGKey(0)
    kx, kp = jax.random.split(key)
    x = jax.random.normal(kx, (B, T, C), jnp.float32)
    params = init_params(kp, C)              # f32 "PyTorch-like" params
    kparams = prepare_params(params, H)      # bf16 weights, scale folded into q

    out = jax.block_until_ready(encoder_block(x, kparams, n_heads=H))
    ref = encoder_block_ref(x, params, H)    # f32 reference

    assert out.shape == (B, T, C)
    max_err = float(jnp.max(jnp.abs(out - ref)))
    # tolerance covers bf16 matmul operands + approximate softmax reciprocal
    assert jnp.allclose(out, ref, atol=3e-2, rtol=3e-2), f"mismatch vs ref (max |err|={max_err})"
    print("KERNEL_OK")
</pallas_src>

<mosaic_0001>
module attributes {stable_mosaic.version = 11 : i64} {
  func.func @encoder_block_kernel(%arg0: i32, %arg1: memref<4x64x128xf32, #tpu.memory_space<vmem>>, %arg2: memref<128x384xbf16, #tpu.memory_space<vmem>>, %arg3: memref<1x384xf32, #tpu.memory_space<vmem>>, %arg4: memref<128x128xbf16, #tpu.memory_space<vmem>>, %arg5: memref<1x128xf32, #tpu.memory_space<vmem>>, %arg6: memref<1x128xf32, #tpu.memory_space<vmem>>, %arg7: memref<1x128xf32, #tpu.memory_space<vmem>>, %arg8: memref<128x512xbf16, #tpu.memory_space<vmem>>, %arg9: memref<1x512xf32, #tpu.memory_space<vmem>>, %arg10: memref<512x128xbf16, #tpu.memory_space<vmem>>, %arg11: memref<1x128xf32, #tpu.memory_space<vmem>>, %arg12: memref<1x128xf32, #tpu.memory_space<vmem>>, %arg13: memref<1x128xf32, #tpu.memory_space<vmem>>, %arg14: memref<4x64x128xf32, #tpu.memory_space<vmem>>, %arg15: memref<256x128xf32, #tpu.memory_space<vmem>>) attributes {dimension_semantics = [#tpu.dimension_semantics<parallel>], iteration_bounds = array<i64: 2>, scalar_prefetch = 0 : i64, scratch_operands = 1 : i64, tpu.core_type = #tpu.core_type<tc>, window_params = [{transform_indices = @transform_0, window_bounds = array<i64: 4, 64, 128>}, {pipeline_mode = #tpu.pipeline_mode<synchronous>, transform_indices = @transform_1, window_bounds = array<i64: 128, 384>}, {pipeline_mode = #tpu.pipeline_mode<synchronous>, transform_indices = @transform_2, window_bounds = array<i64: 1, 384>}, {pipeline_mode = #tpu.pipeline_mode<synchronous>, transform_indices = @transform_3, window_bounds = array<i64: 128, 128>}, {pipeline_mode = #tpu.pipeline_mode<synchronous>, transform_indices = @transform_4, window_bounds = array<i64: 1, 128>}, {pipeline_mode = #tpu.pipeline_mode<synchronous>, transform_indices = @transform_5, window_bounds = array<i64: 1, 128>}, {pipeline_mode = #tpu.pipeline_mode<synchronous>, transform_indices = @transform_6, window_bounds = array<i64: 1, 128>}, {pipeline_mode = #tpu.pipeline_mode<synchronous>, transform_indices = @transform_7, window_bounds = array<i64: 128, 512>}, {pipeline_mode = #tpu.pipeline_mode<synchronous>, transform_indices = @transform_8, window_bounds = array<i64: 1, 512>}, {pipeline_mode = #tpu.pipeline_mode<synchronous>, transform_indices = @transform_9, window_bounds = array<i64: 512, 128>}, {pipeline_mode = #tpu.pipeline_mode<synchronous>, transform_indices = @transform_10, window_bounds = array<i64: 1, 128>}, {pipeline_mode = #tpu.pipeline_mode<synchronous>, transform_indices = @transform_11, window_bounds = array<i64: 1, 128>}, {pipeline_mode = #tpu.pipeline_mode<synchronous>, transform_indices = @transform_12, window_bounds = array<i64: 1, 128>}, {transform_indices = @transform_13, window_bounds = array<i64: 4, 64, 128>}]} {
    %c0 = arith.constant 0 : index
    %c0_0 = arith.constant 0 : index
    %c0_1 = arith.constant 0 : index
    %0 = vector.load %arg1[%c0, %c0_0, %c0_1] : memref<4x64x128xf32, #tpu.memory_space<vmem>>, vector<4x64x128xf32>
    %1 = vector.shape_cast %0 : vector<4x64x128xf32> to vector<256x128xf32>
    %2 = arith.truncf %1 : vector<256x128xf32> to vector<256x128xbf16>
    %c0_2 = arith.constant 0 : index
    %c0_3 = arith.constant 0 : index
    %3 = vector.load %arg2[%c0_2, %c0_3] : memref<128x384xbf16, #tpu.memory_space<vmem>>, vector<128x384xbf16>
    %cst = arith.constant dense<0.000000e+00> : vector<256x384xf32>
    %4 = tpu.matmul %2, %3, %cst {dimension_numbers = #tpu.dot_dimension_numbers<[1], [0], [0], [1], [0, 0, 1, 1], [], []>} : vector<256x128xbf16>, vector<128x384xbf16>, vector<256x384xf32> -> vector<256x384xf32>
    %c0_4 = arith.constant 0 : index
    %c0_5 = arith.constant 0 : index
    %5 = vector.load %arg3[%c0_4, %c0_5] : memref<1x384xf32, #tpu.memory_space<vmem>>, vector<1x384xf32>
    %6 = vector.broadcast %5 : vector<1x384xf32> to vector<256x384xf32>
    %7 = arith.addf %4, %6 : vector<256x384xf32>
    %8 = vector.extract_strided_slice %7 {offsets = [0, 0], sizes = [256, 128], strides = [1, 1]} : vector<256x384xf32> to vector<256x128xf32>
    %9 = arith.truncf %8 : vector<256x128xf32> to vector<256x128xbf16>
    %10 = vector.shape_cast %9 : vector<256x128xbf16> to vector<4x64x128xbf16>
    %11 = vector.extract_strided_slice %7 {offsets = [0, 128], sizes = [256, 128], strides = [1, 1]} : vector<256x384xf32> to vector<256x128xf32>
    %12 = arith.truncf %11 : vector<256x128xf32> to vector<256x128xbf16>
    %13 = vector.shape_cast %12 : vector<256x128xbf16> to vector<4x64x128xbf16>
    %14 = vector.extract_strided_slice %7 {offsets = [0, 256], sizes = [256, 128], strides = [1, 1]} : vector<256x384xf32> to vector<256x128xf32>
    %15 = arith.truncf %14 : vector<256x128xf32> to vector<256x128xbf16>
    %16 = vector.shape_cast %15 : vector<256x128xbf16> to vector<4x64x128xbf16>
    %17 = vector.extract_strided_slice %10 {offsets = [0, 0, 0], sizes = [4, 64, 32], strides = [1, 1, 1]} : vector<4x64x128xbf16> to vector<4x64x32xbf16>
    %18 = vector.extract_strided_slice %13 {offsets = [0, 0, 0], sizes = [4, 64, 32], strides = [1, 1, 1]} : vector<4x64x128xbf16> to vector<4x64x32xbf16>
    %19 = vector.extract_strided_slice %16 {offsets = [0, 0, 0], sizes = [4, 64, 32], strides = [1, 1, 1]} : vector<4x64x128xbf16> to vector<4x64x32xbf16>
    "tpu.trace_start"() <{level = 10 : i32, message = "bqd,bkd->bqk"}> : () -> ()
    %cst_6 = arith.constant dense<0.000000e+00> : vector<4x64x64xf32>
    %20 = tpu.matmul %17, %18, %cst_6 {dimension_numbers = #tpu.dot_dimension_numbers<[2], [2], [1], [1], [0, 0, 0, 1, 1, 1], [0], [0]>} : vector<4x64x32xbf16>, vector<4x64x32xbf16>, vector<4x64x64xf32> -> vector<4x64x64xf32>
    "tpu.trace_stop"() : () -> ()
    %cst_7 = arith.constant dense<0xFF800000> : vector<4x64xf32>
    %21 = vector.multi_reduction <maximumf>, %20, %cst_7 [2] : vector<4x64x64xf32> to vector<4x64xf32>
    %22 = vector.shape_cast %21 : vector<4x64xf32> to vector<4x64x1xf32>
    %23 = vector.broadcast %22 : vector<4x64x1xf32> to vector<4x64x64xf32>
    %24 = arith.subf %20, %23 : vector<4x64x64xf32>
    %25 = math.exp %24 : vector<4x64x64xf32>
    %cst_8 = arith.constant dense<0.000000e+00> : vector<4x64xf32>
    %26 = vector.multi_reduction <add>, %25, %cst_8 [2] : vector<4x64x64xf32> to vector<4x64xf32>
    %27 = vector.shape_cast %26 : vector<4x64xf32> to vector<4x64x1xf32>
    %28 = tpu.reciprocal %27 {approx = true} : vector<4x64x1xf32> -> vector<4x64x1xf32>
    %29 = arith.truncf %25 : vector<4x64x64xf32> to vector<4x64x64xbf16>
    "tpu.trace_start"() <{level = 10 : i32, message = "bqk,bkd->bqd"}> : () -> ()
    %cst_9 = arith.constant dense<0.000000e+00> : vector<4x64x32xf32>
    %30 = tpu.matmul %29, %19, %cst_9 {dimension_numbers = #tpu.dot_dimension_numbers<[2], [1], [1], [2], [0, 0, 0, 1, 1, 2], [0], [0]>} : vector<4x64x64xbf16>, vector<4x64x32xbf16>, vector<4x64x32xf32> -> vector<4x64x32xf32>
    "tpu.trace_stop"() : () -> ()
    %31 = vector.broadcast %28 : vector<4x64x1xf32> to vector<4x64x32xf32>
    %32 = arith.mulf %30, %31 : vector<4x64x32xf32>
    %33 = vector.shape_cast %32 : vector<4x64x32xf32> to vector<256x32xf32>
    %c0_10 = arith.constant 0 : index
    %c0_11 = arith.constant 0 : index
    %34 = vector.load %arg15[%c0_10, %c0_11] : memref<256x128xf32, #tpu.memory_space<vmem>>, vector<256x32xf32>
    tpu.vector_store %arg15[%c0_10, %c0_11], %33 {strides = array<i32>} : memref<256x128xf32, #tpu.memory_space<vmem>>, vector<256x32xf32>,
    %35 = vector.extract_strided_slice %10 {offsets = [0, 0, 32], sizes = [4, 64, 32], strides = [1, 1, 1]} : vector<4x64x128xbf16> to vector<4x64x32xbf16>
    %36 = vector.extract_strided_slice %13 {offsets = [0, 0, 32], sizes = [4, 64, 32], strides = [1, 1, 1]} : vector<4x64x128xbf16> to vector<4x64x32xbf16>
    %37 = vector.extract_strided_slice %16 {offsets = [0, 0, 32], sizes = [4, 64, 32], strides = [1, 1, 1]} : vector<4x64x128xbf16> to vector<4x64x32xbf16>
    "tpu.trace_start"() <{level = 10 : i32, message = "bqd,bkd->bqk"}> : () -> ()
    %cst_12 = arith.constant dense<0.000000e+00> : vector<4x64x64xf32>
    %38 = tpu.matmul %35, %36, %cst_12 {dimension_numbers = #tpu.dot_dimension_numbers<[2], [2], [1], [1], [0, 0, 0, 1, 1, 1], [0], [0]>} : vector<4x64x32xbf16>, vector<4x64x32xbf16>, vector<4x64x64xf32> -> vector<4x64x64xf32>
    "tpu.trace_stop"() : () -> ()
    %cst_13 = arith.constant dense<0xFF800000> : vector<4x64xf32>
    %39 = vector.multi_reduction <maximumf>, %38, %cst_13 [2] : vector<4x64x64xf32> to vector<4x64xf32>
    %40 = vector.shape_cast %39 : vector<4x64xf32> to vector<4x64x1xf32>
    %41 = vector.broadcast %40 : vector<4x64x1xf32> to vector<4x64x64xf32>
    %42 = arith.subf %38, %41 : vector<4x64x64xf32>
    %43 = math.exp %42 : vector<4x64x64xf32>
    %cst_14 = arith.constant dense<0.000000e+00> : vector<4x64xf32>
    %44 = vector.multi_reduction <add>, %43, %cst_14 [2] : vector<4x64x64xf32> to vector<4x64xf32>
    %45 = vector.shape_cast %44 : vector<4x64xf32> to vector<4x64x1xf32>
    %46 = tpu.reciprocal %45 {approx = true} : vector<4x64x1xf32> -> vector<4x64x1xf32>
    %47 = arith.truncf %43 : vector<4x64x64xf32> to vector<4x64x64xbf16>
    "tpu.trace_start"() <{level = 10 : i32, message = "bqk,bkd->bqd"}> : () -> ()
    %cst_15 = arith.constant dense<0.000000e+00> : vector<4x64x32xf32>
    %48 = tpu.matmul %47, %37, %cst_15 {dimension_numbers = #tpu.dot_dimension_numbers<[2], [1], [1], [2], [0, 0, 0, 1, 1, 2], [0], [0]>} : vector<4x64x64xbf16>, vector<4x64x32xbf16>, vector<4x64x32xf32> -> vector<4x64x32xf32>
    "tpu.trace_stop"() : () -> ()
    %49 = vector.broadcast %46 : vector<4x64x1xf32> to vector<4x64x32xf32>
    %50 = arith.mulf %48, %49 : vector<4x64x32xf32>
    %51 = vector.shape_cast %50 : vector<4x64x32xf32> to vector<256x32xf32>
    %c0_16 = arith.constant 0 : index
    %c32 = arith.constant 32 : index
    %52 = vector.load %arg15[%c0_16, %c32] : memref<256x128xf32, #tpu.memory_space<vmem>>, vector<256x32xf32>
    tpu.vector_store %arg15[%c0_16, %c32], %51 {strides = array<i32>} : memref<256x128xf32, #tpu.memory_space<vmem>>, vector<256x32xf32>,
    %53 = vector.extract_strided_slice %10 {offsets = [0, 0, 64], sizes = [4, 64, 32], strides = [1, 1, 1]} : vector<4x64x128xbf16> to vector<4x64x32xbf16>
    %54 = vector.extract_strided_slice %13 {offsets = [0, 0, 64], sizes = [4, 64, 32], strides = [1, 1, 1]} : vector<4x64x128xbf16> to vector<4x64x32xbf16>
    %55 = vector.extract_strided_slice %16 {offsets = [0, 0, 64], sizes = [4, 64, 32], strides = [1, 1, 1]} : vector<4x64x128xbf16> to vector<4x64x32xbf16>
    "tpu.trace_start"() <{level = 10 : i32, message = "bqd,bkd->bqk"}> : () -> ()
    %cst_17 = arith.constant dense<0.000000e+00> : vector<4x64x64xf32>
    %56 = tpu.matmul %53, %54, %cst_17 {dimension_numbers = #tpu.dot_dimension_numbers<[2], [2], [1], [1], [0, 0, 0, 1, 1, 1], [0], [0]>} : vector<4x64x32xbf16>, vector<4x64x32xbf16>, vector<4x64x64xf32> -> vector<4x64x64xf32>
    "tpu.trace_stop"() : () -> ()
    %cst_18 = arith.constant dense<0xFF800000> : vector<4x64xf32>
    %57 = vector.multi_reduction <maximumf>, %56, %cst_18 [2] : vector<4x64x64xf32> to vector<4x64xf32>
    %58 = vector.shape_cast %57 : vector<4x64xf32> to vector<4x64x1xf32>
    %59 = vector.broadcast %58 : vector<4x64x1xf32> to vector<4x64x64xf32>
    %60 = arith.subf %56, %59 : vector<4x64x64xf32>
    %61 = math.exp %60 : vector<4x64x64xf32>
    %cst_19 = arith.constant dense<0.000000e+00> : vector<4x64xf32>
    %62 = vector.multi_reduction <add>, %61, %cst_19 [2] : vector<4x64x64xf32> to vector<4x64xf32>
    %63 = vector.shape_cast %62 : vector<4x64xf32> to vector<4x64x1xf32>
    %64 = tpu.reciprocal %63 {approx = true} : vector<4x64x1xf32> -> vector<4x64x1xf32>
    %65 = arith.truncf %61 : vector<4x64x64xf32> to vector<4x64x64xbf16>
    "tpu.trace_start"() <{level = 10 : i32, message = "bqk,bkd->bqd"}> : () -> ()
    %cst_20 = arith.constant dense<0.000000e+00> : vector<4x64x32xf32>
    %66 = tpu.matmul %65, %55, %cst_20 {dimension_numbers = #tpu.dot_dimension_numbers<[2], [1], [1], [2], [0, 0, 0, 1, 1, 2], [0], [0]>} : vector<4x64x64xbf16>, vector<4x64x32xbf16>, vector<4x64x32xf32> -> vector<4x64x32xf32>
    "tpu.trace_stop"() : () -> ()
    %67 = vector.broadcast %64 : vector<4x64x1xf32> to vector<4x64x32xf32>
    %68 = arith.mulf %66, %67 : vector<4x64x32xf32>
    %69 = vector.shape_cast %68 : vector<4x64x32xf32> to vector<256x32xf32>
    %c0_21 = arith.constant 0 : index
    %c64 = arith.constant 64 : index
    %70 = vector.load %arg15[%c0_21, %c64] : memref<256x128xf32, #tpu.memory_space<vmem>>, vector<256x32xf32>
    tpu.vector_store %arg15[%c0_21, %c64], %69 {strides = array<i32>} : memref<256x128xf32, #tpu.memory_space<vmem>>, vector<256x32xf32>,
    %71 = vector.extract_strided_slice %10 {offsets = [0, 0, 96], sizes = [4, 64, 32], strides = [1, 1, 1]} : vector<4x64x128xbf16> to vector<4x64x32xbf16>
    %72 = vector.extract_strided_slice %13 {offsets = [0, 0, 96], sizes = [4, 64, 32], strides = [1, 1, 1]} : vector<4x64x128xbf16> to vector<4x64x32xbf16>
    %73 = vector.extract_strided_slice %16 {offsets = [0, 0, 96], sizes = [4, 64, 32], strides = [1, 1, 1]} : vector<4x64x128xbf16> to vector<4x64x32xbf16>
    "tpu.trace_start"() <{level = 10 : i32, message = "bqd,bkd->bqk"}> : () -> ()
    %cst_22 = arith.constant dense<0.000000e+00> : vector<4x64x64xf32>
    %74 = tpu.matmul %71, %72, %cst_22 {dimension_numbers = #tpu.dot_dimension_numbers<[2], [2], [1], [1], [0, 0, 0, 1, 1, 1], [0], [0]>} : vector<4x64x32xbf16>, vector<4x64x32xbf16>, vector<4x64x64xf32> -> vector<4x64x64xf32>
    "tpu.trace_stop"() : () -> ()
    %cst_23 = arith.constant dense<0xFF800000> : vector<4x64xf32>
    %75 = vector.multi_reduction <maximumf>, %74, %cst_23 [2] : vector<4x64x64xf32> to vector<4x64xf32>
    %76 = vector.shape_cast %75 : vector<4x64xf32> to vector<4x64x1xf32>
    %77 = vector.broadcast %76 : vector<4x64x1xf32> to vector<4x64x64xf32>
    %78 = arith.subf %74, %77 : vector<4x64x64xf32>
    %79 = math.exp %78 : vector<4x64x64xf32>
    %cst_24 = arith.constant dense<0.000000e+00> : vector<4x64xf32>
    %80 = vector.multi_reduction <add>, %79, %cst_24 [2] : vector<4x64x64xf32> to vector<4x64xf32>
    %81 = vector.shape_cast %80 : vector<4x64xf32> to vector<4x64x1xf32>
    %82 = tpu.reciprocal %81 {approx = true} : vector<4x64x1xf32> -> vector<4x64x1xf32>
    %83 = arith.truncf %79 : vector<4x64x64xf32> to vector<4x64x64xbf16>
    "tpu.trace_start"() <{level = 10 : i32, message = "bqk,bkd->bqd"}> : () -> ()
    %cst_25 = arith.constant dense<0.000000e+00> : vector<4x64x32xf32>
    %84 = tpu.matmul %83, %73, %cst_25 {dimension_numbers = #tpu.dot_dimension_numbers<[2], [1], [1], [2], [0, 0, 0, 1, 1, 2], [0], [0]>} : vector<4x64x64xbf16>, vector<4x64x32xbf16>, vector<4x64x32xf32> -> vector<4x64x32xf32>
    "tpu.trace_stop"() : () -> ()
    %85 = vector.broadcast %82 : vector<4x64x1xf32> to vector<4x64x32xf32>
    %86 = arith.mulf %84, %85 : vector<4x64x32xf32>
    %87 = vector.shape_cast %86 : vector<4x64x32xf32> to vector<256x32xf32>
    %c0_26 = arith.constant 0 : index
    %c96 = arith.constant 96 : index
    %88 = vector.load %arg15[%c0_26, %c96] : memref<256x128xf32, #tpu.memory_space<vmem>>, vector<256x32xf32>
    tpu.vector_store %arg15[%c0_26, %c96], %87 {strides = array<i32>} : memref<256x128xf32, #tpu.memory_space<vmem>>, vector<256x32xf32>,
    %c0_27 = arith.constant 0 : index
    %c0_28 = arith.constant 0 : index
    %89 = vector.load %arg15[%c0_27, %c0_28] : memref<256x128xf32, #tpu.memory_space<vmem>>, vector<256x128xf32>
    %90 = arith.truncf %89 : vector<256x128xf32> to vector<256x128xbf16>
    %c0_29 = arith.constant 0 : index
    %c0_30 = arith.constant 0 : index
    %91 = vector.load %arg4[%c0_29, %c0_30] : memref<128x128xbf16, #tpu.memory_space<vmem>>, vector<128x128xbf16>
    %cst_31 = arith.constant dense<0.000000e+00> : vector<256x128xf32>
    %92 = tpu.matmul %90, %91, %cst_31 {dimension_numbers = #tpu.dot_dimension_numbers<[1], [0], [0], [1], [0, 0, 1, 1], [], []>} : vector<256x128xbf16>, vector<128x128xbf16>, vector<256x128xf32> -> vector<256x128xf32>
    %c0_32 = arith.constant 0 : index
    %c0_33 = arith.constant 0 : index
    %93 = vector.load %arg5[%c0_32, %c0_33] : memref<1x128xf32, #tpu.memory_space<vmem>>, vector<1x128xf32>
    %94 = vector.broadcast %93 : vector<1x128xf32> to vector<256x128xf32>
    %95 = arith.addf %92, %94 : vector<256x128xf32>
    %96 = arith.addf %1, %95 : vector<256x128xf32>
    %c0_34 = arith.constant 0 : index
    %c0_35 = arith.constant 0 : index
    %97 = vector.load %arg6[%c0_34, %c0_35] : memref<1x128xf32, #tpu.memory_space<vmem>>, vector<1x128xf32>
    %c0_36 = arith.constant 0 : index
    %c0_37 = arith.constant 0 : index
    %98 = vector.load %arg7[%c0_36, %c0_37] : memref<1x128xf32, #tpu.memory_space<vmem>>, vector<1x128xf32>
    %cst_38 = arith.constant dense<0.000000e+00> : vector<256xf32>
    %99 = vector.multi_reduction <add>, %96, %cst_38 [1] : vector<256x128xf32> to vector<256xf32>
    %100 = vector.shape_cast %99 : vector<256xf32> to vector<256x1xf32>
    %cst_39 = arith.constant 1.280000e+02 : f32
    %101 = vector.broadcast %cst_39 : f32 to vector<256x1xf32>
    %102 = arith.divf %100, %101 : vector<256x1xf32>
    %103 = vector.broadcast %102 : vector<256x1xf32> to vector<256x128xf32>
    %104 = arith.subf %96, %103 : vector<256x128xf32>
    %105 = arith.mulf %104, %104 : vector<256x128xf32>
    %cst_40 = arith.constant dense<0.000000e+00> : vector<256xf32>
    %106 = vector.multi_reduction <add>, %105, %cst_40 [1] : vector<256x128xf32> to vector<256xf32>
    %107 = vector.shape_cast %106 : vector<256xf32> to vector<256x1xf32>
    %cst_41 = arith.constant 1.280000e+02 : f32
    %108 = vector.broadcast %cst_41 : f32 to vector<256x1xf32>
    %109 = arith.divf %107, %108 : vector<256x1xf32>
    %110 = vector.broadcast %102 : vector<256x1xf32> to vector<256x128xf32>
    %111 = arith.subf %96, %110 : vector<256x128xf32>
    %cst_42 = arith.constant 9.99999974E-6 : f32
    %112 = vector.broadcast %cst_42 : f32 to vector<256x1xf32>
    %113 = arith.addf %109, %112 : vector<256x1xf32>
    %114 = math.rsqrt %113 : vector<256x1xf32>
    %115 = vector.broadcast %114 : vector<256x1xf32> to vector<256x128xf32>
    %116 = arith.mulf %111, %115 : vector<256x128xf32>
    %117 = vector.broadcast %97 : vector<1x128xf32> to vector<256x128xf32>
    %118 = arith.mulf %116, %117 : vector<256x128xf32>
    %119 = vector.broadcast %98 : vector<1x128xf32> to vector<256x128xf32>
    %120 = arith.addf %118, %119 : vector<256x128xf32>
    %121 = arith.truncf %120 : vector<256x128xf32> to vector<256x128xbf16>
    %c0_43 = arith.constant 0 : index
    %c0_44 = arith.constant 0 : index
    %122 = vector.load %arg8[%c0_43, %c0_44] : memref<128x512xbf16, #tpu.memory_space<vmem>>, vector<128x512xbf16>
    %cst_45 = arith.constant dense<0.000000e+00> : vector<256x512xf32>
    %123 = tpu.matmul %121, %122, %cst_45 {dimension_numbers = #tpu.dot_dimension_numbers<[1], [0], [0], [1], [0, 0, 1, 1], [], []>} : vector<256x128xbf16>, vector<128x512xbf16>, vector<256x512xf32> -> vector<256x512xf32>
    %c0_46 = arith.constant 0 : index
    %c0_47 = arith.constant 0 : index
    %124 = vector.load %arg9[%c0_46, %c0_47] : memref<1x512xf32, #tpu.memory_space<vmem>>, vector<1x512xf32>
    %125 = vector.broadcast %124 : vector<1x512xf32> to vector<256x512xf32>
    %126 = arith.addf %123, %125 : vector<256x512xf32>
    %cst_48 = arith.constant 0.000000e+00 : f32
    %127 = vector.broadcast %cst_48 : f32 to vector<256x512xf32>
    %128 = arith.maximumf %126, %127 : vector<256x512xf32>
    %129 = arith.truncf %128 : vector<256x512xf32> to vector<256x512xbf16>
    %c0_49 = arith.constant 0 : index
    %c0_50 = arith.constant 0 : index
    %130 = vector.load %arg10[%c0_49, %c0_50] : memref<512x128xbf16, #tpu.memory_space<vmem>>, vector<512x128xbf16>
    %cst_51 = arith.constant dense<0.000000e+00> : vector<256x128xf32>
    %131 = tpu.matmul %129, %130, %cst_51 {dimension_numbers = #tpu.dot_dimension_numbers<[1], [0], [0], [1], [0, 0, 1, 1], [], []>} : vector<256x512xbf16>, vector<512x128xbf16>, vector<256x128xf32> -> vector<256x128xf32>
    %c0_52 = arith.constant 0 : index
    %c0_53 = arith.constant 0 : index
    %132 = vector.load %arg11[%c0_52, %c0_53] : memref<1x128xf32, #tpu.memory_space<vmem>>, vector<1x128xf32>
    %133 = vector.broadcast %132 : vector<1x128xf32> to vector<256x128xf32>
    %134 = arith.addf %131, %133 : vector<256x128xf32>
    %135 = arith.addf %120, %134 : vector<256x128xf32>
    %c0_54 = arith.constant 0 : index
    %c0_55 = arith.constant 0 : index
    %136 = vector.load %arg12[%c0_54, %c0_55] : memref<1x128xf32, #tpu.memory_space<vmem>>, vector<1x128xf32>
    %c0_56 = arith.constant 0 : index
    %c0_57 = arith.constant 0 : index
    %137 = vector.load %arg13[%c0_56, %c0_57] : memref<1x128xf32, #tpu.memory_space<vmem>>, vector<1x128xf32>
    %cst_58 = arith.constant dense<0.000000e+00> : vector<256xf32>
    %138 = vector.multi_reduction <add>, %135, %cst_58 [1] : vector<256x128xf32> to vector<256xf32>
    %139 = vector.shape_cast %138 : vector<256xf32> to vector<256x1xf32>
    %cst_59 = arith.constant 1.280000e+02 : f32
    %140 = vector.broadcast %cst_59 : f32 to vector<256x1xf32>
    %141 = arith.divf %139, %140 : vector<256x1xf32>
    %142 = vector.broadcast %141 : vector<256x1xf32> to vector<256x128xf32>
    %143 = arith.subf %135, %142 : vector<256x128xf32>
    %144 = arith.mulf %143, %143 : vector<256x128xf32>
    %cst_60 = arith.constant dense<0.000000e+00> : vector<256xf32>
    %145 = vector.multi_reduction <add>, %144, %cst_60 [1] : vector<256x128xf32> to vector<256xf32>
    %146 = vector.shape_cast %145 : vector<256xf32> to vector<256x1xf32>
    %cst_61 = arith.constant 1.280000e+02 : f32
    %147 = vector.broadcast %cst_61 : f32 to vector<256x1xf32>
    %148 = arith.divf %146, %147 : vector<256x1xf32>
    %149 = vector.broadcast %141 : vector<256x1xf32> to vector<256x128xf32>
    %150 = arith.subf %135, %149 : vector<256x128xf32>
    %cst_62 = arith.constant 9.99999974E-6 : f32
    %151 = vector.broadcast %cst_62 : f32 to vector<256x1xf32>
    %152 = arith.addf %148, %151 : vector<256x1xf32>
    %153 = math.rsqrt %152 : vector<256x1xf32>
    %154 = vector.broadcast %153 : vector<256x1xf32> to vector<256x128xf32>
    %155 = arith.mulf %150, %154 : vector<256x128xf32>
    %156 = vector.broadcast %136 : vector<1x128xf32> to vector<256x128xf32>
    %157 = arith.mulf %155, %156 : vector<256x128xf32>
    %158 = vector.broadcast %137 : vector<1x128xf32> to vector<256x128xf32>
    %159 = arith.addf %157, %158 : vector<256x128xf32>
    %160 = vector.shape_cast %159 : vector<256x128xf32> to vector<4x64x128xf32>
    %c0_63 = arith.constant 0 : index
    %c0_64 = arith.constant 0 : index
    %c0_65 = arith.constant 0 : index
    %161 = vector.load %arg14[%c0_63, %c0_64, %c0_65] : memref<4x64x128xf32, #tpu.memory_space<vmem>>, vector<4x64x128xf32>
    tpu.vector_store %arg14[%c0_63, %c0_64, %c0_65], %160 {strides = array<i32>} : memref<4x64x128xf32, #tpu.memory_space<vmem>>, vector<4x64x128xf32>,
    return
  }
  func.func @transform_0(%arg0: i32) -> (i32, i32, i32) {
    %c0_i32 = arith.constant 0 : i32
    %c0_i32_0 = arith.constant 0 : i32
    %c0_i32_1 = arith.constant 0 : i32
    return %arg0, %c0_i32, %c0_i32_0 : i32, i32, i32
  }
  func.func @transform_1(%arg0: i32) -> (i32, i32) {
    %c0_i32 = arith.constant 0 : i32
    %c0_i32_0 = arith.constant 0 : i32
    %c0_i32_1 = arith.constant 0 : i32
    return %c0_i32, %c0_i32_0 : i32, i32
  }
  func.func @transform_2(%arg0: i32) -> (i32, i32) {
    %c0_i32 = arith.constant 0 : i32
    %c0_i32_0 = arith.constant 0 : i32
    %c0_i32_1 = arith.constant 0 : i32
    return %c0_i32, %c0_i32_0 : i32, i32
  }
  func.func @transform_3(%arg0: i32) -> (i32, i32) {
    %c0_i32 = arith.constant 0 : i32
    %c0_i32_0 = arith.constant 0 : i32
    %c0_i32_1 = arith.constant 0 : i32
    return %c0_i32, %c0_i32_0 : i32, i32
  }
  func.func @transform_4(%arg0: i32) -> (i32, i32) {
    %c0_i32 = arith.constant 0 : i32
    %c0_i32_0 = arith.constant 0 : i32
    %c0_i32_1 = arith.constant 0 : i32
    return %c0_i32, %c0_i32_0 : i32, i32
  }
  func.func @transform_5(%arg0: i32) -> (i32, i32) {
    %c0_i32 = arith.constant 0 : i32
    %c0_i32_0 = arith.constant 0 : i32
    %c0_i32_1 = arith.constant 0 : i32
    return %c0_i32, %c0_i32_0 : i32, i32
  }
  func.func @transform_6(%arg0: i32) -> (i32, i32) {
    %c0_i32 = arith.constant 0 : i32
    %c0_i32_0 = arith.constant 0 : i32
    %c0_i32_1 = arith.constant 0 : i32
    return %c0_i32, %c0_i32_0 : i32, i32
  }
  func.func @transform_7(%arg0: i32) -> (i32, i32) {
    %c0_i32 = arith.constant 0 : i32
    %c0_i32_0 = arith.constant 0 : i32
    %c0_i32_1 = arith.constant 0 : i32
    return %c0_i32, %c0_i32_0 : i32, i32
  }
  func.func @transform_8(%arg0: i32) -> (i32, i32) {
    %c0_i32 = arith.constant 0 : i32
    %c0_i32_0 = arith.constant 0 : i32
    %c0_i32_1 = arith.constant 0 : i32
    return %c0_i32, %c0_i32_0 : i32, i32
  }
  func.func @transform_9(%arg0: i32) -> (i32, i32) {
    %c0_i32 = arith.constant 0 : i32
    %c0_i32_0 = arith.constant 0 : i32
    %c0_i32_1 = arith.constant 0 : i32
    return %c0_i32, %c0_i32_0 : i32, i32
  }
  func.func @transform_10(%arg0: i32) -> (i32, i32) {
    %c0_i32 = arith.constant 0 : i32
    %c0_i32_0 = arith.constant 0 : i32
    %c0_i32_1 = arith.constant 0 : i32
    return %c0_i32, %c0_i32_0 : i32, i32
  }
  func.func @transform_11(%arg0: i32) -> (i32, i32) {
    %c0_i32 = arith.constant 0 : i32
    %c0_i32_0 = arith.constant 0 : i32
    %c0_i32_1 = arith.constant 0 : i32
    return %c0_i32, %c0_i32_0 : i32, i32
  }
  func.func @transform_12(%arg0: i32) -> (i32, i32) {
    %c0_i32 = arith.constant 0 : i32
    %c0_i32_0 = arith.constant 0 : i32
    %c0_i32_1 = arith.constant 0 : i32
    return %c0_i32, %c0_i32_0 : i32, i32
  }
  func.func @transform_13(%arg0: i32) -> (i32, i32, i32) {
    %c0_i32 = arith.constant 0 : i32
    %c0_i32_0 = arith.constant 0 : i32
    %c0_i32_1 = arith.constant 0 : i32
    return %arg0, %c0_i32, %c0_i32_0 : i32, i32, i32
  }
}

</mosaic_0001>

<llo_original>
// kernel: tpu_custom_call.1
$region0: #{tpu_custom_call.1}
  #allocation0 [shape = 'u32[]', space=smem, size = 0x4, offset = 0x4, fixed_abs, tag = 'smem constant byte address 0x4 - core index']
  #allocation1 [shape = 'u32[144,128]{1,0:T(1,128)}', space=vmem, size = 0x12000, scoped, tag = 'internal scratch']
  #allocation2 [shape = 'f32[256,128]{1,0:T(8,128)}', space=vmem, size = 0x20000, scoped, tag = 'scratch operand']
  %s0 = inlined_call_operand.hbm [shape: f32[8,64,128], index: 0, kind: input, shape index: {}]
  %s1 = inlined_call_operand.hbm [shape: bf16[128,384], index: 1, kind: input, shape index: {}]
  %s2 = inlined_call_operand.vmem [shape: f32[1,384], index: 2, kind: input, shape index: {}]
  %s3 = inlined_call_operand.hbm [shape: bf16[128,128], index: 3, kind: input, shape index: {}]
  %s4 = inlined_call_operand.vmem [shape: f32[1,128], index: 4, kind: input, shape index: {}]
  %s5 = inlined_call_operand.vmem [shape: f32[1,128], index: 5, kind: input, shape index: {}]
  %s6 = inlined_call_operand.vmem [shape: f32[1,128], index: 6, kind: input, shape index: {}]
  %s7 = inlined_call_operand.hbm [shape: bf16[128,512], index: 7, kind: input, shape index: {}]
  %s8 = inlined_call_operand.vmem [shape: f32[1,512], index: 8, kind: input, shape index: {}]
  %s9 = inlined_call_operand.hbm [shape: bf16[512,128], index: 9, kind: input, shape index: {}]
  %s10 = inlined_call_operand.vmem [shape: f32[1,128], index: 10, kind: input, shape index: {}]
  %s11 = inlined_call_operand.vmem [shape: f32[1,128], index: 11, kind: input, shape index: {}]
  %s12 = inlined_call_operand.vmem [shape: f32[1,128], index: 12, kind: input, shape index: {}]
  %s13 = inlined_call_operand.hbm [shape: f32[8,64,128], index: 13, kind: output, shape index: {}]
  %s14 = sld [smem:[#allocation0]]
  $region105: #{tpu_custom_call.1} parent=0
    _
  %s16 = ssub.s32 1, %s14
  %s17 = scalar_select 0, %s16, %s14
  $region1: #{tpu_custom_call.1} parent=0
    #allocation3 [shape = 'u8[262144]{0}', space=vmem, size = 0x40000, scoped, tag = 'input window, operand 0']
    #allocation4 [shape = 's32[2]{0}', space=sflag, size = 0x8, scoped, tag = 'scoped memory for tpu_custom_call.1']
    #allocation5 [shape = 's32[2]{0}', space=sflag, size = 0x8, scoped, tag = 'scoped memory for tpu_custom_call.1']
    #allocation6 [shape = 'u8[98304]{0}', space=vmem, size = 0x18000, scoped, tag = 'input window, operand 1, single buffered']
    #allocation7 [shape = 's32[1]{0}', space=sflag, size = 0x4, scoped, tag = 'scoped memory for tpu_custom_call.1']
    #allocation8 [shape = 'u8[32768]{0}', space=vmem, size = 0x8000, scoped, tag = 'input window, operand 3, single buffered']
    #allocation9 [shape = 'u8[131072]{0}', space=vmem, size = 0x20000, scoped, tag = 'input window, operand 7, single buffered']
    #allocation10 [shape = 's32[1]{0}', space=sflag, size = 0x4, scoped, tag = 'scoped memory for tpu_custom_call.1']
    #allocation11 [shape = 'u8[131072]{0}', space=vmem, size = 0x20000, scoped, tag = 'input window, operand 9, single buffered']
    #allocation12 [shape = 'u8[262144]{0}', space=vmem, size = 0x40000, scoped, tag = 'output window, operand 0']
    %18 = vsyncpa [#allocation4], 0
    %s19 = scalar_lea.sflag [#allocation4], 1
    %20 = vsyncpa %s19, 0
    %21 = vsyncpa [#allocation7], 0
    %22 = vsyncpa [#allocation10], 0
    %23 = vsyncpa [#allocation5], 0
    %s24 = scalar_lea.sflag [#allocation5], 1
    %25 = vsyncpa %s24, 0
    loop: start=0, step=1, limit=4
    $region2: #{tpu_custom_call.1} parent=1 // loop_pre_header
      _
    $region3: #{tpu_custom_call.1} parent=1 // loop_header
      %s27 = sphi 0, %s31
      %p28 = scmp.ge.s32.totalorder %s27, 4
      %s37 = sphi 0, %s39
      %s40 = sphi 0, %s37
      %s41 = sphi 0, %s40
      %s57 = sphi 0, %s41
      %s61 = sphi 0, %s61
      %s63 = sphi 0, %s61
      %s64 = sphi 0, %s63
      %s78 = sphi 0, %s64
      %s82 = sphi 0, %s82
      %s84 = sphi 0, %s82
      %s85 = sphi 0, %s84
      %s99 = sphi 0, %s85
      %s103 = sphi 0, %s103
      %s105 = sphi 0, %s103
      %s106 = sphi 0, %s105
      %s120 = sphi 0, %s106
      %s124 = sphi 0, %s124
      %s126 = sphi 0, %s124
      %s127 = sphi 0, %s126
      %s141 = sphi 0, %s127
      %s145 = sphi 0, %s145
      %s147 = sphi 0, %s145
      %s148 = sphi 0, %s147
      %s162 = sphi 0, %s148
      %s166 = sphi 0, %s166
      %s168 = sphi 0, %s166
      %s169 = sphi 0, %s168
      %s183 = sphi 0, %s169
      %s187 = sphi 0, %s187
      %s189 = sphi 0, %s187
      %s190 = sphi 0, %s189
      %s204 = sphi 0, %s190
      %s208 = sphi 0, %s208
      %s210 = sphi 0, %s208
      %s211 = sphi 0, %s210
      %s225 = sphi 0, %s211
      %s229 = sphi 0, %s229
      %s231 = sphi 0, %s229
      %s232 = sphi 0, %s231
      %s246 = sphi 0, %s232
      %s250 = sphi 0, %s250
      %s252 = sphi 0, %s250
      %s253 = sphi 0, %s252
      %s267 = sphi 0, %s253
      %s271 = sphi 0, %s271
      %s273 = sphi 0, %s271
      %s274 = sphi 0, %s273
      %s288 = sphi 0, %s274
      %s292 = sphi 0, %s292
      %s294 = sphi 0, %s292
      %s295 = sphi 0, %s294
      %s309 = sphi 0, %s295
      %s315 = sphi 0, %s317
      %s318 = sphi 0, %s315
      %s319 = sphi 0, %s318
      %s335 = sphi 0, %s319
    $region4: #{tpu_custom_call.1} parent=1 // loop_header_branch
      %30 = sbr.rel (%p28) target = $region8
    $region5: #{tpu_custom_call.1} parent=1 // loop_body
      %s32 = ssub.s32 %s27, 1
      %s33 = ssub.s32 %s27, 2
      %s34 = sadd.s32 %s27, 1
      %s35 = ssub.s32 %s27, %s34
      %p36 = scmp.eq.s32.totalorder %s35, 0
      %s38 = sadd.s32 %s37, 1
      %s39 = scalar_select %p36, %s37, %s38
      %p42 = pneg %p36
      %p43 = scmp.eq.s32.totalorder %s27, 1
      %p44 = por %p42, %p43
      %p45 = scmp.ne.s32.totalorder %s37, %s40
      %p46 = scmp.eq.s32.totalorder %s27, 0
      %p47 = por %p45, %p46
      %p48 = scmp.ne.s32.totalorder %s37, %s40
      %p49 = scmp.eq.s32.totalorder %s32, 1
      %p50 = por %p48, %p49
      %p51 = scmp.ne.s32.totalorder %s40, %s41
      %p52 = scmp.eq.s32.totalorder %s32, 0
      %p53 = por %p51, %p52
      %p54 = scmp.ne.s32.totalorder %s40, %s41
      %p55 = scmp.eq.s32.totalorder %s33, 1
      %p56 = por %p54, %p55
      %p58 = scmp.ne.s32.totalorder %s41, %s57
      %p59 = scmp.eq.s32.totalorder %s33, 0
      %p60 = por %p58, %p59
      %s62 = sadd.s32 %s61, 1
      %p65 = scmp.eq.s32.totalorder %s27, 1
      %p66 = scmp.ne.s32.totalorder %s61, %s63
      %p67 = scmp.eq.s32.totalorder %s27, 0
      %p68 = por %p66, %p67
      %p69 = scmp.ne.s32.totalorder %s61, %s63
      %p70 = scmp.eq.s32.totalorder %s32, 1
      %p71 = por %p69, %p70
      %p72 = scmp.ne.s32.totalorder %s63, %s64
      %p73 = scmp.eq.s32.totalorder %s32, 0
      %p74 = por %p72, %p73
      %p75 = scmp.ne.s32.totalorder %s63, %s64
      %p76 = scmp.eq.s32.totalorder %s33, 1
      %p77 = por %p75, %p76
      %p79 = scmp.ne.s32.totalorder %s64, %s78
      %p80 = scmp.eq.s32.totalorder %s33, 0
      %p81 = por %p79, %p80
      %s83 = sadd.s32 %s82, 1
      %p86 = scmp.eq.s32.totalorder %s27, 1
      %p87 = scmp.ne.s32.totalorder %s82, %s84
      %p88 = scmp.eq.s32.totalorder %s27, 0
      %p89 = por %p87, %p88
      %p90 = scmp.ne.s32.totalorder %s82, %s84
      %p91 = scmp.eq.s32.totalorder %s32, 1
      %p92 = por %p90, %p91
      %p93 = scmp.ne.s32.totalorder %s84, %s85
      %p94 = scmp.eq.s32.totalorder %s32, 0
      %p95 = por %p93, %p94
      %p96 = scmp.ne.s32.totalorder %s84, %s85
      %p97 = scmp.eq.s32.totalorder %s33, 1
      %p98 = por %p96, %p97
      %p100 = scmp.ne.s32.totalorder %s85, %s99
      %p101 = scmp.eq.s32.totalorder %s33, 0
      %p102 = por %p100, %p101
      %s104 = sadd.s32 %s103, 1
      %p107 = scmp.eq.s32.totalorder %s27, 1
      %p108 = scmp.ne.s32.totalorder %s103, %s105
      %p109 = scmp.eq.s32.totalorder %s27, 0
      %p110 = por %p108, %p109
      %p111 = scmp.ne.s32.totalorder %s103, %s105
      %p112 = scmp.eq.s32.totalorder %s32, 1
      %p113 = por %p111, %p112
      %p114 = scmp.ne.s32.totalorder %s105, %s106
      %p115 = scmp.eq.s32.totalorder %s32, 0
      %p116 = por %p114, %p115
      %p117 = scmp.ne.s32.totalorder %s105, %s106
      %p118 = scmp.eq.s32.totalorder %s33, 1
      %p119 = por %p117, %p118
      %p121 = scmp.ne.s32.totalorder %s106, %s120
      %p122 = scmp.eq.s32.totalorder %s33, 0
      %p123 = por %p121, %p122
      %s125 = sadd.s32 %s124, 1
      %p128 = scmp.eq.s32.totalorder %s27, 1
      %p129 = scmp.ne.s32.totalorder %s124, %s126
      %p130 = scmp.eq.s32.totalorder %s27, 0
      %p131 = por %p129, %p130
      %p132 = scmp.ne.s32.totalorder %s124, %s126
      %p133 = scmp.eq.s32.totalorder %s32, 1
      %p134 = por %p132, %p133
      %p135 = scmp.ne.s32.totalorder %s126, %s127
      %p136 = scmp.eq.s32.totalorder %s32, 0
      %p137 = por %p135, %p136
      %p138 = scmp.ne.s32.totalorder %s126, %s127
      %p139 = scmp.eq.s32.totalorder %s33, 1
      %p140 = por %p138, %p139
      %p142 = scmp.ne.s32.totalorder %s127, %s141
      %p143 = scmp.eq.s32.totalorder %s33, 0
      %p144 = por %p142, %p143
      %s146 = sadd.s32 %s145, 1
      %p149 = scmp.eq.s32.totalorder %s27, 1
      %p150 = scmp.ne.s32.totalorder %s145, %s147
      %p151 = scmp.eq.s32.totalorder %s27, 0
      %p152 = por %p150, %p151
      %p153 = scmp.ne.s32.totalorder %s145, %s147
      %p154 = scmp.eq.s32.totalorder %s32, 1
      %p155 = por %p153, %p154
      %p156 = scmp.ne.s32.totalorder %s147, %s148
      %p157 = scmp.eq.s32.totalorder %s32, 0
      %p158 = por %p156, %p157
      %p159 = scmp.ne.s32.totalorder %s147, %s148
      %p160 = scmp.eq.s32.totalorder %s33, 1
      %p161 = por %p159, %p160
      %p163 = scmp.ne.s32.totalorder %s148, %s162
      %p164 = scmp.eq.s32.totalorder %s33, 0
      %p165 = por %p163, %p164
      %s167 = sadd.s32 %s166, 1
      %p170 = scmp.eq.s32.totalorder %s27, 1
      %p171 = scmp.ne.s32.totalorder %s166, %s168
      %p172 = scmp.eq.s32.totalorder %s27, 0
      %p173 = por %p171, %p172
      %p174 = scmp.ne.s32.totalorder %s166, %s168
      %p175 = scmp.eq.s32.totalorder %s32, 1
      %p176 = por %p174, %p175
      %p177 = scmp.ne.s32.totalorder %s168, %s169
      %p178 = scmp.eq.s32.totalorder %s32, 0
      %p179 = por %p177, %p178
      %p180 = scmp.ne.s32.totalorder %s168, %s169
      %p181 = scmp.eq.s32.totalorder %s33, 1
      %p182 = por %p180, %p181
      %p184 = scmp.ne.s32.totalorder %s169, %s183
      %p185 = scmp.eq.s32.totalorder %s33, 0
      %p186 = por %p184, %p185
      %s188 = sadd.s32 %s187, 1
      %p191 = scmp.eq.s32.totalorder %s27, 1
      %p192 = scmp.ne.s32.totalorder %s187, %s189
      %p193 = scmp.eq.s32.totalorder %s27, 0
      %p194 = por %p192, %p193
      %p195 = scmp.ne.s32.totalorder %s187, %s189
      %p196 = scmp.eq.s32.totalorder %s32, 1
      %p197 = por %p195, %p196
      %p198 = scmp.ne.s32.totalorder %s189, %s190
      %p199 = scmp.eq.s32.totalorder %s32, 0
      %p200 = por %p198, %p199
      %p201 = scmp.ne.s32.totalorder %s189, %s190
      %p202 = scmp.eq.s32.totalorder %s33, 1
      %p203 = por %p201, %p202
      %p205 = scmp.ne.s32.totalorder %s190, %s204
      %p206 = scmp.eq.s32.totalorder %s33, 0
      %p207 = por %p205, %p206
      %s209 = sadd.s32 %s208, 1
      %p212 = scmp.eq.s32.totalorder %s27, 1
      %p213 = scmp.ne.s32.totalorder %s208, %s210
      %p214 = scmp.eq.s32.totalorder %s27, 0
      %p215 = por %p213, %p214
      %p216 = scmp.ne.s32.totalorder %s208, %s210
      %p217 = scmp.eq.s32.totalorder %s32, 1
      %p218 = por %p216, %p217
      %p219 = scmp.ne.s32.totalorder %s210, %s211
      %p220 = scmp.eq.s32.totalorder %s32, 0
      %p221 = por %p219, %p220
      %p222 = scmp.ne.s32.totalorder %s210, %s211
      %p223 = scmp.eq.s32.totalorder %s33, 1
      %p224 = por %p222, %p223
      %p226 = scmp.ne.s32.totalorder %s211, %s225
      %p227 = scmp.eq.s32.totalorder %s33, 0
      %p228 = por %p226, %p227
      %s230 = sadd.s32 %s229, 1
      %p233 = scmp.eq.s32.totalorder %s27, 1
      %p234 = scmp.ne.s32.totalorder %s229, %s231
      %p235 = scmp.eq.s32.totalorder %s27, 0
      %p236 = por %p234, %p235
      %p237 = scmp.ne.s32.totalorder %s229, %s231
      %p238 = scmp.eq.s32.totalorder %s32, 1
      %p239 = por %p237, %p238
      %p240 = scmp.ne.s32.totalorder %s231, %s232
      %p241 = scmp.eq.s32.totalorder %s32, 0
      %p242 = por %p240, %p241
      %p243 = scmp.ne.s32.totalorder %s231, %s232
      %p244 = scmp.eq.s32.totalorder %s33, 1
      %p245 = por %p243, %p244
      %p247 = scmp.ne.s32.totalorder %s232, %s246
      %p248 = scmp.eq.s32.totalorder %s33, 0
      %p249 = por %p247, %p248
      %s251 = sadd.s32 %s250, 1
      %p254 = scmp.eq.s32.totalorder %s27, 1
      %p255 = scmp.ne.s32.totalorder %s250, %s252
      %p256 = scmp.eq.s32.totalorder %s27, 0
      %p257 = por %p255, %p256
      %p258 = scmp.ne.s32.totalorder %s250, %s252
      %p259 = scmp.eq.s32.totalorder %s32, 1
      %p260 = por %p258, %p259
      %p261 = scmp.ne.s32.totalorder %s252, %s253
      %p262 = scmp.eq.s32.totalorder %s32, 0
      %p263 = por %p261, %p262
      %p264 = scmp.ne.s32.totalorder %s252, %s253
      %p265 = scmp.eq.s32.totalorder %s33, 1
      %p266 = por %p264, %p265
      %p268 = scmp.ne.s32.totalorder %s253, %s267
      %p269 = scmp.eq.s32.totalorder %s33, 0
      %p270 = por %p268, %p269
      %s272 = sadd.s32 %s271, 1
      %p275 = scmp.eq.s32.totalorder %s27, 1
      %p276 = scmp.ne.s32.totalorder %s271, %s273
      %p277 = scmp.eq.s32.totalorder %s27, 0
      %p278 = por %p276, %p277
      %p279 = scmp.ne.s32.totalorder %s271, %s273
      %p280 = scmp.eq.s32.totalorder %s32, 1
      %p281 = por %p279, %p280
      %p282 = scmp.ne.s32.totalorder %s273, %s274
      %p283 = scmp.eq.s32.totalorder %s32, 0
      %p284 = por %p282, %p283
      %p285 = scmp.ne.s32.totalorder %s273, %s274
      %p286 = scmp.eq.s32.totalorder %s33, 1
      %p287 = por %p285, %p286
      %p289 = scmp.ne.s32.totalorder %s274, %s288
      %p290 = scmp.eq.s32.totalorder %s33, 0
      %p291 = por %p289, %p290
      %s293 = sadd.s32 %s292, 1
      %p296 = scmp.eq.s32.totalorder %s27, 1
      %p297 = scmp.ne.s32.totalorder %s292, %s294
      %p298 = scmp.eq.s32.totalorder %s27, 0
      %p299 = por %p297, %p298
      %p300 = scmp.ne.s32.totalorder %s292, %s294
      %p301 = scmp.eq.s32.totalorder %s32, 1
      %p302 = por %p300, %p301
      %p303 = scmp.ne.s32.totalorder %s294, %s295
      %p304 = scmp.eq.s32.totalorder %s32, 0
      %p305 = por %p303, %p304
      %p306 = scmp.ne.s32.totalorder %s294, %s295
      %p307 = scmp.eq.s32.totalorder %s33, 1
      %p308 = por %p306, %p307
      %p310 = scmp.ne.s32.totalorder %s295, %s309
      %p311 = scmp.eq.s32.totalorder %s33, 0
      %p312 = por %p310, %p311
      %s313 = ssub.s32 %s27, %s34
      %p314 = scmp.eq.s32.totalorder %s313, 0
      %s316 = sadd.s32 %s315, 1
      %s317 = scalar_select %p314, %s315, %s316
      %p320 = pneg %p314
      %p321 = scmp.eq.s32.totalorder %s27, 1
      %p322 = por %p320, %p321
      %p323 = scmp.ne.s32.totalorder %s315, %s318
      %p324 = scmp.eq.s32.totalorder %s27, 0
      %p325 = por %p323, %p324
      %p326 = scmp.ne.s32.totalorder %s315, %s318
      %p327 = scmp.eq.s32.totalorder %s32, 1
      %p328 = por %p326, %p327
      %p329 = scmp.ne.s32.totalorder %s318, %s319
      %p330 = scmp.eq.s32.totalorder %s32, 0
      %p331 = por %p329, %p330
      %p332 = scmp.ne.s32.totalorder %s318, %s319
      %p333 = scmp.eq.s32.totalorder %s33, 1
      %p334 = por %p332, %p333
      %p336 = scmp.ne.s32.totalorder %s319, %s335
      %p337 = scmp.eq.s32.totalorder %s33, 0
      %p338 = por %p336, %p337
      %p339 = scmp.le.s32.totalorder 1, %s27
      %p340 = scmp.lt.s32.totalorder %s27, 3
      %p341 = pnand %p339, %p340
      %p342 = pneg %p341
      // Predicated region
      $region9: #{tpu_custom_call.1} parent=5 // pred_check
        _
      $region10: #{tpu_custom_call.1} parent=5 // pred_check_branch
        %344 = sbr.rel (%p341) target = $region12
      $region11: #{tpu_custom_call.1} parent=5 // pred_region
        %s345 = ssub.s32 %s27, 1
        // Predicated region
        $region13: #{tpu_custom_call.1} parent=11 // pred_check
          %p346 = pneg %p74
        $region14: #{tpu_custom_call.1} parent=11 // pred_check_branch
          %348 = sbr.rel (%p346) target = $region16
        $region15: #{tpu_custom_call.1} parent=11 // pred_region
          %s350 = ssub.s32 3072, 3072
          %351 = vsyncadd [#allocation7], %s350
          %s352 = sshll.u32 [#allocation6], 4
          %s353 = int_to_ptr.vmem [resolvable:$true] %s352
          %358 = dma.hbm_to_vmem [thread:$0]  %s1, 3072, %s353, [#allocation7], 192, 192, 12
        $region16: #{tpu_custom_call.1} parent=11 // pred_fallthru
          _
        // Predicated region
        $region17: #{tpu_custom_call.1} parent=11 // pred_check
          %p359 = pneg %p95
        $region18: #{tpu_custom_call.1} parent=11 // pred_check_branch
          %361 = sbr.rel (%p359) target = $region20
        $region19: #{tpu_custom_call.1} parent=11 // pred_region
          _
        $region20: #{tpu_custom_call.1} parent=11 // pred_fallthru
          _
        // Predicated region
        $region21: #{tpu_custom_call.1} parent=11 // pred_check
          %p362 = pneg %p116
        $region22: #{tpu_custom_call.1} parent=11 // pred_check_branch
          %364 = sbr.rel (%p362) target = $region24
        $region23: #{tpu_custom_call.1} parent=11 // pred_region
          %s366 = ssub.s32 1024, 1024
          %367 = vsyncadd [#allocation7], %s366
          %s368 = sshll.u32 [#allocation8], 4
          %s369 = int_to_ptr.vmem [resolvable:$true] %s368
          %374 = dma.hbm_to_vmem [thread:$0]  %s3, 1024, %s369, [#allocation7], 64, 64, 4
        $region24: #{tpu_custom_call.1} parent=11 // pred_fallthru
          _
        // Predicated region
        $region25: #{tpu_custom_call.1} parent=11 // pred_check
          %p375 = pneg %p137
        $region26: #{tpu_custom_call.1} parent=11 // pred_check_branch
          %377 = sbr.rel (%p375) target = $region28
        $region27: #{tpu_custom_call.1} parent=11 // pred_region
          _
        $region28: #{tpu_custom_call.1} parent=11 // pred_fallthru
          _
        // Predicated region
        $region29: #{tpu_custom_call.1} parent=11 // pred_check
          %p378 = pneg %p158
        $region30: #{tpu_custom_call.1} parent=11 // pred_check_branch
          %380 = sbr.rel (%p378) target = $region32
        $region31: #{tpu_custom_call.1} parent=11 // pred_region
          _
        $region32: #{tpu_custom_call.1} parent=11 // pred_fallthru
          _
        // Predicated region
        $region33: #{tpu_custom_call.1} parent=11 // pred_check
          %p381 = pneg %p179
        $region34: #{tpu_custom_call.1} parent=11 // pred_check_branch
          %383 = sbr.rel (%p381) target = $region36
        $region35: #{tpu_custom_call.1} parent=11 // pred_region
          _
        $region36: #{tpu_custom_call.1} parent=11 // pred_fallthru
          _
        // Predicated region
        $region37: #{tpu_custom_call.1} parent=11 // pred_check
          %p384 = pneg %p200
        $region38: #{tpu_custom_call.1} parent=11 // pred_check_branch
          %386 = sbr.rel (%p384) target = $region40
        $region39: #{tpu_custom_call.1} parent=11 // pred_region
          %s388 = ssub.s32 4096, 4096
          %389 = vsyncadd [#allocation10], %s388
          %s390 = sshll.u32 [#allocation9], 4
          %s391 = int_to_ptr.vmem [resolvable:$true] %s390
          %396 = dma.hbm_to_vmem [thread:$0]  %s7, 4096, %s391, [#allocation10], 256, 256, 16
        $region40: #{tpu_custom_call.1} parent=11 // pred_fallthru
          _
        // Predicated region
        $region41: #{tpu_custom_call.1} parent=11 // pred_check
          %p397 = pneg %p221
        $region42: #{tpu_custom_call.1} parent=11 // pred_check_branch
          %399 = sbr.rel (%p397) target = $region44
        $region43: #{tpu_custom_call.1} parent=11 // pred_region
          _
        $region44: #{tpu_custom_call.1} parent=11 // pred_fallthru
          _
        // Predicated region
        $region45: #{tpu_custom_call.1} parent=11 // pred_check
          %p400 = pneg %p242
        $region46: #{tpu_custom_call.1} parent=11 // pred_check_branch
          %402 = sbr.rel (%p400) target = $region48
        $region47: #{tpu_custom_call.1} parent=11 // pred_region
          %s404 = ssub.s32 4096, 4096
          %405 = vsyncadd [#allocation10], %s404
          %s406 = sshll.u32 [#allocation11], 4
          %s407 = int_to_ptr.vmem [resolvable:$true] %s406
          %412 = dma.hbm_to_vmem [thread:$0]  %s9, 4096, %s407, [#allocation10], 64, 64, 4
        $region48: #{tpu_custom_call.1} parent=11 // pred_fallthru
          _
        // Predicated region
        $region49: #{tpu_custom_call.1} parent=11 // pred_check
          %p413 = pneg %p263
        $region50: #{tpu_custom_call.1} parent=11 // pred_check_branch
          %415 = sbr.rel (%p413) target = $region52
        $region51: #{tpu_custom_call.1} parent=11 // pred_region
          _
        $region52: #{tpu_custom_call.1} parent=11 // pred_fallthru
          _
        // Predicated region
        $region53: #{tpu_custom_call.1} parent=11 // pred_check
          %p416 = pneg %p284
        $region54: #{tpu_custom_call.1} parent=11 // pred_check_branch
          %418 = sbr.rel (%p416) target = $region56
        $region55: #{tpu_custom_call.1} parent=11 // pred_region
          _
        $region56: #{tpu_custom_call.1} parent=11 // pred_fallthru
          _
        // Predicated region
        $region57: #{tpu_custom_call.1} parent=11 // pred_check
          %p419 = pneg %p305
        $region58: #{tpu_custom_call.1} parent=11 // pred_check_branch
          %421 = sbr.rel (%p419) target = $region60
        $region59: #{tpu_custom_call.1} parent=11 // pred_region
          _
        $region60: #{tpu_custom_call.1} parent=11 // pred_fallthru
          _
      $region12: #{tpu_custom_call.1} parent=5 // pred_fallthru
        _
      %p422 = scmp.lt.s32.totalorder %s27, 2
      // Predicated region
      $region61: #{tpu_custom_call.1} parent=5 // pred_check
        %p423 = pneg %p422
      $region62: #{tpu_custom_call.1} parent=5 // pred_check_branch
        %425 = sbr.rel (%p423) target = $region64
      $region63: #{tpu_custom_call.1} parent=5 // pred_region
        // Predicated region
        $region65: #{tpu_custom_call.1} parent=63 // pred_check
          %p426 = pneg %p47
        $region66: #{tpu_custom_call.1} parent=63 // pred_check_branch
          %428 = sbr.rel (%p426) target = $region68
        $region67: #{tpu_custom_call.1} parent=63 // pred_region
          %s429 = sand.u32 %s37, 1
          %s430 = scalar_lea.sflag [#allocation4], %s429
          %s431 = sand.u32 %s37, 1
          %s432 = smul.addr %s431, 256
          %s433 = scalar_lea.vmem [#allocation3], %s432
          %s434 = smul.u32 4, %s27
          %s436 = ssub.s32 4096, 4096
          %437 = vsyncadd %s430, %s436
          %s438 = smul.addr %s434, 8
          %s439 = smul.addr %s438, 128
          %s440 = scalar_lea.hbm %s0, %s439
          %s441 = sshll.u32 %s433, 4
          %s442 = int_to_ptr.vmem [resolvable:$true] %s441
          %447 = dma.hbm_to_vmem [thread:$0]  %s440, 4096, %s442, %s430, 128, 128, 8
        $region68: #{tpu_custom_call.1} parent=63 // pred_fallthru
          _
      $region64: #{tpu_custom_call.1} parent=5 // pred_fallthru
        _
      %p448 = scmp.le.s32.totalorder 1, %s27
      %p449 = scmp.lt.s32.totalorder %s27, 3
      %p450 = pnand %p448, %p449
      %p451 = pneg %p450
      // Predicated region
      $region69: #{tpu_custom_call.1} parent=5 // pred_check
        _
      $region70: #{tpu_custom_call.1} parent=5 // pred_check_branch
        %453 = sbr.rel (%p450) target = $region72
      $region71: #{tpu_custom_call.1} parent=5 // pred_region
        %s454 = ssub.s32 %s27, 1
        %s455 = sand.u32 %s40, 1
        %s456 = scalar_lea.sflag [#allocation4], %s455
        %s457 = sand.u32 %s40, 1
        %s458 = smul.addr %s457, 256
        %s459 = scalar_lea.vmem [#allocation3], %s458
        // Predicated region
        $region73: #{tpu_custom_call.1} parent=71 // pred_check
          %p460 = pneg %p53
        $region74: #{tpu_custom_call.1} parent=71 // pred_check_branch
          %462 = sbr.rel (%p460) target = $region76
        $region75: #{tpu_custom_call.1} parent=71 // pred_region
          %463 = dma.done %s456, 4096
        $region76: #{tpu_custom_call.1} parent=71 // pred_fallthru
          _
        // Predicated region
        $region77: #{tpu_custom_call.1} parent=71 // pred_check
          %p464 = pneg %p74
        $region78: #{tpu_custom_call.1} parent=71 // pred_check_branch
          %466 = sbr.rel (%p464) target = $region80
        $region79: #{tpu_custom_call.1} parent=71 // pred_region
          %467 = dma.done [#allocation7], 3072
        $region80: #{tpu_custom_call.1} parent=71 // pred_fallthru
          _
        // Predicated region
        $region81: #{tpu_custom_call.1} parent=71 // pred_check
          %p468 = pneg %p116
        $region82: #{tpu_custom_call.1} parent=71 // pred_check_branch
          %470 = sbr.rel (%p468) target = $region84
        $region83: #{tpu_custom_call.1} parent=71 // pred_region
          %471 = dma.done [#allocation7], 1024
        $region84: #{tpu_custom_call.1} parent=71 // pred_fallthru
          _
        // Predicated region
        $region85: #{tpu_custom_call.1} parent=71 // pred_check
          %p472 = pneg %p200
        $region86: #{tpu_custom_call.1} parent=71 // pred_check_branch
          %474 = sbr.rel (%p472) target = $region88
        $region87: #{tpu_custom_call.1} parent=71 // pred_region
          %475 = dma.done [#allocation10], 4096
        $region88: #{tpu_custom_call.1} parent=71 // pred_fallthru
          _
        // Predicated region
        $region89: #{tpu_custom_call.1} parent=71 // pred_check
          %p476 = pneg %p242
        $region90: #{tpu_custom_call.1} parent=71 // pred_check_branch
          %478 = sbr.rel (%p476) target = $region92
        $region91: #{tpu_custom_call.1} parent=71 // pred_region
          %479 = dma.done [#allocation10], 4096
        $region92: #{tpu_custom_call.1} parent=71 // pred_fallthru
          _
        %s480 = sand.u32 %s40, 1
        %s481 = scalar_lea.sflag [#allocation4], %s480
        %s482 = sand.u32 %s40, 1
        %s483 = smul.addr %s482, 256
        %s484 = scalar_lea.vmem [#allocation3], %s483
        %p485 = pneg %p53
        %p486 = pneg %p50
        %p487 = pneg %p74
        %p488 = pneg %p71
        %p489 = pneg %p95
        %p490 = pneg %p92
        %p491 = pneg %p116
        %p492 = pneg %p113
        %p493 = pneg %p137
        %p494 = pneg %p134
        %p495 = pneg %p158
        %p496 = pneg %p155
        %p497 = pneg %p179
        %p498 = pneg %p176
        %p499 = pneg %p200
        %p500 = pneg %p197
        %p501 = pneg %p221
        %p502 = pneg %p218
        %p503 = pneg %p242
        %p504 = pneg %p239
        %p505 = pneg %p263
        %p506 = pneg %p260
        %p507 = pneg %p284
        %p508 = pneg %p281
        %p509 = pneg %p305
        %p510 = pneg %p302
        %p511 = pneg %p331
        %p512 = pneg %p328
        %s513 = sand.u32 %s318, 1
        %s514 = scalar_lea.sflag [#allocation5], %s513
        %s515 = sand.u32 %s318, 1
        %s516 = smul.addr %s515, 256
        %s517 = scalar_lea.vmem [#allocation12], %s516
        %s518 = smul.u32 4, %s32
        %s519 = smul.u32 4, %s32
        %v521 = vld [vmem:[%s459] sm:$0xff]
        %v522 = vld [vmem:[%s459 + $0x8] sm:$0xff]
        %v523 = vld [vmem:[%s459 + $0x10] sm:$0xff]
        %v524 = vld [vmem:[%s459 + $0x18] sm:$0xff]
        %v525 = vld [vmem:[%s459 + $0x20] sm:$0xff]
        %v526 = vld [vmem:[%s459 + $0x28] sm:$0xff]
        %v527 = vld [vmem:[%s459 + $0x30] sm:$0xff]
        %v528 = vld [vmem:[%s459 + $0x38] sm:$0xff]
        %v529 = vld [vmem:[%s459 + $0x40] sm:$0xff]
        %v530 = vld [vmem:[%s459 + $0x48] sm:$0xff]
        %v531 = vld [vmem:[%s459 + $0x50] sm:$0xff]
        %v532 = vld [vmem:[%s459 + $0x58] sm:$0xff]
        %v533 = vld [vmem:[%s459 + $0x60] sm:$0xff]
        %v534 = vld [vmem:[%s459 + $0x68] sm:$0xff]
        %v535 = vld [vmem:[%s459 + $0x70] sm:$0xff]
        %v536 = vld [vmem:[%s459 + $0x78] sm:$0xff]
        %v537 = vld [vmem:[%s459 + $0x80] sm:$0xff]
        %v538 = vld [vmem:[%s459 + $0x88] sm:$0xff]
        %v539 = vld [vmem:[%s459 + $0x90] sm:$0xff]
        %v540 = vld [vmem:[%s459 + $0x98] sm:$0xff]
        %v541 = vld [vmem:[%s459 + $0xa0] sm:$0xff]
        %v542 = vld [vmem:[%s459 + $0xa8] sm:$0xff]
        %v543 = vld [vmem:[%s459 + $0xb0] sm:$0xff]
        %v544 = vld [vmem:[%s459 + $0xb8] sm:$0xff]
        %v545 = vld [vmem:[%s459 + $0xc0] sm:$0xff]
        %v546 = vld [vmem:[%s459 + $0xc8] sm:$0xff]
        %v547 = vld [vmem:[%s459 + $0xd0] sm:$0xff]
        %v548 = vld [vmem:[%s459 + $0xd8] sm:$0xff]
        %v549 = vld [vmem:[%s459 + $0xe0] sm:$0xff]
        %v550 = vld [vmem:[%s459 + $0xe8] sm:$0xff]
        %v551 = vld [vmem:[%s459 + $0xf0] sm:$0xff]
        %v552 = vld [vmem:[%s459 + $0xf8] sm:$0xff]
        %v553 = vpack.c.bf16 %v522, %v521
        %v554 = vpack.c.bf16 %v524, %v523
        %v555 = vpack.c.bf16 %v526, %v525
        %v556 = vpack.c.bf16 %v528, %v527
        %v557 = vpack.c.bf16 %v530, %v529
        %v558 = vpack.c.bf16 %v532, %v531
        %v559 = vpack.c.bf16 %v534, %v533
        %v560 = vpack.c.bf16 %v536, %v535
        %v561 = vpack.c.bf16 %v538, %v537
        %v562 = vpack.c.bf16 %v540, %v539
        %v563 = vpack.c.bf16 %v542, %v541
        %v564 = vpack.c.bf16 %v544, %v543
        %v565 = vpack.c.bf16 %v546, %v545
        %v566 = vpack.c.bf16 %v548, %v547
        %v567 = vpack.c.bf16 %v550, %v549
        %v568 = vpack.c.bf16 %v552, %v551
        %v569 = vld [vmem:[#allocation6] sm:$0xff]
        %v570 = vld [vmem:[#allocation6 + $0x8] sm:$0xf]
        %v571 = vld [vmem:[#allocation6 + $0xc] sm:$0xff]
        %v572 = vld [vmem:[#allocation6 + $0x14] sm:$0xf]
        %v573 = vld [vmem:[#allocation6 + $0x18] sm:$0xff]
        %v574 = vld [vmem:[#allocation6 + $0x20] sm:$0xf]
        %v575 = vld [vmem:[#allocation6 + $0x24] sm:$0xff]
        %v576 = vld [vmem:[#allocation6 + $0x2c] sm:$0xf]
        %v577 = vld [vmem:[#allocation6 + $0x30] sm:$0xff]
        %v578 = vld [vmem:[#allocation6 + $0x38] sm:$0xf]
        %v579 = vld [vmem:[#allocation6 + $0x3c] sm:$0xff]
        %v580 = vld [vmem:[#allocation6 + $0x44] sm:$0xf]
        %v581 = vld [vmem:[#allocation6 + $0x48] sm:$0xff]
        %v582 = vld [vmem:[#allocation6 + $0x50] sm:$0xf]
        %v583 = vld [vmem:[#allocation6 + $0x54] sm:$0xff]
        %v584 = vld [vmem:[#allocation6 + $0x5c] sm:$0xf]
        %v585 = vld [vmem:[#allocation6 + $0x60] sm:$0xff]
        %v586 = vld [vmem:[#allocation6 + $0x68] sm:$0xf]
        %v587 = vld [vmem:[#allocation6 + $0x6c] sm:$0xff]
        %v588 = vld [vmem:[#allocation6 + $0x74] sm:$0xf]
        %v589 = vld [vmem:[#allocation6 + $0x78] sm:$0xff]
        %v590 = vld [vmem:[#allocation6 + $0x80] sm:$0xf]
        %v591 = vld [vmem:[#allocation6 + $0x84] sm:$0xff]
        %v592 = vld [vmem:[#allocation6 + $0x8c] sm:$0xf]
        %v593 = vld [vmem:[#allocation6 + $0x90] sm:$0xff]
        %v594 = vld [vmem:[#allocation6 + $0x98] sm:$0xf]
        %v595 = vld [vmem:[#allocation6 + $0x9c] sm:$0xff]
        %v596 = vld [vmem:[#allocation6 + $0xa4] sm:$0xf]
        %v597 = vld [vmem:[#allocation6 + $0xa8] sm:$0xff]
        %v598 = vld [vmem:[#allocation6 + $0xb0] sm:$0xf]
        %v599 = vld [vmem:[#allocation6 + $0xb4] sm:$0xff]
        %v600 = vld [vmem:[#allocation6 + $0xbc] sm:$0xf]
        %v601 = vld [vmem:[%s2] sm:$0x7]
        %v603 = vlaneseq
        %v604 = vshrl.u32 %v603, 7
        %v605 = vsub.s32 0, %v604
        %v606 = vrot.slane %v601, %v605
        %v607 = vlaneseq
        %v608 = vshrl.u32 %v607, 7
        %v609 = vsub.s32 1, %v608
        %v610 = vrot.slane %v601, %v609
        %v611 = vlaneseq
        %v612 = vshrl.u32 %v611, 7
        %v613 = vsub.s32 2, %v612
        %v614 = vrot.slane %v601, %v613
        %v650 = vunpack.c.l.b16 %v569
        %v651 = vunpack.c.h.b16 %v569
        %v652 = vunpack.c.l.b16 %v570
        %v653 = vunpack.c.l.b16 %v571
        %v654 = vunpack.c.h.b16 %v571
        %v655 = vunpack.c.l.b16 %v572
        %v656 = vunpack.c.l.b16 %v573
        %v657 = vunpack.c.h.b16 %v573
        %v658 = vunpack.c.l.b16 %v574
        %v659 = vunpack.c.l.b16 %v575
        %v660 = vunpack.c.h.b16 %v575
        %v661 = vunpack.c.l.b16 %v576
        %v662 = vunpack.c.l.b16 %v577
        %v663 = vunpack.c.h.b16 %v577
        %v664 = vunpack.c.l.b16 %v578
        %v665 = vunpack.c.l.b16 %v579
        %v666 = vunpack.c.h.b16 %v579
        %v667 = vunpack.c.l.b16 %v580
        %v668 = vunpack.c.l.b16 %v581
        %v669 = vunpack.c.h.b16 %v581
        %v670 = vunpack.c.l.b16 %v582
        %v671 = vunpack.c.l.b16 %v583
        %v672 = vunpack.c.h.b16 %v583
        %v673 = vunpack.c.l.b16 %v584
        %v674 = vunpack.c.l.b16 %v585
        %v675 = vunpack.c.h.b16 %v585
        %v676 = vunpack.c.l.b16 %v586
        %v677 = vunpack.c.l.b16 %v587
        %v678 = vunpack.c.h.b16 %v587
        %v679 = vunpack.c.l.b16 %v588
        %v680 = vunpack.c.l.b16 %v589
        %v681 = vunpack.c.h.b16 %v589
        %v682 = vunpack.c.l.b16 %v590
        %v683 = vunpack.c.l.b16 %v591
        %v684 = vunpack.c.h.b16 %v591
        %v685 = vunpack.c.l.b16 %v592
        %v686 = vunpack.c.l.b16 %v593
        %v687 = vunpack.c.h.b16 %v593
        %v688 = vunpack.c.l.b16 %v594
        %v689 = vunpack.c.l.b16 %v595
        %v690 = vunpack.c.h.b16 %v595
        %v691 = vunpack.c.l.b16 %v596
        %v692 = vunpack.c.l.b16 %v597
        %v693 = vunpack.c.h.b16 %v597
        %v694 = vunpack.c.l.b16 %v598
        %v695 = vunpack.c.l.b16 %v599
        %v696 = vunpack.c.h.b16 %v599
        %v697 = vunpack.c.l.b16 %v600
        %v698 = vpack.c.b16 %v653, %v650
        %v699 = vpack.c.b16 %v654, %v651
        %v700 = vpack.c.b16 %v655, %v652
        %v701 = vpack.c.b16 %v659, %v656
        %v702 = vpack.c.b16 %v660, %v657
        %v703 = vpack.c.b16 %v661, %v658
        %v704 = vpack.c.b16 %v665, %v662
        %v705 = vpack.c.b16 %v666, %v663
        %v706 = vpack.c.b16 %v667, %v664
        %v707 = vpack.c.b16 %v671, %v668
        %v708 = vpack.c.b16 %v672, %v669
        %v709 = vpack.c.b16 %v673, %v670
        %v710 = vpack.c.b16 %v677, %v674
        %v711 = vpack.c.b16 %v678, %v675
        %v712 = vpack.c.b16 %v679, %v676
        %v713 = vpack.c.b16 %v683, %v680
        %v714 = vpack.c.b16 %v684, %v681
        %v715 = vpack.c.b16 %v685, %v682
        %v716 = vpack.c.b16 %v689, %v686
        %v717 = vpack.c.b16 %v690, %v687
        %v718 = vpack.c.b16 %v691, %v688
        %v719 = vpack.c.b16 %v695, %v692
        %v720 = vpack.c.b16 %v696, %v693
        %v721 = vpack.c.b16 %v697, %v694
        %746 = vmatprep.subr.bf16.mxu0 %v699
        %747 = vmatpush1.bf16.msra.mxu0 %v698
        %748 = vmatprep.subr.bf16.mxu0 %v702
        %749 = vmatpush1.bf16.msra.mxu0 %v701
        %750 = vmatprep.subr.bf16.mxu0 %v705
        %751 = vmatpush1.bf16.msra.mxu0 %v704
        %752 = vmatprep.subr.bf16.mxu0 %v708
        %753 = vmatpush1.bf16.msra.mxu0 %v707
        %754 = vmatprep.subr.bf16.mxu0 %v711
        %755 = vmatpush1.bf16.msra.mxu0 %v710
        %756 = vmatprep.subr.bf16.mxu0 %v714
        %757 = vmatpush1.bf16.msra.mxu0 %v713
        %758 = vmatprep.subr.bf16.mxu0 %v717
        %759 = vmatpush1.bf16.msra.mxu0 %v716
        %760 = vmatprep.subr.bf16.mxu0 %v720
        %761 = vmatpush1.bf16.msra.mxu0 %v719
        %762 = vmatprep.subr.bf16.mxu0 0
        %763 = vmatpush1.bf16.msra.mxu0 0
        %764 = vmatprep.subr.bf16.mxu0 0
        %765 = vmatpush1.bf16.msra.mxu0 0
        %766 = vmatprep.subr.bf16.mxu0 0
        %767 = vmatpush1.bf16.msra.mxu0 0
        %768 = vmatprep.subr.bf16.mxu0 0
        %769 = vmatpush1.bf16.msra.mxu0 0
        %770 = vmatprep.subr.bf16.mxu0 0
        %771 = vmatpush1.bf16.msra.mxu0 0
        %772 = vmatprep.subr.bf16.mxu0 0
        %773 = vmatpush1.bf16.msra.mxu0 0
        %774 = vmatprep.subr.bf16.mxu0 0
        %775 = vmatpush1.bf16.msra.mxu0 0
        %776 = vmatprep.subr.bf16.mxu0 0
        %777 = vmatpush1.bf16.msra.mxu0 0
        %778 = vmatprep.mubr.bf16.mxu0 0
        %779 = vmatmul.mubr.bf16.gmra.mrb[0].mxu0 %v553
        %v780 = vpop.f32.mrb[0].mxu0
        %v781 = vadd.f32 %v606, %v780
        %v782 = vpop.f32.mrb[0].mxu0
        %v783 = vadd.f32 %v610, %v782
        %v784 = vpop.f32.mrb[0].mxu0
        %v785 = vadd.f32 %v606, %v784
        %v786 = vpop.f32.mrb[0].mxu0
        %v787 = vadd.f32 %v610, %v786
        %788 = vmatprep.mubr.bf16.mxu0 0
        %789 = vmatmul.mubr.bf16.gmra.mrb[0].mxu0 %v554
        %v790 = vpop.f32.mrb[0].mxu0
        %v791 = vadd.f32 %v606, %v790
        %v792 = vpop.f32.mrb[0].mxu0
        %v793 = vadd.f32 %v610, %v792
        %v794 = vpop.f32.mrb[0].mxu0
        %v795 = vadd.f32 %v606, %v794
        %v796 = vpop.f32.mrb[0].mxu0
        %v797 = vadd.f32 %v610, %v796
        %798 = vmatprep.mubr.bf16.mxu0 0
        %799 = vmatmul.mubr.bf16.gmra.mrb[0].mxu0 %v555
        %v800 = vpop.f32.mrb[0].mxu0
        %v801 = vadd.f32 %v606, %v800
        %v802 = vpop.f32.mrb[0].mxu0
        %v803 = vadd.f32 %v610, %v802
        %v804 = vpop.f32.mrb[0].mxu0
        %v805 = vadd.f32 %v606, %v804
        %v806 = vpop.f32.mrb[0].mxu0
        %v807 = vadd.f32 %v610, %v806
        %808 = vmatprep.mubr.bf16.mxu0 0
        %809 = vmatmul.mubr.bf16.gmra.mrb[0].mxu0 %v556
        %v810 = vpop.f32.mrb[0].mxu0
        %v811 = vadd.f32 %v606, %v810
        %v812 = vpop.f32.mrb[0].mxu0
        %v813 = vadd.f32 %v610, %v812
        %v814 = vpop.f32.mrb[0].mxu0
        %v815 = vadd.f32 %v606, %v814
        %v816 = vpop.f32.mrb[0].mxu0
        %v817 = vadd.f32 %v610, %v816
        %818 = vmatprep.mubr.bf16.mxu0 0
        %819 = vmatmul.mubr.bf16.gmra.mrb[0].mxu0 %v557
        %v820 = vpop.f32.mrb[0].mxu0
        %v821 = vadd.f32 %v606, %v820
        %v822 = vpop.f32.mrb[0].mxu0
        %v823 = vadd.f32 %v610, %v822
        %v824 = vpop.f32.mrb[0].mxu0
        %v825 = vadd.f32 %v606, %v824
        %v826 = vpop.f32.mrb[0].mxu0
        %v827 = vadd.f32 %v610, %v826
        %828 = vmatprep.mubr.bf16.mxu0 0
        %829 = vmatmul.mubr.bf16.gmra.mrb[0].mxu0 %v558
        %v830 = vpop.f32.mrb[0].mxu0
        %v831 = vadd.f32 %v606, %v830
        %v832 = vpop.f32.mrb[0].mxu0
        %v833 = vadd.f32 %v610, %v832
        %v834 = vpop.f32.mrb[0].mxu0
        %v835 = vadd.f32 %v606, %v834
        %v836 = vpop.f32.mrb[0].mxu0
        %v837 = vadd.f32 %v610, %v836
        %838 = vmatprep.mubr.bf16.mxu0 0
        %839 = vmatmul.mubr.bf16.gmra.mrb[0].mxu0 %v559
        %v840 = vpop.f32.mrb[0].mxu0
        %v841 = vadd.f32 %v606, %v840
        %v842 = vpop.f32.mrb[0].mxu0
        %v843 = vadd.f32 %v610, %v842
        %v844 = vpop.f32.mrb[0].mxu0
        %v845 = vadd.f32 %v606, %v844
        %v846 = vpop.f32.mrb[0].mxu0
        %v847 = vadd.f32 %v610, %v846
        %848 = vmatprep.mubr.bf16.mxu0 0
        %849 = vmatmul.mubr.bf16.gmra.mrb[0].mxu0 %v560
        %v850 = vpop.f32.mrb[0].mxu0
        %v851 = vadd.f32 %v606, %v850
        %v852 = vpop.f32.mrb[0].mxu0
        %v853 = vadd.f32 %v610, %v852
        %v854 = vpop.f32.mrb[0].mxu0
        %v855 = vadd.f32 %v606, %v854
        %v856 = vpop.f32.mrb[0].mxu0
        %v857 = vadd.f32 %v610, %v856
        %858 = vmatprep.mubr.bf16.mxu0 0
        %859 = vmatmul.mubr.bf16.gmra.mrb[0].mxu0 %v561
        %v860 = vpop.f32.mrb[0].mxu0
        %v861 = vadd.f32 %v606, %v860
        %v862 = vpop.f32.mrb[0].mxu0
        %v863 = vadd.f32 %v610, %v862
        %v864 = vpop.f32.mrb[0].mxu0
        %v865 = vadd.f32 %v606, %v864
        %v866 = vpop.f32.mrb[0].mxu0
        %v867 = vadd.f32 %v610, %v866
        %868 = vmatprep.mubr.bf16.mxu0 0
        %869 = vmatmul.mubr.bf16.gmra.mrb[0].mxu0 %v562
        %v870 = vpop.f32.mrb[0].mxu0
        %v871 = vadd.f32 %v606, %v870
        %v872 = vpop.f32.mrb[0].mxu0
        %v873 = vadd.f32 %v610, %v872
        %v874 = vpop.f32.mrb[0].mxu0
        %v875 = vadd.f32 %v606, %v874
        %v876 = vpop.f32.mrb[0].mxu0
        %v877 = vadd.f32 %v610, %v876
        %878 = vmatprep.mubr.bf16.mxu0 0
        %879 = vmatmul.mubr.bf16.gmra.mrb[0].mxu0 %v563
        %v880 = vpop.f32.mrb[0].mxu0
        %v881 = vadd.f32 %v606, %v880
        %v882 = vpop.f32.mrb[0].mxu0
        %v883 = vadd.f32 %v610, %v882
        %v884 = vpop.f32.mrb[0].mxu0
        %v885 = vadd.f32 %v606, %v884
        %v886 = vpop.f32.mrb[0].mxu0
        %v887 = vadd.f32 %v610, %v886
        %888 = vmatprep.mubr.bf16.mxu0 0
        %889 = vmatmul.mubr.bf16.gmra.mrb[0].mxu0 %v564
        %v890 = vpop.f32.mrb[0].mxu0
        %v891 = vadd.f32 %v606, %v890
        %v892 = vpop.f32.mrb[0].mxu0
        %v893 = vadd.f32 %v610, %v892
        %v894 = vpop.f32.mrb[0].mxu0
        %v895 = vadd.f32 %v606, %v894
        %v896 = vpop.f32.mrb[0].mxu0
        %v897 = vadd.f32 %v610, %v896
        %898 = vmatprep.mubr.bf16.mxu0 0
        %899 = vmatmul.mubr.bf16.gmra.mrb[0].mxu0 %v565
        %v900 = vpop.f32.mrb[0].mxu0
        %v901 = vadd.f32 %v606, %v900
        %v902 = vpop.f32.mrb[0].mxu0
        %v903 = vadd.f32 %v610, %v902
        %v904 = vpop.f32.mrb[0].mxu0
        %v905 = vadd.f32 %v606, %v904
        %v906 = vpop.f32.mrb[0].mxu0
        %v907 = vadd.f32 %v610, %v906
        %908 = vmatprep.mubr.bf16.mxu0 0
        %909 = vmatmul.mubr.bf16.gmra.mrb[0].mxu0 %v566
        %v910 = vpop.f32.mrb[0].mxu0
        %v911 = vadd.f32 %v606, %v910
        %v912 = vpop.f32.mrb[0].mxu0
        %v913 = vadd.f32 %v610, %v912
        %v914 = vpop.f32.mrb[0].mxu0
        %v915 = vadd.f32 %v606, %v914
        %v916 = vpop.f32.mrb[0].mxu0
        %v917 = vadd.f32 %v610, %v916
        %918 = vmatprep.mubr.bf16.mxu0 0
        %919 = vmatmul.mubr.bf16.gmra.mrb[0].mxu0 %v567
        %v920 = vpop.f32.mrb[0].mxu0
        %v921 = vadd.f32 %v606, %v920
        %v922 = vpop.f32.mrb[0].mxu0
        %v923 = vadd.f32 %v610, %v922
        %v924 = vpop.f32.mrb[0].mxu0
        %v925 = vadd.f32 %v606, %v924
        %v926 = vpop.f32.mrb[0].mxu0
        %v927 = vadd.f32 %v610, %v926
        %928 = vmatprep.mubr.bf16.mxu0 0
        %929 = vmatmul.mubr.bf16.gmra.mrb[0].mxu0 %v568
        %v930 = vpop.f32.mrb[0].mxu0
        %v931 = vadd.f32 %v606, %v930
        %v932 = vpop.f32.mrb[0].mxu0
        %v933 = vadd.f32 %v610, %v932
        %v934 = vpop.f32.mrb[0].mxu0
        %v935 = vadd.f32 %v606, %v934
        %v936 = vpop.f32.mrb[0].mxu0
        %v937 = vadd.f32 %v610, %v936
        %938 = vdwg.mxu0
        %939 = vmatprep.subr.bf16.mxu0 0
        %940 = vmatpush1.bf16.msra.mxu0 %v700
        %941 = vmatprep.subr.bf16.mxu0 0
        %942 = vmatpush1.bf16.msra.mxu0 %v703
        %943 = vmatprep.subr.bf16.mxu0 0
        %944 = vmatpush1.bf16.msra.mxu0 %v706
        %945 = vmatprep.subr.bf16.mxu0 0
        %946 = vmatpush1.bf16.msra.mxu0 %v709
        %947 = vmatprep.subr.bf16.mxu0 0
        %948 = vmatpush1.bf16.msra.mxu0 %v712
        %949 = vmatprep.subr.bf16.mxu0 0
        %950 = vmatpush1.bf16.msra.mxu0 %v715
        %951 = vmatprep.subr.bf16.mxu0 0
        %952 = vmatpush1.bf16.msra.mxu0 %v718
        %953 = vmatprep.subr.bf16.mxu0 0
        %954 = vmatpush1.bf16.msra.mxu0 %v721
        %955 = vmatprep.subr.bf16.mxu0 0
        %956 = vmatpush1.bf16.msra.mxu0 0
        %957 = vmatprep.subr.bf16.mxu0 0
        %958 = vmatpush1.bf16.msra.mxu0 0
        %959 = vmatprep.subr.bf16.mxu0 0
        %960 = vmatpush1.bf16.msra.mxu0 0
        %961 = vmatprep.subr.bf16.mxu0 0
        %962 = vmatpush1.bf16.msra.mxu0 0
        %963 = vmatprep.subr.bf16.mxu0 0
        %964 = vmatpush1.bf16.msra.mxu0 0
        %965 = vmatprep.subr.bf16.mxu0 0
        %966 = vmatpush1.bf16.msra.mxu0 0
        %967 = vmatprep.subr.bf16.mxu0 0
        %968 = vmatpush1.bf16.msra.mxu0 0
        %969 = vmatprep.subr.bf16.mxu0 0
        %970 = vmatpush1.bf16.msra.mxu0 0
        %971 = vmatprep.mubr.bf16.mxu0 0
        %972 = vmatmul.mubr.bf16.gmra.mrb[0].mxu0 %v553
        %v973 = vpop.f32.mrb[0].mxu0
        %v974 = vadd.f32 %v614, %v973
        %v975 = vpop.f32.mrb[0].mxu0
        %v976 = vpop.f32.mrb[0].mxu0
        %v977 = vadd.f32 %v614, %v976
        %v978 = vpop.f32.mrb[0].mxu0
        %979 = vmatprep.mubr.bf16.mxu0 0
        %980 = vmatmul.mubr.bf16.gmra.mrb[0].mxu0 %v554
        %v981 = vpop.f32.mrb[0].mxu0
        %v982 = vadd.f32 %v614, %v981
        %v983 = vpop.f32.mrb[0].mxu0
        %v984 = vpop.f32.mrb[0].mxu0
        %v985 = vadd.f32 %v614, %v984
        %v986 = vpop.f32.mrb[0].mxu0
        %987 = vmatprep.mubr.bf16.mxu0 0
        %988 = vmatmul.mubr.bf16.gmra.mrb[0].mxu0 %v555
        %v989 = vpop.f32.mrb[0].mxu0
        %v990 = vadd.f32 %v614, %v989
        %v991 = vpop.f32.mrb[0].mxu0
        %v992 = vpop.f32.mrb[0].mxu0
        %v993 = vadd.f32 %v614, %v992
        %v994 = vpop.f32.mrb[0].mxu0
        %995 = vmatprep.mubr.bf16.mxu0 0
        %996 = vmatmul.mubr.bf16.gmra.mrb[0].mxu0 %v556
        %v997 = vpop.f32.mrb[0].mxu0
        %v998 = vadd.f32 %v614, %v997
        %v999 = vpop.f32.mrb[0].mxu0
        %v1000 = vpop.f32.mrb[0].mxu0
        %v1001 = vadd.f32 %v614, %v1000
        %v1002 = vpop.f32.mrb[0].mxu0
        %1003 = vmatprep.mubr.bf16.mxu0 0
        %1004 = vmatmul.mubr.bf16.gmra.mrb[0].mxu0 %v557
        %v1005 = vpop.f32.mrb[0].mxu0
        %v1006 = vadd.f32 %v614, %v1005
        %v1007 = vpop.f32.mrb[0].mxu0
        %v1008 = vpop.f32.mrb[0].mxu0
        %v1009 = vadd.f32 %v614, %v1008
        %v1010 = vpop.f32.mrb[0].mxu0
        %1011 = vmatprep.mubr.bf16.mxu0 0
        %1012 = vmatmul.mubr.bf16.gmra.mrb[0].mxu0 %v558
        %v1013 = vpop.f32.mrb[0].mxu0
        %v1014 = vadd.f32 %v614, %v1013
        %v1015 = vpop.f32.mrb[0].mxu0
        %v1016 = vpop.f32.mrb[0].mxu0
        %v1017 = vadd.f32 %v614, %v1016
        %v1018 = vpop.f32.mrb[0].mxu0
        %1019 = vmatprep.mubr.bf16.mxu0 0
        %1020 = vmatmul.mubr.bf16.gmra.mrb[0].mxu0 %v559
        %v1021 = vpop.f32.mrb[0].mxu0
        %v1022 = vadd.f32 %v614, %v1021
        %v1023 = vpop.f32.mrb[0].mxu0
        %v1024 = vpop.f32.mrb[0].mxu0
        %v1025 = vadd.f32 %v614, %v1024
        %v1026 = vpop.f32.mrb[0].mxu0
        %1027 = vmatprep.mubr.bf16.mxu0 0
        %1028 = vmatmul.mubr.bf16.gmra.mrb[0].mxu0 %v560
        %v1029 = vpop.f32.mrb[0].mxu0
        %v1030 = vadd.f32 %v614, %v1029
        %v1031 = vpop.f32.mrb[0].mxu0
        %v1032 = vpop.f32.mrb[0].mxu0
        %v1033 = vadd.f32 %v614, %v1032
        %v1034 = vpop.f32.mrb[0].mxu0
        %1035 = vmatprep.mubr.bf16.mxu0 0
        %1036 = vmatmul.mubr.bf16.gmra.mrb[0].mxu0 %v561
        %v1037 = vpop.f32.mrb[0].mxu0
        %v1038 = vadd.f32 %v614, %v1037
        %v1039 = vpop.f32.mrb[0].mxu0
        %v1040 = vpop.f32.mrb[0].mxu0
        %v1041 = vadd.f32 %v614, %v1040
        %v1042 = vpop.f32.mrb[0].mxu0
        %1043 = vmatprep.mubr.bf16.mxu0 0
        %1044 = vmatmul.mubr.bf16.gmra.mrb[0].mxu0 %v562
        %v1045 = vpop.f32.mrb[0].mxu0
        %v1046 = vadd.f32 %v614, %v1045
        %v1047 = vpop.f32.mrb[0].mxu0
        %v1048 = vpop.f32.mrb[0].mxu0
        %v1049 = vadd.f32 %v614, %v1048
        %v1050 = vpop.f32.mrb[0].mxu0
        %1051 = vmatprep.mubr.bf16.mxu0 0
        %1052 = vmatmul.mubr.bf16.gmra.mrb[0].mxu0 %v563
        %v1053 = vpop.f32.mrb[0].mxu0
        %v1054 = vadd.f32 %v614, %v1053
        %v1055 = vpop.f32.mrb[0].mxu0
        %v1056 = vpop.f32.mrb[0].mxu0
        %v1057 = vadd.f32 %v614, %v1056
        %v1058 = vpop.f32.mrb[0].mxu0
        %1059 = vmatprep.mubr.bf16.mxu0 0
        %1060 = vmatmul.mubr.bf16.gmra.mrb[0].mxu0 %v564
        %v1061 = vpop.f32.mrb[0].mxu0
        %v1062 = vadd.f32 %v614, %v1061
        %v1063 = vpop.f32.mrb[0].mxu0
        %v1064 = vpop.f32.mrb[0].mxu0
        %v1065 = vadd.f32 %v614, %v1064
        %v1066 = vpop.f32.mrb[0].mxu0
        %1067 = vmatprep.mubr.bf16.mxu0 0
        %1068 = vmatmul.mubr.bf16.gmra.mrb[0].mxu0 %v565
        %v1069 = vpop.f32.mrb[0].mxu0
        %v1070 = vadd.f32 %v614, %v1069
        %v1071 = vpop.f32.mrb[0].mxu0
        %v1072 = vpop.f32.mrb[0].mxu0
        %v1073 = vadd.f32 %v614, %v1072
        %v1074 = vpop.f32.mrb[0].mxu0
        %1075 = vmatprep.mubr.bf16.mxu0 0
        %1076 = vmatmul.mubr.bf16.gmra.mrb[0].mxu0 %v566
        %v1077 = vpop.f32.mrb[0].mxu0
        %v1078 = vadd.f32 %v614, %v1077
        %v1079 = vpop.f32.mrb[0].mxu0
        %v1080 = vpop.f32.mrb[0].mxu0
        %v1081 = vadd.f32 %v614, %v1080
        %v1082 = vpop.f32.mrb[0].mxu0
        %1083 = vmatprep.mubr.bf16.mxu0 0
        %1084 = vmatmul.mubr.bf16.gmra.mrb[0].mxu0 %v567
        %v1085 = vpop.f32.mrb[0].mxu0
        %v1086 = vadd.f32 %v614, %v1085
        %v1087 = vpop.f32.mrb[0].mxu0
        %v1088 = vpop.f32.mrb[0].mxu0
        %v1089 = vadd.f32 %v614, %v1088
        %v1090 = vpop.f32.mrb[0].mxu0
        %1091 = vmatprep.mubr.bf16.mxu0 0
        %1092 = vmatmul.mubr.bf16.gmra.mrb[0].mxu0 %v568
        %v1093 = vpop.f32.mrb[0].mxu0
        %v1094 = vadd.f32 %v614, %v1093
        %v1095 = vpop.f32.mrb[0].mxu0
        %v1096 = vpop.f32.mrb[0].mxu0
        %v1097 = vadd.f32 %v614, %v1096
        %v1098 = vpop.f32.mrb[0].mxu0
        %1099 = vdwg.mxu0
        %v1100 = vpack.c.bf16 %v785, %v781
        %v1101 = vpack.c.bf16 %v795, %v791
        %v1102 = vpack.c.bf16 %v805, %v801
        %v1103 = vpack.c.bf16 %v815, %v811
        %v1104 = vpack.c.bf16 %v825, %v821
        %v1105 = vpack.c.bf16 %v835, %v831
        %v1106 = vpack.c.bf16 %v845, %v841
        %v1107 = vpack.c.bf16 %v855, %v851
        %v1108 = vpack.c.bf16 %v865, %v861
        %v1109 = vpack.c.bf16 %v875, %v871
        %v1110 = vpack.c.bf16 %v885, %v881
        %v1111 = vpack.c.bf16 %v895, %v891
        %v1112 = vpack.c.bf16 %v905, %v901
        %v1113 = vpack.c.bf16 %v915, %v911
        %v1114 = vpack.c.bf16 %v925, %v921
        %v1115 = vpack.c.bf16 %v935, %v931
        %v1116 = vpack.c.bf16 %v787, %v783
        %v1117 = vpack.c.bf16 %v797, %v793
        %v1118 = vpack.c.bf16 %v807, %v803
        %v1119 = vpack.c.bf16 %v817, %v813
        %v1120 = vpack.c.bf16 %v827, %v823
        %v1121 = vpack.c.bf16 %v837, %v833
        %v1122 = vpack.c.bf16 %v847, %v843
        %v1123 = vpack.c.bf16 %v857, %v853
        %v1124 = vpack.c.bf16 %v867, %v863
        %v1125 = vpack.c.bf16 %v877, %v873
        %v1126 = vpack.c.bf16 %v887, %v883
        %v1127 = vpack.c.bf16 %v897, %v893
        %v1128 = vpack.c.bf16 %v907, %v903
        %v1129 = vpack.c.bf16 %v917, %v913
        %v1130 = vpack.c.bf16 %v927, %v923
        %v1131 = vpack.c.bf16 %v937, %v933
        %v1132 = vpack.c.bf16 %v977, %v974
        %v1133 = vpack.c.bf16 %v985, %v982
        %v1134 = vpack.c.bf16 %v993, %v990
        %v1135 = vpack.c.bf16 %v1001, %v998
        %v1136 = vpack.c.bf16 %v1009, %v1006
        %v1137 = vpack.c.bf16 %v1017, %v1014
        %v1138 = vpack.c.bf16 %v1025, %v1022
        %v1139 = vpack.c.bf16 %v1033, %v1030
        %v1140 = vpack.c.bf16 %v1041, %v1038
        %v1141 = vpack.c.bf16 %v1049, %v1046
        %v1142 = vpack.c.bf16 %v1057, %v1054
        %v1143 = vpack.c.bf16 %v1065, %v1062
        %v1144 = vpack.c.bf16 %v1073, %v1070
        %v1145 = vpack.c.bf16 %v1081, %v1078
        %v1146 = vpack.c.bf16 %v1089, %v1086
        %v1147 = vpack.c.bf16 %v1097, %v1094
        %vm1148 = vcmask 261120
        %v1150 = vsel %vm1148, %v1100, 0
        %v1153 = vsel %vm1148, %v1101, 0
        %v1156 = vsel %vm1148, %v1102, 0
        %v1159 = vsel %vm1148, %v1103, 0
        %v1162 = vsel %vm1148, %v1116, 0
        %v1165 = vsel %vm1148, %v1117, 0
        %v1168 = vsel %vm1148, %v1118, 0
        %v1171 = vsel %vm1148, %v1119, 0
        %1173 = vmatprep.subr.bf16.mxu0 0
        %1174 = vmatpush1.bf16.xpose.msra.mxu0 %v1162
        %1175 = vmatprep.subr.bf16.mxu0 0
        %1176 = vmatpush1.bf16.xpose.msra.mxu0 %v1165
        %1177 = vmatprep.subr.bf16.mxu0 0
        %1178 = vmatpush1.bf16.xpose.msra.mxu0 %v1168
        %1179 = vmatprep.subr.bf16.mxu0 0
        %1180 = vmatpush1.bf16.xpose.msra.mxu0 %v1171
        %1181 = vmatprep.subr.bf16.mxu0 0
        %1182 = vmatpush1.bf16.xpose.msra.mxu0 0
        %1183 = vmatprep.subr.bf16.mxu0 0
        %1184 = vmatpush1.bf16.xpose.msra.mxu0 0
        %1185 = vmatprep.subr.bf16.mxu0 0
        %1186 = vmatpush1.bf16.xpose.msra.mxu0 0
        %1187 = vmatprep.subr.bf16.mxu0 0
        %1188 = vmatpush1.bf16.xpose.msra.mxu0 0
        %1189 = vmatprep.subr.bf16.mxu0 0
        %1190 = vmatpush1.bf16.xpose.msra.mxu0 0
        %1191 = vmatprep.subr.bf16.mxu0 0
        %1192 = vmatpush1.bf16.xpose.msra.mxu0 0
        %1193 = vmatprep.subr.bf16.mxu0 0
        %1194 = vmatpush1.bf16.xpose.msra.mxu0 0
        %1195 = vmatprep.subr.bf16.mxu0 0
        %1196 = vmatpush1.bf16.xpose.msra.mxu0 0
        %1197 = vmatprep.subr.bf16.mxu0 0
        %1198 = vmatpush1.bf16.xpose.msra.mxu0 0
        %1199 = vmatprep.subr.bf16.mxu0 0
        %1200 = vmatpush1.bf16.xpose.msra.mxu0 0
        %1201 = vmatprep.subr.bf16.mxu0 0
        %1202 = vmatpush1.bf16.xpose.msra.mxu0 0
        %1203 = vmatprep.subr.bf16.mxu0 0
        %1204 = vmatpush1.bf16.xpose.msra.mxu0 0
        %1205 = vmatprep.mubr.bf16.mxu0 0
        %1206 = vmatmul.mubr.bf16.gmra.mrb[0].mxu0 %v1150
        %v1207 = vpop.f32.mrb[0].mxu0
        %v1208 = vadd.f32 0.0, %v1207
        %v1209 = vpop.f32.mrb[0].mxu0
        %v1210 = vpop.f32.mrb[0].mxu0
        %v1211 = vadd.f32 0.0, %v1210
        %v1212 = vpop.f32.mrb[0].mxu0
        %1213 = vmatprep.mubr.bf16.mxu0 0
        %1214 = vmatmul.mubr.bf16.gmra.mrb[0].mxu0 %v1153
        %v1215 = vpop.f32.mrb[0].mxu0
        %v1216 = vadd.f32 0.0, %v1215
        %v1217 = vpop.f32.mrb[0].mxu0
        %v1218 = vpop.f32.mrb[0].mxu0
        %v1219 = vadd.f32 0.0, %v1218
        %v1220 = vpop.f32.mrb[0].mxu0
        %1221 = vmatprep.mubr.bf16.mxu0 0
        %1222 = vmatmul.mubr.bf16.gmra.mrb[0].mxu0 %v1156
        %v1223 = vpop.f32.mrb[0].mxu0
        %v1224 = vadd.f32 0.0, %v1223
        %v1225 = vpop.f32.mrb[0].mxu0
        %v1226 = vpop.f32.mrb[0].mxu0
        %v1227 = vadd.f32 0.0, %v1226
        %v1228 = vpop.f32.mrb[0].mxu0
        %1229 = vmatprep.mubr.bf16.mxu0 0
        %1230 = vmatmul.mubr.bf16.gmra.mrb[0].mxu0 %v1159
        %v1231 = vpop.f32.mrb[0].mxu0
        %v1232 = vadd.f32 0.0, %v1231
        %v1233 = vpop.f32.mrb[0].mxu0
        %v1234 = vpop.f32.mrb[0].mxu0
        %v1235 = vadd.f32 0.0, %v1234
        %v1236 = vpop.f32.mrb[0].mxu0
        %1237 = vdwg.mxu0
        %v1239 = vsel %vm1148, %v1104, 0
        %v1242 = vsel %vm1148, %v1105, 0
        %v1245 = vsel %vm1148, %v1106, 0
        %v1248 = vsel %vm1148, %v1107, 0
        %v1251 = vsel %vm1148, %v1120, 0
        %v1254 = vsel %vm1148, %v1121, 0
        %v1257 = vsel %vm1148, %v1122, 0
        %v1260 = vsel %vm1148, %v1123, 0
        %1262 = vmatprep.subr.bf16.mxu0 0
        %1263 = vmatpush1.bf16.xpose.msra.mxu0 %v1251
        %1264 = vmatprep.subr.bf16.mxu0 0
        %1265 = vmatpush1.bf16.xpose.msra.mxu0 %v1254
        %1266 = vmatprep.subr.bf16.mxu0 0
        %1267 = vmatpush1.bf16.xpose.msra.mxu0 %v1257
        %1268 = vmatprep.subr.bf16.mxu0 0
        %1269 = vmatpush1.bf16.xpose.msra.mxu0 %v1260
        %1270 = vmatprep.subr.bf16.mxu0 0
        %1271 = vmatpush1.bf16.xpose.msra.mxu0 0
        %1272 = vmatprep.subr.bf16.mxu0 0
        %1273 = vmatpush1.bf16.xpose.msra.mxu0 0
        %1274 = vmatprep.subr.bf16.mxu0 0
        %1275 = vmatpush1.bf16.xpose.msra.mxu0 0
        %1276 = vmatprep.subr.bf16.mxu0 0
        %1277 = vmatpush1.bf16.xpose.msra.mxu0 0
        %1278 = vmatprep.subr.bf16.mxu0 0
        %1279 = vmatpush1.bf16.xpose.msra.mxu0 0
        %1280 = vmatprep.subr.bf16.mxu0 0
        %1281 = vmatpush1.bf16.xpose.msra.mxu0 0
        %1282 = vmatprep.subr.bf16.mxu0 0
        %1283 = vmatpush1.bf16.xpose.msra.mxu0 0
        %1284 = vmatprep.subr.bf16.mxu0 0
        %1285 = vmatpush1.bf16.xpose.msra.mxu0 0
        %1286 = vmatprep.subr.bf16.mxu0 0
        %1287 = vmatpush1.bf16.xpose.msra.mxu0 0
        %1288 = vmatprep.subr.bf16.mxu0 0
        %1289 = vmatpush1.bf16.xpose.msra.mxu0 0
        %1290 = vmatprep.subr.bf16.mxu0 0
        %1291 = vmatpush1.bf16.xpose.msra.mxu0 0
        %1292 = vmatprep.subr.bf16.mxu0 0
        %1293 = vmatpush1.bf16.xpose.msra.mxu0 0
        %1294 = vmatprep.mubr.bf16.mxu0 0
        %1295 = vmatmul.mubr.bf16.gmra.mrb[0].mxu0 %v1239
        %v1296 = vpop.f32.mrb[0].mxu0
        %v1297 = vadd.f32 0.0, %v1296
        %v1298 = vpop.f32.mrb[0].mxu0
        %v1299 = vpop.f32.mrb[0].mxu0
        %v1300 = vadd.f32 0.0, %v1299
        %v1301 = vpop.f32.mrb[0].mxu0
        %1302 = vmatprep.mubr.bf16.mxu0 0
        %1303 = vmatmul.mubr.bf16.gmra.mrb[0].mxu0 %v1242
        %v1304 = vpop.f32.mrb[0].mxu0
        %v1305 = vadd.f32 0.0, %v1304
        %v1306 = vpop.f32.mrb[0].mxu0
        %v1307 = vpop.f32.mrb[0].mxu0
        %v1308 = vadd.f32 0.0, %v1307
        %v1309 = vpop.f32.mrb[0].mxu0
        %1310 = vmatprep.mubr.bf16.mxu0 0
        %1311 = vmatmul.mubr.bf16.gmra.mrb[0].mxu0 %v1245
        %v1312 = vpop.f32.mrb[0].mxu0
        %v1313 = vadd.f32 0.0, %v1312
        %v1314 = vpop.f32.mrb[0].mxu0
        %v1315 = vpop.f32.mrb[0].mxu0
        %v1316 = vadd.f32 0.0, %v1315
        %v1317 = vpop.f32.mrb[0].mxu0
        %1318 = vmatprep.mubr.bf16.mxu0 0
        %1319 = vmatmul.mubr.bf16.gmra.mrb[0].mxu0 %v1248
        %v1320 = vpop.f32.mrb[0].mxu0
        %v1321 = vadd.f32 0.0, %v1320
        %v1322 = vpop.f32.mrb[0].mxu0
        %v1323 = vpop.f32.mrb[0].mxu0
        %v1324 = vadd.f32 0.0, %v1323
        %v1325 = vpop.f32.mrb[0].mxu0
        %1326 = vdwg.mxu0
        %v1328 = vsel %vm1148, %v1108, 0
        %v1331 = vsel %vm1148, %v1109, 0
        %v1334 = vsel %vm1148, %v1110, 0
        %v1337 = vsel %vm1148, %v1111, 0
        %v1340 = vsel %vm1148, %v1124, 0
        %v1343 = vsel %vm1148, %v1125, 0
        %v1346 = vsel %vm1148, %v1126, 0
        %v1349 = vsel %vm1148, %v1127, 0
        %1351 = vmatprep.subr.bf16.mxu0 0
        %1352 = vmatpush1.bf16.xpose.msra.mxu0 %v1340
        %1353 = vmatprep.subr.bf16.mxu0 0
        %1354 = vmatpush1.bf16.xpose.msra.mxu0 %v1343
        %1355 = vmatprep.subr.bf16.mxu0 0
        %1356 = vmatpush1.bf16.xpose.msra.mxu0 %v1346
        %1357 = vmatprep.subr.bf16.mxu0 0
        %1358 = vmatpush1.bf16.xpose.msra.mxu0 %v1349
        %1359 = vmatprep.subr.bf16.mxu0 0
        %1360 = vmatpush1.bf16.xpose.msra.mxu0 0
        %1361 = vmatprep.subr.bf16.mxu0 0
        %1362 = vmatpush1.bf16.xpose.msra.mxu0 0
        %1363 = vmatprep.subr.bf16.mxu0 0
        %1364 = vmatpush1.bf16.xpose.msra.mxu0 0
        %1365 = vmatprep.subr.bf16.mxu0 0
        %1366 = vmatpush1.bf16.xpose.msra.mxu0 0
        %1367 = vmatprep.subr.bf16.mxu0 0
        %1368 = vmatpush1.bf16.xpose.msra.mxu0 0
        %1369 = vmatprep.subr.bf16.mxu0 0
        %1370 = vmatpush1.bf16.xpose.msra.mxu0 0
        %1371 = vmatprep.subr.bf16.mxu0 0
        %1372 = vmatpush1.bf16.xpose.msra.mxu0 0
        %1373 = vmatprep.subr.bf16.mxu0 0
        %1374 = vmatpush1.bf16.xpose.msra.mxu0 0
        %1375 = vmatprep.subr.bf16.mxu0 0
        %1376 = vmatpush1.bf16.xpose.msra.mxu0 0
        %1377 = vmatprep.subr.bf16.mxu0 0
        %1378 = vmatpush1.bf16.xpose.msra.mxu0 0
        %1379 = vmatprep.subr.bf16.mxu0 0
        %1380 = vmatpush1.bf16.xpose.msra.mxu0 0
        %1381 = vmatprep.subr.bf16.mxu0 0
        %1382 = vmatpush1.bf16.xpose.msra.mxu0 0
        %1383 = vmatprep.mubr.bf16.mxu0 0
        %1384 = vmatmul.mubr.bf16.gmra.mrb[0].mxu0 %v1328
        %v1385 = vpop.f32.mrb[0].mxu0
        %v1386 = vadd.f32 0.0, %v1385
        %v1387 = vpop.f32.mrb[0].mxu0
        %v1388 = vpop.f32.mrb[0].mxu0
        %v1389 = vadd.f32 0.0, %v1388
        %v1390 = vpop.f32.mrb[0].mxu0
        %1391 = vmatprep.mubr.bf16.mxu0 0
        %1392 = vmatmul.mubr.bf16.gmra.mrb[0].mxu0 %v1331
        %v1393 = vpop.f32.mrb[0].mxu0
        %v1394 = vadd.f32 0.0, %v1393
        %v1395 = vpop.f32.mrb[0].mxu0
        %v1396 = vpop.f32.mrb[0].mxu0
        %v1397 = vadd.f32 0.0, %v1396
        %v1398 = vpop.f32.mrb[0].mxu0
        %1399 = vmatprep.mubr.bf16.mxu0 0
        %1400 = vmatmul.mubr.bf16.gmra.mrb[0].mxu0 %v1334
        %v1401 = vpop.f32.mrb[0].mxu0
        %v1402 = vadd.f32 0.0, %v1401
        %v1403 = vpop.f32.mrb[0].mxu0
        %v1404 = vpop.f32.mrb[0].mxu0
        %v1405 = vadd.f32 0.0, %v1404
        %v1406 = vpop.f32.mrb[0].mxu0
        %1407 = vmatprep.mubr.bf16.mxu0 0
        %1408 = vmatmul.mubr.bf16.gmra.mrb[0].mxu0 %v1337
        %v1409 = vpop.f32.mrb[0].mxu0
        %v1410 = vadd.f32 0.0, %v1409
        %v1411 = vpop.f32.mrb[0].mxu0
        %v1412 = vpop.f32.mrb[0].mxu0
        %v1413 = vadd.f32 0.0, %v1412
        %v1414 = vpop.f32.mrb[0].mxu0
        %1415 = vdwg.mxu0
        %v1417 = vsel %vm1148, %v1112, 0
        %v1420 = vsel %vm1148, %v1113, 0
        %v1423 = vsel %vm1148, %v1114, 0
        %v1426 = vsel %vm1148, %v1115, 0
        %v1429 = vsel %vm1148, %v1128, 0
        %v1432 = vsel %vm1148, %v1129, 0
        %v1435 = vsel %vm1148, %v1130, 0
        %v1438 = vsel %vm1148, %v1131, 0
        %1440 = vmatprep.subr.bf16.mxu0 0
        %1441 = vmatpush1.bf16.xpose.msra.mxu0 %v1429
        %1442 = vmatprep.subr.bf16.mxu0 0
        %1443 = vmatpush1.bf16.xpose.msra.mxu0 %v1432
        %1444 = vmatprep.subr.bf16.mxu0 0
        %1445 = vmatpush1.bf16.xpose.msra.mxu0 %v1435
        %1446 = vmatprep.subr.bf16.mxu0 0
        %1447 = vmatpush1.bf16.xpose.msra.mxu0 %v1438
        %1448 = vmatprep.subr.bf16.mxu0 0
        %1449 = vmatpush1.bf16.xpose.msra.mxu0 0
        %1450 = vmatprep.subr.bf16.mxu0 0
        %1451 = vmatpush1.bf16.xpose.msra.mxu0 0
        %1452 = vmatprep.subr.bf16.mxu0 0
        %1453 = vmatpush1.bf16.xpose.msra.mxu0 0
        %1454 = vmatprep.subr.bf16.mxu0 0
        %1455 = vmatpush1.bf16.xpose.msra.mxu0 0
        %1456 = vmatprep.subr.bf16.mxu0 0
        %1457 = vmatpush1.bf16.xpose.msra.mxu0 0
        %1458 = vmatprep.subr.bf16.mxu0 0
        %1459 = vmatpush1.bf16.xpose.msra.mxu0 0
        %1460 = vmatprep.subr.bf16.mxu0 0
        %1461 = vmatpush1.bf16.xpose.msra.mxu0 0
        %1462 = vmatprep.subr.bf16.mxu0 0
        %1463 = vmatpush1.bf16.xpose.msra.mxu0 0
        %1464 = vmatprep.subr.bf16.mxu0 0
        %1465 = vmatpush1.bf16.xpose.msra.mxu0 0
        %1466 = vmatprep.subr.bf16.mxu0 0
        %1467 = vmatpush1.bf16.xpose.msra.mxu0 0
        %1468 = vmatprep.subr.bf16.mxu0 0
        %1469 = vmatpush1.bf16.xpose.msra.mxu0 0
        %1470 = vmatprep.subr.bf16.mxu0 0
        %1471 = vmatpush1.bf16.xpose.msra.mxu0 0
        %1472 = vmatprep.mubr.bf16.mxu0 0
        %1473 = vmatmul.mubr.bf16.gmra.mrb[0].mxu0 %v1417
        %v1474 = vpop.f32.mrb[0].mxu0
        %v1475 = vadd.f32 0.0, %v1474
        %v1476 = vpop.f32.mrb[0].mxu0
        %v1477 = vpop.f32.mrb[0].mxu0
        %v1478 = vadd.f32 0.0, %v1477
        %v1479 = vpop.f32.mrb[0].mxu0
        %1480 = vmatprep.mubr.bf16.mxu0 0
        %1481 = vmatmul.mubr.bf16.gmra.mrb[0].mxu0 %v1420
        %v1482 = vpop.f32.mrb[0].mxu0
        %v1483 = vadd.f32 0.0, %v1482
        %v1484 = vpop.f32.mrb[0].mxu0
        %v1485 = vpop.f32.mrb[0].mxu0
        %v1486 = vadd.f32 0.0, %v1485
        %v1487 = vpop.f32.mrb[0].mxu0
        %1488 = vmatprep.mubr.bf16.mxu0 0
        %1489 = vmatmul.mubr.bf16.gmra.mrb[0].mxu0 %v1423
        %v1490 = vpop.f32.mrb[0].mxu0
        %v1491 = vadd.f32 0.0, %v1490
        %v1492 = vpop.f32.mrb[0].mxu0
        %v1493 = vpop.f32.mrb[0].mxu0
        %v1494 = vadd.f32 0.0, %v1493
        %v1495 = vpop.f32.mrb[0].mxu0
        %1496 = vmatprep.mubr.bf16.mxu0 0
        %1497 = vmatmul.mubr.bf16.gmra.mrb[0].mxu0 %v1426
        %v1498 = vpop.f32.mrb[0].mxu0
        %v1499 = vadd.f32 0.0, %v1498
        %v1500 = vpop.f32.mrb[0].mxu0
        %v1501 = vpop.f32.mrb[0].mxu0
        %v1502 = vadd.f32 0.0, %v1501
        %v1503 = vpop.f32.mrb[0].mxu0
        %1504 = vdwg.mxu0
        %vm1505 = vcmask 523264
        %v1506 = vsel %vm1505, %v1208, -inf
        %1507 = vmax.xlane.f32.xlu0 %v1506
        %v1508 = vpop.xlane.xlu0 %1507
        %v1509 = vsel %vm1505, %v1211, -inf
        %1510 = vmax.xlane.f32.xlu0 %v1509
        %v1511 = vpop.xlane.xlu0 %1510
        %v1512 = vsel %vm1505, %v1216, -inf
        %1513 = vmax.xlane.f32.xlu0 %v1512
        %v1514 = vpop.xlane.xlu0 %1513
        %v1515 = vsel %vm1505, %v1219, -inf
        %1516 = vmax.xlane.f32.xlu0 %v1515
        %v1517 = vpop.xlane.xlu0 %1516
        %v1518 = vsel %vm1505, %v1224, -inf
        %1519 = vmax.xlane.f32.xlu0 %v1518
        %v1520 = vpop.xlane.xlu0 %1519
        %v1521 = vsel %vm1505, %v1227, -inf
        %1522 = vmax.xlane.f32.xlu0 %v1521
        %v1523 = vpop.xlane.xlu0 %1522
        %v1524 = vsel %vm1505, %v1232, -inf
        %1525 = vmax.xlane.f32.xlu0 %v1524
        %v1526 = vpop.xlane.xlu0 %1525
        %v1527 = vsel %vm1505, %v1235, -inf
        %1528 = vmax.xlane.f32.xlu0 %v1527
        %v1529 = vpop.xlane.xlu0 %1528
        %v1530 = vsel %vm1505, %v1297, -inf
        %1531 = vmax.xlane.f32.xlu0 %v1530
        %v1532 = vpop.xlane.xlu0 %1531
        %v1533 = vsel %vm1505, %v1300, -inf
        %1534 = vmax.xlane.f32.xlu0 %v1533
        %v1535 = vpop.xlane.xlu0 %1534
        %v1536 = vsel %vm1505, %v1305, -inf
        %1537 = vmax.xlane.f32.xlu0 %v1536
        %v1538 = vpop.xlane.xlu0 %1537
        %v1539 = vsel %vm1505, %v1308, -inf
        %1540 = vmax.xlane.f32.xlu0 %v1539
        %v1541 = vpop.xlane.xlu0 %1540
        %v1542 = vsel %vm1505, %v1313, -inf
        %1543 = vmax.xlane.f32.xlu0 %v1542
        %v1544 = vpop.xlane.xlu0 %1543
        %v1545 = vsel %vm1505, %v1316, -inf
        %1546 = vmax.xlane.f32.xlu0 %v1545
        %v1547 = vpop.xlane.xlu0 %1546
        %v1548 = vsel %vm1505, %v1321, -inf
        %1549 = vmax.xlane.f32.xlu0 %v1548
        %v1550 = vpop.xlane.xlu0 %1549
        %v1551 = vsel %vm1505, %v1324, -inf
        %1552 = vmax.xlane.f32.xlu0 %v1551
        %v1553 = vpop.xlane.xlu0 %1552
        %v1554 = vsel %vm1505, %v1386, -inf
        %1555 = vmax.xlane.f32.xlu0 %v1554
        %v1556 = vpop.xlane.xlu0 %1555
        %v1557 = vsel %vm1505, %v1389, -inf
        %1558 = vmax.xlane.f32.xlu0 %v1557
        %v1559 = vpop.xlane.xlu0 %1558
        %v1560 = vsel %vm1505, %v1394, -inf
        %1561 = vmax.xlane.f32.xlu0 %v1560
        %v1562 = vpop.xlane.xlu0 %1561
        %v1563 = vsel %vm1505, %v1397, -inf
        %1564 = vmax.xlane.f32.xlu0 %v1563
        %v1565 = vpop.xlane.xlu0 %1564
        %v1566 = vsel %vm1505, %v1402, -inf
        %1567 = vmax.xlane.f32.xlu0 %v1566
        %v1568 = vpop.xlane.xlu0 %1567
        %v1569 = vsel %vm1505, %v1405, -inf
        %1570 = vmax.xlane.f32.xlu0 %v1569
        %v1571 = vpop.xlane.xlu0 %1570
        %v1572 = vsel %vm1505, %v1410, -inf
        %1573 = vmax.xlane.f32.xlu0 %v1572
        %v1574 = vpop.xlane.xlu0 %1573
        %v1575 = vsel %vm1505, %v1413, -inf
        %1576 = vmax.xlane.f32.xlu0 %v1575
        %v1577 = vpop.xlane.xlu0 %1576
        %v1578 = vsel %vm1505, %v1475, -inf
        %1579 = vmax.xlane.f32.xlu0 %v1578
        %v1580 = vpop.xlane.xlu0 %1579
        %v1581 = vsel %vm1505, %v1478, -inf
        %1582 = vmax.xlane.f32.xlu0 %v1581
        %v1583 = vpop.xlane.xlu0 %1582
        %v1584 = vsel %vm1505, %v1483, -inf
        %1585 = vmax.xlane.f32.xlu0 %v1584
        %v1586 = vpop.xlane.xlu0 %1585
        %v1587 = vsel %vm1505, %v1486, -inf
        %1588 = vmax.xlane.f32.xlu0 %v1587
        %v1589 = vpop.xlane.xlu0 %1588
        %v1590 = vsel %vm1505, %v1491, -inf
        %1591 = vmax.xlane.f32.xlu0 %v1590
        %v1592 = vpop.xlane.xlu0 %1591
        %v1593 = vsel %vm1505, %v1494, -inf
        %1594 = vmax.xlane.f32.xlu0 %v1593
        %v1595 = vpop.xlane.xlu0 %1594
        %v1596 = vsel %vm1505, %v1499, -inf
        %1597 = vmax.xlane.f32.xlu0 %v1596
        %v1598 = vpop.xlane.xlu0 %1597
        %v1599 = vsel %vm1505, %v1502, -inf
        %1600 = vmax.xlane.f32.xlu0 %v1599
        %v1601 = vpop.xlane.xlu0 %1600
        %v1602 = vsub.f32 %v1208, %v1508
        %v1603 = vsub.f32 %v1211, %v1511
        %v1604 = vsub.f32 %v1216, %v1514
        %v1605 = vsub.f32 %v1219, %v1517
        %v1606 = vsub.f32 %v1224, %v1520
        %v1607 = vsub.f32 %v1227, %v1523
        %v1608 = vsub.f32 %v1232, %v1526
        %v1609 = vsub.f32 %v1235, %v1529
        %v1610 = vsub.f32 %v1297, %v1532
        %v1611 = vsub.f32 %v1300, %v1535
        %v1612 = vsub.f32 %v1305, %v1538
        %v1613 = vsub.f32 %v1308, %v1541
        %v1614 = vsub.f32 %v1313, %v1544
        %v1615 = vsub.f32 %v1316, %v1547
        %v1616 = vsub.f32 %v1321, %v1550
        %v1617 = vsub.f32 %v1324, %v1553
        %v1618 = vsub.f32 %v1386, %v1556
        %v1619 = vsub.f32 %v1389, %v1559
        %v1620 = vsub.f32 %v1394, %v1562
        %v1621 = vsub.f32 %v1397, %v1565
        %v1622 = vsub.f32 %v1402, %v1568
        %v1623 = vsub.f32 %v1405, %v1571
        %v1624 = vsub.f32 %v1410, %v1574
        %v1625 = vsub.f32 %v1413, %v1577
        %v1626 = vsub.f32 %v1475, %v1580
        %v1627 = vsub.f32 %v1478, %v1583
        %v1628 = vsub.f32 %v1483, %v1586
        %v1629 = vsub.f32 %v1486, %v1589
        %v1630 = vsub.f32 %v1491, %v1592
        %v1631 = vsub.f32 %v1494, %v1595
        %v1632 = vsub.f32 %v1499, %v1598
        %v1633 = vsub.f32 %v1502, %v1601
        %v1634 = vmul.f32 %v1602, 1.442695
        %v1635 = vpow.pop %v1634
        %v1636 = vmul.f32 %v1603, 1.442695
        %v1637 = vpow.pop %v1636
        %v1638 = vmul.f32 %v1604, 1.442695
        %v1639 = vpow.pop %v1638
        %v1640 = vmul.f32 %v1605, 1.442695
        %v1641 = vpow.pop %v1640
        %v1642 = vmul.f32 %v1606, 1.442695
        %v1643 = vpow.pop %v1642
        %v1644 = vmul.f32 %v1607, 1.442695
        %v1645 = vpow.pop %v1644
        %v1646 = vmul.f32 %v1608, 1.442695
        %v1647 = vpow.pop %v1646
        %v1648 = vmul.f32 %v1609, 1.442695
        %v1649 = vpow.pop %v1648
        %v1650 = vmul.f32 %v1610, 1.442695
        %v1651 = vpow.pop %v1650
        %v1652 = vmul.f32 %v1611, 1.442695
        %v1653 = vpow.pop %v1652
        %v1654 = vmul.f32 %v1612, 1.442695
        %v1655 = vpow.pop %v1654
        %v1656 = vmul.f32 %v1613, 1.442695
        %v1657 = vpow.pop %v1656
        %v1658 = vmul.f32 %v1614, 1.442695
        %v1659 = vpow.pop %v1658
        %v1660 = vmul.f32 %v1615, 1.442695
        %v1661 = vpow.pop %v1660
        %v1662 = vmul.f32 %v1616, 1.442695
        %v1663 = vpow.pop %v1662
        %v1664 = vmul.f32 %v1617, 1.442695
        %v1665 = vpow.pop %v1664
        %v1666 = vmul.f32 %v1618, 1.442695
        %v1667 = vpow.pop %v1666
        %v1668 = vmul.f32 %v1619, 1.442695
        %v1669 = vpow.pop %v1668
        %v1670 = vmul.f32 %v1620, 1.442695
        %v1671 = vpow.pop %v1670
        %v1672 = vmul.f32 %v1621, 1.442695
        %v1673 = vpow.pop %v1672
        %v1674 = vmul.f32 %v1622, 1.442695
        %v1675 = vpow.pop %v1674
        %v1676 = vmul.f32 %v1623, 1.442695
        %v1677 = vpow.pop %v1676
        %v1678 = vmul.f32 %v1624, 1.442695
        %v1679 = vpow.pop %v1678
        %v1680 = vmul.f32 %v1625, 1.442695
        %v1681 = vpow.pop %v1680
        %v1682 = vmul.f32 %v1626, 1.442695
        %v1683 = vpow.pop %v1682
        %v1684 = vmul.f32 %v1627, 1.442695
        %v1685 = vpow.pop %v1684
        %v1686 = vmul.f32 %v1628, 1.442695
        %v1687 = vpow.pop %v1686
        %v1688 = vmul.f32 %v1629, 1.442695
        %v1689 = vpow.pop %v1688
        %v1690 = vmul.f32 %v1630, 1.442695
        %v1691 = vpow.pop %v1690
        %v1692 = vmul.f32 %v1631, 1.442695
        %v1693 = vpow.pop %v1692
        %v1694 = vmul.f32 %v1632, 1.442695
        %v1695 = vpow.pop %v1694
        %v1696 = vmul.f32 %v1633, 1.442695
        %v1697 = vpow.pop %v1696
        %v1698 = vsel %vm1505, %v1635, 0.0
        %1699 = vadd.xlane.f32.xlu0 %v1698
        %v1700 = vpop.xlane.xlu0 %1699
        %v1701 = vsel %vm1505, %v1637, 0.0
        %1702 = vadd.xlane.f32.xlu0 %v1701
        %v1703 = vpop.xlane.xlu0 %1702
        %v1704 = vsel %vm1505, %v1639, 0.0
        %1705 = vadd.xlane.f32.xlu0 %v1704
        %v1706 = vpop.xlane.xlu0 %1705
        %v1707 = vsel %vm1505, %v1641, 0.0
        %1708 = vadd.xlane.f32.xlu0 %v1707
        %v1709 = vpop.xlane.xlu0 %1708
        %v1710 = vsel %vm1505, %v1643, 0.0
        %1711 = vadd.xlane.f32.xlu0 %v1710
        %v1712 = vpop.xlane.xlu0 %1711
        %v1713 = vsel %vm1505, %v1645, 0.0
        %1714 = vadd.xlane.f32.xlu0 %v1713
        %v1715 = vpop.xlane.xlu0 %1714
        %v1716 = vsel %vm1505, %v1647, 0.0
        %1717 = vadd.xlane.f32.xlu0 %v1716
        %v1718 = vpop.xlane.xlu0 %1717
        %v1719 = vsel %vm1505, %v1649, 0.0
        %1720 = vadd.xlane.f32.xlu0 %v1719
        %v1721 = vpop.xlane.xlu0 %1720
        %v1722 = vsel %vm1505, %v1651, 0.0
        %1723 = vadd.xlane.f32.xlu0 %v1722
        %v1724 = vpop.xlane.xlu0 %1723
        %v1725 = vsel %vm1505, %v1653, 0.0
        %1726 = vadd.xlane.f32.xlu0 %v1725
        %v1727 = vpop.xlane.xlu0 %1726
        %v1728 = vsel %vm1505, %v1655, 0.0
        %1729 = vadd.xlane.f32.xlu0 %v1728
        %v1730 = vpop.xlane.xlu0 %1729
        %v1731 = vsel %vm1505, %v1657, 0.0
        %1732 = vadd.xlane.f32.xlu0 %v1731
        %v1733 = vpop.xlane.xlu0 %1732
        %v1734 = vsel %vm1505, %v1659, 0.0
        %1735 = vadd.xlane.f32.xlu0 %v1734
        %v1736 = vpop.xlane.xlu0 %1735
        %v1737 = vsel %vm1505, %v1661, 0.0
        %1738 = vadd.xlane.f32.xlu0 %v1737
        %v1739 = vpop.xlane.xlu0 %1738
        %v1740 = vsel %vm1505, %v1663, 0.0
        %1741 = vadd.xlane.f32.xlu0 %v1740
        %v1742 = vpop.xlane.xlu0 %1741
        %v1743 = vsel %vm1505, %v1665, 0.0
        %1744 = vadd.xlane.f32.xlu0 %v1743
        %v1745 = vpop.xlane.xlu0 %1744
        %v1746 = vsel %vm1505, %v1667, 0.0
        %1747 = vadd.xlane.f32.xlu0 %v1746
        %v1748 = vpop.xlane.xlu0 %1747
        %v1749 = vsel %vm1505, %v1669, 0.0
        %1750 = vadd.xlane.f32.xlu0 %v1749
        %v1751 = vpop.xlane.xlu0 %1750
        %v1752 = vsel %vm1505, %v1671, 0.0
        %1753 = vadd.xlane.f32.xlu0 %v1752
        %v1754 = vpop.xlane.xlu0 %1753
        %v1755 = vsel %vm1505, %v1673, 0.0
        %1756 = vadd.xlane.f32.xlu0 %v1755
        %v1757 = vpop.xlane.xlu0 %1756
        %v1758 = vsel %vm1505, %v1675, 0.0
        %1759 = vadd.xlane.f32.xlu0 %v1758
        %v1760 = vpop.xlane.xlu0 %1759
        %v1761 = vsel %vm1505, %v1677, 0.0
        %1762 = vadd.xlane.f32.xlu0 %v1761
        %v1763 = vpop.xlane.xlu0 %1762
        %v1764 = vsel %vm1505, %v1679, 0.0
        %1765 = vadd.xlane.f32.xlu0 %v1764
        %v1766 = vpop.xlane.xlu0 %1765
        %v1767 = vsel %vm1505, %v1681, 0.0
        %1768 = vadd.xlane.f32.xlu0 %v1767
        %v1769 = vpop.xlane.xlu0 %1768
        %v1770 = vsel %vm1505, %v1683, 0.0
        %1771 = vadd.xlane.f32.xlu0 %v1770
        %v1772 = vpop.xlane.xlu0 %1771
        %v1773 = vsel %vm1505, %v1685, 0.0
        %1774 = vadd.xlane.f32.xlu0 %v1773
        %v1775 = vpop.xlane.xlu0 %1774
        %v1776 = vsel %vm1505, %v1687, 0.0
        %1777 = vadd.xlane.f32.xlu0 %v1776
        %v1778 = vpop.xlane.xlu0 %1777
        %v1779 = vsel %vm1505, %v1689, 0.0
        %1780 = vadd.xlane.f32.xlu0 %v1779
        %v1781 = vpop.xlane.xlu0 %1780
        %v1782 = vsel %vm1505, %v1691, 0.0
        %1783 = vadd.xlane.f32.xlu0 %v1782
        %v1784 = vpop.xlane.xlu0 %1783
        %v1785 = vsel %vm1505, %v1693, 0.0
        %1786 = vadd.xlane.f32.xlu0 %v1785
        %v1787 = vpop.xlane.xlu0 %1786
        %v1788 = vsel %vm1505, %v1695, 0.0
        %1789 = vadd.xlane.f32.xlu0 %v1788
        %v1790 = vpop.xlane.xlu0 %1789
        %v1791 = vsel %vm1505, %v1697, 0.0
        %1792 = vadd.xlane.f32.xlu0 %v1791
        %v1793 = vpop.xlane.xlu0 %1792
        %v1794 = vrcp.pop %v1700
        %v1795 = vrcp.pop %v1703
        %v1796 = vrcp.pop %v1706
        %v1797 = vrcp.pop %v1709
        %v1798 = vrcp.pop %v1712
        %v1799 = vrcp.pop %v1715
        %v1800 = vrcp.pop %v1718
        %v1801 = vrcp.pop %v1721
        %v1802 = vrcp.pop %v1724
        %v1803 = vrcp.pop %v1727
        %v1804 = vrcp.pop %v1730
        %v1805 = vrcp.pop %v1733
        %v1806 = vrcp.pop %v1736
        %v1807 = vrcp.pop %v1739
        %v1808 = vrcp.pop %v1742
        %v1809 = vrcp.pop %v1745
        %v1810 = vrcp.pop %v1748
        %v1811 = vrcp.pop %v1751
        %v1812 = vrcp.pop %v1754
        %v1813 = vrcp.pop %v1757
        %v1814 = vrcp.pop %v1760
        %v1815 = vrcp.pop %v1763
        %v1816 = vrcp.pop %v1766
        %v1817 = vrcp.pop %v1769
        %v1818 = vrcp.pop %v1772
        %v1819 = vrcp.pop %v1775
        %v1820 = vrcp.pop %v1778
        %v1821 = vrcp.pop %v1781
        %v1822 = vrcp.pop %v1784
        %v1823 = vrcp.pop %v1787
        %v1824 = vrcp.pop %v1790
        %v1825 = vrcp.pop %v1793
        %v1826 = vpack.c.bf16 %v1637, %v1635
        %v1827 = vpack.c.bf16 %v1641, %v1639
        %v1828 = vpack.c.bf16 %v1645, %v1643
        %v1829 = vpack.c.bf16 %v1649, %v1647
        %v1830 = vpack.c.bf16 %v1653, %v1651
        %v1831 = vpack.c.bf16 %v1657, %v1655
        %v1832 = vpack.c.bf16 %v1661, %v1659
        %v1833 = vpack.c.bf16 %v1665, %v1663
        %v1834 = vpack.c.bf16 %v1669, %v1667
        %v1835 = vpack.c.bf16 %v1673, %v1671
        %v1836 = vpack.c.bf16 %v1677, %v1675
        %v1837 = vpack.c.bf16 %v1681, %v1679
        %v1838 = vpack.c.bf16 %v1685, %v1683
        %v1839 = vpack.c.bf16 %v1689, %v1687
        %v1840 = vpack.c.bf16 %v1693, %v1691
        %v1841 = vpack.c.bf16 %v1697, %v1695
        %v1843 = vsel %vm1505, %v1826, 0
        %v1846 = vsel %vm1505, %v1827, 0
        %v1849 = vsel %vm1505, %v1828, 0
        %v1852 = vsel %vm1505, %v1829, 0
        %1854 = vmatprep.subr.bf16.mxu0 0
        %1855 = vmatpush1.bf16.msra.mxu0 %v1132
        %1856 = vmatprep.subr.bf16.mxu0 0
        %1857 = vmatpush1.bf16.msra.mxu0 %v1133
        %1858 = vmatprep.subr.bf16.mxu0 0
        %1859 = vmatpush1.bf16.msra.mxu0 %v1134
        %1860 = vmatprep.subr.bf16.mxu0 0
        %1861 = vmatpush1.bf16.msra.mxu0 %v1135
        %1862 = vmatprep.subr.bf16.mxu0 0
        %1863 = vmatpush1.bf16.msra.mxu0 0
        %1864 = vmatprep.subr.bf16.mxu0 0
        %1865 = vmatpush1.bf16.msra.mxu0 0
        %1866 = vmatprep.subr.bf16.mxu0 0
        %1867 = vmatpush1.bf16.msra.mxu0 0
        %1868 = vmatprep.subr.bf16.mxu0 0
        %1869 = vmatpush1.bf16.msra.mxu0 0
        %1870 = vmatprep.subr.bf16.mxu0 0
        %1871 = vmatpush1.bf16.msra.mxu0 0
        %1872 = vmatprep.subr.bf16.mxu0 0
        %1873 = vmatpush1.bf16.msra.mxu0 0
        %1874 = vmatprep.subr.bf16.mxu0 0
        %1875 = vmatpush1.bf16.msra.mxu0 0
        %1876 = vmatprep.subr.bf16.mxu0 0
        %1877 = vmatpush1.bf16.msra.mxu0 0
        %1878 = vmatprep.subr.bf16.mxu0 0
        %1879 = vmatpush1.bf16.msra.mxu0 0
        %1880 = vmatprep.subr.bf16.mxu0 0
        %1881 = vmatpush1.bf16.msra.mxu0 0
        %1882 = vmatprep.subr.bf16.mxu0 0
        %1883 = vmatpush1.bf16.msra.mxu0 0
        %1884 = vmatprep.subr.bf16.mxu0 0
        %1885 = vmatpush1.bf16.msra.mxu0 0
        %1886 = vmatprep.mubr.bf16.mxu0 0
        %1887 = vmatmul.mubr.bf16.gmra.mrb[0].mxu0 %v1843
        %v1888 = vpop.f32.mrb[0].mxu0
        %v1889 = vadd.f32 0.0, %v1888
        %v1890 = vpop.f32.mrb[0].mxu0
        %v1891 = vpop.f32.mrb[0].mxu0
        %v1892 = vadd.f32 0.0, %v1891
        %v1893 = vpop.f32.mrb[0].mxu0
        %1894 = vmatprep.mubr.bf16.mxu0 0
        %1895 = vmatmul.mubr.bf16.gmra.mrb[0].mxu0 %v1846
        %v1896 = vpop.f32.mrb[0].mxu0
        %v1897 = vadd.f32 0.0, %v1896
        %v1898 = vpop.f32.mrb[0].mxu0
        %v1899 = vpop.f32.mrb[0].mxu0
        %v1900 = vadd.f32 0.0, %v1899
        %v1901 = vpop.f32.mrb[0].mxu0
        %1902 = vmatprep.mubr.bf16.mxu0 0
        %1903 = vmatmul.mubr.bf16.gmra.mrb[0].mxu0 %v1849
        %v1904 = vpop.f32.mrb[0].mxu0
        %v1905 = vadd.f32 0.0, %v1904
        %v1906 = vpop.f32.mrb[0].mxu0
        %v1907 = vpop.f32.mrb[0].mxu0
        %v1908 = vadd.f32 0.0, %v1907
        %v1909 = vpop.f32.mrb[0].mxu0
        %1910 = vmatprep.mubr.bf16.mxu0 0
        %1911 = vmatmul.mubr.bf16.gmra.mrb[0].mxu0 %v1852
        %v1912 = vpop.f32.mrb[0].mxu0
        %v1913 = vadd.f32 0.0, %v1912
        %v1914 = vpop.f32.mrb[0].mxu0
        %v1915 = vpop.f32.mrb[0].mxu0
        %v1916 = vadd.f32 0.0, %v1915
        %v1917 = vpop.f32.mrb[0].mxu0
        %1918 = vdwg.mxu0
        %v1920 = vsel %vm1505, %v1830, 0
        %v1923 = vsel %vm1505, %v1831, 0
        %v1926 = vsel %vm1505, %v1832, 0
        %v1929 = vsel %vm1505, %v1833, 0
        %1931 = vmatprep.subr.bf16.mxu0 0
        %1932 = vmatpush1.bf16.msra.mxu0 %v1136
        %1933 = vmatprep.subr.bf16.mxu0 0
        %1934 = vmatpush1.bf16.msra.mxu0 %v1137
        %1935 = vmatprep.subr.bf16.mxu0 0
        %1936 = vmatpush1.bf16.msra.mxu0 %v1138
        %1937 = vmatprep.subr.bf16.mxu0 0
        %1938 = vmatpush1.bf16.msra.mxu0 %v1139
        %1939 = vmatprep.subr.bf16.mxu0 0
        %1940 = vmatpush1.bf16.msra.mxu0 0
        %1941 = vmatprep.subr.bf16.mxu0 0
        %1942 = vmatpush1.bf16.msra.mxu0 0
        %1943 = vmatprep.subr.bf16.mxu0 0
        %1944 = vmatpush1.bf16.msra.mxu0 0
        %1945 = vmatprep.subr.bf16.mxu0 0
        %1946 = vmatpush1.bf16.msra.mxu0 0
        %1947 = vmatprep.subr.bf16.mxu0 0
        %1948 = vmatpush1.bf16.msra.mxu0 0
        %1949 = vmatprep.subr.bf16.mxu0 0
        %1950 = vmatpush1.bf16.msra.mxu0 0
        %1951 = vmatprep.subr.bf16.mxu0 0
        %1952 = vmatpush1.bf16.msra.mxu0 0
        %1953 = vmatprep.subr.bf16.mxu0 0
        %1954 = vmatpush1.bf16.msra.mxu0 0
        %1955 = vmatprep.subr.bf16.mxu0 0
        %1956 = vmatpush1.bf16.msra.mxu0 0
        %1957 = vmatprep.subr.bf16.mxu0 0
        %1958 = vmatpush1.bf16.msra.mxu0 0
        %1959 = vmatprep.subr.bf16.mxu0 0
        %1960 = vmatpush1.bf16.msra.mxu0 0
        %1961 = vmatprep.subr.bf16.mxu0 0
        %1962 = vmatpush1.bf16.msra.mxu0 0
        %1963 = vmatprep.mubr.bf16.mxu0 0
        %1964 = vmatmul.mubr.bf16.gmra.mrb[0].mxu0 %v1920
        %v1965 = vpop.f32.mrb[0].mxu0
        %v1966 = vadd.f32 0.0, %v1965
        %v1967 = vpop.f32.mrb[0].mxu0
        %v1968 = vpop.f32.mrb[0].mxu0
        %v1969 = vadd.f32 0.0, %v1968
        %v1970 = vpop.f32.mrb[0].mxu0
        %1971 = vmatprep.mubr.bf16.mxu0 0
        %1972 = vmatmul.mubr.bf16.gmra.mrb[0].mxu0 %v1923
        %v1973 = vpop.f32.mrb[0].mxu0
        %v1974 = vadd.f32 0.0, %v1973
        %v1975 = vpop.f32.mrb[0].mxu0
        %v1976 = vpop.f32.mrb[0].mxu0
        %v1977 = vadd.f32 0.0, %v1976
        %v1978 = vpop.f32.mrb[0].mxu0
        %1979 = vmatprep.mubr.bf16.mxu0 0
        %1980 = vmatmul.mubr.bf16.gmra.mrb[0].mxu0 %v1926
        %v1981 = vpop.f32.mrb[0].mxu0
        %v1982 = vadd.f32 0.0, %v1981
        %v1983 = vpop.f32.mrb[0].mxu0
        %v1984 = vpop.f32.mrb[0].mxu0
        %v1985 = vadd.f32 0.0, %v1984
        %v1986 = vpop.f32.mrb[0].mxu0
        %1987 = vmatprep.mubr.bf16.mxu0 0
        %1988 = vmatmul.mubr.bf16.gmra.mrb[0].mxu0 %v1929
        %v1989 = vpop.f32.mrb[0].mxu0
        %v1990 = vadd.f32 0.0, %v1989
        %v1991 = vpop.f32.mrb[0].mxu0
        %v1992 = vpop.f32.mrb[0].mxu0
        %v1993 = vadd.f32 0.0, %v1992
        %v1994 = vpop.f32.mrb[0].mxu0
        %1995 = vdwg.mxu0
        %v1997 = vsel %vm1505, %v1834, 0
        %v2000 = vsel %vm1505, %v1835, 0
        %v2003 = vsel %vm1505, %v1836, 0
        %v2006 = vsel %vm1505, %v1837, 0
        %2008 = vmatprep.subr.bf16.mxu0 0
        %2009 = vmatpush1.bf16.msra.mxu0 %v1140
        %2010 = vmatprep.subr.bf16.mxu0 0
        %2011 = vmatpush1.bf16.msra.mxu0 %v1141
        %2012 = vmatprep.subr.bf16.mxu0 0
        %2013 = vmatpush1.bf16.msra.mxu0 %v1142
        %2014 = vmatprep.subr.bf16.mxu0 0
        %2015 = vmatpush1.bf16.msra.mxu0 %v1143
        %2016 = vmatprep.subr.bf16.mxu0 0
        %2017 = vmatpush1.bf16.msra.mxu0 0
        %2018 = vmatprep.subr.bf16.mxu0 0
        %2019 = vmatpush1.bf16.msra.mxu0 0
        %2020 = vmatprep.subr.bf16.mxu0 0
        %2021 = vmatpush1.bf16.msra.mxu0 0
        %2022 = vmatprep.subr.bf16.mxu0 0
        %2023 = vmatpush1.bf16.msra.mxu0 0
        %2024 = vmatprep.subr.bf16.mxu0 0
        %2025 = vmatpush1.bf16.msra.mxu0 0
        %2026 = vmatprep.subr.bf16.mxu0 0
        %2027 = vmatpush1.bf16.msra.mxu0 0
        %2028 = vmatprep.subr.bf16.mxu0 0
        %2029 = vmatpush1.bf16.msra.mxu0 0
        %2030 = vmatprep.subr.bf16.mxu0 0
        %2031 = vmatpush1.bf16.msra.mxu0 0
        %2032 = vmatprep.subr.bf16.mxu0 0
        %2033 = vmatpush1.bf16.msra.mxu0 0
        %2034 = vmatprep.subr.bf16.mxu0 0
        %2035 = vmatpush1.bf16.msra.mxu0 0
        %2036 = vmatprep.subr.bf16.mxu0 0
        %2037 = vmatpush1.bf16.msra.mxu0 0
        %2038 = vmatprep.subr.bf16.mxu0 0
        %2039 = vmatpush1.bf16.msra.mxu0 0
        %2040 = vmatprep.mubr.bf16.mxu0 0
        %2041 = vmatmul.mubr.bf16.gmra.mrb[0].mxu0 %v1997
        %v2042 = vpop.f32.mrb[0].mxu0
        %v2043 = vadd.f32 0.0, %v2042
        %v2044 = vpop.f32.mrb[0].mxu0
        %v2045 = vpop.f32.mrb[0].mxu0
        %v2046 = vadd.f32 0.0, %v2045
        %v2047 = vpop.f32.mrb[0].mxu0
        %2048 = vmatprep.mubr.bf16.mxu0 0
        %2049 = vmatmul.mubr.bf16.gmra.mrb[0].mxu0 %v2000
        %v2050 = vpop.f32.mrb[0].mxu0
        %v2051 = vadd.f32 0.0, %v2050
        %v2052 = vpop.f32.mrb[0].mxu0
        %v2053 = vpop.f32.mrb[0].mxu0
        %v2054 = vadd.f32 0.0, %v2053
        %v2055 = vpop.f32.mrb[0].mxu0
        %2056 = vmatprep.mubr.bf16.mxu0 0
        %2057 = vmatmul.mubr.bf16.gmra.mrb[0].mxu0 %v2003
        %v2058 = vpop.f32.mrb[0].mxu0
        %v2059 = vadd.f32 0.0, %v2058
        %v2060 = vpop.f32.mrb[0].mxu0
        %v2061 = vpop.f32.mrb[0].mxu0
        %v2062 = vadd.f32 0.0, %v2061
        %v2063 = vpop.f32.mrb[0].mxu0
        %2064 = vmatprep.mubr.bf16.mxu0 0
        %2065 = vmatmul.mubr.bf16.gmra.mrb[0].mxu0 %v2006
        %v2066 = vpop.f32.mrb[0].mxu0
        %v2067 = vadd.f32 0.0, %v2066
        %v2068 = vpop.f32.mrb[0].mxu0
        %v2069 = vpop.f32.mrb[0].mxu0
        %v2070 = vadd.f32 0.0, %v2069
        %v2071 = vpop.f32.mrb[0].mxu0
        %2072 = vdwg.mxu0
        %v2074 = vsel %vm1505, %v1838, 0
        %v2077 = vsel %vm1505, %v1839, 0
        %v2080 = vsel %vm1505, %v1840, 0
        %v2083 = vsel %vm1505, %v1841, 0
        %2085 = vmatprep.subr.bf16.mxu0 0
        %2086 = vmatpush1.bf16.msra.mxu0 %v1144
        %2087 = vmatprep.subr.bf16.mxu0 0
        %2088 = vmatpush1.bf16.msra.mxu0 %v1145
        %2089 = vmatprep.subr.bf16.mxu0 0
        %2090 = vmatpush1.bf16.msra.mxu0 %v1146
        %2091 = vmatprep.subr.bf16.mxu0 0
        %2092 = vmatpush1.bf16.msra.mxu0 %v1147
        %2093 = vmatprep.subr.bf16.mxu0 0
        %2094 = vmatpush1.bf16.msra.mxu0 0
        %2095 = vmatprep.subr.bf16.mxu0 0
        %2096 = vmatpush1.bf16.msra.mxu0 0
        %2097 = vmatprep.subr.bf16.mxu0 0
        %2098 = vmatpush1.bf16.msra.mxu0 0
        %2099 = vmatprep.subr.bf16.mxu0 0
        %2100 = vmatpush1.bf16.msra.mxu0 0
        %2101 = vmatprep.subr.bf16.mxu0 0
        %2102 = vmatpush1.bf16.msra.mxu0 0
        %2103 = vmatprep.subr.bf16.mxu0 0
        %2104 = vmatpush1.bf16.msra.mxu0 0
        %2105 = vmatprep.subr.bf16.mxu0 0
        %2106 = vmatpush1.bf16.msra.mxu0 0
        %2107 = vmatprep.subr.bf16.mxu0 0
        %2108 = vmatpush1.bf16.msra.mxu0 0
        %2109 = vmatprep.subr.bf16.mxu0 0
        %2110 = vmatpush1.bf16.msra.mxu0 0
        %2111 = vmatprep.subr.bf16.mxu0 0
        %2112 = vmatpush1.bf16.msra.mxu0 0
        %2113 = vmatprep.subr.bf16.mxu0 0
        %2114 = vmatpush1.bf16.msra.mxu0 0
        %2115 = vmatprep.subr.bf16.mxu0 0
        %2116 = vmatpush1.bf16.msra.mxu0 0
        %2117 = vmatprep.mubr.bf16.mxu0 0
        %2118 = vmatmul.mubr.bf16.gmra.mrb[0].mxu0 %v2074
        %v2119 = vpop.f32.mrb[0].mxu0
        %v2120 = vadd.f32 0.0, %v2119
        %v2121 = vpop.f32.mrb[0].mxu0
        %v2122 = vpop.f32.mrb[0].mxu0
        %v2123 = vadd.f32 0.0, %v2122
        %v2124 = vpop.f32.mrb[0].mxu0
        %2125 = vmatprep.mubr.bf16.mxu0 0
        %2126 = vmatmul.mubr.bf16.gmra.mrb[0].mxu0 %v2077
        %v2127 = vpop.f32.mrb[0].mxu0
        %v2128 = vadd.f32 0.0, %v2127
        %v2129 = vpop.f32.mrb[0].mxu0
        %v2130 = vpop.f32.mrb[0].mxu0
        %v2131 = vadd.f32 0.0, %v2130
        %v2132 = vpop.f32.mrb[0].mxu0
        %2133 = vmatprep.mubr.bf16.mxu0 0
        %2134 = vmatmul.mubr.bf16.gmra.mrb[0].mxu0 %v2080
        %v2135 = vpop.f32.mrb[0].mxu0
        %v2136 = vadd.f32 0.0, %v2135
        %v2137 = vpop.f32.mrb[0].mxu0
        %v2138 = vpop.f32.mrb[0].mxu0
        %v2139 = vadd.f32 0.0, %v2138
        %v2140 = vpop.f32.mrb[0].mxu0
        %2141 = vmatprep.mubr.bf16.mxu0 0
        %2142 = vmatmul.mubr.bf16.gmra.mrb[0].mxu0 %v2083
        %v2143 = vpop.f32.mrb[0].mxu0
        %v2144 = vadd.f32 0.0, %v2143
        %v2145 = vpop.f32.mrb[0].mxu0
        %v2146 = vpop.f32.mrb[0].mxu0
        %v2147 = vadd.f32 0.0, %v2146
        %v2148 = vpop.f32.mrb[0].mxu0
        %2149 = vdwg.mxu0
        %v2150 = vmul.f32 %v1889, %v1794
        %v2151 = vmul.f32 %v1892, %v1795
        %v2152 = vmul.f32 %v1897, %v1796
        %v2153 = vmul.f32 %v1900, %v1797
        %v2154 = vmul.f32 %v1905, %v1798
        %v2155 = vmul.f32 %v1908, %v1799
        %v2156 = vmul.f32 %v1913, %v1800
        %v2157 = vmul.f32 %v1916, %v1801
        %v2158 = vmul.f32 %v1966, %v1802
        %v2159 = vmul.f32 %v1969, %v1803
        %v2160 = vmul.f32 %v1974, %v1804
        %v2161 = vmul.f32 %v1977, %v1805
        %v2162 = vmul.f32 %v1982, %v1806
        %v2163 = vmul.f32 %v1985, %v1807
        %v2164 = vmul.f32 %v1990, %v1808
        %v2165 = vmul.f32 %v1993, %v1809
        %v2166 = vmul.f32 %v2043, %v1810
        %v2167 = vmul.f32 %v2046, %v1811
        %v2168 = vmul.f32 %v2051, %v1812
        %v2169 = vmul.f32 %v2054, %v1813
        %v2170 = vmul.f32 %v2059, %v1814
        %v2171 = vmul.f32 %v2062, %v1815
        %v2172 = vmul.f32 %v2067, %v1816
        %v2173 = vmul.f32 %v2070, %v1817
        %v2174 = vmul.f32 %v2120, %v1818
        %v2175 = vmul.f32 %v2123, %v1819
        %v2176 = vmul.f32 %v2128, %v1820
        %v2177 = vmul.f32 %v2131, %v1821
        %v2178 = vmul.f32 %v2136, %v1822
        %v2179 = vmul.f32 %v2139, %v1823
        %v2180 = vmul.f32 %v2144, %v1824
        %v2181 = vmul.f32 %v2147, %v1825
        %2182 = vst.msk [vmem:[#allocation2] sm:$0xff] %vm1148, %v2150
        %2183 = vst.msk [vmem:[#allocation2 + $0x8] sm:$0xff] %vm1148, %v2151
        %2184 = vst.msk [vmem:[#allocation2 + $0x10] sm:$0xff] %vm1148, %v2152
        %2185 = vst.msk [vmem:[#allocation2 + $0x18] sm:$0xff] %vm1148, %v2153
        %2186 = vst.msk [vmem:[#allocation2 + $0x20] sm:$0xff] %vm1148, %v2154
        %2187 = vst.msk [vmem:[#allocation2 + $0x28] sm:$0xff] %vm1148, %v2155
        %2188 = vst.msk [vmem:[#allocation2 + $0x30] sm:$0xff] %vm1148, %v2156
        %2189 = vst.msk [vmem:[#allocation2 + $0x38] sm:$0xff] %vm1148, %v2157
        %2190 = vst.msk [vmem:[#allocation2 + $0x40] sm:$0xff] %vm1148, %v2158
        %2191 = vst.msk [vmem:[#allocation2 + $0x48] sm:$0xff] %vm1148, %v2159
        %2192 = vst.msk [vmem:[#allocation2 + $0x50] sm:$0xff] %vm1148, %v2160
        %2193 = vst.msk [vmem:[#allocation2 + $0x58] sm:$0xff] %vm1148, %v2161
        %2194 = vst.msk [vmem:[#allocation2 + $0x60] sm:$0xff] %vm1148, %v2162
        %2195 = vst.msk [vmem:[#allocation2 + $0x68] sm:$0xff] %vm1148, %v2163
        %2196 = vst.msk [vmem:[#allocation2 + $0x70] sm:$0xff] %vm1148, %v2164
        %2197 = vst.msk [vmem:[#allocation2 + $0x78] sm:$0xff] %vm1148, %v2165
        %2198 = vst.msk [vmem:[#allocation2 + $0x80] sm:$0xff] %vm1148, %v2166
        %2199 = vst.msk [vmem:[#allocation2 + $0x88] sm:$0xff] %vm1148, %v2167
        %2200 = vst.msk [vmem:[#allocation2 + $0x90] sm:$0xff] %vm1148, %v2168
        %2201 = vst.msk [vmem:[#allocation2 + $0x98] sm:$0xff] %vm1148, %v2169
        %2202 = vst.msk [vmem:[#allocation2 + $0xa0] sm:$0xff] %vm1148, %v2170
        %2203 = vst.msk [vmem:[#allocation2 + $0xa8] sm:$0xff] %vm1148, %v2171
        %2204 = vst.msk [vmem:[#allocation2 + $0xb0] sm:$0xff] %vm1148, %v2172
        %2205 = vst.msk [vmem:[#allocation2 + $0xb8] sm:$0xff] %vm1148, %v2173
        %2206 = vst.msk [vmem:[#allocation2 + $0xc0] sm:$0xff] %vm1148, %v2174
        %2207 = vst.msk [vmem:[#allocation2 + $0xc8] sm:$0xff] %vm1148, %v2175
        %2208 = vst.msk [vmem:[#allocation2 + $0xd0] sm:$0xff] %vm1148, %v2176
        %2209 = vst.msk [vmem:[#allocation2 + $0xd8] sm:$0xff] %vm1148, %v2177
        %2210 = vst.msk [vmem:[#allocation2 + $0xe0] sm:$0xff] %vm1148, %v2178
        %2211 = vst.msk [vmem:[#allocation2 + $0xe8] sm:$0xff] %vm1148, %v2179
        %2212 = vst.msk [vmem:[#allocation2 + $0xf0] sm:$0xff] %vm1148, %v2180
        %2213 = vst.msk [vmem:[#allocation2 + $0xf8] sm:$0xff] %vm1148, %v2181
        %2218 = vrot.lane.b32.xlu0 %v1100, 96
        %v2219 = vpop.permute.xlu0 %2218
        %2220 = vrot.lane.b32.xlu0 %v1101, 96
        %v2221 = vpop.permute.xlu0 %2220
        %2222 = vrot.lane.b32.xlu0 %v1102, 96
        %v2223 = vpop.permute.xlu0 %2222
        %2224 = vrot.lane.b32.xlu0 %v1103, 96
        %v2225 = vpop.permute.xlu0 %2224
        %2230 = vrot.lane.b32.xlu0 %v1116, 96
        %v2231 = vpop.permute.xlu0 %2230
        %2232 = vrot.lane.b32.xlu0 %v1117, 96
        %v2233 = vpop.permute.xlu0 %2232
        %2234 = vrot.lane.b32.xlu0 %v1118, 96
        %v2235 = vpop.permute.xlu0 %2234
        %2236 = vrot.lane.b32.xlu0 %v1119, 96
        %v2237 = vpop.permute.xlu0 %2236
        %v2239 = vsel %vm1148, %v2219, 0
        %v2242 = vsel %vm1148, %v2221, 0
        %v2245 = vsel %vm1148, %v2223, 0
        %v2248 = vsel %vm1148, %v2225, 0
        %v2251 = vsel %vm1148, %v2231, 0
        %v2254 = vsel %vm1148, %v2233, 0
        %v2257 = vsel %vm1148, %v2235, 0
        %v2260 = vsel %vm1148, %v2237, 0
        %2262 = vmatprep.subr.bf16.mxu0 0
        %2263 = vmatpush1.bf16.xpose.msra.mxu0 %v2251
        %2264 = vmatprep.subr.bf16.mxu0 0
        %2265 = vmatpush1.bf16.xpose.msra.mxu0 %v2254
        %2266 = vmatprep.subr.bf16.mxu0 0
        %2267 = vmatpush1.bf16.xpose.msra.mxu0 %v2257
        %2268 = vmatprep.subr.bf16.mxu0 0
        %2269 = vmatpush1.bf16.xpose.msra.mxu0 %v2260
        %2270 = vmatprep.subr.bf16.mxu0 0
        %2271 = vmatpush1.bf16.xpose.msra.mxu0 0
        %2272 = vmatprep.subr.bf16.mxu0 0
        %2273 = vmatpush1.bf16.xpose.msra.mxu0 0
        %2274 = vmatprep.subr.bf16.mxu0 0
        %2275 = vmatpush1.bf16.xpose.msra.mxu0 0
        %2276 = vmatprep.subr.bf16.mxu0 0
        %2277 = vmatpush1.bf16.xpose.msra.mxu0 0
        %2278 = vmatprep.subr.bf16.mxu0 0
        %2279 = vmatpush1.bf16.xpose.msra.mxu0 0
        %2280 = vmatprep.subr.bf16.mxu0 0
        %2281 = vmatpush1.bf16.xpose.msra.mxu0 0
        %2282 = vmatprep.subr.bf16.mxu0 0
        %2283 = vmatpush1.bf16.xpose.msra.mxu0 0
        %2284 = vmatprep.subr.bf16.mxu0 0
        %2285 = vmatpush1.bf16.xpose.msra.mxu0 0
        %2286 = vmatprep.subr.bf16.mxu0 0
        %2287 = vmatpush1.bf16.xpose.msra.mxu0 0
        %2288 = vmatprep.subr.bf16.mxu0 0
        %2289 = vmatpush1.bf16.xpose.msra.mxu0 0
        %2290 = vmatprep.subr.bf16.mxu0 0
        %2291 = vmatpush1.bf16.xpose.msra.mxu0 0
        %2292 = vmatprep.subr.bf16.mxu0 0
        %2293 = vmatpush1.bf16.xpose.msra.mxu0 0
        %2294 = vmatprep.mubr.bf16.mxu0 0
        %2295 = vmatmul.mubr.bf16.gmra.mrb[0].mxu0 %v2239
        %v2296 = vpop.f32.mrb[0].mxu0
        %v2297 = vadd.f32 0.0, %v2296
        %v2298 = vpop.f32.mrb[0].mxu0
        %v2299 = vpop.f32.mrb[0].mxu0
        %v2300 = vadd.f32 0.0, %v2299
        %v2301 = vpop.f32.mrb[0].mxu0
        %2302 = vmatprep.mubr.bf16.mxu0 0
        %2303 = vmatmul.mubr.bf16.gmra.mrb[0].mxu0 %v2242
        %v2304 = vpop.f32.mrb[0].mxu0
        %v2305 = vadd.f32 0.0, %v2304
        %v2306 = vpop.f32.mrb[0].mxu0
        %v2307 = vpop.f32.mrb[0].mxu0
        %v2308 = vadd.f32 0.0, %v2307
        %v2309 = vpop.f32.mrb[0].mxu0
        %2310 = vmatprep.mubr.bf16.mxu0 0
        %2311 = vmatmul.mubr.bf16.gmra.mrb[0].mxu0 %v2245
        %v2312 = vpop.f32.mrb[0].mxu0
        %v2313 = vadd.f32 0.0, %v2312
        %v2314 = vpop.f32.mrb[0].mxu0
        %v2315 = vpop.f32.mrb[0].mxu0
        %v2316 = vadd.f32 0.0, %v2315
        %v2317 = vpop.f32.mrb[0].mxu0
        %2318 = vmatprep.mubr.bf16.mxu0 0
        %2319 = vmatmul.mubr.bf16.gmra.mrb[0].mxu0 %v2248
        %v2320 = vpop.f32.mrb[0].mxu0
        %v2321 = vadd.f32 0.0, %v2320
        %v2322 = vpop.f32.mrb[0].mxu0
        %v2323 = vpop.f32.mrb[0].mxu0
        %v2324 = vadd.f32 0.0, %v2323
        %v2325 = vpop.f32.mrb[0].mxu0
        %2326 = vdwg.mxu0
        %2331 = vrot.lane.b32.xlu0 %v1104, 96
        %v2332 = vpop.permute.xlu0 %2331
        %2333 = vrot.lane.b32.xlu0 %v1105, 96
        %v2334 = vpop.permute.xlu0 %2333
        %2335 = vrot.lane.b32.xlu0 %v1106, 96
        %v2336 = vpop.permute.xlu0 %2335
        %2337 = vrot.lane.b32.xlu0 %v1107, 96
        %v2338 = vpop.permute.xlu0 %2337
        %2343 = vrot.lane.b32.xlu0 %v1120, 96
        %v2344 = vpop.permute.xlu0 %2343
        %2345 = vrot.lane.b32.xlu0 %v1121, 96
        %v2346 = vpop.permute.xlu0 %2345
        %2347 = vrot.lane.b32.xlu0 %v1122, 96
        %v2348 = vpop.permute.xlu0 %2347
        %2349 = vrot.lane.b32.xlu0 %v1123, 96
        %v2350 = vpop.permute.xlu0 %2349
        %v2352 = vsel %vm1148, %v2332, 0
        %v2355 = vsel %vm1148, %v2334, 0
        %v2358 = vsel %vm1148, %v2336, 0
        %v2361 = vsel %vm1148, %v2338, 0
        %v2364 = vsel %vm1148, %v2344, 0
        %v2367 = vsel %vm1148, %v2346, 0
        %v2370 = vsel %vm1148, %v2348, 0
        %v2373 = vsel %vm1148, %v2350, 0
        %2375 = vmatprep.subr.bf16.mxu0 0
        %2376 = vmatpush1.bf16.xpose.msra.mxu0 %v2364
        %2377 = vmatprep.subr.bf16.mxu0 0
        %2378 = vmatpush1.bf16.xpose.msra.mxu0 %v2367
        %2379 = vmatprep.subr.bf16.mxu0 0
        %2380 = vmatpush1.bf16.xpose.msra.mxu0 %v2370
        %2381 = vmatprep.subr.bf16.mxu0 0
        %2382 = vmatpush1.bf16.xpose.msra.mxu0 %v2373
        %2383 = vmatprep.subr.bf16.mxu0 0
        %2384 = vmatpush1.bf16.xpose.msra.mxu0 0
        %2385 = vmatprep.subr.bf16.mxu0 0
        %2386 = vmatpush1.bf16.xpose.msra.mxu0 0
        %2387 = vmatprep.subr.bf16.mxu0 0
        %2388 = vmatpush1.bf16.xpose.msra.mxu0 0
        %2389 = vmatprep.subr.bf16.mxu0 0
        %2390 = vmatpush1.bf16.xpose.msra.mxu0 0
        %2391 = vmatprep.subr.bf16.mxu0 0
        %2392 = vmatpush1.bf16.xpose.msra.mxu0 0
        %2393 = vmatprep.subr.bf16.mxu0 0
        %2394 = vmatpush1.bf16.xpose.msra.mxu0 0
        %2395 = vmatprep.subr.bf16.mxu0 0
        %2396 = vmatpush1.bf16.xpose.msra.mxu0 0
        %2397 = vmatprep.subr.bf16.mxu0 0
        %2398 = vmatpush1.bf16.xpose.msra.mxu0 0
        %2399 = vmatprep.subr.bf16.mxu0 0
        %2400 = vmatpush1.bf16.xpose.msra.mxu0 0
        %2401 = vmatprep.subr.bf16.mxu0 0
        %2402 = vmatpush1.bf16.xpose.msra.mxu0 0
        %2403 = vmatprep.subr.bf16.mxu0 0
        %2404 = vmatpush1.bf16.xpose.msra.mxu0 0
        %2405 = vmatprep.subr.bf16.mxu0 0
        %2406 = vmatpush1.bf16.xpose.msra.mxu0 0
        %2407 = vmatprep.mubr.bf16.mxu0 0
        %2408 = vmatmul.mubr.bf16.gmra.mrb[0].mxu0 %v2352
        %v2409 = vpop.f32.mrb[0].mxu0
        %v2410 = vadd.f32 0.0, %v2409
        %v2411 = vpop.f32.mrb[0].mxu0
        %v2412 = vpop.f32.mrb[0].mxu0
        %v2413 = vadd.f32 0.0, %v2412
        %v2414 = vpop.f32.mrb[0].mxu0
        %2415 = vmatprep.mubr.bf16.mxu0 0
        %2416 = vmatmul.mubr.bf16.gmra.mrb[0].mxu0 %v2355
        %v2417 = vpop.f32.mrb[0].mxu0
        %v2418 = vadd.f32 0.0, %v2417
        %v2419 = vpop.f32.mrb[0].mxu0
        %v2420 = vpop.f32.mrb[0].mxu0
        %v2421 = vadd.f32 0.0, %v2420
        %v2422 = vpop.f32.mrb[0].mxu0
        %2423 = vmatprep.mubr.bf16.mxu0 0
        %2424 = vmatmul.mubr.bf16.gmra.mrb[0].mxu0 %v2358
        %v2425 = vpop.f32.mrb[0].mxu0
        %v2426 = vadd.f32 0.0, %v2425
        %v2427 = vpop.f32.mrb[0].mxu0
        %v2428 = vpop.f32.mrb[0].mxu0
        %v2429 = vadd.f32 0.0, %v2428
        %v2430 = vpop.f32.mrb[0].mxu0
        %2431 = vmatprep.mubr.bf16.mxu0 0
        %2432 = vmatmul.mubr.bf16.gmra.mrb[0].mxu0 %v2361
        %v2433 = vpop.f32.mrb[0].mxu0
        %v2434 = vadd.f32 0.0, %v2433
        %v2435 = vpop.f32.mrb[0].mxu0
        %v2436 = vpop.f32.mrb[0].mxu0
        %v2437 = vadd.f32 0.0, %v2436
        %v2438 = vpop.f32.mrb[0].mxu0
        %2439 = vdwg.mxu0
        %2444 = vrot.lane.b32.xlu0 %v1108, 96
        %v2445 = vpop.permute.xlu0 %2444
        %2446 = vrot.lane.b32.xlu0 %v1109, 96
        %v2447 = vpop.permute.xlu0 %2446
        %2448 = vrot.lane.b32.xlu0 %v1110, 96
        %v2449 = vpop.permute.xlu0 %2448
        %2450 = vrot.lane.b32.xlu0 %v1111, 96
        %v2451 = vpop.permute.xlu0 %2450
        %2456 = vrot.lane.b32.xlu0 %v1124, 96
        %v2457 = vpop.permute.xlu0 %2456
        %2458 = vrot.lane.b32.xlu0 %v1125, 96
        %v2459 = vpop.permute.xlu0 %2458
        %2460 = vrot.lane.b32.xlu0 %v1126, 96
        %v2461 = vpop.permute.xlu0 %2460
        %2462 = vrot.lane.b32.xlu0 %v1127, 96
        %v2463 = vpop.permute.xlu0 %2462
        %v2465 = vsel %vm1148, %v2445, 0
        %v2468 = vsel %vm1148, %v2447, 0
        %v2471 = vsel %vm1148, %v2449, 0
        %v2474 = vsel %vm1148, %v2451, 0
        %v2477 = vsel %vm1148, %v2457, 0
        %v2480 = vsel %vm1148, %v2459, 0
        %v2483 = vsel %vm1148, %v2461, 0
        %v2486 = vsel %vm1148, %v2463, 0
        %2488 = vmatprep.subr.bf16.mxu0 0
        %2489 = vmatpush1.bf16.xpose.msra.mxu0 %v2477
        %2490 = vmatprep.subr.bf16.mxu0 0
        %2491 = vmatpush1.bf16.xpose.msra.mxu0 %v2480
        %2492 = vmatprep.subr.bf16.mxu0 0
        %2493 = vmatpush1.bf16.xpose.msra.mxu0 %v2483
        %2494 = vmatprep.subr.bf16.mxu0 0
        %2495 = vmatpush1.bf16.xpose.msra.mxu0 %v2486
        %2496 = vmatprep.subr.bf16.mxu0 0
        %2497 = vmatpush1.bf16.xpose.msra.mxu0 0
        %2498 = vmatprep.subr.bf16.mxu0 0
        %2499 = vmatpush1.bf16.xpose.msra.mxu0 0
        %2500 = vmatprep.subr.bf16.mxu0 0
        %2501 = vmatpush1.bf16.xpose.msra.mxu0 0
        %2502 = vmatprep.subr.bf16.mxu0 0
        %2503 = vmatpush1.bf16.xpose.msra.mxu0 0
        %2504 = vmatprep.subr.bf16.mxu0 0
        %2505 = vmatpush1.bf16.xpose.msra.mxu0 0
        %2506 = vmatprep.subr.bf16.mxu0 0
        %2507 = vmatpush1.bf16.xpose.msra.mxu0 0
        %2508 = vmatprep.subr.bf16.mxu0 0
        %2509 = vmatpush1.bf16.xpose.msra.mxu0 0
        %2510 = vmatprep.subr.bf16.mxu0 0
        %2511 = vmatpush1.bf16.xpose.msra.mxu0 0
        %2512 = vmatprep.subr.bf16.mxu0 0
        %2513 = vmatpush1.bf16.xpose.msra.mxu0 0
        %2514 = vmatprep.subr.bf16.mxu0 0
        %2515 = vmatpush1.bf16.xpose.msra.mxu0 0
        %2516 = vmatprep.subr.bf16.mxu0 0
        %2517 = vmatpush1.bf16.xpose.msra.mxu0 0
        %2518 = vmatprep.subr.bf16.mxu0 0
        %2519 = vmatpush1.bf16.xpose.msra.mxu0 0
        %2520 = vmatprep.mubr.bf16.mxu0 0
        %2521 = vmatmul.mubr.bf16.gmra.mrb[0].mxu0 %v2465
        %v2522 = vpop.f32.mrb[0].mxu0
        %v2523 = vadd.f32 0.0, %v2522
        %v2524 = vpop.f32.mrb[0].mxu0
        %v2525 = vpop.f32.mrb[0].mxu0
        %v2526 = vadd.f32 0.0, %v2525
        %v2527 = vpop.f32.mrb[0].mxu0
        %2528 = vmatprep.mubr.bf16.mxu0 0
        %2529 = vmatmul.mubr.bf16.gmra.mrb[0].mxu0 %v2468
        %v2530 = vpop.f32.mrb[0].mxu0
        %v2531 = vadd.f32 0.0, %v2530
        %v2532 = vpop.f32.mrb[0].mxu0
        %v2533 = vpop.f32.mrb[0].mxu0
        %v2534 = vadd.f32 0.0, %v2533
        %v2535 = vpop.f32.mrb[0].mxu0
        %2536 = vmatprep.mubr.bf16.mxu0 0
        %2537 = vmatmul.mubr.bf16.gmra.mrb[0].mxu0 %v2471
        %v2538 = vpop.f32.mrb[0].mxu0
        %v2539 = vadd.f32 0.0, %v2538
        %v2540 = vpop.f32.mrb[0].mxu0
        %v2541 = vpop.f32.mrb[0].mxu0
        %v2542 = vadd.f32 0.0, %v2541
        %v2543 = vpop.f32.mrb[0].mxu0
        %2544 = vmatprep.mubr.bf16.mxu0 0
        %2545 = vmatmul.mubr.bf16.gmra.mrb[0].mxu0 %v2474
        %v2546 = vpop.f32.mrb[0].mxu0
        %v2547 = vadd.f32 0.0, %v2546
        %v2548 = vpop.f32.mrb[0].mxu0
        %v2549 = vpop.f32.mrb[0].mxu0
        %v2550 = vadd.f32 0.0, %v2549
        %v2551 = vpop.f32.mrb[0].mxu0
        %2552 = vdwg.mxu0
        %2557 = vrot.lane.b32.xlu0 %v1112, 96
        %v2558 = vpop.permute.xlu0 %2557
        %2559 = vrot.lane.b32.xlu0 %v1113, 96
        %v2560 = vpop.permute.xlu0 %2559
        %2561 = vrot.lane.b32.xlu0 %v1114, 96
        %v2562 = vpop.permute.xlu0 %2561
        %2563 = vrot.lane.b32.xlu0 %v1115, 96
        %v2564 = vpop.permute.xlu0 %2563
        %2569 = vrot.lane.b32.xlu0 %v1128, 96
        %v2570 = vpop.permute.xlu0 %2569
        %2571 = vrot.lane.b32.xlu0 %v1129, 96
        %v2572 = vpop.permute.xlu0 %2571
        %2573 = vrot.lane.b32.xlu0 %v1130, 96
        %v2574 = vpop.permute.xlu0 %2573
        %2575 = vrot.lane.b32.xlu0 %v1131, 96
        %v2576 = vpop.permute.xlu0 %2575
        %v2578 = vsel %vm1148, %v2558, 0
        %v2581 = vsel %vm1148, %v2560, 0
        %v2584 = vsel %vm1148, %v2562, 0
        %v2587 = vsel %vm1148, %v2564, 0
        %v2590 = vsel %vm1148, %v2570, 0
        %v2593 = vsel %vm1148, %v2572, 0
        %v2596 = vsel %vm1148, %v2574, 0
        %v2599 = vsel %vm1148, %v2576, 0
        %2601 = vmatprep.subr.bf16.mxu0 0
        %2602 = vmatpush1.bf16.xpose.msra.mxu0 %v2590
        %2603 = vmatprep.subr.bf16.mxu0 0
        %2604 = vmatpush1.bf16.xpose.msra.mxu0 %v2593
        %2605 = vmatprep.subr.bf16.mxu0 0
        %2606 = vmatpush1.bf16.xpose.msra.mxu0 %v2596
        %2607 = vmatprep.subr.bf16.mxu0 0
        %2608 = vmatpush1.bf16.xpose.msra.mxu0 %v2599
        %2609 = vmatprep.subr.bf16.mxu0 0
        %2610 = vmatpush1.bf16.xpose.msra.mxu0 0
        %2611 = vmatprep.subr.bf16.mxu0 0
        %2612 = vmatpush1.bf16.xpose.msra.mxu0 0
        %2613 = vmatprep.subr.bf16.mxu0 0
        %2614 = vmatpush1.bf16.xpose.msra.mxu0 0
        %2615 = vmatprep.subr.bf16.mxu0 0
        %2616 = vmatpush1.bf16.xpose.msra.mxu0 0
        %2617 = vmatprep.subr.bf16.mxu0 0
        %2618 = vmatpush1.bf16.xpose.msra.mxu0 0
        %2619 = vmatprep.subr.bf16.mxu0 0
        %2620 = vmatpush1.bf16.xpose.msra.mxu0 0
        %2621 = vmatprep.subr.bf16.mxu0 0
        %2622 = vmatpush1.bf16.xpose.msra.mxu0 0
        %2623 = vmatprep.subr.bf16.mxu0 0
        %2624 = vmatpush1.bf16.xpose.msra.mxu0 0
        %2625 = vmatprep.subr.bf16.mxu0 0
        %2626 = vmatpush1.bf16.xpose.msra.mxu0 0
        %2627 = vmatprep.subr.bf16.mxu0 0
        %2628 = vmatpush1.bf16.xpose.msra.mxu0 0
        %2629 = vmatprep.subr.bf16.mxu0 0
        %2630 = vmatpush1.bf16.xpose.msra.mxu0 0
        %2631 = vmatprep.subr.bf16.mxu0 0
        %2632 = vmatpush1.bf16.xpose.msra.mxu0 0
        %2633 = vmatprep.mubr.bf16.mxu0 0
        %2634 = vmatmul.mubr.bf16.gmra.mrb[0].mxu0 %v2578
        %v2635 = vpop.f32.mrb[0].mxu0
        %v2636 = vadd.f32 0.0, %v2635
        %v2637 = vpop.f32.mrb[0].mxu0
        %v2638 = vpop.f32.mrb[0].mxu0
        %v2639 = vadd.f32 0.0, %v2638
        %v2640 = vpop.f32.mrb[0].mxu0
        %2641 = vmatprep.mubr.bf16.mxu0 0
        %2642 = vmatmul.mubr.bf16.gmra.mrb[0].mxu0 %v2581
        %v2643 = vpop.f32.mrb[0].mxu0
        %v2644 = vadd.f32 0.0, %v2643
        %v2645 = vpop.f32.mrb[0].mxu0
        %v2646 = vpop.f32.mrb[0].mxu0
        %v2647 = vadd.f32 0.0, %v2646
        %v2648 = vpop.f32.mrb[0].mxu0
        %2649 = vmatprep.mubr.bf16.mxu0 0
        %2650 = vmatmul.mubr.bf16.gmra.mrb[0].mxu0 %v2584
        %v2651 = vpop.f32.mrb[0].mxu0
        %v2652 = vadd.f32 0.0, %v2651
        %v2653 = vpop.f32.mrb[0].mxu0
        %v2654 = vpop.f32.mrb[0].mxu0
        %v2655 = vadd.f32 0.0, %v2654
        %v2656 = vpop.f32.mrb[0].mxu0
        %2657 = vmatprep.mubr.bf16.mxu0 0
        %2658 = vmatmul.mubr.bf16.gmra.mrb[0].mxu0 %v2587
        %v2659 = vpop.f32.mrb[0].mxu0
        %v2660 = vadd.f32 0.0, %v2659
        %v2661 = vpop.f32.mrb[0].mxu0
        %v2662 = vpop.f32.mrb[0].mxu0
        %v2663 = vadd.f32 0.0, %v2662
        %v2664 = vpop.f32.mrb[0].mxu0
        %2665 = vdwg.mxu0
        %v2666 = vsel %vm1505, %v2297, -inf
        %2667 = vmax.xlane.f32.xlu0 %v2666
        %v2668 = vpop.xlane.xlu0 %2667
        %v2669 = vsel %vm1505, %v2300, -inf
        %2670 = vmax.xlane.f32.xlu0 %v2669
        %v2671 = vpop.xlane.xlu0 %2670
        %v2672 = vsel %vm1505, %v2305, -inf
        %2673 = vmax.xlane.f32.xlu0 %v2672
        %v2674 = vpop.xlane.xlu0 %2673
        %v2675 = vsel %vm1505, %v2308, -inf
        %2676 = vmax.xlane.f32.xlu0 %v2675
        %v2677 = vpop.xlane.xlu0 %2676
        %v2678 = vsel %vm1505, %v2313, -inf
        %2679 = vmax.xlane.f32.xlu0 %v2678
        %v2680 = vpop.xlane.xlu0 %2679
        %v2681 = vsel %vm1505, %v2316, -inf
        %2682 = vmax.xlane.f32.xlu0 %v2681
        %v2683 = vpop.xlane.xlu0 %2682
        %v2684 = vsel %vm1505, %v2321, -inf
        %2685 = vmax.xlane.f32.xlu0 %v2684
        %v2686 = vpop.xlane.xlu0 %2685
        %v2687 = vsel %vm1505, %v2324, -inf
        %2688 = vmax.xlane.f32.xlu0 %v2687
        %v2689 = vpop.xlane.xlu0 %2688
        %v2690 = vsel %vm1505, %v2410, -inf
        %2691 = vmax.xlane.f32.xlu0 %v2690
        %v2692 = vpop.xlane.xlu0 %2691
        %v2693 = vsel %vm1505, %v2413, -inf
        %2694 = vmax.xlane.f32.xlu0 %v2693
        %v2695 = vpop.xlane.xlu0 %2694
        %v2696 = vsel %vm1505, %v2418, -inf
        %2697 = vmax.xlane.f32.xlu0 %v2696
        %v2698 = vpop.xlane.xlu0 %2697
        %v2699 = vsel %vm1505, %v2421, -inf
        %2700 = vmax.xlane.f32.xlu0 %v2699
        %v2701 = vpop.xlane.xlu0 %2700
        %v2702 = vsel %vm1505, %v2426, -inf
        %2703 = vmax.xlane.f32.xlu0 %v2702
        %v2704 = vpop.xlane.xlu0 %2703
        %v2705 = vsel %vm1505, %v2429, -inf
        %2706 = vmax.xlane.f32.xlu0 %v2705
        %v2707 = vpop.xlane.xlu0 %2706
        %v2708 = vsel %vm1505, %v2434, -inf
        %2709 = vmax.xlane.f32.xlu0 %v2708
        %v2710 = vpop.xlane.xlu0 %2709
        %v2711 = vsel %vm1505, %v2437, -inf
        %2712 = vmax.xlane.f32.xlu0 %v2711
        %v2713 = vpop.xlane.xlu0 %2712
        %v2714 = vsel %vm1505, %v2523, -inf
        %2715 = vmax.xlane.f32.xlu0 %v2714
        %v2716 = vpop.xlane.xlu0 %2715
        %v2717 = vsel %vm1505, %v2526, -inf
        %2718 = vmax.xlane.f32.xlu0 %v2717
        %v2719 = vpop.xlane.xlu0 %2718
        %v2720 = vsel %vm1505, %v2531, -inf
        %2721 = vmax.xlane.f32.xlu0 %v2720
        %v2722 = vpop.xlane.xlu0 %2721
        %v2723 = vsel %vm1505, %v2534, -inf
        %2724 = vmax.xlane.f32.xlu0 %v2723
        %v2725 = vpop.xlane.xlu0 %2724
        %v2726 = vsel %vm1505, %v2539, -inf
        %2727 = vmax.xlane.f32.xlu0 %v2726
        %v2728 = vpop.xlane.xlu0 %2727
        %v2729 = vsel %vm1505, %v2542, -inf
        %2730 = vmax.xlane.f32.xlu0 %v2729
        %v2731 = vpop.xlane.xlu0 %2730
        %v2732 = vsel %vm1505, %v2547, -inf
        %2733 = vmax.xlane.f32.xlu0 %v2732
        %v2734 = vpop.xlane.xlu0 %2733
        %v2735 = vsel %vm1505, %v2550, -inf
        %2736 = vmax.xlane.f32.xlu0 %v2735
        %v2737 = vpop.xlane.xlu0 %2736
        %v2738 = vsel %vm1505, %v2636, -inf
        %2739 = vmax.xlane.f32.xlu0 %v2738
        %v2740 = vpop.xlane.xlu0 %2739
        %v2741 = vsel %vm1505, %v2639, -inf
        %2742 = vmax.xlane.f32.xlu0 %v2741
        %v2743 = vpop.xlane.xlu0 %2742
        %v2744 = vsel %vm1505, %v2644, -inf
        %2745 = vmax.xlane.f32.xlu0 %v2744
        %v2746 = vpop.xlane.xlu0 %2745
        %v2747 = vsel %vm1505, %v2647, -inf
        %2748 = vmax.xlane.f32.xlu0 %v2747
        %v2749 = vpop.xlane.xlu0 %2748
        %v2750 = vsel %vm1505, %v2652, -inf
        %2751 = vmax.xlane.f32.xlu0 %v2750
        %v2752 = vpop.xlane.xlu0 %2751
        %v2753 = vsel %vm1505, %v2655, -inf
        %2754 = vmax.xlane.f32.xlu0 %v2753
        %v2755 = vpop.xlane.xlu0 %2754
        %v2756 = vsel %vm1505, %v2660, -inf
        %2757 = vmax.xlane.f32.xlu0 %v2756
        %v2758 = vpop.xlane.xlu0 %2757
        %v2759 = vsel %vm1505, %v2663, -inf
        %2760 = vmax.xlane.f32.xlu0 %v2759
        %v2761 = vpop.xlane.xlu0 %2760
        %v2762 = vsub.f32 %v2297, %v2668
        %v2763 = vsub.f32 %v2300, %v2671
        %v2764 = vsub.f32 %v2305, %v2674
        %v2765 = vsub.f32 %v2308, %v2677
        %v2766 = vsub.f32 %v2313, %v2680
        %v2767 = vsub.f32 %v2316, %v2683
        %v2768 = vsub.f32 %v2321, %v2686
        %v2769 = vsub.f32 %v2324, %v2689
        %v2770 = vsub.f32 %v2410, %v2692
        %v2771 = vsub.f32 %v2413, %v2695
        %v2772 = vsub.f32 %v2418, %v2698
        %v2773 = vsub.f32 %v2421, %v2701
        %v2774 = vsub.f32 %v2426, %v2704
        %v2775 = vsub.f32 %v2429, %v2707
        %v2776 = vsub.f32 %v2434, %v2710
        %v2777 = vsub.f32 %v2437, %v2713
        %v2778 = vsub.f32 %v2523, %v2716
        %v2779 = vsub.f32 %v2526, %v2719
        %v2780 = vsub.f32 %v2531, %v2722
        %v2781 = vsub.f32 %v2534, %v2725
        %v2782 = vsub.f32 %v2539, %v2728
        %v2783 = vsub.f32 %v2542, %v2731
        %v2784 = vsub.f32 %v2547, %v2734
        %v2785 = vsub.f32 %v2550, %v2737
        %v2786 = vsub.f32 %v2636, %v2740
        %v2787 = vsub.f32 %v2639, %v2743
        %v2788 = vsub.f32 %v2644, %v2746
        %v2789 = vsub.f32 %v2647, %v2749
        %v2790 = vsub.f32 %v2652, %v2752
        %v2791 = vsub.f32 %v2655, %v2755
        %v2792 = vsub.f32 %v2660, %v2758
        %v2793 = vsub.f32 %v2663, %v2761
        %v2794 = vmul.f32 %v2762, 1.442695
        %v2795 = vpow.pop %v2794
        %v2796 = vmul.f32 %v2763, 1.442695
        %v2797 = vpow.pop %v2796
        %v2798 = vmul.f32 %v2764, 1.442695
        %v2799 = vpow.pop %v2798
        %v2800 = vmul.f32 %v2765, 1.442695
        %v2801 = vpow.pop %v2800
        %v2802 = vmul.f32 %v2766, 1.442695
        %v2803 = vpow.pop %v2802
        %v2804 = vmul.f32 %v2767, 1.442695
        %v2805 = vpow.pop %v2804
        %v2806 = vmul.f32 %v2768, 1.442695
        %v2807 = vpow.pop %v2806
        %v2808 = vmul.f32 %v2769, 1.442695
        %v2809 = vpow.pop %v2808
        %v2810 = vmul.f32 %v2770, 1.442695
        %v2811 = vpow.pop %v2810
        %v2812 = vmul.f32 %v2771, 1.442695
        %v2813 = vpow.pop %v2812
        %v2814 = vmul.f32 %v2772, 1.442695
        %v2815 = vpow.pop %v2814
        %v2816 = vmul.f32 %v2773, 1.442695
        %v2817 = vpow.pop %v2816
        %v2818 = vmul.f32 %v2774, 1.442695
        %v2819 = vpow.pop %v2818
        %v2820 = vmul.f32 %v2775, 1.442695
        %v2821 = vpow.pop %v2820
        %v2822 = vmul.f32 %v2776, 1.442695
        %v2823 = vpow.pop %v2822
        %v2824 = vmul.f32 %v2777, 1.442695
        %v2825 = vpow.pop %v2824
        %v2826 = vmul.f32 %v2778, 1.442695
        %v2827 = vpow.pop %v2826
        %v2828 = vmul.f32 %v2779, 1.442695
        %v2829 = vpow.pop %v2828
        %v2830 = vmul.f32 %v2780, 1.442695
        %v2831 = vpow.pop %v2830
        %v2832 = vmul.f32 %v2781, 1.442695
        %v2833 = vpow.pop %v2832
        %v2834 = vmul.f32 %v2782, 1.442695
        %v2835 = vpow.pop %v2834
        %v2836 = vmul.f32 %v2783, 1.442695
        %v2837 = vpow.pop %v2836
        %v2838 = vmul.f32 %v2784, 1.442695
        %v2839 = vpow.pop %v2838
        %v2840 = vmul.f32 %v2785, 1.442695
        %v2841 = vpow.pop %v2840
        %v2842 = vmul.f32 %v2786, 1.442695
        %v2843 = vpow.pop %v2842
        %v2844 = vmul.f32 %v2787, 1.442695
        %v2845 = vpow.pop %v2844
        %v2846 = vmul.f32 %v2788, 1.442695
        %v2847 = vpow.pop %v2846
        %v2848 = vmul.f32 %v2789, 1.442695
        %v2849 = vpow.pop %v2848
        %v2850 = vmul.f32 %v2790, 1.442695
        %v2851 = vpow.pop %v2850
        %v2852 = vmul.f32 %v2791, 1.442695
        %v2853 = vpow.pop %v2852
        %v2854 = vmul.f32 %v2792, 1.442695
        %v2855 = vpow.pop %v2854
        %v2856 = vmul.f32 %v2793, 1.442695
        %v2857 = vpow.pop %v2856
        %v2858 = vsel %vm1505, %v2795, 0.0
        %2859 = vadd.xlane.f32.xlu0 %v2858
        %v2860 = vpop.xlane.xlu0 %2859
        %v2861 = vsel %vm1505, %v2797, 0.0
        %2862 = vadd.xlane.f32.xlu0 %v2861
        %v2863 = vpop.xlane.xlu0 %2862
        %v2864 = vsel %vm1505, %v2799, 0.0
        %2865 = vadd.xlane.f32.xlu0 %v2864
        %v2866 = vpop.xlane.xlu0 %2865
        %v2867 = vsel %vm1505, %v2801, 0.0
        %2868 = vadd.xlane.f32.xlu0 %v2867
        %v2869 = vpop.xlane.xlu0 %2868
        %v2870 = vsel %vm1505, %v2803, 0.0
        %2871 = vadd.xlane.f32.xlu0 %v2870
        %v2872 = vpop.xlane.xlu0 %2871
        %v2873 = vsel %vm1505, %v2805, 0.0
        %2874 = vadd.xlane.f32.xlu0 %v2873
        %v2875 = vpop.xlane.xlu0 %2874
        %v2876 = vsel %vm1505, %v2807, 0.0
        %2877 = vadd.xlane.f32.xlu0 %v2876
        %v2878 = vpop.xlane.xlu0 %2877
        %v2879 = vsel %vm1505, %v2809, 0.0
        %2880 = vadd.xlane.f32.xlu0 %v2879
        %v2881 = vpop.xlane.xlu0 %2880
        %v2882 = vsel %vm1505, %v2811, 0.0
        %2883 = vadd.xlane.f32.xlu0 %v2882
        %v2884 = vpop.xlane.xlu0 %2883
        %v2885 = vsel %vm1505, %v2813, 0.0
        %2886 = vadd.xlane.f32.xlu0 %v2885
        %v2887 = vpop.xlane.xlu0 %2886
        %v2888 = vsel %vm1505, %v2815, 0.0
        %2889 = vadd.xlane.f32.xlu0 %v2888
        %v2890 = vpop.xlane.xlu0 %2889
        %v2891 = vsel %vm1505, %v2817, 0.0
        %2892 = vadd.xlane.f32.xlu0 %v2891
        %v2893 = vpop.xlane.xlu0 %2892
        %v2894 = vsel %vm1505, %v2819, 0.0
        %2895 = vadd.xlane.f32.xlu0 %v2894
        %v2896 = vpop.xlane.xlu0 %2895
        %v2897 = vsel %vm1505, %v2821, 0.0
        %2898 = vadd.xlane.f32.xlu0 %v2897
        %v2899 = vpop.xlane.xlu0 %2898
        %v2900 = vsel %vm1505, %v2823, 0.0
        %2901 = vadd.xlane.f32.xlu0 %v2900
        %v2902 = vpop.xlane.xlu0 %2901
        %v2903 = vsel %vm1505, %v2825, 0.0
        %2904 = vadd.xlane.f32.xlu0 %v2903
        %v2905 = vpop.xlane.xlu0 %2904
        %v2906 = vsel %vm1505, %v2827, 0.0
        %2907 = vadd.xlane.f32.xlu0 %v2906
        %v2908 = vpop.xlane.xlu0 %2907
        %v2909 = vsel %vm1505, %v2829, 0.0
        %2910 = vadd.xlane.f32.xlu0 %v2909
        %v2911 = vpop.xlane.xlu0 %2910
        %v2912 = vsel %vm1505, %v2831, 0.0
        %2913 = vadd.xlane.f32.xlu0 %v2912
        %v2914 = vpop.xlane.xlu0 %2913
        %v2915 = vsel %vm1505, %v2833, 0.0
        %2916 = vadd.xlane.f32.xlu0 %v2915
        %v2917 = vpop.xlane.xlu0 %2916
        %v2918 = vsel %vm1505, %v2835, 0.0
        %2919 = vadd.xlane.f32.xlu0 %v2918
        %v2920 = vpop.xlane.xlu0 %2919
        %v2921 = vsel %vm1505, %v2837, 0.0
        %2922 = vadd.xlane.f32.xlu0 %v2921
        %v2923 = vpop.xlane.xlu0 %2922
        %v2924 = vsel %vm1505, %v2839, 0.0
        %2925 = vadd.xlane.f32.xlu0 %v2924
        %v2926 = vpop.xlane.xlu0 %2925
        %v2927 = vsel %vm1505, %v2841, 0.0
        %2928 = vadd.xlane.f32.xlu0 %v2927
        %v2929 = vpop.xlane.xlu0 %2928
        %v2930 = vsel %vm1505, %v2843, 0.0
        %2931 = vadd.xlane.f32.xlu0 %v2930
        %v2932 = vpop.xlane.xlu0 %2931
        %v2933 = vsel %vm1505, %v2845, 0.0
        %2934 = vadd.xlane.f32.xlu0 %v2933
        %v2935 = vpop.xlane.xlu0 %2934
        %v2936 = vsel %vm1505, %v2847, 0.0
        %2937 = vadd.xlane.f32.xlu0 %v2936
        %v2938 = vpop.xlane.xlu0 %2937
        %v2939 = vsel %vm1505, %v2849, 0.0
        %2940 = vadd.xlane.f32.xlu0 %v2939
        %v2941 = vpop.xlane.xlu0 %2940
        %v2942 = vsel %vm1505, %v2851, 0.0
        %2943 = vadd.xlane.f32.xlu0 %v2942
        %v2944 = vpop.xlane.xlu0 %2943
        %v2945 = vsel %vm1505, %v2853, 0.0
        %2946 = vadd.xlane.f32.xlu0 %v2945
        %v2947 = vpop.xlane.xlu0 %2946
        %v2948 = vsel %vm1505, %v2855, 0.0
        %2949 = vadd.xlane.f32.xlu0 %v2948
        %v2950 = vpop.xlane.xlu0 %2949
        %v2951 = vsel %vm1505, %v2857, 0.0
        %2952 = vadd.xlane.f32.xlu0 %v2951
        %v2953 = vpop.xlane.xlu0 %2952
        %v2954 = vrcp.pop %v2860
        %v2955 = vrcp.pop %v2863
        %v2956 = vrcp.pop %v2866
        %v2957 = vrcp.pop %v2869
        %v2958 = vrcp.pop %v2872
        %v2959 = vrcp.pop %v2875
        %v2960 = vrcp.pop %v2878
        %v2961 = vrcp.pop %v2881
        %v2962 = vrcp.pop %v2884
        %v2963 = vrcp.pop %v2887
        %v2964 = vrcp.pop %v2890
        %v2965 = vrcp.pop %v2893
        %v2966 = vrcp.pop %v2896
        %v2967 = vrcp.pop %v2899
        %v2968 = vrcp.pop %v2902
        %v2969 = vrcp.pop %v2905
        %v2970 = vrcp.pop %v2908
        %v2971 = vrcp.pop %v2911
        %v2972 = vrcp.pop %v2914
        %v2973 = vrcp.pop %v2917
        %v2974 = vrcp.pop %v2920
        %v2975 = vrcp.pop %v2923
        %v2976 = vrcp.pop %v2926
        %v2977 = vrcp.pop %v2929
        %v2978 = vrcp.pop %v2932
        %v2979 = vrcp.pop %v2935
        %v2980 = vrcp.pop %v2938
        %v2981 = vrcp.pop %v2941
        %v2982 = vrcp.pop %v2944
        %v2983 = vrcp.pop %v2947
        %v2984 = vrcp.pop %v2950
        %v2985 = vrcp.pop %v2953
        %v2986 = vpack.c.bf16 %v2797, %v2795
        %v2987 = vpack.c.bf16 %v2801, %v2799
        %v2988 = vpack.c.bf16 %v2805, %v2803
        %v2989 = vpack.c.bf16 %v2809, %v2807
        %v2990 = vpack.c.bf16 %v2813, %v2811
        %v2991 = vpack.c.bf16 %v2817, %v2815
        %v2992 = vpack.c.bf16 %v2821, %v2819
        %v2993 = vpack.c.bf16 %v2825, %v2823
        %v2994 = vpack.c.bf16 %v2829, %v2827
        %v2995 = vpack.c.bf16 %v2833, %v2831
        %v2996 = vpack.c.bf16 %v2837, %v2835
        %v2997 = vpack.c.bf16 %v2841, %v2839
        %v2998 = vpack.c.bf16 %v2845, %v2843
        %v2999 = vpack.c.bf16 %v2849, %v2847
        %v3000 = vpack.c.bf16 %v2853, %v2851
        %v3001 = vpack.c.bf16 %v2857, %v2855
        %3006 = vrot.lane.b32.xlu0 %v1132, 96
        %v3007 = vpop.permute.xlu0 %3006
        %3008 = vrot.lane.b32.xlu0 %v1133, 96
        %v3009 = vpop.permute.xlu0 %3008
        %3010 = vrot.lane.b32.xlu0 %v1134, 96
        %v3011 = vpop.permute.xlu0 %3010
        %3012 = vrot.lane.b32.xlu0 %v1135, 96
        %v3013 = vpop.permute.xlu0 %3012
        %v3019 = vsel %vm1505, %v2986, 0
        %v3022 = vsel %vm1505, %v2987, 0
        %v3025 = vsel %vm1505, %v2988, 0
        %v3028 = vsel %vm1505, %v2989, 0
        %3030 = vmatprep.subr.bf16.mxu0 0
        %3031 = vmatpush1.bf16.msra.mxu0 %v3007
        %3032 = vmatprep.subr.bf16.mxu0 0
        %3033 = vmatpush1.bf16.msra.mxu0 %v3009
        %3034 = vmatprep.subr.bf16.mxu0 0
        %3035 = vmatpush1.bf16.msra.mxu0 %v3011
        %3036 = vmatprep.subr.bf16.mxu0 0
        %3037 = vmatpush1.bf16.msra.mxu0 %v3013
        %3038 = vmatprep.subr.bf16.mxu0 0
        %3039 = vmatpush1.bf16.msra.mxu0 0
        %3040 = vmatprep.subr.bf16.mxu0 0
        %3041 = vmatpush1.bf16.msra.mxu0 0
        %3042 = vmatprep.subr.bf16.mxu0 0
        %3043 = vmatpush1.bf16.msra.mxu0 0
        %3044 = vmatprep.subr.bf16.mxu0 0
        %3045 = vmatpush1.bf16.msra.mxu0 0
        %3046 = vmatprep.subr.bf16.mxu0 0
        %3047 = vmatpush1.bf16.msra.mxu0 0
        %3048 = vmatprep.subr.bf16.mxu0 0
        %3049 = vmatpush1.bf16.msra.mxu0 0
        %3050 = vmatprep.subr.bf16.mxu0 0
        %3051 = vmatpush1.bf16.msra.mxu0 0
        %3052 = vmatprep.subr.bf16.mxu0 0
        %3053 = vmatpush1.bf16.msra.mxu0 0
        %3054 = vmatprep.subr.bf16.mxu0 0
        %3055 = vmatpush1.bf16.msra.mxu0 0
        %3056 = vmatprep.subr.bf16.mxu0 0
        %3057 = vmatpush1.bf16.msra.mxu0 0
        %3058 = vmatprep.subr.bf16.mxu0 0
        %3059 = vmatpush1.bf16.msra.mxu0 0
        %3060 = vmatprep.subr.bf16.mxu0 0
        %3061 = vmatpush1.bf16.msra.mxu0 0
        %3062 = vmatprep.mubr.bf16.mxu0 0
        %3063 = vmatmul.mubr.bf16.gmra.mrb[0].mxu0 %v3019
        %v3064 = vpop.f32.mrb[0].mxu0
        %v3065 = vadd.f32 0.0, %v3064
        %v3066 = vpop.f32.mrb[0].mxu0
        %v3067 = vpop.f32.mrb[0].mxu0
        %v3068 = vadd.f32 0.0, %v3067
        %v3069 = vpop.f32.mrb[0].mxu0
        %3070 = vmatprep.mubr.bf16.mxu0 0
        %3071 = vmatmul.mubr.bf16.gmra.mrb[0].mxu0 %v3022
        %v3072 = vpop.f32.mrb[0].mxu0
        %v3073 = vadd.f32 0.0, %v3072
        %v3074 = vpop.f32.mrb[0].mxu0
        %v3075 = vpop.f32.mrb[0].mxu0
        %v3076 = vadd.f32 0.0, %v3075
        %v3077 = vpop.f32.mrb[0].mxu0
        %3078 = vmatprep.mubr.bf16.mxu0 0
        %3079 = vmatmul.mubr.bf16.gmra.mrb[0].mxu0 %v3025
        %v3080 = vpop.f32.mrb[0].mxu0
        %v3081 = vadd.f32 0.0, %v3080
        %v3082 = vpop.f32.mrb[0].mxu0
        %v3083 = vpop.f32.mrb[0].mxu0
        %v3084 = vadd.f32 0.0, %v3083
        %v3085 = vpop.f32.mrb[0].mxu0
        %3086 = vmatprep.mubr.bf16.mxu0 0
        %3087 = vmatmul.mubr.bf16.gmra.mrb[0].mxu0 %v3028
        %v3088 = vpop.f32.mrb[0].mxu0
        %v3089 = vadd.f32 0.0, %v3088
        %v3090 = vpop.f32.mrb[0].mxu0
        %v3091 = vpop.f32.mrb[0].mxu0
        %v3092 = vadd.f32 0.0, %v3091
        %v3093 = vpop.f32.mrb[0].mxu0
        %3094 = vdwg.mxu0
        %3099 = vrot.lane.b32.xlu0 %v1136, 96
        %v3100 = vpop.permute.xlu0 %3099
        %3101 = vrot.lane.b32.xlu0 %v1137, 96
        %v3102 = vpop.permute.xlu0 %3101
        %3103 = vrot.lane.b32.xlu0 %v1138, 96
        %v3104 = vpop.permute.xlu0 %3103
        %3105 = vrot.lane.b32.xlu0 %v1139, 96
        %v3106 = vpop.permute.xlu0 %3105
        %v3112 = vsel %vm1505, %v2990, 0
        %v3115 = vsel %vm1505, %v2991, 0
        %v3118 = vsel %vm1505, %v2992, 0
        %v3121 = vsel %vm1505, %v2993, 0
        %3123 = vmatprep.subr.bf16.mxu0 0
        %3124 = vmatpush1.bf16.msra.mxu0 %v3100
        %3125 = vmatprep.subr.bf16.mxu0 0
        %3126 = vmatpush1.bf16.msra.mxu0 %v3102
        %3127 = vmatprep.subr.bf16.mxu0 0
        %3128 = vmatpush1.bf16.msra.mxu0 %v3104
        %3129 = vmatprep.subr.bf16.mxu0 0
        %3130 = vmatpush1.bf16.msra.mxu0 %v3106
        %3131 = vmatprep.subr.bf16.mxu0 0
        %3132 = vmatpush1.bf16.msra.mxu0 0
        %3133 = vmatprep.subr.bf16.mxu0 0
        %3134 = vmatpush1.bf16.msra.mxu0 0
        %3135 = vmatprep.subr.bf16.mxu0 0
        %3136 = vmatpush1.bf16.msra.mxu0 0
        %3137 = vmatprep.subr.bf16.mxu0 0
        %3138 = vmatpush1.bf16.msra.mxu0 0
        %3139 = vmatprep.subr.bf16.mxu0 0
        %3140 = vmatpush1.bf16.msra.mxu0 0
        %3141 = vmatprep.subr.bf16.mxu0 0
        %3142 = vmatpush1.bf16.msra.mxu0 0
        %3143 = vmatprep.subr.bf16.mxu0 0
        %3144 = vmatpush1.bf16.msra.mxu0 0
        %3145 = vmatprep.subr.bf16.mxu0 0
        %3146 = vmatpush1.bf16.msra.mxu0 0
        %3147 = vmatprep.subr.bf16.mxu0 0
        %3148 = vmatpush1.bf16.msra.mxu0 0
        %3149 = vmatprep.subr.bf16.mxu0 0
        %3150 = vmatpush1.bf16.msra.mxu0 0
        %3151 = vmatprep.subr.bf16.mxu0 0
        %3152 = vmatpush1.bf16.msra.mxu0 0
        %3153 = vmatprep.subr.bf16.mxu0 0
        %3154 = vmatpush1.bf16.msra.mxu0 0
        %3155 = vmatprep.mubr.bf16.mxu0 0
        %3156 = vmatmul.mubr.bf16.gmra.mrb[0].mxu0 %v3112
        %v3157 = vpop.f32.mrb[0].mxu0
        %v3158 = vadd.f32 0.0, %v3157
        %v3159 = vpop.f32.mrb[0].mxu0
        %v3160 = vpop.f32.mrb[0].mxu0
        %v3161 = vadd.f32 0.0, %v3160
        %v3162 = vpop.f32.mrb[0].mxu0
        %3163 = vmatprep.mubr.bf16.mxu0 0
        %3164 = vmatmul.mubr.bf16.gmra.mrb[0].mxu0 %v3115
        %v3165 = vpop.f32.mrb[0].mxu0
        %v3166 = vadd.f32 0.0, %v3165
        %v3167 = vpop.f32.mrb[0].mxu0
        %v3168 = vpop.f32.mrb[0].mxu0
        %v3169 = vadd.f32 0.0, %v3168
        %v3170 = vpop.f32.mrb[0].mxu0
        %3171 = vmatprep.mubr.bf16.mxu0 0
        %3172 = vmatmul.mubr.bf16.gmra.mrb[0].mxu0 %v3118
        %v3173 = vpop.f32.mrb[0].mxu0
        %v3174 = vadd.f32 0.0, %v3173
        %v3175 = vpop.f32.mrb[0].mxu0
        %v3176 = vpop.f32.mrb[0].mxu0
        %v3177 = vadd.f32 0.0, %v3176
        %v3178 = vpop.f32.mrb[0].mxu0
        %3179 = vmatprep.mubr.bf16.mxu0 0
        %3180 = vmatmul.mubr.bf16.gmra.mrb[0].mxu0 %v3121
        %v3181 = vpop.f32.mrb[0].mxu0
        %v3182 = vadd.f32 0.0, %v3181
        %v3183 = vpop.f32.mrb[0].mxu0
        %v3184 = vpop.f32.mrb[0].mxu0
        %v3185 = vadd.f32 0.0, %v3184
        %v3186 = vpop.f32.mrb[0].mxu0
        %3187 = vdwg.mxu0
        %3192 = vrot.lane.b32.xlu0 %v1140, 96
        %v3193 = vpop.permute.xlu0 %3192
        %3194 = vrot.lane.b32.xlu0 %v1141, 96
        %v3195 = vpop.permute.xlu0 %3194
        %3196 = vrot.lane.b32.xlu0 %v1142, 96
        %v3197 = vpop.permute.xlu0 %3196
        %3198 = vrot.lane.b32.xlu0 %v1143, 96
        %v3199 = vpop.permute.xlu0 %3198
        %v3205 = vsel %vm1505, %v2994, 0
        %v3208 = vsel %vm1505, %v2995, 0
        %v3211 = vsel %vm1505, %v2996, 0
        %v3214 = vsel %vm1505, %v2997, 0
        %3216 = vmatprep.subr.bf16.mxu0 0
        %3217 = vmatpush1.bf16.msra.mxu0 %v3193
        %3218 = vmatprep.subr.bf16.mxu0 0
        %3219 = vmatpush1.bf16.msra.mxu0 %v3195
        %3220 = vmatprep.subr.bf16.mxu0 0
        %3221 = vmatpush1.bf16.msra.mxu0 %v3197
        %3222 = vmatprep.subr.bf16.mxu0 0
        %3223 = vmatpush1.bf16.msra.mxu0 %v3199
        %3224 = vmatprep.subr.bf16.mxu0 0
        %3225 = vmatpush1.bf16.msra.mxu0 0
        %3226 = vmatprep.subr.bf16.mxu0 0
        %3227 = vmatpush1.bf16.msra.mxu0 0
        %3228 = vmatprep.subr.bf16.mxu0 0
        %3229 = vmatpush1.bf16.msra.mxu0 0
        %3230 = vmatprep.subr.bf16.mxu0 0
        %3231 = vmatpush1.bf16.msra.mxu0 0
        %3232 = vmatprep.subr.bf16.mxu0 0
        %3233 = vmatpush1.bf16.msra.mxu0 0
        %3234 = vmatprep.subr.bf16.mxu0 0
        %3235 = vmatpush1.bf16.msra.mxu0 0
        %3236 = vmatprep.subr.bf16.mxu0 0
        %3237 = vmatpush1.bf16.msra.mxu0 0
        %3238 = vmatprep.subr.bf16.mxu0 0
        %3239 = vmatpush1.bf16.msra.mxu0 0
        %3240 = vmatprep.subr.bf16.mxu0 0
        %3241 = vmatpush1.bf16.msra.mxu0 0
        %3242 = vmatprep.subr.bf16.mxu0 0
        %3243 = vmatpush1.bf16.msra.mxu0 0
        %3244 = vmatprep.subr.bf16.mxu0 0
        %3245 = vmatpush1.bf16.msra.mxu0 0
        %3246 = vmatprep.subr.bf16.mxu0 0
        %3247 = vmatpush1.bf16.msra.mxu0 0
        %3248 = vmatprep.mubr.bf16.mxu0 0
        %3249 = vmatmul.mubr.bf16.gmra.mrb[0].mxu0 %v3205
        %v3250 = vpop.f32.mrb[0].mxu0
        %v3251 = vadd.f32 0.0, %v3250
        %v3252 = vpop.f32.mrb[0].mxu0
        %v3253 = vpop.f32.mrb[0].mxu0
        %v3254 = vadd.f32 0.0, %v3253
        %v3255 = vpop.f32.mrb[0].mxu0
        %3256 = vmatprep.mubr.bf16.mxu0 0
        %3257 = vmatmul.mubr.bf16.gmra.mrb[0].mxu0 %v3208
        %v3258 = vpop.f32.mrb[0].mxu0
        %v3259 = vadd.f32 0.0, %v3258
        %v3260 = vpop.f32.mrb[0].mxu0
        %v3261 = vpop.f32.mrb[0].mxu0
        %v3262 = vadd.f32 0.0, %v3261
        %v3263 = vpop.f32.mrb[0].mxu0
        %3264 = vmatprep.mubr.bf16.mxu0 0
        %3265 = vmatmul.mubr.bf16.gmra.mrb[0].mxu0 %v3211
        %v3266 = vpop.f32.mrb[0].mxu0
        %v3267 = vadd.f32 0.0, %v3266
        %v3268 = vpop.f32.mrb[0].mxu0
        %v3269 = vpop.f32.mrb[0].mxu0
        %v3270 = vadd.f32 0.0, %v3269
        %v3271 = vpop.f32.mrb[0].mxu0
        %3272 = vmatprep.mubr.bf16.mxu0 0
        %3273 = vmatmul.mubr.bf16.gmra.mrb[0].mxu0 %v3214
        %v3274 = vpop.f32.mrb[0].mxu0
        %v3275 = vadd.f32 0.0, %v3274
        %v3276 = vpop.f32.mrb[0].mxu0
        %v3277 = vpop.f32.mrb[0].mxu0
        %v3278 = vadd.f32 0.0, %v3277
        %v3279 = vpop.f32.mrb[0].mxu0
        %3280 = vdwg.mxu0
        %3285 = vrot.lane.b32.xlu0 %v1144, 96
        %v3286 = vpop.permute.xlu0 %3285
        %3287 = vrot.lane.b32.xlu0 %v1145, 96
        %v3288 = vpop.permute.xlu0 %3287
        %3289 = vrot.lane.b32.xlu0 %v1146, 96
        %v3290 = vpop.permute.xlu0 %3289
        %3291 = vrot.lane.b32.xlu0 %v1147, 96
        %v3292 = vpop.permute.xlu0 %3291
        %v3298 = vsel %vm1505, %v2998, 0
        %v3301 = vsel %vm1505, %v2999, 0
        %v3304 = vsel %vm1505, %v3000, 0
        %v3307 = vsel %vm1505, %v3001, 0
        %3309 = vmatprep.subr.bf16.mxu0 0
        %3310 = vmatpush1.bf16.msra.mxu0 %v3286
        %3311 = vmatprep.subr.bf16.mxu0 0
        %3312 = vmatpush1.bf16.msra.mxu0 %v3288
        %3313 = vmatprep.subr.bf16.mxu0 0
        %3314 = vmatpush1.bf16.msra.mxu0 %v3290
        %3315 = vmatprep.subr.bf16.mxu0 0
        %3316 = vmatpush1.bf16.msra.mxu0 %v3292
        %3317 = vmatprep.subr.bf16.mxu0 0
        %3318 = vmatpush1.bf16.msra.mxu0 0
        %3319 = vmatprep.subr.bf16.mxu0 0
        %3320 = vmatpush1.bf16.msra.mxu0 0
        %3321 = vmatprep.subr.bf16.mxu0 0
        %3322 = vmatpush1.bf16.msra.mxu0 0
        %3323 = vmatprep.subr.bf16.mxu0 0
        %3324 = vmatpush1.bf16.msra.mxu0 0
        %3325 = vmatprep.subr.bf16.mxu0 0
        %3326 = vmatpush1.bf16.msra.mxu0 0
        %3327 = vmatprep.subr.bf16.mxu0 0
        %3328 = vmatpush1.bf16.msra.mxu0 0
        %3329 = vmatprep.subr.bf16.mxu0 0
        %3330 = vmatpush1.bf16.msra.mxu0 0
        %3331 = vmatprep.subr.bf16.mxu0 0
        %3332 = vmatpush1.bf16.msra.mxu0 0
        %3333 = vmatprep.subr.bf16.mxu0 0
        %3334 = vmatpush1.bf16.msra.mxu0 0
        %3335 = vmatprep.subr.bf16.mxu0 0
        %3336 = vmatpush1.bf16.msra.mxu0 0
        %3337 = vmatprep.subr.bf16.mxu0 0
        %3338 = vmatpush1.bf16.msra.mxu0 0
        %3339 = vmatprep.subr.bf16.mxu0 0
        %3340 = vmatpush1.bf16.msra.mxu0 0
        %3341 = vmatprep.mubr.bf16.mxu0 0
        %3342 = vmatmul.mubr.bf16.gmra.mrb[0].mxu0 %v3298
        %v3343 = vpop.f32.mrb[0].mxu0
        %v3344 = vadd.f32 0.0, %v3343
        %v3345 = vpop.f32.mrb[0].mxu0
        %v3346 = vpop.f32.mrb[0].mxu0
        %v3347 = vadd.f32 0.0, %v3346
        %v3348 = vpop.f32.mrb[0].mxu0
        %3349 = vmatprep.mubr.bf16.mxu0 0
        %3350 = vmatmul.mubr.bf16.gmra.mrb[0].mxu0 %v3301
        %v3351 = vpop.f32.mrb[0].mxu0
        %v3352 = vadd.f32 0.0, %v3351
        %v3353 = vpop.f32.mrb[0].mxu0
        %v3354 = vpop.f32.mrb[0].mxu0
        %v3355 = vadd.f32 0.0, %v3354
        %v3356 = vpop.f32.mrb[0].mxu0
        %3357 = vmatprep.mubr.bf16.mxu0 0
        %3358 = vmatmul.mubr.bf16.gmra.mrb[0].mxu0 %v3304
        %v3359 = vpop.f32.mrb[0].mxu0
        %v3360 = vadd.f32 0.0, %v3359
        %v3361 = vpop.f32.mrb[0].mxu0
        %v3362 = vpop.f32.mrb[0].mxu0
        %v3363 = vadd.f32 0.0, %v3362
        %v3364 = vpop.f32.mrb[0].mxu0
        %3365 = vmatprep.mubr.bf16.mxu0 0
        %3366 = vmatmul.mubr.bf16.gmra.mrb[0].mxu0 %v3307
        %v3367 = vpop.f32.mrb[0].mxu0
        %v3368 = vadd.f32 0.0, %v3367
        %v3369 = vpop.f32.mrb[0].mxu0
        %v3370 = vpop.f32.mrb[0].mxu0
        %v3371 = vadd.f32 0.0, %v3370
        %v3372 = vpop.f32.mrb[0].mxu0
        %3373 = vdwg.mxu0
        %v3374 = vmul.f32 %v3065, %v2954
        %v3375 = vmul.f32 %v3068, %v2955
        %v3376 = vmul.f32 %v3073, %v2956
        %v3377 = vmul.f32 %v3076, %v2957
        %v3378 = vmul.f32 %v3081, %v2958
        %v3379 = vmul.f32 %v3084, %v2959
        %v3380 = vmul.f32 %v3089, %v2960
        %v3381 = vmul.f32 %v3092, %v2961
        %v3382 = vmul.f32 %v3158, %v2962
        %v3383 = vmul.f32 %v3161, %v2963
        %v3384 = vmul.f32 %v3166, %v2964
        %v3385 = vmul.f32 %v3169, %v2965
        %v3386 = vmul.f32 %v3174, %v2966
        %v3387 = vmul.f32 %v3177, %v2967
        %v3388 = vmul.f32 %v3182, %v2968
        %v3389 = vmul.f32 %v3185, %v2969
        %v3390 = vmul.f32 %v3251, %v2970
        %v3391 = vmul.f32 %v3254, %v2971
        %v3392 = vmul.f32 %v3259, %v2972
        %v3393 = vmul.f32 %v3262, %v2973
        %v3394 = vmul.f32 %v3267, %v2974
        %v3395 = vmul.f32 %v3270, %v2975
        %v3396 = vmul.f32 %v3275, %v2976
        %v3397 = vmul.f32 %v3278, %v2977
        %v3398 = vmul.f32 %v3344, %v2978
        %v3399 = vmul.f32 %v3347, %v2979
        %v3400 = vmul.f32 %v3352, %v2980
        %v3401 = vmul.f32 %v3355, %v2981
        %v3402 = vmul.f32 %v3360, %v2982
        %v3403 = vmul.f32 %v3363, %v2983
        %v3404 = vmul.f32 %v3368, %v2984
        %v3405 = vmul.f32 %v3371, %v2985
        %3438 = vrot.lane.b32.xlu0 %v3374, 32
        %v3439 = vpop.permute.xlu0 %3438
        %3440 = vrot.lane.b32.xlu0 %v3375, 32
        %v3441 = vpop.permute.xlu0 %3440
        %3442 = vrot.lane.b32.xlu0 %v3376, 32
        %v3443 = vpop.permute.xlu0 %3442
        %3444 = vrot.lane.b32.xlu0 %v3377, 32
        %v3445 = vpop.permute.xlu0 %3444
        %3446 = vrot.lane.b32.xlu0 %v3378, 32
        %v3447 = vpop.permute.xlu0 %3446
        %3448 = vrot.lane.b32.xlu0 %v3379, 32
        %v3449 = vpop.permute.xlu0 %3448
        %3450 = vrot.lane.b32.xlu0 %v3380, 32
        %v3451 = vpop.permute.xlu0 %3450
        %3452 = vrot.lane.b32.xlu0 %v3381, 32
        %v3453 = vpop.permute.xlu0 %3452
        %3454 = vrot.lane.b32.xlu0 %v3382, 32
        %v3455 = vpop.permute.xlu0 %3454
        %3456 = vrot.lane.b32.xlu0 %v3383, 32
        %v3457 = vpop.permute.xlu0 %3456
        %3458 = vrot.lane.b32.xlu0 %v3384, 32
        %v3459 = vpop.permute.xlu0 %3458
        %3460 = vrot.lane.b32.xlu0 %v3385, 32
        %v3461 = vpop.permute.xlu0 %3460
        %3462 = vrot.lane.b32.xlu0 %v3386, 32
        %v3463 = vpop.permute.xlu0 %3462
        %3464 = vrot.lane.b32.xlu0 %v3387, 32
        %v3465 = vpop.permute.xlu0 %3464
        %3466 = vrot.lane.b32.xlu0 %v3388, 32
        %v3467 = vpop.permute.xlu0 %3466
        %3468 = vrot.lane.b32.xlu0 %v3389, 32
        %v3469 = vpop.permute.xlu0 %3468
        %3470 = vrot.lane.b32.xlu0 %v3390, 32
        %v3471 = vpop.permute.xlu0 %3470
        %3472 = vrot.lane.b32.xlu0 %v3391, 32
        %v3473 = vpop.permute.xlu0 %3472
        %3474 = vrot.lane.b32.xlu0 %v3392, 32
        %v3475 = vpop.permute.xlu0 %3474
        %3476 = vrot.lane.b32.xlu0 %v3393, 32
        %v3477 = vpop.permute.xlu0 %3476
        %3478 = vrot.lane.b32.xlu0 %v3394, 32
        %v3479 = vpop.permute.xlu0 %3478
        %3480 = vrot.lane.b32.xlu0 %v3395, 32
        %v3481 = vpop.permute.xlu0 %3480
        %3482 = vrot.lane.b32.xlu0 %v3396, 32
        %v3483 = vpop.permute.xlu0 %3482
        %3484 = vrot.lane.b32.xlu0 %v3397, 32
        %v3485 = vpop.permute.xlu0 %3484
        %3486 = vrot.lane.b32.xlu0 %v3398, 32
        %v3487 = vpop.permute.xlu0 %3486
        %3488 = vrot.lane.b32.xlu0 %v3399, 32
        %v3489 = vpop.permute.xlu0 %3488
        %3490 = vrot.lane.b32.xlu0 %v3400, 32
        %v3491 = vpop.permute.xlu0 %3490
        %3492 = vrot.lane.b32.xlu0 %v3401, 32
        %v3493 = vpop.permute.xlu0 %3492
        %3494 = vrot.lane.b32.xlu0 %v3402, 32
        %v3495 = vpop.permute.xlu0 %3494
        %3496 = vrot.lane.b32.xlu0 %v3403, 32
        %v3497 = vpop.permute.xlu0 %3496
        %3498 = vrot.lane.b32.xlu0 %v3404, 32
        %v3499 = vpop.permute.xlu0 %3498
        %3500 = vrot.lane.b32.xlu0 %v3405, 32
        %v3501 = vpop.permute.xlu0 %3500
        %vm3534 = vcmask 523520
        %3535 = vst.msk [vmem:[#allocation2] sm:$0xff] %vm3534, %v3439
        %3536 = vst.msk [vmem:[#allocation2 + $0x8] sm:$0xff] %vm3534, %v3441
        %3537 = vst.msk [vmem:[#allocation2 + $0x10] sm:$0xff] %vm3534, %v3443
        %3538 = vst.msk [vmem:[#allocation2 + $0x18] sm:$0xff] %vm3534, %v3445
        %3539 = vst.msk [vmem:[#allocation2 + $0x20] sm:$0xff] %vm3534, %v3447
        %3540 = vst.msk [vmem:[#allocation2 + $0x28] sm:$0xff] %vm3534, %v3449
        %3541 = vst.msk [vmem:[#allocation2 + $0x30] sm:$0xff] %vm3534, %v3451
        %3542 = vst.msk [vmem:[#allocation2 + $0x38] sm:$0xff] %vm3534, %v3453
        %3543 = vst.msk [vmem:[#allocation2 + $0x40] sm:$0xff] %vm3534, %v3455
        %3544 = vst.msk [vmem:[#allocation2 + $0x48] sm:$0xff] %vm3534, %v3457
        %3545 = vst.msk [vmem:[#allocation2 + $0x50] sm:$0xff] %vm3534, %v3459
        %3546 = vst.msk [vmem:[#allocation2 + $0x58] sm:$0xff] %vm3534, %v3461
        %3547 = vst.msk [vmem:[#allocation2 + $0x60] sm:$0xff] %vm3534, %v3463
        %3548 = vst.msk [vmem:[#allocation2 + $0x68] sm:$0xff] %vm3534, %v3465
        %3549 = vst.msk [vmem:[#allocation2 + $0x70] sm:$0xff] %vm3534, %v3467
        %3550 = vst.msk [vmem:[#allocation2 + $0x78] sm:$0xff] %vm3534, %v3469
        %3551 = vst.msk [vmem:[#allocation2 + $0x80] sm:$0xff] %vm3534, %v3471
        %3552 = vst.msk [vmem:[#allocation2 + $0x88] sm:$0xff] %vm3534, %v3473
        %3553 = vst.msk [vmem:[#allocation2 + $0x90] sm:$0xff] %vm3534, %v3475
        %3554 = vst.msk [vmem:[#allocation2 + $0x98] sm:$0xff] %vm3534, %v3477
        %3555 = vst.msk [vmem:[#allocation2 + $0xa0] sm:$0xff] %vm3534, %v3479
        %3556 = vst.msk [vmem:[#allocation2 + $0xa8] sm:$0xff] %vm3534, %v3481
        %3557 = vst.msk [vmem:[#allocation2 + $0xb0] sm:$0xff] %vm3534, %v3483
        %3558 = vst.msk [vmem:[#allocation2 + $0xb8] sm:$0xff] %vm3534, %v3485
        %3559 = vst.msk [vmem:[#allocation2 + $0xc0] sm:$0xff] %vm3534, %v3487
        %3560 = vst.msk [vmem:[#allocation2 + $0xc8] sm:$0xff] %vm3534, %v3489
        %3561 = vst.msk [vmem:[#allocation2 + $0xd0] sm:$0xff] %vm3534, %v3491
        %3562 = vst.msk [vmem:[#allocation2 + $0xd8] sm:$0xff] %vm3534, %v3493
        %3563 = vst.msk [vmem:[#allocation2 + $0xe0] sm:$0xff] %vm3534, %v3495
        %3564 = vst.msk [vmem:[#allocation2 + $0xe8] sm:$0xff] %vm3534, %v3497
        %3565 = vst.msk [vmem:[#allocation2 + $0xf0] sm:$0xff] %vm3534, %v3499
        %3566 = vst.msk [vmem:[#allocation2 + $0xf8] sm:$0xff] %vm3534, %v3501
        %3567 = vrot.lane.b32.xlu0 %v1100, 64
        %v3568 = vpop.permute.xlu0 %3567
        %3569 = vrot.lane.b32.xlu0 %v1101, 64
        %v3570 = vpop.permute.xlu0 %3569
        %3571 = vrot.lane.b32.xlu0 %v1102, 64
        %v3572 = vpop.permute.xlu0 %3571
        %3573 = vrot.lane.b32.xlu0 %v1103, 64
        %v3574 = vpop.permute.xlu0 %3573
        %3575 = vrot.lane.b32.xlu0 %v1116, 64
        %v3576 = vpop.permute.xlu0 %3575
        %3577 = vrot.lane.b32.xlu0 %v1117, 64
        %v3578 = vpop.permute.xlu0 %3577
        %3579 = vrot.lane.b32.xlu0 %v1118, 64
        %v3580 = vpop.permute.xlu0 %3579
        %3581 = vrot.lane.b32.xlu0 %v1119, 64
        %v3582 = vpop.permute.xlu0 %3581
        %v3584 = vsel %vm1148, %v3568, 0
        %v3587 = vsel %vm1148, %v3570, 0
        %v3590 = vsel %vm1148, %v3572, 0
        %v3593 = vsel %vm1148, %v3574, 0
        %v3596 = vsel %vm1148, %v3576, 0
        %v3599 = vsel %vm1148, %v3578, 0
        %v3602 = vsel %vm1148, %v3580, 0
        %v3605 = vsel %vm1148, %v3582, 0
        %3607 = vmatprep.subr.bf16.mxu0 0
        %3608 = vmatpush1.bf16.xpose.msra.mxu0 %v3596
        %3609 = vmatprep.subr.bf16.mxu0 0
        %3610 = vmatpush1.bf16.xpose.msra.mxu0 %v3599
        %3611 = vmatprep.subr.bf16.mxu0 0
        %3612 = vmatpush1.bf16.xpose.msra.mxu0 %v3602
        %3613 = vmatprep.subr.bf16.mxu0 0
        %3614 = vmatpush1.bf16.xpose.msra.mxu0 %v3605
        %3615 = vmatprep.subr.bf16.mxu0 0
        %3616 = vmatpush1.bf16.xpose.msra.mxu0 0
        %3617 = vmatprep.subr.bf16.mxu0 0
        %3618 = vmatpush1.bf16.xpose.msra.mxu0 0
        %3619 = vmatprep.subr.bf16.mxu0 0
        %3620 = vmatpush1.bf16.xpose.msra.mxu0 0
        %3621 = vmatprep.subr.bf16.mxu0 0
        %3622 = vmatpush1.bf16.xpose.msra.mxu0 0
        %3623 = vmatprep.subr.bf16.mxu0 0
        %3624 = vmatpush1.bf16.xpose.msra.mxu0 0
        %3625 = vmatprep.subr.bf16.mxu0 0
        %3626 = vmatpush1.bf16.xpose.msra.mxu0 0
        %3627 = vmatprep.subr.bf16.mxu0 0
        %3628 = vmatpush1.bf16.xpose.msra.mxu0 0
        %3629 = vmatprep.subr.bf16.mxu0 0
        %3630 = vmatpush1.bf16.xpose.msra.mxu0 0
        %3631 = vmatprep.subr.bf16.mxu0 0
        %3632 = vmatpush1.bf16.xpose.msra.mxu0 0
        %3633 = vmatprep.subr.bf16.mxu0 0
        %3634 = vmatpush1.bf16.xpose.msra.mxu0 0
        %3635 = vmatprep.subr.bf16.mxu0 0
        %3636 = vmatpush1.bf16.xpose.msra.mxu0 0
        %3637 = vmatprep.subr.bf16.mxu0 0
        %3638 = vmatpush1.bf16.xpose.msra.mxu0 0
        %3639 = vmatprep.mubr.bf16.mxu0 0
        %3640 = vmatmul.mubr.bf16.gmra.mrb[0].mxu0 %v3584
        %v3641 = vpop.f32.mrb[0].mxu0
        %v3642 = vadd.f32 0.0, %v3641
        %v3643 = vpop.f32.mrb[0].mxu0
        %v3644 = vpop.f32.mrb[0].mxu0
        %v3645 = vadd.f32 0.0, %v3644
        %v3646 = vpop.f32.mrb[0].mxu0
        %3647 = vmatprep.mubr.bf16.mxu0 0
        %3648 = vmatmul.mubr.bf16.gmra.mrb[0].mxu0 %v3587
        %v3649 = vpop.f32.mrb[0].mxu0
        %v3650 = vadd.f32 0.0, %v3649
        %v3651 = vpop.f32.mrb[0].mxu0
        %v3652 = vpop.f32.mrb[0].mxu0
        %v3653 = vadd.f32 0.0, %v3652
        %v3654 = vpop.f32.mrb[0].mxu0
        %3655 = vmatprep.mubr.bf16.mxu0 0
        %3656 = vmatmul.mubr.bf16.gmra.mrb[0].mxu0 %v3590
        %v3657 = vpop.f32.mrb[0].mxu0
        %v3658 = vadd.f32 0.0, %v3657
        %v3659 = vpop.f32.mrb[0].mxu0
        %v3660 = vpop.f32.mrb[0].mxu0
        %v3661 = vadd.f32 0.0, %v3660
        %v3662 = vpop.f32.mrb[0].mxu0
        %3663 = vmatprep.mubr.bf16.mxu0 0
        %3664 = vmatmul.mubr.bf16.gmra.mrb[0].mxu0 %v3593
        %v3665 = vpop.f32.mrb[0].mxu0
        %v3666 = vadd.f32 0.0, %v3665
        %v3667 = vpop.f32.mrb[0].mxu0
        %v3668 = vpop.f32.mrb[0].mxu0
        %v3669 = vadd.f32 0.0, %v3668
        %v3670 = vpop.f32.mrb[0].mxu0
        %3671 = vdwg.mxu0
        %3672 = vrot.lane.b32.xlu0 %v1104, 64
        %v3673 = vpop.permute.xlu0 %3672
        %3674 = vrot.lane.b32.xlu0 %v1105, 64
        %v3675 = vpop.permute.xlu0 %3674
        %3676 = vrot.lane.b32.xlu0 %v1106, 64
        %v3677 = vpop.permute.xlu0 %3676
        %3678 = vrot.lane.b32.xlu0 %v1107, 64
        %v3679 = vpop.permute.xlu0 %3678
        %3680 = vrot.lane.b32.xlu0 %v1120, 64
        %v3681 = vpop.permute.xlu0 %3680
        %3682 = vrot.lane.b32.xlu0 %v1121, 64
        %v3683 = vpop.permute.xlu0 %3682
        %3684 = vrot.lane.b32.xlu0 %v1122, 64
        %v3685 = vpop.permute.xlu0 %3684
        %3686 = vrot.lane.b32.xlu0 %v1123, 64
        %v3687 = vpop.permute.xlu0 %3686
        %v3689 = vsel %vm1148, %v3673, 0
        %v3692 = vsel %vm1148, %v3675, 0
        %v3695 = vsel %vm1148, %v3677, 0
        %v3698 = vsel %vm1148, %v3679, 0
        %v3701 = vsel %vm1148, %v3681, 0
        %v3704 = vsel %vm1148, %v3683, 0
        %v3707 = vsel %vm1148, %v3685, 0
        %v3710 = vsel %vm1148, %v3687, 0
        %3712 = vmatprep.subr.bf16.mxu0 0
        %3713 = vmatpush1.bf16.xpose.msra.mxu0 %v3701
        %3714 = vmatprep.subr.bf16.mxu0 0
        %3715 = vmatpush1.bf16.xpose.msra.mxu0 %v3704
        %3716 = vmatprep.subr.bf16.mxu0 0
        %3717 = vmatpush1.bf16.xpose.msra.mxu0 %v3707
        %3718 = vmatprep.subr.bf16.mxu0 0
        %3719 = vmatpush1.bf16.xpose.msra.mxu0 %v3710
        %3720 = vmatprep.subr.bf16.mxu0 0
        %3721 = vmatpush1.bf16.xpose.msra.mxu0 0
        %3722 = vmatprep.subr.bf16.mxu0 0
        %3723 = vmatpush1.bf16.xpose.msra.mxu0 0
        %3724 = vmatprep.subr.bf16.mxu0 0
        %3725 = vmatpush1.bf16.xpose.msra.mxu0 0
        %3726 = vmatprep.subr.bf16.mxu0 0
        %3727 = vmatpush1.bf16.xpose.msra.mxu0 0
        %3728 = vmatprep.subr.bf16.mxu0 0
        %3729 = vmatpush1.bf16.xpose.msra.mxu0 0
        %3730 = vmatprep.subr.bf16.mxu0 0
        %3731 = vmatpush1.bf16.xpose.msra.mxu0 0
        %3732 = vmatprep.subr.bf16.mxu0 0
        %3733 = vmatpush1.bf16.xpose.msra.mxu0 0
        %3734 = vmatprep.subr.bf16.mxu0 0
        %3735 = vmatpush1.bf16.xpose.msra.mxu0 0
        %3736 = vmatprep.subr.bf16.mxu0 0
        %3737 = vmatpush1.bf16.xpose.msra.mxu0 0
        %3738 = vmatprep.subr.bf16.mxu0 0
        %3739 = vmatpush1.bf16.xpose.msra.mxu0 0
        %3740 = vmatprep.subr.bf16.mxu0 0
        %3741 = vmatpush1.bf16.xpose.msra.mxu0 0
        %3742 = vmatprep.subr.bf16.mxu0 0
        %3743 = vmatpush1.bf16.xpose.msra.mxu0 0
        %3744 = vmatprep.mubr.bf16.mxu0 0
        %3745 = vmatmul.mubr.bf16.gmra.mrb[0].mxu0 %v3689
        %v3746 = vpop.f32.mrb[0].mxu0
        %v3747 = vadd.f32 0.0, %v3746
        %v3748 = vpop.f32.mrb[0].mxu0
        %v3749 = vpop.f32.mrb[0].mxu0
        %v3750 = vadd.f32 0.0, %v3749
        %v3751 = vpop.f32.mrb[0].mxu0
        %3752 = vmatprep.mubr.bf16.mxu0 0
        %3753 = vmatmul.mubr.bf16.gmra.mrb[0].mxu0 %v3692
        %v3754 = vpop.f32.mrb[0].mxu0
        %v3755 = vadd.f32 0.0, %v3754
        %v3756 = vpop.f32.mrb[0].mxu0
        %v3757 = vpop.f32.mrb[0].mxu0
        %v3758 = vadd.f32 0.0, %v3757
        %v3759 = vpop.f32.mrb[0].mxu0
        %3760 = vmatprep.mubr.bf16.mxu0 0
        %3761 = vmatmul.mubr.bf16.gmra.mrb[0].mxu0 %v3695
        %v3762 = vpop.f32.mrb[0].mxu0
        %v3763 = vadd.f32 0.0, %v3762
        %v3764 = vpop.f32.mrb[0].mxu0
        %v3765 = vpop.f32.mrb[0].mxu0
        %v3766 = vadd.f32 0.0, %v3765
        %v3767 = vpop.f32.mrb[0].mxu0
        %3768 = vmatprep.mubr.bf16.mxu0 0
        %3769 = vmatmul.mubr.bf16.gmra.mrb[0].mxu0 %v3698
        %v3770 = vpop.f32.mrb[0].mxu0
        %v3771 = vadd.f32 0.0, %v3770
        %v3772 = vpop.f32.mrb[0].mxu0
        %v3773 = vpop.f32.mrb[0].mxu0
        %v3774 = vadd.f32 0.0, %v3773
        %v3775 = vpop.f32.mrb[0].mxu0
        %3776 = vdwg.mxu0
        %3777 = vrot.lane.b32.xlu0 %v1108, 64
        %v3778 = vpop.permute.xlu0 %3777
        %3779 = vrot.lane.b32.xlu0 %v1109, 64
        %v3780 = vpop.permute.xlu0 %3779
        %3781 = vrot.lane.b32.xlu0 %v1110, 64
        %v3782 = vpop.permute.xlu0 %3781
        %3783 = vrot.lane.b32.xlu0 %v1111, 64
        %v3784 = vpop.permute.xlu0 %3783
        %3785 = vrot.lane.b32.xlu0 %v1124, 64
        %v3786 = vpop.permute.xlu0 %3785
        %3787 = vrot.lane.b32.xlu0 %v1125, 64
        %v3788 = vpop.permute.xlu0 %3787
        %3789 = vrot.lane.b32.xlu0 %v1126, 64
        %v3790 = vpop.permute.xlu0 %3789
        %3791 = vrot.lane.b32.xlu0 %v1127, 64
        %v3792 = vpop.permute.xlu0 %3791
        %v3794 = vsel %vm1148, %v3778, 0
        %v3797 = vsel %vm1148, %v3780, 0
        %v3800 = vsel %vm1148, %v3782, 0
        %v3803 = vsel %vm1148, %v3784, 0
        %v3806 = vsel %vm1148, %v3786, 0
        %v3809 = vsel %vm1148, %v3788, 0
        %v3812 = vsel %vm1148, %v3790, 0
        %v3815 = vsel %vm1148, %v3792, 0
        %3817 = vmatprep.subr.bf16.mxu0 0
        %3818 = vmatpush1.bf16.xpose.msra.mxu0 %v3806
        %3819 = vmatprep.subr.bf16.mxu0 0
        %3820 = vmatpush1.bf16.xpose.msra.mxu0 %v3809
        %3821 = vmatprep.subr.bf16.mxu0 0
        %3822 = vmatpush1.bf16.xpose.msra.mxu0 %v3812
        %3823 = vmatprep.subr.bf16.mxu0 0
        %3824 = vmatpush1.bf16.xpose.msra.mxu0 %v3815
        %3825 = vmatprep.subr.bf16.mxu0 0
        %3826 = vmatpush1.bf16.xpose.msra.mxu0 0
        %3827 = vmatprep.subr.bf16.mxu0 0
        %3828 = vmatpush1.bf16.xpose.msra.mxu0 0
        %3829 = vmatprep.subr.bf16.mxu0 0
        %3830 = vmatpush1.bf16.xpose.msra.mxu0 0
        %3831 = vmatprep.subr.bf16.mxu0 0
        %3832 = vmatpush1.bf16.xpose.msra.mxu0 0
        %3833 = vmatprep.subr.bf16.mxu0 0
        %3834 = vmatpush1.bf16.xpose.msra.mxu0 0
        %3835 = vmatprep.subr.bf16.mxu0 0
        %3836 = vmatpush1.bf16.xpose.msra.mxu0 0
        %3837 = vmatprep.subr.bf16.mxu0 0
        %3838 = vmatpush1.bf16.xpose.msra.mxu0 0
        %3839 = vmatprep.subr.bf16.mxu0 0
        %3840 = vmatpush1.bf16.xpose.msra.mxu0 0
        %3841 = vmatprep.subr.bf16.mxu0 0
        %3842 = vmatpush1.bf16.xpose.msra.mxu0 0
        %3843 = vmatprep.subr.bf16.mxu0 0
        %3844 = vmatpush1.bf16.xpose.msra.mxu0 0
        %3845 = vmatprep.subr.bf16.mxu0 0
        %3846 = vmatpush1.bf16.xpose.msra.mxu0 0
        %3847 = vmatprep.subr.bf16.mxu0 0
        %3848 = vmatpush1.bf16.xpose.msra.mxu0 0
        %3849 = vmatprep.mubr.bf16.mxu0 0
        %3850 = vmatmul.mubr.bf16.gmra.mrb[0].mxu0 %v3794
        %v3851 = vpop.f32.mrb[0].mxu0
        %v3852 = vadd.f32 0.0, %v3851
        %v3853 = vpop.f32.mrb[0].mxu0
        %v3854 = vpop.f32.mrb[0].mxu0
        %v3855 = vadd.f32 0.0, %v3854
        %v3856 = vpop.f32.mrb[0].mxu0
        %3857 = vmatprep.mubr.bf16.mxu0 0
        %3858 = vmatmul.mubr.bf16.gmra.mrb[0].mxu0 %v3797
        %v3859 = vpop.f32.mrb[0].mxu0
        %v3860 = vadd.f32 0.0, %v3859
        %v3861 = vpop.f32.mrb[0].mxu0
        %v3862 = vpop.f32.mrb[0].mxu0
        %v3863 = vadd.f32 0.0, %v3862
        %v3864 = vpop.f32.mrb[0].mxu0
        %3865 = vmatprep.mubr.bf16.mxu0 0
        %3866 = vmatmul.mubr.bf16.gmra.mrb[0].mxu0 %v3800
        %v3867 = vpop.f32.mrb[0].mxu0
        %v3868 = vadd.f32 0.0, %v3867
        %v3869 = vpop.f32.mrb[0].mxu0
        %v3870 = vpop.f32.mrb[0].mxu0
        %v3871 = vadd.f32 0.0, %v3870
        %v3872 = vpop.f32.mrb[0].mxu0
        %3873 = vmatprep.mubr.bf16.mxu0 0
        %3874 = vmatmul.mubr.bf16.gmra.mrb[0].mxu0 %v3803
        %v3875 = vpop.f32.mrb[0].mxu0
        %v3876 = vadd.f32 0.0, %v3875
        %v3877 = vpop.f32.mrb[0].mxu0
        %v3878 = vpop.f32.mrb[0].mxu0
        %v3879 = vadd.f32 0.0, %v3878
        %v3880 = vpop.f32.mrb[0].mxu0
        %3881 = vdwg.mxu0
        %3882 = vrot.lane.b32.xlu0 %v1112, 64
        %v3883 = vpop.permute.xlu0 %3882
        %3884 = vrot.lane.b32.xlu0 %v1113, 64
        %v3885 = vpop.permute.xlu0 %3884
        %3886 = vrot.lane.b32.xlu0 %v1114, 64
        %v3887 = vpop.permute.xlu0 %3886
        %3888 = vrot.lane.b32.xlu0 %v1115, 64
        %v3889 = vpop.permute.xlu0 %3888
        %3890 = vrot.lane.b32.xlu0 %v1128, 64
        %v3891 = vpop.permute.xlu0 %3890
        %3892 = vrot.lane.b32.xlu0 %v1129, 64
        %v3893 = vpop.permute.xlu0 %3892
        %3894 = vrot.lane.b32.xlu0 %v1130, 64
        %v3895 = vpop.permute.xlu0 %3894
        %3896 = vrot.lane.b32.xlu0 %v1131, 64
        %v3897 = vpop.permute.xlu0 %3896
        %v3899 = vsel %vm1148, %v3883, 0
        %v3902 = vsel %vm1148, %v3885, 0
        %v3905 = vsel %vm1148, %v3887, 0
        %v3908 = vsel %vm1148, %v3889, 0
        %v3911 = vsel %vm1148, %v3891, 0
        %v3914 = vsel %vm1148, %v3893, 0
        %v3917 = vsel %vm1148, %v3895, 0
        %v3920 = vsel %vm1148, %v3897, 0
        %3922 = vmatprep.subr.bf16.mxu0 0
        %3923 = vmatpush1.bf16.xpose.msra.mxu0 %v3911
        %3924 = vmatprep.subr.bf16.mxu0 0
        %3925 = vmatpush1.bf16.xpose.msra.mxu0 %v3914
        %3926 = vmatprep.subr.bf16.mxu0 0
        %3927 = vmatpush1.bf16.xpose.msra.mxu0 %v3917
        %3928 = vmatprep.subr.bf16.mxu0 0
        %3929 = vmatpush1.bf16.xpose.msra.mxu0 %v3920
        %3930 = vmatprep.subr.bf16.mxu0 0
        %3931 = vmatpush1.bf16.xpose.msra.mxu0 0
        %3932 = vmatprep.subr.bf16.mxu0 0
        %3933 = vmatpush1.bf16.xpose.msra.mxu0 0
        %3934 = vmatprep.subr.bf16.mxu0 0
        %3935 = vmatpush1.bf16.xpose.msra.mxu0 0
        %3936 = vmatprep.subr.bf16.mxu0 0
        %3937 = vmatpush1.bf16.xpose.msra.mxu0 0
        %3938 = vmatprep.subr.bf16.mxu0 0
        %3939 = vmatpush1.bf16.xpose.msra.mxu0 0
        %3940 = vmatprep.subr.bf16.mxu0 0
        %3941 = vmatpush1.bf16.xpose.msra.mxu0 0
        %3942 = vmatprep.subr.bf16.mxu0 0
        %3943 = vmatpush1.bf16.xpose.msra.mxu0 0
        %3944 = vmatprep.subr.bf16.mxu0 0
        %3945 = vmatpush1.bf16.xpose.msra.mxu0 0
        %3946 = vmatprep.subr.bf16.mxu0 0
        %3947 = vmatpush1.bf16.xpose.msra.mxu0 0
        %3948 = vmatprep.subr.bf16.mxu0 0
        %3949 = vmatpush1.bf16.xpose.msra.mxu0 0
        %3950 = vmatprep.subr.bf16.mxu0 0
        %3951 = vmatpush1.bf16.xpose.msra.mxu0 0
        %3952 = vmatprep.subr.bf16.mxu0 0
        %3953 = vmatpush1.bf16.xpose.msra.mxu0 0
        %3954 = vmatprep.mubr.bf16.mxu0 0
        %3955 = vmatmul.mubr.bf16.gmra.mrb[0].mxu0 %v3899
        %v3956 = vpop.f32.mrb[0].mxu0
        %v3957 = vadd.f32 0.0, %v3956
        %v3958 = vpop.f32.mrb[0].mxu0
        %v3959 = vpop.f32.mrb[0].mxu0
        %v3960 = vadd.f32 0.0, %v3959
        %v3961 = vpop.f32.mrb[0].mxu0
        %3962 = vmatprep.mubr.bf16.mxu0 0
        %3963 = vmatmul.mubr.bf16.gmra.mrb[0].mxu0 %v3902
        %v3964 = vpop.f32.mrb[0].mxu0
        %v3965 = vadd.f32 0.0, %v3964
        %v3966 = vpop.f32.mrb[0].mxu0
        %v3967 = vpop.f32.mrb[0].mxu0
        %v3968 = vadd.f32 0.0, %v3967
        %v3969 = vpop.f32.mrb[0].mxu0
        %3970 = vmatprep.mubr.bf16.mxu0 0
        %3971 = vmatmul.mubr.bf16.gmra.mrb[0].mxu0 %v3905
        %v3972 = vpop.f32.mrb[0].mxu0
        %v3973 = vadd.f32 0.0, %v3972
        %v3974 = vpop.f32.mrb[0].mxu0
        %v3975 = vpop.f32.mrb[0].mxu0
        %v3976 = vadd.f32 0.0, %v3975
        %v3977 = vpop.f32.mrb[0].mxu0
        %3978 = vmatprep.mubr.bf16.mxu0 0
        %3979 = vmatmul.mubr.bf16.gmra.mrb[0].mxu0 %v3908
        %v3980 = vpop.f32.mrb[0].mxu0
        %v3981 = vadd.f32 0.0, %v3980
        %v3982 = vpop.f32.mrb[0].mxu0
        %v3983 = vpop.f32.mrb[0].mxu0
        %v3984 = vadd.f32 0.0, %v3983
        %v3985 = vpop.f32.mrb[0].mxu0
        %3986 = vdwg.mxu0
        %v3987 = vsel %vm1505, %v3642, -inf
        %3988 = vmax.xlane.f32.xlu0 %v3987
        %v3989 = vpop.xlane.xlu0 %3988
        %v3990 = vsel %vm1505, %v3645, -inf
        %3991 = vmax.xlane.f32.xlu0 %v3990
        %v3992 = vpop.xlane.xlu0 %3991
        %v3993 = vsel %vm1505, %v3650, -inf
        %3994 = vmax.xlane.f32.xlu0 %v3993
        %v3995 = vpop.xlane.xlu0 %3994
        %v3996 = vsel %vm1505, %v3653, -inf
        %3997 = vmax.xlane.f32.xlu0 %v3996
        %v3998 = vpop.xlane.xlu0 %3997
        %v3999 = vsel %vm1505, %v3658, -inf
        %4000 = vmax.xlane.f32.xlu0 %v3999
        %v4001 = vpop.xlane.xlu0 %4000
        %v4002 = vsel %vm1505, %v3661, -inf
        %4003 = vmax.xlane.f32.xlu0 %v4002
        %v4004 = vpop.xlane.xlu0 %4003
        %v4005 = vsel %vm1505, %v3666, -inf
        %4006 = vmax.xlane.f32.xlu0 %v4005
        %v4007 = vpop.xlane.xlu0 %4006
        %v4008 = vsel %vm1505, %v3669, -inf
        %4009 = vmax.xlane.f32.xlu0 %v4008
        %v4010 = vpop.xlane.xlu0 %4009
        %v4011 = vsel %vm1505, %v3747, -inf
        %4012 = vmax.xlane.f32.xlu0 %v4011
        %v4013 = vpop.xlane.xlu0 %4012
        %v4014 = vsel %vm1505, %v3750, -inf
        %4015 = vmax.xlane.f32.xlu0 %v4014
        %v4016 = vpop.xlane.xlu0 %4015
        %v4017 = vsel %vm1505, %v3755, -inf
        %4018 = vmax.xlane.f32.xlu0 %v4017
        %v4019 = vpop.xlane.xlu0 %4018
        %v4020 = vsel %vm1505, %v3758, -inf
        %4021 = vmax.xlane.f32.xlu0 %v4020
        %v4022 = vpop.xlane.xlu0 %4021
        %v4023 = vsel %vm1505, %v3763, -inf
        %4024 = vmax.xlane.f32.xlu0 %v4023
        %v4025 = vpop.xlane.xlu0 %4024
        %v4026 = vsel %vm1505, %v3766, -inf
        %4027 = vmax.xlane.f32.xlu0 %v4026
        %v4028 = vpop.xlane.xlu0 %4027
        %v4029 = vsel %vm1505, %v3771, -inf
        %4030 = vmax.xlane.f32.xlu0 %v4029
        %v4031 = vpop.xlane.xlu0 %4030
        %v4032 = vsel %vm1505, %v3774, -inf
        %4033 = vmax.xlane.f32.xlu0 %v4032
        %v4034 = vpop.xlane.xlu0 %4033
        %v4035 = vsel %vm1505, %v3852, -inf
        %4036 = vmax.xlane.f32.xlu0 %v4035
        %v4037 = vpop.xlane.xlu0 %4036
        %v4038 = vsel %vm1505, %v3855, -inf
        %4039 = vmax.xlane.f32.xlu0 %v4038
        %v4040 = vpop.xlane.xlu0 %4039
        %v4041 = vsel %vm1505, %v3860, -inf
        %4042 = vmax.xlane.f32.xlu0 %v4041
        %v4043 = vpop.xlane.xlu0 %4042
        %v4044 = vsel %vm1505, %v3863, -inf
        %4045 = vmax.xlane.f32.xlu0 %v4044
        %v4046 = vpop.xlane.xlu0 %4045
        %v4047 = vsel %vm1505, %v3868, -inf
        %4048 = vmax.xlane.f32.xlu0 %v4047
        %v4049 = vpop.xlane.xlu0 %4048
        %v4050 = vsel %vm1505, %v3871, -inf
        %4051 = vmax.xlane.f32.xlu0 %v4050
        %v4052 = vpop.xlane.xlu0 %4051
        %v4053 = vsel %vm1505, %v3876, -inf
        %4054 = vmax.xlane.f32.xlu0 %v4053
        %v4055 = vpop.xlane.xlu0 %4054
        %v4056 = vsel %vm1505, %v3879, -inf
        %4057 = vmax.xlane.f32.xlu0 %v4056
        %v4058 = vpop.xlane.xlu0 %4057
        %v4059 = vsel %vm1505, %v3957, -inf
        %4060 = vmax.xlane.f32.xlu0 %v4059
        %v4061 = vpop.xlane.xlu0 %4060
        %v4062 = vsel %vm1505, %v3960, -inf
        %4063 = vmax.xlane.f32.xlu0 %v4062
        %v4064 = vpop.xlane.xlu0 %4063
        %v4065 = vsel %vm1505, %v3965, -inf
        %4066 = vmax.xlane.f32.xlu0 %v4065
        %v4067 = vpop.xlane.xlu0 %4066
        %v4068 = vsel %vm1505, %v3968, -inf
        %4069 = vmax.xlane.f32.xlu0 %v4068
        %v4070 = vpop.xlane.xlu0 %4069
        %v4071 = vsel %vm1505, %v3973, -inf
        %4072 = vmax.xlane.f32.xlu0 %v4071
        %v4073 = vpop.xlane.xlu0 %4072
        %v4074 = vsel %vm1505, %v3976, -inf
        %4075 = vmax.xlane.f32.xlu0 %v4074
        %v4076 = vpop.xlane.xlu0 %4075
        %v4077 = vsel %vm1505, %v3981, -inf
        %4078 = vmax.xlane.f32.xlu0 %v4077
        %v4079 = vpop.xlane.xlu0 %4078
        %v4080 = vsel %vm1505, %v3984, -inf
        %4081 = vmax.xlane.f32.xlu0 %v4080
        %v4082 = vpop.xlane.xlu0 %4081
        %v4083 = vsub.f32 %v3642, %v3989
        %v4084 = vsub.f32 %v3645, %v3992
        %v4085 = vsub.f32 %v3650, %v3995
        %v4086 = vsub.f32 %v3653, %v3998
        %v4087 = vsub.f32 %v3658, %v4001
        %v4088 = vsub.f32 %v3661, %v4004
        %v4089 = vsub.f32 %v3666, %v4007
        %v4090 = vsub.f32 %v3669, %v4010
        %v4091 = vsub.f32 %v3747, %v4013
        %v4092 = vsub.f32 %v3750, %v4016
        %v4093 = vsub.f32 %v3755, %v4019
        %v4094 = vsub.f32 %v3758, %v4022
        %v4095 = vsub.f32 %v3763, %v4025
        %v4096 = vsub.f32 %v3766, %v4028
        %v4097 = vsub.f32 %v3771, %v4031
        %v4098 = vsub.f32 %v3774, %v4034
        %v4099 = vsub.f32 %v3852, %v4037
        %v4100 = vsub.f32 %v3855, %v4040
        %v4101 = vsub.f32 %v3860, %v4043
        %v4102 = vsub.f32 %v3863, %v4046
        %v4103 = vsub.f32 %v3868, %v4049
        %v4104 = vsub.f32 %v3871, %v4052
        %v4105 = vsub.f32 %v3876, %v4055
        %v4106 = vsub.f32 %v3879, %v4058
        %v4107 = vsub.f32 %v3957, %v4061
        %v4108 = vsub.f32 %v3960, %v4064
        %v4109 = vsub.f32 %v3965, %v4067
        %v4110 = vsub.f32 %v3968, %v4070
        %v4111 = vsub.f32 %v3973, %v4073
        %v4112 = vsub.f32 %v3976, %v4076
        %v4113 = vsub.f32 %v3981, %v4079
        %v4114 = vsub.f32 %v3984, %v4082
        %v4115 = vmul.f32 %v4083, 1.442695
        %v4116 = vpow.pop %v4115
        %v4117 = vmul.f32 %v4084, 1.442695
        %v4118 = vpow.pop %v4117
        %v4119 = vmul.f32 %v4085, 1.442695
        %v4120 = vpow.pop %v4119
        %v4121 = vmul.f32 %v4086, 1.442695
        %v4122 = vpow.pop %v4121
        %v4123 = vmul.f32 %v4087, 1.442695
        %v4124 = vpow.pop %v4123
        %v4125 = vmul.f32 %v4088, 1.442695
        %v4126 = vpow.pop %v4125
        %v4127 = vmul.f32 %v4089, 1.442695
        %v4128 = vpow.pop %v4127
        %v4129 = vmul.f32 %v4090, 1.442695
        %v4130 = vpow.pop %v4129
        %v4131 = vmul.f32 %v4091, 1.442695
        %v4132 = vpow.pop %v4131
        %v4133 = vmul.f32 %v4092, 1.442695
        %v4134 = vpow.pop %v4133
        %v4135 = vmul.f32 %v4093, 1.442695
        %v4136 = vpow.pop %v4135
        %v4137 = vmul.f32 %v4094, 1.442695
        %v4138 = vpow.pop %v4137
        %v4139 = vmul.f32 %v4095, 1.442695
        %v4140 = vpow.pop %v4139
        %v4141 = vmul.f32 %v4096, 1.442695
        %v4142 = vpow.pop %v4141
        %v4143 = vmul.f32 %v4097, 1.442695
        %v4144 = vpow.pop %v4143
        %v4145 = vmul.f32 %v4098, 1.442695
        %v4146 = vpow.pop %v4145
        %v4147 = vmul.f32 %v4099, 1.442695
        %v4148 = vpow.pop %v4147
        %v4149 = vmul.f32 %v4100, 1.442695
        %v4150 = vpow.pop %v4149
        %v4151 = vmul.f32 %v4101, 1.442695
        %v4152 = vpow.pop %v4151
        %v4153 = vmul.f32 %v4102, 1.442695
        %v4154 = vpow.pop %v4153
        %v4155 = vmul.f32 %v4103, 1.442695
        %v4156 = vpow.pop %v4155
        %v4157 = vmul.f32 %v4104, 1.442695
        %v4158 = vpow.pop %v4157
        %v4159 = vmul.f32 %v4105, 1.442695
        %v4160 = vpow.pop %v4159
        %v4161 = vmul.f32 %v4106, 1.442695
        %v4162 = vpow.pop %v4161
        %v4163 = vmul.f32 %v4107, 1.442695
        %v4164 = vpow.pop %v4163
        %v4165 = vmul.f32 %v4108, 1.442695
        %v4166 = vpow.pop %v4165
        %v4167 = vmul.f32 %v4109, 1.442695
        %v4168 = vpow.pop %v4167
        %v4169 = vmul.f32 %v4110, 1.442695
        %v4170 = vpow.pop %v4169
        %v4171 = vmul.f32 %v4111, 1.442695
        %v4172 = vpow.pop %v4171
        %v4173 = vmul.f32 %v4112, 1.442695
        %v4174 = vpow.pop %v4173
        %v4175 = vmul.f32 %v4113, 1.442695
        %v4176 = vpow.pop %v4175
        %v4177 = vmul.f32 %v4114, 1.442695
        %v4178 = vpow.pop %v4177
        %v4179 = vsel %vm1505, %v4116, 0.0
        %4180 = vadd.xlane.f32.xlu0 %v4179
        %v4181 = vpop.xlane.xlu0 %4180
        %v4182 = vsel %vm1505, %v4118, 0.0
        %4183 = vadd.xlane.f32.xlu0 %v4182
        %v4184 = vpop.xlane.xlu0 %4183
        %v4185 = vsel %vm1505, %v4120, 0.0
        %4186 = vadd.xlane.f32.xlu0 %v4185
        %v4187 = vpop.xlane.xlu0 %4186
        %v4188 = vsel %vm1505, %v4122, 0.0
        %4189 = vadd.xlane.f32.xlu0 %v4188
        %v4190 = vpop.xlane.xlu0 %4189
        %v4191 = vsel %vm1505, %v4124, 0.0
        %4192 = vadd.xlane.f32.xlu0 %v4191
        %v4193 = vpop.xlane.xlu0 %4192
        %v4194 = vsel %vm1505, %v4126, 0.0
        %4195 = vadd.xlane.f32.xlu0 %v4194
        %v4196 = vpop.xlane.xlu0 %4195
        %v4197 = vsel %vm1505, %v4128, 0.0
        %4198 = vadd.xlane.f32.xlu0 %v4197
        %v4199 = vpop.xlane.xlu0 %4198
        %v4200 = vsel %vm1505, %v4130, 0.0
        %4201 = vadd.xlane.f32.xlu0 %v4200
        %v4202 = vpop.xlane.xlu0 %4201
        %v4203 = vsel %vm1505, %v4132, 0.0
        %4204 = vadd.xlane.f32.xlu0 %v4203
        %v4205 = vpop.xlane.xlu0 %4204
        %v4206 = vsel %vm1505, %v4134, 0.0
        %4207 = vadd.xlane.f32.xlu0 %v4206
        %v4208 = vpop.xlane.xlu0 %4207
        %v4209 = vsel %vm1505, %v4136, 0.0
        %4210 = vadd.xlane.f32.xlu0 %v4209
        %v4211 = vpop.xlane.xlu0 %4210
        %v4212 = vsel %vm1505, %v4138, 0.0
        %4213 = vadd.xlane.f32.xlu0 %v4212
        %v4214 = vpop.xlane.xlu0 %4213
        %v4215 = vsel %vm1505, %v4140, 0.0
        %4216 = vadd.xlane.f32.xlu0 %v4215
        %v4217 = vpop.xlane.xlu0 %4216
        %v4218 = vsel %vm1505, %v4142, 0.0
        %4219 = vadd.xlane.f32.xlu0 %v4218
        %v4220 = vpop.xlane.xlu0 %4219
        %v4221 = vsel %vm1505, %v4144, 0.0
        %4222 = vadd.xlane.f32.xlu0 %v4221
        %v4223 = vpop.xlane.xlu0 %4222
        %v4224 = vsel %vm1505, %v4146, 0.0
        %4225 = vadd.xlane.f32.xlu0 %v4224
        %v4226 = vpop.xlane.xlu0 %4225
        %v4227 = vsel %vm1505, %v4148, 0.0
        %4228 = vadd.xlane.f32.xlu0 %v4227
        %v4229 = vpop.xlane.xlu0 %4228
        %v4230 = vsel %vm1505, %v4150, 0.0
        %4231 = vadd.xlane.f32.xlu0 %v4230
        %v4232 = vpop.xlane.xlu0 %4231
        %v4233 = vsel %vm1505, %v4152, 0.0
        %4234 = vadd.xlane.f32.xlu0 %v4233
        %v4235 = vpop.xlane.xlu0 %4234
        %v4236 = vsel %vm1505, %v4154, 0.0
        %4237 = vadd.xlane.f32.xlu0 %v4236
        %v4238 = vpop.xlane.xlu0 %4237
        %v4239 = vsel %vm1505, %v4156, 0.0
        %4240 = vadd.xlane.f32.xlu0 %v4239
        %v4241 = vpop.xlane.xlu0 %4240
        %v4242 = vsel %vm1505, %v4158, 0.0
        %4243 = vadd.xlane.f32.xlu0 %v4242
        %v4244 = vpop.xlane.xlu0 %4243
        %v4245 = vsel %vm1505, %v4160, 0.0
        %4246 = vadd.xlane.f32.xlu0 %v4245
        %v4247 = vpop.xlane.xlu0 %4246
        %v4248 = vsel %vm1505, %v4162, 0.0
        %4249 = vadd.xlane.f32.xlu0 %v4248
        %v4250 = vpop.xlane.xlu0 %4249
        %v4251 = vsel %vm1505, %v4164, 0.0
        %4252 = vadd.xlane.f32.xlu0 %v4251
        %v4253 = vpop.xlane.xlu0 %4252
        %v4254 = vsel %vm1505, %v4166, 0.0
        %4255 = vadd.xlane.f32.xlu0 %v4254
        %v4256 = vpop.xlane.xlu0 %4255
        %v4257 = vsel %vm1505, %v4168, 0.0
        %4258 = vadd.xlane.f32.xlu0 %v4257
        %v4259 = vpop.xlane.xlu0 %4258
        %v4260 = vsel %vm1505, %v4170, 0.0
        %4261 = vadd.xlane.f32.xlu0 %v4260
        %v4262 = vpop.xlane.xlu0 %4261
        %v4263 = vsel %vm1505, %v4172, 0.0
        %4264 = vadd.xlane.f32.xlu0 %v4263
        %v4265 = vpop.xlane.xlu0 %4264
        %v4266 = vsel %vm1505, %v4174, 0.0
        %4267 = vadd.xlane.f32.xlu0 %v4266
        %v4268 = vpop.xlane.xlu0 %4267
        %v4269 = vsel %vm1505, %v4176, 0.0
        %4270 = vadd.xlane.f32.xlu0 %v4269
        %v4271 = vpop.xlane.xlu0 %4270
        %v4272 = vsel %vm1505, %v4178, 0.0
        %4273 = vadd.xlane.f32.xlu0 %v4272
        %v4274 = vpop.xlane.xlu0 %4273
        %v4275 = vrcp.pop %v4181
        %v4276 = vrcp.pop %v4184
        %v4277 = vrcp.pop %v4187
        %v4278 = vrcp.pop %v4190
        %v4279 = vrcp.pop %v4193
        %v4280 = vrcp.pop %v4196
        %v4281 = vrcp.pop %v4199
        %v4282 = vrcp.pop %v4202
        %v4283 = vrcp.pop %v4205
        %v4284 = vrcp.pop %v4208
        %v4285 = vrcp.pop %v4211
        %v4286 = vrcp.pop %v4214
        %v4287 = vrcp.pop %v4217
        %v4288 = vrcp.pop %v4220
        %v4289 = vrcp.pop %v4223
        %v4290 = vrcp.pop %v4226
        %v4291 = vrcp.pop %v4229
        %v4292 = vrcp.pop %v4232
        %v4293 = vrcp.pop %v4235
        %v4294 = vrcp.pop %v4238
        %v4295 = vrcp.pop %v4241
        %v4296 = vrcp.pop %v4244
        %v4297 = vrcp.pop %v4247
        %v4298 = vrcp.pop %v4250
        %v4299 = vrcp.pop %v4253
        %v4300 = vrcp.pop %v4256
        %v4301 = vrcp.pop %v4259
        %v4302 = vrcp.pop %v4262
        %v4303 = vrcp.pop %v4265
        %v4304 = vrcp.pop %v4268
        %v4305 = vrcp.pop %v4271
        %v4306 = vrcp.pop %v4274
        %v4307 = vpack.c.bf16 %v4118, %v4116
        %v4308 = vpack.c.bf16 %v4122, %v4120
        %v4309 = vpack.c.bf16 %v4126, %v4124
        %v4310 = vpack.c.bf16 %v4130, %v4128
        %v4311 = vpack.c.bf16 %v4134, %v4132
        %v4312 = vpack.c.bf16 %v4138, %v4136
        %v4313 = vpack.c.bf16 %v4142, %v4140
        %v4314 = vpack.c.bf16 %v4146, %v4144
        %v4315 = vpack.c.bf16 %v4150, %v4148
        %v4316 = vpack.c.bf16 %v4154, %v4152
        %v4317 = vpack.c.bf16 %v4158, %v4156
        %v4318 = vpack.c.bf16 %v4162, %v4160
        %v4319 = vpack.c.bf16 %v4166, %v4164
        %v4320 = vpack.c.bf16 %v4170, %v4168
        %v4321 = vpack.c.bf16 %v4174, %v4172
        %v4322 = vpack.c.bf16 %v4178, %v4176
        %4323 = vrot.lane.b32.xlu0 %v1132, 64
        %v4324 = vpop.permute.xlu0 %4323
        %4325 = vrot.lane.b32.xlu0 %v1133, 64
        %v4326 = vpop.permute.xlu0 %4325
        %4327 = vrot.lane.b32.xlu0 %v1134, 64
        %v4328 = vpop.permute.xlu0 %4327
        %4329 = vrot.lane.b32.xlu0 %v1135, 64
        %v4330 = vpop.permute.xlu0 %4329
        %v4336 = vsel %vm1505, %v4307, 0
        %v4339 = vsel %vm1505, %v4308, 0
        %v4342 = vsel %vm1505, %v4309, 0
        %v4345 = vsel %vm1505, %v4310, 0
        %4347 = vmatprep.subr.bf16.mxu0 0
        %4348 = vmatpush1.bf16.msra.mxu0 %v4324
        %4349 = vmatprep.subr.bf16.mxu0 0
        %4350 = vmatpush1.bf16.msra.mxu0 %v4326
        %4351 = vmatprep.subr.bf16.mxu0 0
        %4352 = vmatpush1.bf16.msra.mxu0 %v4328
        %4353 = vmatprep.subr.bf16.mxu0 0
        %4354 = vmatpush1.bf16.msra.mxu0 %v4330
        %4355 = vmatprep.subr.bf16.mxu0 0
        %4356 = vmatpush1.bf16.msra.mxu0 0
        %4357 = vmatprep.subr.bf16.mxu0 0
        %4358 = vmatpush1.bf16.msra.mxu0 0
        %4359 = vmatprep.subr.bf16.mxu0 0
        %4360 = vmatpush1.bf16.msra.mxu0 0
        %4361 = vmatprep.subr.bf16.mxu0 0
        %4362 = vmatpush1.bf16.msra.mxu0 0
        %4363 = vmatprep.subr.bf16.mxu0 0
        %4364 = vmatpush1.bf16.msra.mxu0 0
        %4365 = vmatprep.subr.bf16.mxu0 0
        %4366 = vmatpush1.bf16.msra.mxu0 0
        %4367 = vmatprep.subr.bf16.mxu0 0
        %4368 = vmatpush1.bf16.msra.mxu0 0
        %4369 = vmatprep.subr.bf16.mxu0 0
        %4370 = vmatpush1.bf16.msra.mxu0 0
        %4371 = vmatprep.subr.bf16.mxu0 0
        %4372 = vmatpush1.bf16.msra.mxu0 0
        %4373 = vmatprep.subr.bf16.mxu0 0
        %4374 = vmatpush1.bf16.msra.mxu0 0
        %4375 = vmatprep.subr.bf16.mxu0 0
        %4376 = vmatpush1.bf16.msra.mxu0 0
        %4377 = vmatprep.subr.bf16.mxu0 0
        %4378 = vmatpush1.bf16.msra.mxu0 0
        %4379 = vmatprep.mubr.bf16.mxu0 0
        %4380 = vmatmul.mubr.bf16.gmra.mrb[0].mxu0 %v4336
        %v4381 = vpop.f32.mrb[0].mxu0
        %v4382 = vadd.f32 0.0, %v4381
        %v4383 = vpop.f32.mrb[0].mxu0
        %v4384 = vpop.f32.mrb[0].mxu0
        %v4385 = vadd.f32 0.0, %v4384
        %v4386 = vpop.f32.mrb[0].mxu0
        %4387 = vmatprep.mubr.bf16.mxu0 0
        %4388 = vmatmul.mubr.bf16.gmra.mrb[0].mxu0 %v4339
        %v4389 = vpop.f32.mrb[0].mxu0
        %v4390 = vadd.f32 0.0, %v4389
        %v4391 = vpop.f32.mrb[0].mxu0
        %v4392 = vpop.f32.mrb[0].mxu0
        %v4393 = vadd.f32 0.0, %v4392
        %v4394 = vpop.f32.mrb[0].mxu0
        %4395 = vmatprep.mubr.bf16.mxu0 0
        %4396 = vmatmul.mubr.bf16.gmra.mrb[0].mxu0 %v4342
        %v4397 = vpop.f32.mrb[0].mxu0
        %v4398 = vadd.f32 0.0, %v4397
        %v4399 = vpop.f32.mrb[0].mxu0
        %v4400 = vpop.f32.mrb[0].mxu0
        %v4401 = vadd.f32 0.0, %v4400
        %v4402 = vpop.f32.mrb[0].mxu0
        %4403 = vmatprep.mubr.bf16.mxu0 0
        %4404 = vmatmul.mubr.bf16.gmra.mrb[0].mxu0 %v4345
        %v4405 = vpop.f32.mrb[0].mxu0
        %v4406 = vadd.f32 0.0, %v4405
        %v4407 = vpop.f32.mrb[0].mxu0
        %v4408 = vpop.f32.mrb[0].mxu0
        %v4409 = vadd.f32 0.0, %v4408
        %v4410 = vpop.f32.mrb[0].mxu0
        %4411 = vdwg.mxu0
        %4412 = vrot.lane.b32.xlu0 %v1136, 64
        %v4413 = vpop.permute.xlu0 %4412
        %4414 = vrot.lane.b32.xlu0 %v1137, 64
        %v4415 = vpop.permute.xlu0 %4414
        %4416 = vrot.lane.b32.xlu0 %v1138, 64
        %v4417 = vpop.permute.xlu0 %4416
        %4418 = vrot.lane.b32.xlu0 %v1139, 64
        %v4419 = vpop.permute.xlu0 %4418
        %v4425 = vsel %vm1505, %v4311, 0
        %v4428 = vsel %vm1505, %v4312, 0
        %v4431 = vsel %vm1505, %v4313, 0
        %v4434 = vsel %vm1505, %v4314, 0
        %4436 = vmatprep.subr.bf16.mxu0 0
        %4437 = vmatpush1.bf16.msra.mxu0 %v4413
        %4438 = vmatprep.subr.bf16.mxu0 0
        %4439 = vmatpush1.bf16.msra.mxu0 %v4415
        %4440 = vmatprep.subr.bf16.mxu0 0
        %4441 = vmatpush1.bf16.msra.mxu0 %v4417
        %4442 = vmatprep.subr.bf16.mxu0 0
        %4443 = vmatpush1.bf16.msra.mxu0 %v4419
        %4444 = vmatprep.subr.bf16.mxu0 0
        %4445 = vmatpush1.bf16.msra.mxu0 0
        %4446 = vmatprep.subr.bf16.mxu0 0
        %4447 = vmatpush1.bf16.msra.mxu0 0
        %4448 = vmatprep.subr.bf16.mxu0 0
        %4449 = vmatpush1.bf16.msra.mxu0 0
        %4450 = vmatprep.subr.bf16.mxu0 0
        %4451 = vmatpush1.bf16.msra.mxu0 0
        %4452 = vmatprep.subr.bf16.mxu0 0
        %4453 = vmatpush1.bf16.msra.mxu0 0
        %4454 = vmatprep.subr.bf16.mxu0 0
        %4455 = vmatpush1.bf16.msra.mxu0 0
        %4456 = vmatprep.subr.bf16.mxu0 0
        %4457 = vmatpush1.bf16.msra.mxu0 0
        %4458 = vmatprep.subr.bf16.mxu0 0
        %4459 = vmatpush1.bf16.msra.mxu0 0
        %4460 = vmatprep.subr.bf16.mxu0 0
        %4461 = vmatpush1.bf16.msra.mxu0 0
        %4462 = vmatprep.subr.bf16.mxu0 0
        %4463 = vmatpush1.bf16.msra.mxu0 0
        %4464 = vmatprep.subr.bf16.mxu0 0
        %4465 = vmatpush1.bf16.msra.mxu0 0
        %4466 = vmatprep.subr.bf16.mxu0 0
        %4467 = vmatpush1.bf16.msra.mxu0 0
        %4468 = vmatprep.mubr.bf16.mxu0 0
        %4469 = vmatmul.mubr.bf16.gmra.mrb[0].mxu0 %v4425
        %v4470 = vpop.f32.mrb[0].mxu0
        %v4471 = vadd.f32 0.0, %v4470
        %v4472 = vpop.f32.mrb[0].mxu0
        %v4473 = vpop.f32.mrb[0].mxu0
        %v4474 = vadd.f32 0.0, %v4473
        %v4475 = vpop.f32.mrb[0].mxu0
        %4476 = vmatprep.mubr.bf16.mxu0 0
        %4477 = vmatmul.mubr.bf16.gmra.mrb[0].mxu0 %v4428
        %v4478 = vpop.f32.mrb[0].mxu0
        %v4479 = vadd.f32 0.0, %v4478
        %v4480 = vpop.f32.mrb[0].mxu0
        %v4481 = vpop.f32.mrb[0].mxu0
        %v4482 = vadd.f32 0.0, %v4481
        %v4483 = vpop.f32.mrb[0].mxu0
        %4484 = vmatprep.mubr.bf16.mxu0 0
        %4485 = vmatmul.mubr.bf16.gmra.mrb[0].mxu0 %v4431
        %v4486 = vpop.f32.mrb[0].mxu0
        %v4487 = vadd.f32 0.0, %v4486
        %v4488 = vpop.f32.mrb[0].mxu0
        %v4489 = vpop.f32.mrb[0].mxu0
        %v4490 = vadd.f32 0.0, %v4489
        %v4491 = vpop.f32.mrb[0].mxu0
        %4492 = vmatprep.mubr.bf16.mxu0 0
        %4493 = vmatmul.mubr.bf16.gmra.mrb[0].mxu0 %v4434
        %v4494 = vpop.f32.mrb[0].mxu0
        %v4495 = vadd.f32 0.0, %v4494
        %v4496 = vpop.f32.mrb[0].mxu0
        %v4497 = vpop.f32.mrb[0].mxu0
        %v4498 = vadd.f32 0.0, %v4497
        %v4499 = vpop.f32.mrb[0].mxu0
        %4500 = vdwg.mxu0
        %4501 = vrot.lane.b32.xlu0 %v1140, 64
        %v4502 = vpop.permute.xlu0 %4501
        %4503 = vrot.lane.b32.xlu0 %v1141, 64
        %v4504 = vpop.permute.xlu0 %4503
        %4505 = vrot.lane.b32.xlu0 %v1142, 64
        %v4506 = vpop.permute.xlu0 %4505
        %4507 = vrot.lane.b32.xlu0 %v1143, 64
        %v4508 = vpop.permute.xlu0 %4507
        %v4514 = vsel %vm1505, %v4315, 0
        %v4517 = vsel %vm1505, %v4316, 0
        %v4520 = vsel %vm1505, %v4317, 0
        %v4523 = vsel %vm1505, %v4318, 0
        %4525 = vmatprep.subr.bf16.mxu0 0
        %4526 = vmatpush1.bf16.msra.mxu0 %v4502
        %4527 = vmatprep.subr.bf16.mxu0 0
        %4528 = vmatpush1.bf16.msra.mxu0 %v4504
        %4529 = vmatprep.subr.bf16.mxu0 0
        %4530 = vmatpush1.bf16.msra.mxu0 %v4506
        %4531 = vmatprep.subr.bf16.mxu0 0
        %4532 = vmatpush1.bf16.msra.mxu0 %v4508
        %4533 = vmatprep.subr.bf16.mxu0 0
        %4534 = vmatpush1.bf16.msra.mxu0 0
        %4535 = vmatprep.subr.bf16.mxu0 0
        %4536 = vmatpush1.bf16.msra.mxu0 0
        %4537 = vmatprep.subr.bf16.mxu0 0
        %4538 = vmatpush1.bf16.msra.mxu0 0
        %4539 = vmatprep.subr.bf16.mxu0 0
        %4540 = vmatpush1.bf16.msra.mxu0 0
        %4541 = vmatprep.subr.bf16.mxu0 0
        %4542 = vmatpush1.bf16.msra.mxu0 0
        %4543 = vmatprep.subr.bf16.mxu0 0
        %4544 = vmatpush1.bf16.msra.mxu0 0
        %4545 = vmatprep.subr.bf16.mxu0 0
        %4546 = vmatpush1.bf16.msra.mxu0 0
        %4547 = vmatprep.subr.bf16.mxu0 0
        %4548 = vmatpush1.bf16.msra.mxu0 0
        %4549 = vmatprep.subr.bf16.mxu0 0
        %4550 = vmatpush1.bf16.msra.mxu0 0
        %4551 = vmatprep.subr.bf16.mxu0 0
        %4552 = vmatpush1.bf16.msra.mxu0 0
        %4553 = vmatprep.subr.bf16.mxu0 0
        %4554 = vmatpush1.bf16.msra.mxu0 0
        %4555 = vmatprep.subr.bf16.mxu0 0
        %4556 = vmatpush1.bf16.msra.mxu0 0
        %4557 = vmatprep.mubr.bf16.mxu0 0
        %4558 = vmatmul.mubr.bf16.gmra.mrb[0].mxu0 %v4514
        %v4559 = vpop.f32.mrb[0].mxu0
        %v4560 = vadd.f32 0.0, %v4559
        %v4561 = vpop.f32.mrb[0].mxu0
        %v4562 = vpop.f32.mrb[0].mxu0
        %v4563 = vadd.f32 0.0, %v4562
        %v4564 = vpop.f32.mrb[0].mxu0
        %4565 = vmatprep.mubr.bf16.mxu0 0
        %4566 = vmatmul.mubr.bf16.gmra.mrb[0].mxu0 %v4517
        %v4567 = vpop.f32.mrb[0].mxu0
        %v4568 = vadd.f32 0.0, %v4567
        %v4569 = vpop.f32.mrb[0].mxu0
        %v4570 = vpop.f32.mrb[0].mxu0
        %v4571 = vadd.f32 0.0, %v4570
        %v4572 = vpop.f32.mrb[0].mxu0
        %4573 = vmatprep.mubr.bf16.mxu0 0
        %4574 = vmatmul.mubr.bf16.gmra.mrb[0].mxu0 %v4520
        %v4575 = vpop.f32.mrb[0].mxu0
        %v4576 = vadd.f32 0.0, %v4575
        %v4577 = vpop.f32.mrb[0].mxu0
        %v4578 = vpop.f32.mrb[0].mxu0
        %v4579 = vadd.f32 0.0, %v4578
        %v4580 = vpop.f32.mrb[0].mxu0
        %4581 = vmatprep.mubr.bf16.mxu0 0
        %4582 = vmatmul.mubr.bf16.gmra.mrb[0].mxu0 %v4523
        %v4583 = vpop.f32.mrb[0].mxu0
        %v4584 = vadd.f32 0.0, %v4583
        %v4585 = vpop.f32.mrb[0].mxu0
        %v4586 = vpop.f32.mrb[0].mxu0
        %v4587 = vadd.f32 0.0, %v4586
        %v4588 = vpop.f32.mrb[0].mxu0
        %4589 = vdwg.mxu0
        %4590 = vrot.lane.b32.xlu0 %v1144, 64
        %v4591 = vpop.permute.xlu0 %4590
        %4592 = vrot.lane.b32.xlu0 %v1145, 64
        %v4593 = vpop.permute.xlu0 %4592
        %4594 = vrot.lane.b32.xlu0 %v1146, 64
        %v4595 = vpop.permute.xlu0 %4594
        %4596 = vrot.lane.b32.xlu0 %v1147, 64
        %v4597 = vpop.permute.xlu0 %4596
        %v4603 = vsel %vm1505, %v4319, 0
        %v4606 = vsel %vm1505, %v4320, 0
        %v4609 = vsel %vm1505, %v4321, 0
        %v4612 = vsel %vm1505, %v4322, 0
        %4614 = vmatprep.subr.bf16.mxu0 0
        %4615 = vmatpush1.bf16.msra.mxu0 %v4591
        %4616 = vmatprep.subr.bf16.mxu0 0
        %4617 = vmatpush1.bf16.msra.mxu0 %v4593
        %4618 = vmatprep.subr.bf16.mxu0 0
        %4619 = vmatpush1.bf16.msra.mxu0 %v4595
        %4620 = vmatprep.subr.bf16.mxu0 0
        %4621 = vmatpush1.bf16.msra.mxu0 %v4597
        %4622 = vmatprep.subr.bf16.mxu0 0
        %4623 = vmatpush1.bf16.msra.mxu0 0
        %4624 = vmatprep.subr.bf16.mxu0 0
        %4625 = vmatpush1.bf16.msra.mxu0 0
        %4626 = vmatprep.subr.bf16.mxu0 0
        %4627 = vmatpush1.bf16.msra.mxu0 0
        %4628 = vmatprep.subr.bf16.mxu0 0
        %4629 = vmatpush1.bf16.msra.mxu0 0
        %4630 = vmatprep.subr.bf16.mxu0 0
        %4631 = vmatpush1.bf16.msra.mxu0 0
        %4632 = vmatprep.subr.bf16.mxu0 0
        %4633 = vmatpush1.bf16.msra.mxu0 0
        %4634 = vmatprep.subr.bf16.mxu0 0
        %4635 = vmatpush1.bf16.msra.mxu0 0
        %4636 = vmatprep.subr.bf16.mxu0 0
        %4637 = vmatpush1.bf16.msra.mxu0 0
        %4638 = vmatprep.subr.bf16.mxu0 0
        %4639 = vmatpush1.bf16.msra.mxu0 0
        %4640 = vmatprep.subr.bf16.mxu0 0
        %4641 = vmatpush1.bf16.msra.mxu0 0
        %4642 = vmatprep.subr.bf16.mxu0 0
        %4643 = vmatpush1.bf16.msra.mxu0 0
        %4644 = vmatprep.subr.bf16.mxu0 0
        %4645 = vmatpush1.bf16.msra.mxu0 0
        %4646 = vmatprep.mubr.bf16.mxu0 0
        %4647 = vmatmul.mubr.bf16.gmra.mrb[0].mxu0 %v4603
        %v4648 = vpop.f32.mrb[0].mxu0
        %v4649 = vadd.f32 0.0, %v4648
        %v4650 = vpop.f32.mrb[0].mxu0
        %v4651 = vpop.f32.mrb[0].mxu0
        %v4652 = vadd.f32 0.0, %v4651
        %v4653 = vpop.f32.mrb[0].mxu0
        %4654 = vmatprep.mubr.bf16.mxu0 0
        %4655 = vmatmul.mubr.bf16.gmra.mrb[0].mxu0 %v4606
        %v4656 = vpop.f32.mrb[0].mxu0
        %v4657 = vadd.f32 0.0, %v4656
        %v4658 = vpop.f32.mrb[0].mxu0
        %v4659 = vpop.f32.mrb[0].mxu0
        %v4660 = vadd.f32 0.0, %v4659
        %v4661 = vpop.f32.mrb[0].mxu0
        %4662 = vmatprep.mubr.bf16.mxu0 0
        %4663 = vmatmul.mubr.bf16.gmra.mrb[0].mxu0 %v4609
        %v4664 = vpop.f32.mrb[0].mxu0
        %v4665 = vadd.f32 0.0, %v4664
        %v4666 = vpop.f32.mrb[0].mxu0
        %v4667 = vpop.f32.mrb[0].mxu0
        %v4668 = vadd.f32 0.0, %v4667
        %v4669 = vpop.f32.mrb[0].mxu0
        %4670 = vmatprep.mubr.bf16.mxu0 0
        %4671 = vmatmul.mubr.bf16.gmra.mrb[0].mxu0 %v4612
        %v4672 = vpop.f32.mrb[0].mxu0
        %v4673 = vadd.f32 0.0, %v4672
        %v4674 = vpop.f32.mrb[0].mxu0
        %v4675 = vpop.f32.mrb[0].mxu0
        %v4676 = vadd.f32 0.0, %v4675
        %v4677 = vpop.f32.mrb[0].mxu0
        %4678 = vdwg.mxu0
        %v4679 = vmul.f32 %v4382, %v4275
        %v4680 = vmul.f32 %v4385, %v4276
        %v4681 = vmul.f32 %v4390, %v4277
        %v4682 = vmul.f32 %v4393, %v4278
        %v4683 = vmul.f32 %v4398, %v4279
        %v4684 = vmul.f32 %v4401, %v4280
        %v4685 = vmul.f32 %v4406, %v4281
        %v4686 = vmul.f32 %v4409, %v4282
        %v4687 = vmul.f32 %v4471, %v4283
        %v4688 = vmul.f32 %v4474, %v4284
        %v4689 = vmul.f32 %v4479, %v4285
        %v4690 = vmul.f32 %v4482, %v4286
        %v4691 = vmul.f32 %v4487, %v4287
        %v4692 = vmul.f32 %v4490, %v4288
        %v4693 = vmul.f32 %v4495, %v4289
        %v4694 = vmul.f32 %v4498, %v4290
        %v4695 = vmul.f32 %v4560, %v4291
        %v4696 = vmul.f32 %v4563, %v4292
        %v4697 = vmul.f32 %v4568, %v4293
        %v4698 = vmul.f32 %v4571, %v4294
        %v4699 = vmul.f32 %v4576, %v4295
        %v4700 = vmul.f32 %v4579, %v4296
        %v4701 = vmul.f32 %v4584, %v4297
        %v4702 = vmul.f32 %v4587, %v4298
        %v4703 = vmul.f32 %v4649, %v4299
        %v4704 = vmul.f32 %v4652, %v4300
        %v4705 = vmul.f32 %v4657, %v4301
        %v4706 = vmul.f32 %v4660, %v4302
        %v4707 = vmul.f32 %v4665, %v4303
        %v4708 = vmul.f32 %v4668, %v4304
        %v4709 = vmul.f32 %v4673, %v4305
        %v4710 = vmul.f32 %v4676, %v4306
        %4743 = vrot.lane.b32.xlu0 %v4679, 64
        %v4744 = vpop.permute.xlu0 %4743
        %4745 = vrot.lane.b32.xlu0 %v4680, 64
        %v4746 = vpop.permute.xlu0 %4745
        %4747 = vrot.lane.b32.xlu0 %v4681, 64
        %v4748 = vpop.permute.xlu0 %4747
        %4749 = vrot.lane.b32.xlu0 %v4682, 64
        %v4750 = vpop.permute.xlu0 %4749
        %4751 = vrot.lane.b32.xlu0 %v4683, 64
        %v4752 = vpop.permute.xlu0 %4751
        %4753 = vrot.lane.b32.xlu0 %v4684, 64
        %v4754 = vpop.permute.xlu0 %4753
        %4755 = vrot.lane.b32.xlu0 %v4685, 64
        %v4756 = vpop.permute.xlu0 %4755
        %4757 = vrot.lane.b32.xlu0 %v4686, 64
        %v4758 = vpop.permute.xlu0 %4757
        %4759 = vrot.lane.b32.xlu0 %v4687, 64
        %v4760 = vpop.permute.xlu0 %4759
        %4761 = vrot.lane.b32.xlu0 %v4688, 64
        %v4762 = vpop.permute.xlu0 %4761
        %4763 = vrot.lane.b32.xlu0 %v4689, 64
        %v4764 = vpop.permute.xlu0 %4763
        %4765 = vrot.lane.b32.xlu0 %v4690, 64
        %v4766 = vpop.permute.xlu0 %4765
        %4767 = vrot.lane.b32.xlu0 %v4691, 64
        %v4768 = vpop.permute.xlu0 %4767
        %4769 = vrot.lane.b32.xlu0 %v4692, 64
        %v4770 = vpop.permute.xlu0 %4769
        %4771 = vrot.lane.b32.xlu0 %v4693, 64
        %v4772 = vpop.permute.xlu0 %4771
        %4773 = vrot.lane.b32.xlu0 %v4694, 64
        %v4774 = vpop.permute.xlu0 %4773
        %4775 = vrot.lane.b32.xlu0 %v4695, 64
        %v4776 = vpop.permute.xlu0 %4775
        %4777 = vrot.lane.b32.xlu0 %v4696, 64
        %v4778 = vpop.permute.xlu0 %4777
        %4779 = vrot.lane.b32.xlu0 %v4697, 64
        %v4780 = vpop.permute.xlu0 %4779
        %4781 = vrot.lane.b32.xlu0 %v4698, 64
        %v4782 = vpop.permute.xlu0 %4781
        %4783 = vrot.lane.b32.xlu0 %v4699, 64
        %v4784 = vpop.permute.xlu0 %4783
        %4785 = vrot.lane.b32.xlu0 %v4700, 64
        %v4786 = vpop.permute.xlu0 %4785
        %4787 = vrot.lane.b32.xlu0 %v4701, 64
        %v4788 = vpop.permute.xlu0 %4787
        %4789 = vrot.lane.b32.xlu0 %v4702, 64
        %v4790 = vpop.permute.xlu0 %4789
        %4791 = vrot.lane.b32.xlu0 %v4703, 64
        %v4792 = vpop.permute.xlu0 %4791
        %4793 = vrot.lane.b32.xlu0 %v4704, 64
        %v4794 = vpop.permute.xlu0 %4793
        %4795 = vrot.lane.b32.xlu0 %v4705, 64
        %v4796 = vpop.permute.xlu0 %4795
        %4797 = vrot.lane.b32.xlu0 %v4706, 64
        %v4798 = vpop.permute.xlu0 %4797
        %4799 = vrot.lane.b32.xlu0 %v4707, 64
        %v4800 = vpop.permute.xlu0 %4799
        %4801 = vrot.lane.b32.xlu0 %v4708, 64
        %v4802 = vpop.permute.xlu0 %4801
        %4803 = vrot.lane.b32.xlu0 %v4709, 64
        %v4804 = vpop.permute.xlu0 %4803
        %4805 = vrot.lane.b32.xlu0 %v4710, 64
        %v4806 = vpop.permute.xlu0 %4805
        %vm4839 = vcmask 785920
        %4840 = vst.msk [vmem:[#allocation2] sm:$0xff] %vm4839, %v4744
        %4841 = vst.msk [vmem:[#allocation2 + $0x8] sm:$0xff] %vm4839, %v4746
        %4842 = vst.msk [vmem:[#allocation2 + $0x10] sm:$0xff] %vm4839, %v4748
        %4843 = vst.msk [vmem:[#allocation2 + $0x18] sm:$0xff] %vm4839, %v4750
        %4844 = vst.msk [vmem:[#allocation2 + $0x20] sm:$0xff] %vm4839, %v4752
        %4845 = vst.msk [vmem:[#allocation2 + $0x28] sm:$0xff] %vm4839, %v4754
        %4846 = vst.msk [vmem:[#allocation2 + $0x30] sm:$0xff] %vm4839, %v4756
        %4847 = vst.msk [vmem:[#allocation2 + $0x38] sm:$0xff] %vm4839, %v4758
        %4848 = vst.msk [vmem:[#allocation2 + $0x40] sm:$0xff] %vm4839, %v4760
        %4849 = vst.msk [vmem:[#allocation2 + $0x48] sm:$0xff] %vm4839, %v4762
        %4850 = vst.msk [vmem:[#allocation2 + $0x50] sm:$0xff] %vm4839, %v4764
        %4851 = vst.msk [vmem:[#allocation2 + $0x58] sm:$0xff] %vm4839, %v4766
        %4852 = vst.msk [vmem:[#allocation2 + $0x60] sm:$0xff] %vm4839, %v4768
        %4853 = vst.msk [vmem:[#allocation2 + $0x68] sm:$0xff] %vm4839, %v4770
        %4854 = vst.msk [vmem:[#allocation2 + $0x70] sm:$0xff] %vm4839, %v4772
        %4855 = vst.msk [vmem:[#allocation2 + $0x78] sm:$0xff] %vm4839, %v4774
        %4856 = vst.msk [vmem:[#allocation2 + $0x80] sm:$0xff] %vm4839, %v4776
        %4857 = vst.msk [vmem:[#allocation2 + $0x88] sm:$0xff] %vm4839, %v4778
        %4858 = vst.msk [vmem:[#allocation2 + $0x90] sm:$0xff] %vm4839, %v4780
        %4859 = vst.msk [vmem:[#allocation2 + $0x98] sm:$0xff] %vm4839, %v4782
        %4860 = vst.msk [vmem:[#allocation2 + $0xa0] sm:$0xff] %vm4839, %v4784
        %4861 = vst.msk [vmem:[#allocation2 + $0xa8] sm:$0xff] %vm4839, %v4786
        %4862 = vst.msk [vmem:[#allocation2 + $0xb0] sm:$0xff] %vm4839, %v4788
        %4863 = vst.msk [vmem:[#allocation2 + $0xb8] sm:$0xff] %vm4839, %v4790
        %4864 = vst.msk [vmem:[#allocation2 + $0xc0] sm:$0xff] %vm4839, %v4792
        %4865 = vst.msk [vmem:[#allocation2 + $0xc8] sm:$0xff] %vm4839, %v4794
        %4866 = vst.msk [vmem:[#allocation2 + $0xd0] sm:$0xff] %vm4839, %v4796
        %4867 = vst.msk [vmem:[#allocation2 + $0xd8] sm:$0xff] %vm4839, %v4798
        %4868 = vst.msk [vmem:[#allocation2 + $0xe0] sm:$0xff] %vm4839, %v4800
        %4869 = vst.msk [vmem:[#allocation2 + $0xe8] sm:$0xff] %vm4839, %v4802
        %4870 = vst.msk [vmem:[#allocation2 + $0xf0] sm:$0xff] %vm4839, %v4804
        %4871 = vst.msk [vmem:[#allocation2 + $0xf8] sm:$0xff] %vm4839, %v4806
        %4872 = vrot.lane.b32.xlu0 %v1100, 32
        %v4873 = vpop.permute.xlu0 %4872
        %4874 = vrot.lane.b32.xlu0 %v1101, 32
        %v4875 = vpop.permute.xlu0 %4874
        %4876 = vrot.lane.b32.xlu0 %v1102, 32
        %v4877 = vpop.permute.xlu0 %4876
        %4878 = vrot.lane.b32.xlu0 %v1103, 32
        %v4879 = vpop.permute.xlu0 %4878
        %4880 = vrot.lane.b32.xlu0 %v1116, 32
        %v4881 = vpop.permute.xlu0 %4880
        %4882 = vrot.lane.b32.xlu0 %v1117, 32
        %v4883 = vpop.permute.xlu0 %4882
        %4884 = vrot.lane.b32.xlu0 %v1118, 32
        %v4885 = vpop.permute.xlu0 %4884
        %4886 = vrot.lane.b32.xlu0 %v1119, 32
        %v4887 = vpop.permute.xlu0 %4886
        %v4889 = vsel %vm1148, %v4873, 0
        %v4892 = vsel %vm1148, %v4875, 0
        %v4895 = vsel %vm1148, %v4877, 0
        %v4898 = vsel %vm1148, %v4879, 0
        %v4901 = vsel %vm1148, %v4881, 0
        %v4904 = vsel %vm1148, %v4883, 0
        %v4907 = vsel %vm1148, %v4885, 0
        %v4910 = vsel %vm1148, %v4887, 0
        %4912 = vmatprep.subr.bf16.mxu0 0
        %4913 = vmatpush1.bf16.xpose.msra.mxu0 %v4901
        %4914 = vmatprep.subr.bf16.mxu0 0
        %4915 = vmatpush1.bf16.xpose.msra.mxu0 %v4904
        %4916 = vmatprep.subr.bf16.mxu0 0
        %4917 = vmatpush1.bf16.xpose.msra.mxu0 %v4907
        %4918 = vmatprep.subr.bf16.mxu0 0
        %4919 = vmatpush1.bf16.xpose.msra.mxu0 %v4910
        %4920 = vmatprep.subr.bf16.mxu0 0
        %4921 = vmatpush1.bf16.xpose.msra.mxu0 0
        %4922 = vmatprep.subr.bf16.mxu0 0
        %4923 = vmatpush1.bf16.xpose.msra.mxu0 0
        %4924 = vmatprep.subr.bf16.mxu0 0
        %4925 = vmatpush1.bf16.xpose.msra.mxu0 0
        %4926 = vmatprep.subr.bf16.mxu0 0
        %4927 = vmatpush1.bf16.xpose.msra.mxu0 0
        %4928 = vmatprep.subr.bf16.mxu0 0
        %4929 = vmatpush1.bf16.xpose.msra.mxu0 0
        %4930 = vmatprep.subr.bf16.mxu0 0
        %4931 = vmatpush1.bf16.xpose.msra.mxu0 0
        %4932 = vmatprep.subr.bf16.mxu0 0
        %4933 = vmatpush1.bf16.xpose.msra.mxu0 0
        %4934 = vmatprep.subr.bf16.mxu0 0
        %4935 = vmatpush1.bf16.xpose.msra.mxu0 0
        %4936 = vmatprep.subr.bf16.mxu0 0
        %4937 = vmatpush1.bf16.xpose.msra.mxu0 0
        %4938 = vmatprep.subr.bf16.mxu0 0
        %4939 = vmatpush1.bf16.xpose.msra.mxu0 0
        %4940 = vmatprep.subr.bf16.mxu0 0
        %4941 = vmatpush1.bf16.xpose.msra.mxu0 0
        %4942 = vmatprep.subr.bf16.mxu0 0
        %4943 = vmatpush1.bf16.xpose.msra.mxu0 0
        %4944 = vmatprep.mubr.bf16.mxu0 0
        %4945 = vmatmul.mubr.bf16.gmra.mrb[0].mxu0 %v4889
        %v4946 = vpop.f32.mrb[0].mxu0
        %v4947 = vadd.f32 0.0, %v4946
        %v4948 = vpop.f32.mrb[0].mxu0
        %v4949 = vpop.f32.mrb[0].mxu0
        %v4950 = vadd.f32 0.0, %v4949
        %v4951 = vpop.f32.mrb[0].mxu0
        %4952 = vmatprep.mubr.bf16.mxu0 0
        %4953 = vmatmul.mubr.bf16.gmra.mrb[0].mxu0 %v4892
        %v4954 = vpop.f32.mrb[0].mxu0
        %v4955 = vadd.f32 0.0, %v4954
        %v4956 = vpop.f32.mrb[0].mxu0
        %v4957 = vpop.f32.mrb[0].mxu0
        %v4958 = vadd.f32 0.0, %v4957
        %v4959 = vpop.f32.mrb[0].mxu0
        %4960 = vmatprep.mubr.bf16.mxu0 0
        %4961 = vmatmul.mubr.bf16.gmra.mrb[0].mxu0 %v4895
        %v4962 = vpop.f32.mrb[0].mxu0
        %v4963 = vadd.f32 0.0, %v4962
        %v4964 = vpop.f32.mrb[0].mxu0
        %v4965 = vpop.f32.mrb[0].mxu0
        %v4966 = vadd.f32 0.0, %v4965
        %v4967 = vpop.f32.mrb[0].mxu0
        %4968 = vmatprep.mubr.bf16.mxu0 0
        %4969 = vmatmul.mubr.bf16.gmra.mrb[0].mxu0 %v4898
        %v4970 = vpop.f32.mrb[0].mxu0
        %v4971 = vadd.f32 0.0, %v4970
        %v4972 = vpop.f32.mrb[0].mxu0
        %v4973 = vpop.f32.mrb[0].mxu0
        %v4974 = vadd.f32 0.0, %v4973
        %v4975 = vpop.f32.mrb[0].mxu0
        %4976 = vdwg.mxu0
        %4977 = vrot.lane.b32.xlu0 %v1104, 32
        %v4978 = vpop.permute.xlu0 %4977
        %4979 = vrot.lane.b32.xlu0 %v1105, 32
        %v4980 = vpop.permute.xlu0 %4979
        %4981 = vrot.lane.b32.xlu0 %v1106, 32
        %v4982 = vpop.permute.xlu0 %4981
        %4983 = vrot.lane.b32.xlu0 %v1107, 32
        %v4984 = vpop.permute.xlu0 %4983
        %4985 = vrot.lane.b32.xlu0 %v1120, 32
        %v4986 = vpop.permute.xlu0 %4985
        %4987 = vrot.lane.b32.xlu0 %v1121, 32
        %v4988 = vpop.permute.xlu0 %4987
        %4989 = vrot.lane.b32.xlu0 %v1122, 32
        %v4990 = vpop.permute.xlu0 %4989
        %4991 = vrot.lane.b32.xlu0 %v1123, 32
        %v4992 = vpop.permute.xlu0 %4991
        %v4994 = vsel %vm1148, %v4978, 0
        %v4997 = vsel %vm1148, %v4980, 0
        %v5000 = vsel %vm1148, %v4982, 0
        %v5003 = vsel %vm1148, %v4984, 0
        %v5006 = vsel %vm1148, %v4986, 0
        %v5009 = vsel %vm1148, %v4988, 0
        %v5012 = vsel %vm1148, %v4990, 0
        %v5015 = vsel %vm1148, %v4992, 0
        %5017 = vmatprep.subr.bf16.mxu0 0
        %5018 = vmatpush1.bf16.xpose.msra.mxu0 %v5006
        %5019 = vmatprep.subr.bf16.mxu0 0
        %5020 = vmatpush1.bf16.xpose.msra.mxu0 %v5009
        %5021 = vmatprep.subr.bf16.mxu0 0
        %5022 = vmatpush1.bf16.xpose.msra.mxu0 %v5012
        %5023 = vmatprep.subr.bf16.mxu0 0
        %5024 = vmatpush1.bf16.xpose.msra.mxu0 %v5015
        %5025 = vmatprep.subr.bf16.mxu0 0
        %5026 = vmatpush1.bf16.xpose.msra.mxu0 0
        %5027 = vmatprep.subr.bf16.mxu0 0
        %5028 = vmatpush1.bf16.xpose.msra.mxu0 0
        %5029 = vmatprep.subr.bf16.mxu0 0
        %5030 = vmatpush1.bf16.xpose.msra.mxu0 0
        %5031 = vmatprep.subr.bf16.mxu0 0
        %5032 = vmatpush1.bf16.xpose.msra.mxu0 0
        %5033 = vmatprep.subr.bf16.mxu0 0
        %5034 = vmatpush1.bf16.xpose.msra.mxu0 0
        %5035 = vmatprep.subr.bf16.mxu0 0
        %5036 = vmatpush1.bf16.xpose.msra.mxu0 0
        %5037 = vmatprep.subr.bf16.mxu0 0
        %5038 = vmatpush1.bf16.xpose.msra.mxu0 0
        %5039 = vmatprep.subr.bf16.mxu0 0
        %5040 = vmatpush1.bf16.xpose.msra.mxu0 0
        %5041 = vmatprep.subr.bf16.mxu0 0
        %5042 = vmatpush1.bf16.xpose.msra.mxu0 0
        %5043 = vmatprep.subr.bf16.mxu0 0
        %5044 = vmatpush1.bf16.xpose.msra.mxu0 0
        %5045 = vmatprep.subr.bf16.mxu0 0
        %5046 = vmatpush1.bf16.xpose.msra.mxu0 0
        %5047 = vmatprep.subr.bf16.mxu0 0
        %5048 = vmatpush1.bf16.xpose.msra.mxu0 0
        %5049 = vmatprep.mubr.bf16.mxu0 0
        %5050 = vmatmul.mubr.bf16.gmra.mrb[0].mxu0 %v4994
        %v5051 = vpop.f32.mrb[0].mxu0
        %v5052 = vadd.f32 0.0, %v5051
        %v5053 = vpop.f32.mrb[0].mxu0
        %v5054 = vpop.f32.mrb[0].mxu0
        %v5055 = vadd.f32 0.0, %v5054
        %v5056 = vpop.f32.mrb[0].mxu0
        %5057 = vmatprep.mubr.bf16.mxu0 0
        %5058 = vmatmul.mubr.bf16.gmra.mrb[0].mxu0 %v4997
        %v5059 = vpop.f32.mrb[0].mxu0
        %v5060 = vadd.f32 0.0, %v5059
        %v5061 = vpop.f32.mrb[0].mxu0
        %v5062 = vpop.f32.mrb[0].mxu0
        %v5063 = vadd.f32 0.0, %v5062
        %v5064 = vpop.f32.mrb[0].mxu0
        %5065 = vmatprep.mubr.bf16.mxu0 0
        %5066 = vmatmul.mubr.bf16.gmra.mrb[0].mxu0 %v5000
        %v5067 = vpop.f32.mrb[0].mxu0
        %v5068 = vadd.f32 0.0, %v5067
        %v5069 = vpop.f32.mrb[0].mxu0
        %v5070 = vpop.f32.mrb[0].mxu0
        %v5071 = vadd.f32 0.0, %v5070
        %v5072 = vpop.f32.mrb[0].mxu0
        %5073 = vmatprep.mubr.bf16.mxu0 0
        %5074 = vmatmul.mubr.bf16.gmra.mrb[0].mxu0 %v5003
        %v5075 = vpop.f32.mrb[0].mxu0
        %v5076 = vadd.f32 0.0, %v5075
        %v5077 = vpop.f32.mrb[0].mxu0
        %v5078 = vpop.f32.mrb[0].mxu0
        %v5079 = vadd.f32 0.0, %v5078
        %v5080 = vpop.f32.mrb[0].mxu0
        %5081 = vdwg.mxu0
        %5082 = vrot.lane.b32.xlu0 %v1108, 32
        %v5083 = vpop.permute.xlu0 %5082
        %5084 = vrot.lane.b32.xlu0 %v1109, 32
        %v5085 = vpop.permute.xlu0 %5084
        %5086 = vrot.lane.b32.xlu0 %v1110, 32
        %v5087 = vpop.permute.xlu0 %5086
        %5088 = vrot.lane.b32.xlu0 %v1111, 32
        %v5089 = vpop.permute.xlu0 %5088
        %5090 = vrot.lane.b32.xlu0 %v1124, 32
        %v5091 = vpop.permute.xlu0 %5090
        %5092 = vrot.lane.b32.xlu0 %v1125, 32
        %v5093 = vpop.permute.xlu0 %5092
        %5094 = vrot.lane.b32.xlu0 %v1126, 32
        %v5095 = vpop.permute.xlu0 %5094
        %5096 = vrot.lane.b32.xlu0 %v1127, 32
        %v5097 = vpop.permute.xlu0 %5096
        %v5099 = vsel %vm1148, %v5083, 0
        %v5102 = vsel %vm1148, %v5085, 0
        %v5105 = vsel %vm1148, %v5087, 0
        %v5108 = vsel %vm1148, %v5089, 0
        %v5111 = vsel %vm1148, %v5091, 0
        %v5114 = vsel %vm1148, %v5093, 0
        %v5117 = vsel %vm1148, %v5095, 0
        %v5120 = vsel %vm1148, %v5097, 0
        %5122 = vmatprep.subr.bf16.mxu0 0
        %5123 = vmatpush1.bf16.xpose.msra.mxu0 %v5111
        %5124 = vmatprep.subr.bf16.mxu0 0
        %5125 = vmatpush1.bf16.xpose.msra.mxu0 %v5114
        %5126 = vmatprep.subr.bf16.mxu0 0
        %5127 = vmatpush1.bf16.xpose.msra.mxu0 %v5117
        %5128 = vmatprep.subr.bf16.mxu0 0
        %5129 = vmatpush1.bf16.xpose.msra.mxu0 %v5120
        %5130 = vmatprep.subr.bf16.mxu0 0
        %5131 = vmatpush1.bf16.xpose.msra.mxu0 0
        %5132 = vmatprep.subr.bf16.mxu0 0
        %5133 = vmatpush1.bf16.xpose.msra.mxu0 0
        %5134 = vmatprep.subr.bf16.mxu0 0
        %5135 = vmatpush1.bf16.xpose.msra.mxu0 0
        %5136 = vmatprep.subr.bf16.mxu0 0
        %5137 = vmatpush1.bf16.xpose.msra.mxu0 0
        %5138 = vmatprep.subr.bf16.mxu0 0
        %5139 = vmatpush1.bf16.xpose.msra.mxu0 0
        %5140 = vmatprep.subr.bf16.mxu0 0
        %5141 = vmatpush1.bf16.xpose.msra.mxu0 0
        %5142 = vmatprep.subr.bf16.mxu0 0
        %5143 = vmatpush1.bf16.xpose.msra.mxu0 0
        %5144 = vmatprep.subr.bf16.mxu0 0
        %5145 = vmatpush1.bf16.xpose.msra.mxu0 0
        %5146 = vmatprep.subr.bf16.mxu0 0
        %5147 = vmatpush1.bf16.xpose.msra.mxu0 0
        %5148 = vmatprep.subr.bf16.mxu0 0
        %5149 = vmatpush1.bf16.xpose.msra.mxu0 0
        %5150 = vmatprep.subr.bf16.mxu0 0
        %5151 = vmatpush1.bf16.xpose.msra.mxu0 0
        %5152 = vmatprep.subr.bf16.mxu0 0
        %5153 = vmatpush1.bf16.xpose.msra.mxu0 0
        %5154 = vmatprep.mubr.bf16.mxu0 0
        %5155 = vmatmul.mubr.bf16.gmra.mrb[0].mxu0 %v5099
        %v5156 = vpop.f32.mrb[0].mxu0
        %v5157 = vadd.f32 0.0, %v5156
        %v5158 = vpop.f32.mrb[0].mxu0
        %v5159 = vpop.f32.mrb[0].mxu0
        %v5160 = vadd.f32 0.0, %v5159
        %v5161 = vpop.f32.mrb[0].mxu0
        %5162 = vmatprep.mubr.bf16.mxu0 0
        %5163 = vmatmul.mubr.bf16.gmra.mrb[0].mxu0 %v5102
        %v5164 = vpop.f32.mrb[0].mxu0
        %v5165 = vadd.f32 0.0, %v5164
        %v5166 = vpop.f32.mrb[0].mxu0
        %v5167 = vpop.f32.mrb[0].mxu0
        %v5168 = vadd.f32 0.0, %v5167
        %v5169 = vpop.f32.mrb[0].mxu0
        %5170 = vmatprep.mubr.bf16.mxu0 0
        %5171 = vmatmul.mubr.bf16.gmra.mrb[0].mxu0 %v5105
        %v5172 = vpop.f32.mrb[0].mxu0
        %v5173 = vadd.f32 0.0, %v5172
        %v5174 = vpop.f32.mrb[0].mxu0
        %v5175 = vpop.f32.mrb[0].mxu0
        %v5176 = vadd.f32 0.0, %v5175
        %v5177 = vpop.f32.mrb[0].mxu0
        %5178 = vmatprep.mubr.bf16.mxu0 0
        %5179 = vmatmul.mubr.bf16.gmra.mrb[0].mxu0 %v5108
        %v5180 = vpop.f32.mrb[0].mxu0
        %v5181 = vadd.f32 0.0, %v5180
        %v5182 = vpop.f32.mrb[0].mxu0
        %v5183 = vpop.f32.mrb[0].mxu0
        %v5184 = vadd.f32 0.0, %v5183
        %v5185 = vpop.f32.mrb[0].mxu0
        %5186 = vdwg.mxu0
        %5187 = vrot.lane.b32.xlu0 %v1112, 32
        %v5188 = vpop.permute.xlu0 %5187
        %5189 = vrot.lane.b32.xlu0 %v1113, 32
        %v5190 = vpop.permute.xlu0 %5189
        %5191 = vrot.lane.b32.xlu0 %v1114, 32
        %v5192 = vpop.permute.xlu0 %5191
        %5193 = vrot.lane.b32.xlu0 %v1115, 32
        %v5194 = vpop.permute.xlu0 %5193
        %5195 = vrot.lane.b32.xlu0 %v1128, 32
        %v5196 = vpop.permute.xlu0 %5195
        %5197 = vrot.lane.b32.xlu0 %v1129, 32
        %v5198 = vpop.permute.xlu0 %5197
        %5199 = vrot.lane.b32.xlu0 %v1130, 32
        %v5200 = vpop.permute.xlu0 %5199
        %5201 = vrot.lane.b32.xlu0 %v1131, 32
        %v5202 = vpop.permute.xlu0 %5201
        %v5204 = vsel %vm1148, %v5188, 0
        %v5207 = vsel %vm1148, %v5190, 0
        %v5210 = vsel %vm1148, %v5192, 0
        %v5213 = vsel %vm1148, %v5194, 0
        %v5216 = vsel %vm1148, %v5196, 0
        %v5219 = vsel %vm1148, %v5198, 0
        %v5222 = vsel %vm1148, %v5200, 0
        %v5225 = vsel %vm1148, %v5202, 0
        %5227 = vmatprep.subr.bf16.mxu0 0
        %5228 = vmatpush1.bf16.xpose.msra.mxu0 %v5216
        %5229 = vmatprep.subr.bf16.mxu0 0
        %5230 = vmatpush1.bf16.xpose.msra.mxu0 %v5219
        %5231 = vmatprep.subr.bf16.mxu0 0
        %5232 = vmatpush1.bf16.xpose.msra.mxu0 %v5222
        %5233 = vmatprep.subr.bf16.mxu0 0
        %5234 = vmatpush1.bf16.xpose.msra.mxu0 %v5225
        %5235 = vmatprep.subr.bf16.mxu0 0
        %5236 = vmatpush1.bf16.xpose.msra.mxu0 0
        %5237 = vmatprep.subr.bf16.mxu0 0
        %5238 = vmatpush1.bf16.xpose.msra.mxu0 0
        %5239 = vmatprep.subr.bf16.mxu0 0
        %5240 = vmatpush1.bf16.xpose.msra.mxu0 0
        %5241 = vmatprep.subr.bf16.mxu0 0
        %5242 = vmatpush1.bf16.xpose.msra.mxu0 0
        %5243 = vmatprep.subr.bf16.mxu0 0
        %5244 = vmatpush1.bf16.xpose.msra.mxu0 0
        %5245 = vmatprep.subr.bf16.mxu0 0
        %5246 = vmatpush1.bf16.xpose.msra.mxu0 0
        %5247 = vmatprep.subr.bf16.mxu0 0
        %5248 = vmatpush1.bf16.xpose.msra.mxu0 0
        %5249 = vmatprep.subr.bf16.mxu0 0
        %5250 = vmatpush1.bf16.xpose.msra.mxu0 0
        %5251 = vmatprep.subr.bf16.mxu0 0
        %5252 = vmatpush1.bf16.xpose.msra.mxu0 0
        %5253 = vmatprep.subr.bf16.mxu0 0
        %5254 = vmatpush1.bf16.xpose.msra.mxu0 0
        %5255 = vmatprep.subr.bf16.mxu0 0
        %5256 = vmatpush1.bf16.xpose.msra.mxu0 0
        %5257 = vmatprep.subr.bf16.mxu0 0
        %5258 = vmatpush1.bf16.xpose.msra.mxu0 0
        %5259 = vmatprep.mubr.bf16.mxu0 0
        %5260 = vmatmul.mubr.bf16.gmra.mrb[0].mxu0 %v5204
        %v5261 = vpop.f32.mrb[0].mxu0
        %v5262 = vadd.f32 0.0, %v5261
        %v5263 = vpop.f32.mrb[0].mxu0
        %v5264 = vpop.f32.mrb[0].mxu0
        %v5265 = vadd.f32 0.0, %v5264
        %v5266 = vpop.f32.mrb[0].mxu0
        %5267 = vmatprep.mubr.bf16.mxu0 0
        %5268 = vmatmul.mubr.bf16.gmra.mrb[0].mxu0 %v5207
        %v5269 = vpop.f32.mrb[0].mxu0
        %v5270 = vadd.f32 0.0, %v5269
        %v5271 = vpop.f32.mrb[0].mxu0
        %v5272 = vpop.f32.mrb[0].mxu0
        %v5273 = vadd.f32 0.0, %v5272
        %v5274 = vpop.f32.mrb[0].mxu0
        %5275 = vmatprep.mubr.bf16.mxu0 0
        %5276 = vmatmul.mubr.bf16.gmra.mrb[0].mxu0 %v5210
        %v5277 = vpop.f32.mrb[0].mxu0
        %v5278 = vadd.f32 0.0, %v5277
        %v5279 = vpop.f32.mrb[0].mxu0
        %v5280 = vpop.f32.mrb[0].mxu0
        %v5281 = vadd.f32 0.0, %v5280
        %v5282 = vpop.f32.mrb[0].mxu0
        %5283 = vmatprep.mubr.bf16.mxu0 0
        %5284 = vmatmul.mubr.bf16.gmra.mrb[0].mxu0 %v5213
        %v5285 = vpop.f32.mrb[0].mxu0
        %v5286 = vadd.f32 0.0, %v5285
        %v5287 = vpop.f32.mrb[0].mxu0
        %v5288 = vpop.f32.mrb[0].mxu0
        %v5289 = vadd.f32 0.0, %v5288
        %v5290 = vpop.f32.mrb[0].mxu0
        %5291 = vdwg.mxu0
        %v5292 = vsel %vm1505, %v4947, -inf
        %5293 = vmax.xlane.f32.xlu0 %v5292
        %v5294 = vpop.xlane.xlu0 %5293
        %v5295 = vsel %vm1505, %v4950, -inf
        %5296 = vmax.xlane.f32.xlu0 %v5295
        %v5297 = vpop.xlane.xlu0 %5296
        %v5298 = vsel %vm1505, %v4955, -inf
        %5299 = vmax.xlane.f32.xlu0 %v5298
        %v5300 = vpop.xlane.xlu0 %5299
        %v5301 = vsel %vm1505, %v4958, -inf
        %5302 = vmax.xlane.f32.xlu0 %v5301
        %v5303 = vpop.xlane.xlu0 %5302
        %v5304 = vsel %vm1505, %v4963, -inf
        %5305 = vmax.xlane.f32.xlu0 %v5304
        %v5306 = vpop.xlane.xlu0 %5305
        %v5307 = vsel %vm1505, %v4966, -inf
        %5308 = vmax.xlane.f32.xlu0 %v5307
        %v5309 = vpop.xlane.xlu0 %5308
        %v5310 = vsel %vm1505, %v4971, -inf
        %5311 = vmax.xlane.f32.xlu0 %v5310
        %v5312 = vpop.xlane.xlu0 %5311
        %v5313 = vsel %vm1505, %v4974, -inf
        %5314 = vmax.xlane.f32.xlu0 %v5313
        %v5315 = vpop.xlane.xlu0 %5314
        %v5316 = vsel %vm1505, %v5052, -inf
        %5317 = vmax.xlane.f32.xlu0 %v5316
        %v5318 = vpop.xlane.xlu0 %5317
        %v5319 = vsel %vm1505, %v5055, -inf
        %5320 = vmax.xlane.f32.xlu0 %v5319
        %v5321 = vpop.xlane.xlu0 %5320
        %v5322 = vsel %vm1505, %v5060, -inf
        %5323 = vmax.xlane.f32.xlu0 %v5322
        %v5324 = vpop.xlane.xlu0 %5323
        %v5325 = vsel %vm1505, %v5063, -inf
        %5326 = vmax.xlane.f32.xlu0 %v5325
        %v5327 = vpop.xlane.xlu0 %5326
        %v5328 = vsel %vm1505, %v5068, -inf
        %5329 = vmax.xlane.f32.xlu0 %v5328
        %v5330 = vpop.xlane.xlu0 %5329
        %v5331 = vsel %vm1505, %v5071, -inf
        %5332 = vmax.xlane.f32.xlu0 %v5331
        %v5333 = vpop.xlane.xlu0 %5332
        %v5334 = vsel %vm1505, %v5076, -inf
        %5335 = vmax.xlane.f32.xlu0 %v5334
        %v5336 = vpop.xlane.xlu0 %5335
        %v5337 = vsel %vm1505, %v5079, -inf
        %5338 = vmax.xlane.f32.xlu0 %v5337
        %v5339 = vpop.xlane.xlu0 %5338
        %v5340 = vsel %vm1505, %v5157, -inf
        %5341 = vmax.xlane.f32.xlu0 %v5340
        %v5342 = vpop.xlane.xlu0 %5341
        %v5343 = vsel %vm1505, %v5160, -inf
        %5344 = vmax.xlane.f32.xlu0 %v5343
        %v5345 = vpop.xlane.xlu0 %5344
        %v5346 = vsel %vm1505, %v5165, -inf
        %5347 = vmax.xlane.f32.xlu0 %v5346
        %v5348 = vpop.xlane.xlu0 %5347
        %v5349 = vsel %vm1505, %v5168, -inf
        %5350 = vmax.xlane.f32.xlu0 %v5349
        %v5351 = vpop.xlane.xlu0 %5350
        %v5352 = vsel %vm1505, %v5173, -inf
        %5353 = vmax.xlane.f32.xlu0 %v5352
        %v5354 = vpop.xlane.xlu0 %5353
        %v5355 = vsel %vm1505, %v5176, -inf
        %5356 = vmax.xlane.f32.xlu0 %v5355
        %v5357 = vpop.xlane.xlu0 %5356
        %v5358 = vsel %vm1505, %v5181, -inf
        %5359 = vmax.xlane.f32.xlu0 %v5358
        %v5360 = vpop.xlane.xlu0 %5359
        %v5361 = vsel %vm1505, %v5184, -inf
        %5362 = vmax.xlane.f32.xlu0 %v5361
        %v5363 = vpop.xlane.xlu0 %5362
        %v5364 = vsel %vm1505, %v5262, -inf
        %5365 = vmax.xlane.f32.xlu0 %v5364
        %v5366 = vpop.xlane.xlu0 %5365
        %v5367 = vsel %vm1505, %v5265, -inf
        %5368 = vmax.xlane.f32.xlu0 %v5367
        %v5369 = vpop.xlane.xlu0 %5368
        %v5370 = vsel %vm1505, %v5270, -inf
        %5371 = vmax.xlane.f32.xlu0 %v5370
        %v5372 = vpop.xlane.xlu0 %5371
        %v5373 = vsel %vm1505, %v5273, -inf
        %5374 = vmax.xlane.f32.xlu0 %v5373
        %v5375 = vpop.xlane.xlu0 %5374
        %v5376 = vsel %vm1505, %v5278, -inf
        %5377 = vmax.xlane.f32.xlu0 %v5376
        %v5378 = vpop.xlane.xlu0 %5377
        %v5379 = vsel %vm1505, %v5281, -inf
        %5380 = vmax.xlane.f32.xlu0 %v5379
        %v5381 = vpop.xlane.xlu0 %5380
        %v5382 = vsel %vm1505, %v5286, -inf
        %5383 = vmax.xlane.f32.xlu0 %v5382
        %v5384 = vpop.xlane.xlu0 %5383
        %v5385 = vsel %vm1505, %v5289, -inf
        %5386 = vmax.xlane.f32.xlu0 %v5385
        %v5387 = vpop.xlane.xlu0 %5386
        %v5388 = vsub.f32 %v4947, %v5294
        %v5389 = vsub.f32 %v4950, %v5297
        %v5390 = vsub.f32 %v4955, %v5300
        %v5391 = vsub.f32 %v4958, %v5303
        %v5392 = vsub.f32 %v4963, %v5306
        %v5393 = vsub.f32 %v4966, %v5309
        %v5394 = vsub.f32 %v4971, %v5312
        %v5395 = vsub.f32 %v4974, %v5315
        %v5396 = vsub.f32 %v5052, %v5318
        %v5397 = vsub.f32 %v5055, %v5321
        %v5398 = vsub.f32 %v5060, %v5324
        %v5399 = vsub.f32 %v5063, %v5327
        %v5400 = vsub.f32 %v5068, %v5330
        %v5401 = vsub.f32 %v5071, %v5333
        %v5402 = vsub.f32 %v5076, %v5336
        %v5403 = vsub.f32 %v5079, %v5339
        %v5404 = vsub.f32 %v5157, %v5342
        %v5405 = vsub.f32 %v5160, %v5345
        %v5406 = vsub.f32 %v5165, %v5348
        %v5407 = vsub.f32 %v5168, %v5351
        %v5408 = vsub.f32 %v5173, %v5354
        %v5409 = vsub.f32 %v5176, %v5357
        %v5410 = vsub.f32 %v5181, %v5360
        %v5411 = vsub.f32 %v5184, %v5363
        %v5412 = vsub.f32 %v5262, %v5366
        %v5413 = vsub.f32 %v5265, %v5369
        %v5414 = vsub.f32 %v5270, %v5372
        %v5415 = vsub.f32 %v5273, %v5375
        %v5416 = vsub.f32 %v5278, %v5378
        %v5417 = vsub.f32 %v5281, %v5381
        %v5418 = vsub.f32 %v5286, %v5384
        %v5419 = vsub.f32 %v5289, %v5387
        %v5420 = vmul.f32 %v5388, 1.442695
        %v5421 = vpow.pop %v5420
        %v5422 = vmul.f32 %v5389, 1.442695
        %v5423 = vpow.pop %v5422
        %v5424 = vmul.f32 %v5390, 1.442695
        %v5425 = vpow.pop %v5424
        %v5426 = vmul.f32 %v5391, 1.442695
        %v5427 = vpow.pop %v5426
        %v5428 = vmul.f32 %v5392, 1.442695
        %v5429 = vpow.pop %v5428
        %v5430 = vmul.f32 %v5393, 1.442695
        %v5431 = vpow.pop %v5430
        %v5432 = vmul.f32 %v5394, 1.442695
        %v5433 = vpow.pop %v5432
        %v5434 = vmul.f32 %v5395, 1.442695
        %v5435 = vpow.pop %v5434
        %v5436 = vmul.f32 %v5396, 1.442695
        %v5437 = vpow.pop %v5436
        %v5438 = vmul.f32 %v5397, 1.442695
        %v5439 = vpow.pop %v5438
        %v5440 = vmul.f32 %v5398, 1.442695
        %v5441 = vpow.pop %v5440
        %v5442 = vmul.f32 %v5399, 1.442695
        %v5443 = vpow.pop %v5442
        %v5444 = vmul.f32 %v5400, 1.442695
        %v5445 = vpow.pop %v5444
        %v5446 = vmul.f32 %v5401, 1.442695
        %v5447 = vpow.pop %v5446
        %v5448 = vmul.f32 %v5402, 1.442695
        %v5449 = vpow.pop %v5448
        %v5450 = vmul.f32 %v5403, 1.442695
        %v5451 = vpow.pop %v5450
        %v5452 = vmul.f32 %v5404, 1.442695
        %v5453 = vpow.pop %v5452
        %v5454 = vmul.f32 %v5405, 1.442695
        %v5455 = vpow.pop %v5454
        %v5456 = vmul.f32 %v5406, 1.442695
        %v5457 = vpow.pop %v5456
        %v5458 = vmul.f32 %v5407, 1.442695
        %v5459 = vpow.pop %v5458
        %v5460 = vmul.f32 %v5408, 1.442695
        %v5461 = vpow.pop %v5460
        %v5462 = vmul.f32 %v5409, 1.442695
        %v5463 = vpow.pop %v5462
        %v5464 = vmul.f32 %v5410, 1.442695
        %v5465 = vpow.pop %v5464
        %v5466 = vmul.f32 %v5411, 1.442695
        %v5467 = vpow.pop %v5466
        %v5468 = vmul.f32 %v5412, 1.442695
        %v5469 = vpow.pop %v5468
        %v5470 = vmul.f32 %v5413, 1.442695
        %v5471 = vpow.pop %v5470
        %v5472 = vmul.f32 %v5414, 1.442695
        %v5473 = vpow.pop %v5472
        %v5474 = vmul.f32 %v5415, 1.442695
        %v5475 = vpow.pop %v5474
        %v5476 = vmul.f32 %v5416, 1.442695
        %v5477 = vpow.pop %v5476
        %v5478 = vmul.f32 %v5417, 1.442695
        %v5479 = vpow.pop %v5478
        %v5480 = vmul.f32 %v5418, 1.442695
        %v5481 = vpow.pop %v5480
        %v5482 = vmul.f32 %v5419, 1.442695
        %v5483 = vpow.pop %v5482
        %v5484 = vsel %vm1505, %v5421, 0.0
        %5485 = vadd.xlane.f32.xlu0 %v5484
        %v5486 = vpop.xlane.xlu0 %5485
        %v5487 = vsel %vm1505, %v5423, 0.0
        %5488 = vadd.xlane.f32.xlu0 %v5487
        %v5489 = vpop.xlane.xlu0 %5488
        %v5490 = vsel %vm1505, %v5425, 0.0
        %5491 = vadd.xlane.f32.xlu0 %v5490
        %v5492 = vpop.xlane.xlu0 %5491
        %v5493 = vsel %vm1505, %v5427, 0.0
        %5494 = vadd.xlane.f32.xlu0 %v5493
        %v5495 = vpop.xlane.xlu0 %5494
        %v5496 = vsel %vm1505, %v5429, 0.0
        %5497 = vadd.xlane.f32.xlu0 %v5496
        %v5498 = vpop.xlane.xlu0 %5497
        %v5499 = vsel %vm1505, %v5431, 0.0
        %5500 = vadd.xlane.f32.xlu0 %v5499
        %v5501 = vpop.xlane.xlu0 %5500
        %v5502 = vsel %vm1505, %v5433, 0.0
        %5503 = vadd.xlane.f32.xlu0 %v5502
        %v5504 = vpop.xlane.xlu0 %5503
        %v5505 = vsel %vm1505, %v5435, 0.0
        %5506 = vadd.xlane.f32.xlu0 %v5505
        %v5507 = vpop.xlane.xlu0 %5506
        %v5508 = vsel %vm1505, %v5437, 0.0
        %5509 = vadd.xlane.f32.xlu0 %v5508
        %v5510 = vpop.xlane.xlu0 %5509
        %v5511 = vsel %vm1505, %v5439, 0.0
        %5512 = vadd.xlane.f32.xlu0 %v5511
        %v5513 = vpop.xlane.xlu0 %5512
        %v5514 = vsel %vm1505, %v5441, 0.0
        %5515 = vadd.xlane.f32.xlu0 %v5514
        %v5516 = vpop.xlane.xlu0 %5515
        %v5517 = vsel %vm1505, %v5443, 0.0
        %5518 = vadd.xlane.f32.xlu0 %v5517
        %v5519 = vpop.xlane.xlu0 %5518
        %v5520 = vsel %vm1505, %v5445, 0.0
        %5521 = vadd.xlane.f32.xlu0 %v5520
        %v5522 = vpop.xlane.xlu0 %5521
        %v5523 = vsel %vm1505, %v5447, 0.0
        %5524 = vadd.xlane.f32.xlu0 %v5523
        %v5525 = vpop.xlane.xlu0 %5524
        %v5526 = vsel %vm1505, %v5449, 0.0
        %5527 = vadd.xlane.f32.xlu0 %v5526
        %v5528 = vpop.xlane.xlu0 %5527
        %v5529 = vsel %vm1505, %v5451, 0.0
        %5530 = vadd.xlane.f32.xlu0 %v5529
        %v5531 = vpop.xlane.xlu0 %5530
        %v5532 = vsel %vm1505, %v5453, 0.0
        %5533 = vadd.xlane.f32.xlu0 %v5532
        %v5534 = vpop.xlane.xlu0 %5533
        %v5535 = vsel %vm1505, %v5455, 0.0
        %5536 = vadd.xlane.f32.xlu0 %v5535
        %v5537 = vpop.xlane.xlu0 %5536
        %v5538 = vsel %vm1505, %v5457, 0.0
        %5539 = vadd.xlane.f32.xlu0 %v5538
        %v5540 = vpop.xlane.xlu0 %5539
        %v5541 = vsel %vm1505, %v5459, 0.0
        %5542 = vadd.xlane.f32.xlu0 %v5541
        %v5543 = vpop.xlane.xlu0 %5542
        %v5544 = vsel %vm1505, %v5461, 0.0
        %5545 = vadd.xlane.f32.xlu0 %v5544
        %v5546 = vpop.xlane.xlu0 %5545
        %v5547 = vsel %vm1505, %v5463, 0.0
        %5548 = vadd.xlane.f32.xlu0 %v5547
        %v5549 = vpop.xlane.xlu0 %5548
        %v5550 = vsel %vm1505, %v5465, 0.0
        %5551 = vadd.xlane.f32.xlu0 %v5550
        %v5552 = vpop.xlane.xlu0 %5551
        %v5553 = vsel %vm1505, %v5467, 0.0
        %5554 = vadd.xlane.f32.xlu0 %v5553
        %v5555 = vpop.xlane.xlu0 %5554
        %v5556 = vsel %vm1505, %v5469, 0.0
        %5557 = vadd.xlane.f32.xlu0 %v5556
        %v5558 = vpop.xlane.xlu0 %5557
        %v5559 = vsel %vm1505, %v5471, 0.0
        %5560 = vadd.xlane.f32.xlu0 %v5559
        %v5561 = vpop.xlane.xlu0 %5560
        %v5562 = vsel %vm1505, %v5473, 0.0
        %5563 = vadd.xlane.f32.xlu0 %v5562
        %v5564 = vpop.xlane.xlu0 %5563
        %v5565 = vsel %vm1505, %v5475, 0.0
        %5566 = vadd.xlane.f32.xlu0 %v5565
        %v5567 = vpop.xlane.xlu0 %5566
        %v5568 = vsel %vm1505, %v5477, 0.0
        %5569 = vadd.xlane.f32.xlu0 %v5568
        %v5570 = vpop.xlane.xlu0 %5569
        %v5571 = vsel %vm1505, %v5479, 0.0
        %5572 = vadd.xlane.f32.xlu0 %v5571
        %v5573 = vpop.xlane.xlu0 %5572
        %v5574 = vsel %vm1505, %v5481, 0.0
        %5575 = vadd.xlane.f32.xlu0 %v5574
        %v5576 = vpop.xlane.xlu0 %5575
        %v5577 = vsel %vm1505, %v5483, 0.0
        %5578 = vadd.xlane.f32.xlu0 %v5577
        %v5579 = vpop.xlane.xlu0 %5578
        %v5580 = vrcp.pop %v5486
        %v5581 = vrcp.pop %v5489
        %v5582 = vrcp.pop %v5492
        %v5583 = vrcp.pop %v5495
        %v5584 = vrcp.pop %v5498
        %v5585 = vrcp.pop %v5501
        %v5586 = vrcp.pop %v5504
        %v5587 = vrcp.pop %v5507
        %v5588 = vrcp.pop %v5510
        %v5589 = vrcp.pop %v5513
        %v5590 = vrcp.pop %v5516
        %v5591 = vrcp.pop %v5519
        %v5592 = vrcp.pop %v5522
        %v5593 = vrcp.pop %v5525
        %v5594 = vrcp.pop %v5528
        %v5595 = vrcp.pop %v5531
        %v5596 = vrcp.pop %v5534
        %v5597 = vrcp.pop %v5537
        %v5598 = vrcp.pop %v5540
        %v5599 = vrcp.pop %v5543
        %v5600 = vrcp.pop %v5546
        %v5601 = vrcp.pop %v5549
        %v5602 = vrcp.pop %v5552
        %v5603 = vrcp.pop %v5555
        %v5604 = vrcp.pop %v5558
        %v5605 = vrcp.pop %v5561
        %v5606 = vrcp.pop %v5564
        %v5607 = vrcp.pop %v5567
        %v5608 = vrcp.pop %v5570
        %v5609 = vrcp.pop %v5573
        %v5610 = vrcp.pop %v5576
        %v5611 = vrcp.pop %v5579
        %v5612 = vpack.c.bf16 %v5423, %v5421
        %v5613 = vpack.c.bf16 %v5427, %v5425
        %v5614 = vpack.c.bf16 %v5431, %v5429
        %v5615 = vpack.c.bf16 %v5435, %v5433
        %v5616 = vpack.c.bf16 %v5439, %v5437
        %v5617 = vpack.c.bf16 %v5443, %v5441
        %v5618 = vpack.c.bf16 %v5447, %v5445
        %v5619 = vpack.c.bf16 %v5451, %v5449
        %v5620 = vpack.c.bf16 %v5455, %v5453
        %v5621 = vpack.c.bf16 %v5459, %v5457
        %v5622 = vpack.c.bf16 %v5463, %v5461
        %v5623 = vpack.c.bf16 %v5467, %v5465
        %v5624 = vpack.c.bf16 %v5471, %v5469
        %v5625 = vpack.c.bf16 %v5475, %v5473
        %v5626 = vpack.c.bf16 %v5479, %v5477
        %v5627 = vpack.c.bf16 %v5483, %v5481
        %5628 = vrot.lane.b32.xlu0 %v1132, 32
        %v5629 = vpop.permute.xlu0 %5628
        %5630 = vrot.lane.b32.xlu0 %v1133, 32
        %v5631 = vpop.permute.xlu0 %5630
        %5632 = vrot.lane.b32.xlu0 %v1134, 32
        %v5633 = vpop.permute.xlu0 %5632
        %5634 = vrot.lane.b32.xlu0 %v1135, 32
        %v5635 = vpop.permute.xlu0 %5634
        %v5641 = vsel %vm1505, %v5612, 0
        %v5644 = vsel %vm1505, %v5613, 0
        %v5647 = vsel %vm1505, %v5614, 0
        %v5650 = vsel %vm1505, %v5615, 0
        %5652 = vmatprep.subr.bf16.mxu0 0
        %5653 = vmatpush1.bf16.msra.mxu0 %v5629
        %5654 = vmatprep.subr.bf16.mxu0 0
        %5655 = vmatpush1.bf16.msra.mxu0 %v5631
        %5656 = vmatprep.subr.bf16.mxu0 0
        %5657 = vmatpush1.bf16.msra.mxu0 %v5633
        %5658 = vmatprep.subr.bf16.mxu0 0
        %5659 = vmatpush1.bf16.msra.mxu0 %v5635
        %5660 = vmatprep.subr.bf16.mxu0 0
        %5661 = vmatpush1.bf16.msra.mxu0 0
        %5662 = vmatprep.subr.bf16.mxu0 0
        %5663 = vmatpush1.bf16.msra.mxu0 0
        %5664 = vmatprep.subr.bf16.mxu0 0
        %5665 = vmatpush1.bf16.msra.mxu0 0
        %5666 = vmatprep.subr.bf16.mxu0 0
        %5667 = vmatpush1.bf16.msra.mxu0 0
        %5668 = vmatprep.subr.bf16.mxu0 0
        %5669 = vmatpush1.bf16.msra.mxu0 0
        %5670 = vmatprep.subr.bf16.mxu0 0
        %5671 = vmatpush1.bf16.msra.mxu0 0
        %5672 = vmatprep.subr.bf16.mxu0 0
        %5673 = vmatpush1.bf16.msra.mxu0 0
        %5674 = vmatprep.subr.bf16.mxu0 0
        %5675 = vmatpush1.bf16.msra.mxu0 0
        %5676 = vmatprep.subr.bf16.mxu0 0
        %5677 = vmatpush1.bf16.msra.mxu0 0
        %5678 = vmatprep.subr.bf16.mxu0 0
        %5679 = vmatpush1.bf16.msra.mxu0 0
        %5680 = vmatprep.subr.bf16.mxu0 0
        %5681 = vmatpush1.bf16.msra.mxu0 0
        %5682 = vmatprep.subr.bf16.mxu0 0
        %5683 = vmatpush1.bf16.msra.mxu0 0
        %5684 = vmatprep.mubr.bf16.mxu0 0
        %5685 = vmatmul.mubr.bf16.gmra.mrb[0].mxu0 %v5641
        %v5686 = vpop.f32.mrb[0].mxu0
        %v5687 = vadd.f32 0.0, %v5686
        %v5688 = vpop.f32.mrb[0].mxu0
        %v5689 = vpop.f32.mrb[0].mxu0
        %v5690 = vadd.f32 0.0, %v5689
        %v5691 = vpop.f32.mrb[0].mxu0
        %5692 = vmatprep.mubr.bf16.mxu0 0
        %5693 = vmatmul.mubr.bf16.gmra.mrb[0].mxu0 %v5644
        %v5694 = vpop.f32.mrb[0].mxu0
        %v5695 = vadd.f32 0.0, %v5694
        %v5696 = vpop.f32.mrb[0].mxu0
        %v5697 = vpop.f32.mrb[0].mxu0
        %v5698 = vadd.f32 0.0, %v5697
        %v5699 = vpop.f32.mrb[0].mxu0
        %5700 = vmatprep.mubr.bf16.mxu0 0
        %5701 = vmatmul.mubr.bf16.gmra.mrb[0].mxu0 %v5647
        %v5702 = vpop.f32.mrb[0].mxu0
        %v5703 = vadd.f32 0.0, %v5702
        %v5704 = vpop.f32.mrb[0].mxu0
        %v5705 = vpop.f32.mrb[0].mxu0
        %v5706 = vadd.f32 0.0, %v5705
        %v5707 = vpop.f32.mrb[0].mxu0
        %5708 = vmatprep.mubr.bf16.mxu0 0
        %5709 = vmatmul.mubr.bf16.gmra.mrb[0].mxu0 %v5650
        %v5710 = vpop.f32.mrb[0].mxu0
        %v5711 = vadd.f32 0.0, %v5710
        %v5712 = vpop.f32.mrb[0].mxu0
        %v5713 = vpop.f32.mrb[0].mxu0
        %v5714 = vadd.f32 0.0, %v5713
        %v5715 = vpop.f32.mrb[0].mxu0
        %5716 = vdwg.mxu0
        %5717 = vrot.lane.b32.xlu0 %v1136, 32
        %v5718 = vpop.permute.xlu0 %5717
        %5719 = vrot.lane.b32.xlu0 %v1137, 32
        %v5720 = vpop.permute.xlu0 %5719
        %5721 = vrot.lane.b32.xlu0 %v1138, 32
        %v5722 = vpop.permute.xlu0 %5721
        %5723 = vrot.lane.b32.xlu0 %v1139, 32
        %v5724 = vpop.permute.xlu0 %5723
        %v5730 = vsel %vm1505, %v5616, 0
        %v5733 = vsel %vm1505, %v5617, 0
        %v5736 = vsel %vm1505, %v5618, 0
        %v5739 = vsel %vm1505, %v5619, 0
        %5741 = vmatprep.subr.bf16.mxu0 0
        %5742 = vmatpush1.bf16.msra.mxu0 %v5718
        %5743 = vmatprep.subr.bf16.mxu0 0
        %5744 = vmatpush1.bf16.msra.mxu0 %v5720
        %5745 = vmatprep.subr.bf16.mxu0 0
        %5746 = vmatpush1.bf16.msra.mxu0 %v5722
        %5747 = vmatprep.subr.bf16.mxu0 0
        %5748 = vmatpush1.bf16.msra.mxu0 %v5724
        %5749 = vmatprep.subr.bf16.mxu0 0
        %5750 = vmatpush1.bf16.msra.mxu0 0
        %5751 = vmatprep.subr.bf16.mxu0 0
        %5752 = vmatpush1.bf16.msra.mxu0 0
        %5753 = vmatprep.subr.bf16.mxu0 0
        %5754 = vmatpush1.bf16.msra.mxu0 0
        %5755 = vmatprep.subr.bf16.mxu0 0
        %5756 = vmatpush1.bf16.msra.mxu0 0
        %5757 = vmatprep.subr.bf16.mxu0 0
        %5758 = vmatpush1.bf16.msra.mxu0 0
        %5759 = vmatprep.subr.bf16.mxu0 0
        %5760 = vmatpush1.bf16.msra.mxu0 0
        %5761 = vmatprep.subr.bf16.mxu0 0
        %5762 = vmatpush1.bf16.msra.mxu0 0
        %5763 = vmatprep.subr.bf16.mxu0 0
        %5764 = vmatpush1.bf16.msra.mxu0 0
        %5765 = vmatprep.subr.bf16.mxu0 0
        %5766 = vmatpush1.bf16.msra.mxu0 0
        %5767 = vmatprep.subr.bf16.mxu0 0
        %5768 = vmatpush1.bf16.msra.mxu0 0
        %5769 = vmatprep.subr.bf16.mxu0 0
        %5770 = vmatpush1.bf16.msra.mxu0 0
        %5771 = vmatprep.subr.bf16.mxu0 0
        %5772 = vmatpush1.bf16.msra.mxu0 0
        %5773 = vmatprep.mubr.bf16.mxu0 0
        %5774 = vmatmul.mubr.bf16.gmra.mrb[0].mxu0 %v5730
        %v5775 = vpop.f32.mrb[0].mxu0
        %v5776 = vadd.f32 0.0, %v5775
        %v5777 = vpop.f32.mrb[0].mxu0
        %v5778 = vpop.f32.mrb[0].mxu0
        %v5779 = vadd.f32 0.0, %v5778
        %v5780 = vpop.f32.mrb[0].mxu0
        %5781 = vmatprep.mubr.bf16.mxu0 0
        %5782 = vmatmul.mubr.bf16.gmra.mrb[0].mxu0 %v5733
        %v5783 = vpop.f32.mrb[0].mxu0
        %v5784 = vadd.f32 0.0, %v5783
        %v5785 = vpop.f32.mrb[0].mxu0
        %v5786 = vpop.f32.mrb[0].mxu0
        %v5787 = vadd.f32 0.0, %v5786
        %v5788 = vpop.f32.mrb[0].mxu0
        %5789 = vmatprep.mubr.bf16.mxu0 0
        %5790 = vmatmul.mubr.bf16.gmra.mrb[0].mxu0 %v5736
        %v5791 = vpop.f32.mrb[0].mxu0
        %v5792 = vadd.f32 0.0, %v5791
        %v5793 = vpop.f32.mrb[0].mxu0
        %v5794 = vpop.f32.mrb[0].mxu0
        %v5795 = vadd.f32 0.0, %v5794
        %v5796 = vpop.f32.mrb[0].mxu0
        %5797 = vmatprep.mubr.bf16.mxu0 0
        %5798 = vmatmul.mubr.bf16.gmra.mrb[0].mxu0 %v5739
        %v5799 = vpop.f32.mrb[0].mxu0
        %v5800 = vadd.f32 0.0, %v5799
        %v5801 = vpop.f32.mrb[0].mxu0
        %v5802 = vpop.f32.mrb[0].mxu0
        %v5803 = vadd.f32 0.0, %v5802
        %v5804 = vpop.f32.mrb[0].mxu0
        %5805 = vdwg.mxu0
        %5806 = vrot.lane.b32.xlu0 %v1140, 32
        %v5807 = vpop.permute.xlu0 %5806
        %5808 = vrot.lane.b32.xlu0 %v1141, 32
        %v5809 = vpop.permute.xlu0 %5808
        %5810 = vrot.lane.b32.xlu0 %v1142, 32
        %v5811 = vpop.permute.xlu0 %5810
        %5812 = vrot.lane.b32.xlu0 %v1143, 32
        %v5813 = vpop.permute.xlu0 %5812
        %v5819 = vsel %vm1505, %v5620, 0
        %v5822 = vsel %vm1505, %v5621, 0
        %v5825 = vsel %vm1505, %v5622, 0
        %v5828 = vsel %vm1505, %v5623, 0
        %5830 = vmatprep.subr.bf16.mxu0 0
        %5831 = vmatpush1.bf16.msra.mxu0 %v5807
        %5832 = vmatprep.subr.bf16.mxu0 0
        %5833 = vmatpush1.bf16.msra.mxu0 %v5809
        %5834 = vmatprep.subr.bf16.mxu0 0
        %5835 = vmatpush1.bf16.msra.mxu0 %v5811
        %5836 = vmatprep.subr.bf16.mxu0 0
        %5837 = vmatpush1.bf16.msra.mxu0 %v5813
        %5838 = vmatprep.subr.bf16.mxu0 0
        %5839 = vmatpush1.bf16.msra.mxu0 0
        %5840 = vmatprep.subr.bf16.mxu0 0
        %5841 = vmatpush1.bf16.msra.mxu0 0
        %5842 = vmatprep.subr.bf16.mxu0 0
        %5843 = vmatpush1.bf16.msra.mxu0 0
        %5844 = vmatprep.subr.bf16.mxu0 0
        %5845 = vmatpush1.bf16.msra.mxu0 0
        %5846 = vmatprep.subr.bf16.mxu0 0
        %5847 = vmatpush1.bf16.msra.mxu0 0
        %5848 = vmatprep.subr.bf16.mxu0 0
        %5849 = vmatpush1.bf16.msra.mxu0 0
        %5850 = vmatprep.subr.bf16.mxu0 0
        %5851 = vmatpush1.bf16.msra.mxu0 0
        %5852 = vmatprep.subr.bf16.mxu0 0
        %5853 = vmatpush1.bf16.msra.mxu0 0
        %5854 = vmatprep.subr.bf16.mxu0 0
        %5855 = vmatpush1.bf16.msra.mxu0 0
        %5856 = vmatprep.subr.bf16.mxu0 0
        %5857 = vmatpush1.bf16.msra.mxu0 0
        %5858 = vmatprep.subr.bf16.mxu0 0
        %5859 = vmatpush1.bf16.msra.mxu0 0
        %5860 = vmatprep.subr.bf16.mxu0 0
        %5861 = vmatpush1.bf16.msra.mxu0 0
        %5862 = vmatprep.mubr.bf16.mxu0 0
        %5863 = vmatmul.mubr.bf16.gmra.mrb[0].mxu0 %v5819
        %v5864 = vpop.f32.mrb[0].mxu0
        %v5865 = vadd.f32 0.0, %v5864
        %v5866 = vpop.f32.mrb[0].mxu0
        %v5867 = vpop.f32.mrb[0].mxu0
        %v5868 = vadd.f32 0.0, %v5867
        %v5869 = vpop.f32.mrb[0].mxu0
        %5870 = vmatprep.mubr.bf16.mxu0 0
        %5871 = vmatmul.mubr.bf16.gmra.mrb[0].mxu0 %v5822
        %v5872 = vpop.f32.mrb[0].mxu0
        %v5873 = vadd.f32 0.0, %v5872
        %v5874 = vpop.f32.mrb[0].mxu0
        %v5875 = vpop.f32.mrb[0].mxu0
        %v5876 = vadd.f32 0.0, %v5875
        %v5877 = vpop.f32.mrb[0].mxu0
        %5878 = vmatprep.mubr.bf16.mxu0 0
        %5879 = vmatmul.mubr.bf16.gmra.mrb[0].mxu0 %v5825
        %v5880 = vpop.f32.mrb[0].mxu0
        %v5881 = vadd.f32 0.0, %v5880
        %v5882 = vpop.f32.mrb[0].mxu0
        %v5883 = vpop.f32.mrb[0].mxu0
        %v5884 = vadd.f32 0.0, %v5883
        %v5885 = vpop.f32.mrb[0].mxu0
        %5886 = vmatprep.mubr.bf16.mxu0 0
        %5887 = vmatmul.mubr.bf16.gmra.mrb[0].mxu0 %v5828
        %v5888 = vpop.f32.mrb[0].mxu0
        %v5889 = vadd.f32 0.0, %v5888
        %v5890 = vpop.f32.mrb[0].mxu0
        %v5891 = vpop.f32.mrb[0].mxu0
        %v5892 = vadd.f32 0.0, %v5891
        %v5893 = vpop.f32.mrb[0].mxu0
        %5894 = vdwg.mxu0
        %5895 = vrot.lane.b32.xlu0 %v1144, 32
        %v5896 = vpop.permute.xlu0 %5895
        %5897 = vrot.lane.b32.xlu0 %v1145, 32
        %v5898 = vpop.permute.xlu0 %5897
        %5899 = vrot.lane.b32.xlu0 %v1146, 32
        %v5900 = vpop.permute.xlu0 %5899
        %5901 = vrot.lane.b32.xlu0 %v1147, 32
        %v5902 = vpop.permute.xlu0 %5901
        %v5908 = vsel %vm1505, %v5624, 0
        %v5911 = vsel %vm1505, %v5625, 0
        %v5914 = vsel %vm1505, %v5626, 0
        %v5917 = vsel %vm1505, %v5627, 0
        %5919 = vmatprep.subr.bf16.mxu0 0
        %5920 = vmatpush1.bf16.msra.mxu0 %v5896
        %5921 = vmatprep.subr.bf16.mxu0 0
        %5922 = vmatpush1.bf16.msra.mxu0 %v5898
        %5923 = vmatprep.subr.bf16.mxu0 0
        %5924 = vmatpush1.bf16.msra.mxu0 %v5900
        %5925 = vmatprep.subr.bf16.mxu0 0
        %5926 = vmatpush1.bf16.msra.mxu0 %v5902
        %5927 = vmatprep.subr.bf16.mxu0 0
        %5928 = vmatpush1.bf16.msra.mxu0 0
        %5929 = vmatprep.subr.bf16.mxu0 0
        %5930 = vmatpush1.bf16.msra.mxu0 0
        %5931 = vmatprep.subr.bf16.mxu0 0
        %5932 = vmatpush1.bf16.msra.mxu0 0
        %5933 = vmatprep.subr.bf16.mxu0 0
        %5934 = vmatpush1.bf16.msra.mxu0 0
        %5935 = vmatprep.subr.bf16.mxu0 0
        %5936 = vmatpush1.bf16.msra.mxu0 0
        %5937 = vmatprep.subr.bf16.mxu0 0
        %5938 = vmatpush1.bf16.msra.mxu0 0
        %5939 = vmatprep.subr.bf16.mxu0 0
        %5940 = vmatpush1.bf16.msra.mxu0 0
        %5941 = vmatprep.subr.bf16.mxu0 0
        %5942 = vmatpush1.bf16.msra.mxu0 0
        %5943 = vmatprep.subr.bf16.mxu0 0
        %5944 = vmatpush1.bf16.msra.mxu0 0
        %5945 = vmatprep.subr.bf16.mxu0 0
        %5946 = vmatpush1.bf16.msra.mxu0 0
        %5947 = vmatprep.subr.bf16.mxu0 0
        %5948 = vmatpush1.bf16.msra.mxu0 0
        %5949 = vmatprep.subr.bf16.mxu0 0
        %5950 = vmatpush1.bf16.msra.mxu0 0
        %5951 = vmatprep.mubr.bf16.mxu0 0
        %5952 = vmatmul.mubr.bf16.gmra.mrb[0].mxu0 %v5908
        %v5953 = vpop.f32.mrb[0].mxu0
        %v5954 = vadd.f32 0.0, %v5953
        %v5955 = vpop.f32.mrb[0].mxu0
        %v5956 = vpop.f32.mrb[0].mxu0
        %v5957 = vadd.f32 0.0, %v5956
        %v5958 = vpop.f32.mrb[0].mxu0
        %5959 = vmatprep.mubr.bf16.mxu0 0
        %5960 = vmatmul.mubr.bf16.gmra.mrb[0].mxu0 %v5911
        %v5961 = vpop.f32.mrb[0].mxu0
        %v5962 = vadd.f32 0.0, %v5961
        %v5963 = vpop.f32.mrb[0].mxu0
        %v5964 = vpop.f32.mrb[0].mxu0
        %v5965 = vadd.f32 0.0, %v5964
        %v5966 = vpop.f32.mrb[0].mxu0
        %5967 = vmatprep.mubr.bf16.mxu0 0
        %5968 = vmatmul.mubr.bf16.gmra.mrb[0].mxu0 %v5914
        %v5969 = vpop.f32.mrb[0].mxu0
        %v5970 = vadd.f32 0.0, %v5969
        %v5971 = vpop.f32.mrb[0].mxu0
        %v5972 = vpop.f32.mrb[0].mxu0
        %v5973 = vadd.f32 0.0, %v5972
        %v5974 = vpop.f32.mrb[0].mxu0
        %5975 = vmatprep.mubr.bf16.mxu0 0
        %5976 = vmatmul.mubr.bf16.gmra.mrb[0].mxu0 %v5917
        %v5977 = vpop.f32.mrb[0].mxu0
        %v5978 = vadd.f32 0.0, %v5977
        %v5979 = vpop.f32.mrb[0].mxu0
        %v5980 = vpop.f32.mrb[0].mxu0
        %v5981 = vadd.f32 0.0, %v5980
        %v5982 = vpop.f32.mrb[0].mxu0
        %5983 = vdwg.mxu0
        %v5984 = vmul.f32 %v5687, %v5580
        %v5985 = vmul.f32 %v5690, %v5581
        %v5986 = vmul.f32 %v5695, %v5582
        %v5987 = vmul.f32 %v5698, %v5583
        %v5988 = vmul.f32 %v5703, %v5584
        %v5989 = vmul.f32 %v5706, %v5585
        %v5990 = vmul.f32 %v5711, %v5586
        %v5991 = vmul.f32 %v5714, %v5587
        %v5992 = vmul.f32 %v5776, %v5588
        %v5993 = vmul.f32 %v5779, %v5589
        %v5994 = vmul.f32 %v5784, %v5590
        %v5995 = vmul.f32 %v5787, %v5591
        %v5996 = vmul.f32 %v5792, %v5592
        %v5997 = vmul.f32 %v5795, %v5593
        %v5998 = vmul.f32 %v5800, %v5594
        %v5999 = vmul.f32 %v5803, %v5595
        %v6000 = vmul.f32 %v5865, %v5596
        %v6001 = vmul.f32 %v5868, %v5597
        %v6002 = vmul.f32 %v5873, %v5598
        %v6003 = vmul.f32 %v5876, %v5599
        %v6004 = vmul.f32 %v5881, %v5600
        %v6005 = vmul.f32 %v5884, %v5601
        %v6006 = vmul.f32 %v5889, %v5602
        %v6007 = vmul.f32 %v5892, %v5603
        %v6008 = vmul.f32 %v5954, %v5604
        %v6009 = vmul.f32 %v5957, %v5605
        %v6010 = vmul.f32 %v5962, %v5606
        %v6011 = vmul.f32 %v5965, %v5607
        %v6012 = vmul.f32 %v5970, %v5608
        %v6013 = vmul.f32 %v5973, %v5609
        %v6014 = vmul.f32 %v5978, %v5610
        %v6015 = vmul.f32 %v5981, %v5611
        %6048 = vrot.lane.b32.xlu0 %v5984, 96
        %v6049 = vpop.permute.xlu0 %6048
        %6050 = vrot.lane.b32.xlu0 %v5985, 96
        %v6051 = vpop.permute.xlu0 %6050
        %6052 = vrot.lane.b32.xlu0 %v5986, 96
        %v6053 = vpop.permute.xlu0 %6052
        %6054 = vrot.lane.b32.xlu0 %v5987, 96
        %v6055 = vpop.permute.xlu0 %6054
        %6056 = vrot.lane.b32.xlu0 %v5988, 96
        %v6057 = vpop.permute.xlu0 %6056
        %6058 = vrot.lane.b32.xlu0 %v5989, 96
        %v6059 = vpop.permute.xlu0 %6058
        %6060 = vrot.lane.b32.xlu0 %v5990, 96
        %v6061 = vpop.permute.xlu0 %6060
        %6062 = vrot.lane.b32.xlu0 %v5991, 96
        %v6063 = vpop.permute.xlu0 %6062
        %6064 = vrot.lane.b32.xlu0 %v5992, 96
        %v6065 = vpop.permute.xlu0 %6064
        %6066 = vrot.lane.b32.xlu0 %v5993, 96
        %v6067 = vpop.permute.xlu0 %6066
        %6068 = vrot.lane.b32.xlu0 %v5994, 96
        %v6069 = vpop.permute.xlu0 %6068
        %6070 = vrot.lane.b32.xlu0 %v5995, 96
        %v6071 = vpop.permute.xlu0 %6070
        %6072 = vrot.lane.b32.xlu0 %v5996, 96
        %v6073 = vpop.permute.xlu0 %6072
        %6074 = vrot.lane.b32.xlu0 %v5997, 96
        %v6075 = vpop.permute.xlu0 %6074
        %6076 = vrot.lane.b32.xlu0 %v5998, 96
        %v6077 = vpop.permute.xlu0 %6076
        %6078 = vrot.lane.b32.xlu0 %v5999, 96
        %v6079 = vpop.permute.xlu0 %6078
        %6080 = vrot.lane.b32.xlu0 %v6000, 96
        %v6081 = vpop.permute.xlu0 %6080
        %6082 = vrot.lane.b32.xlu0 %v6001, 96
        %v6083 = vpop.permute.xlu0 %6082
        %6084 = vrot.lane.b32.xlu0 %v6002, 96
        %v6085 = vpop.permute.xlu0 %6084
        %6086 = vrot.lane.b32.xlu0 %v6003, 96
        %v6087 = vpop.permute.xlu0 %6086
        %6088 = vrot.lane.b32.xlu0 %v6004, 96
        %v6089 = vpop.permute.xlu0 %6088
        %6090 = vrot.lane.b32.xlu0 %v6005, 96
        %v6091 = vpop.permute.xlu0 %6090
        %6092 = vrot.lane.b32.xlu0 %v6006, 96
        %v6093 = vpop.permute.xlu0 %6092
        %6094 = vrot.lane.b32.xlu0 %v6007, 96
        %v6095 = vpop.permute.xlu0 %6094
        %6096 = vrot.lane.b32.xlu0 %v6008, 96
        %v6097 = vpop.permute.xlu0 %6096
        %6098 = vrot.lane.b32.xlu0 %v6009, 96
        %v6099 = vpop.permute.xlu0 %6098
        %6100 = vrot.lane.b32.xlu0 %v6010, 96
        %v6101 = vpop.permute.xlu0 %6100
        %6102 = vrot.lane.b32.xlu0 %v6011, 96
        %v6103 = vpop.permute.xlu0 %6102
        %6104 = vrot.lane.b32.xlu0 %v6012, 96
        %v6105 = vpop.permute.xlu0 %6104
        %6106 = vrot.lane.b32.xlu0 %v6013, 96
        %v6107 = vpop.permute.xlu0 %6106
        %6108 = vrot.lane.b32.xlu0 %v6014, 96
        %v6109 = vpop.permute.xlu0 %6108
        %6110 = vrot.lane.b32.xlu0 %v6015, 96
        %v6111 = vpop.permute.xlu0 %6110
        %vm6144 = vcmask 1048320
        %6145 = vst.msk [vmem:[#allocation2] sm:$0xff] %vm6144, %v6049
        %6146 = vst.msk [vmem:[#allocation2 + $0x8] sm:$0xff] %vm6144, %v6051
        %6147 = vst.msk [vmem:[#allocation2 + $0x10] sm:$0xff] %vm6144, %v6053
        %6148 = vst.msk [vmem:[#allocation2 + $0x18] sm:$0xff] %vm6144, %v6055
        %6149 = vst.msk [vmem:[#allocation2 + $0x20] sm:$0xff] %vm6144, %v6057
        %6150 = vst.msk [vmem:[#allocation2 + $0x28] sm:$0xff] %vm6144, %v6059
        %6151 = vst.msk [vmem:[#allocation2 + $0x30] sm:$0xff] %vm6144, %v6061
        %6152 = vst.msk [vmem:[#allocation2 + $0x38] sm:$0xff] %vm6144, %v6063
        %6153 = vst.msk [vmem:[#allocation2 + $0x40] sm:$0xff] %vm6144, %v6065
        %6154 = vst.msk [vmem:[#allocation2 + $0x48] sm:$0xff] %vm6144, %v6067
        %6155 = vst.msk [vmem:[#allocation2 + $0x50] sm:$0xff] %vm6144, %v6069
        %6156 = vst.msk [vmem:[#allocation2 + $0x58] sm:$0xff] %vm6144, %v6071
        %6157 = vst.msk [vmem:[#allocation2 + $0x60] sm:$0xff] %vm6144, %v6073
        %6158 = vst.msk [vmem:[#allocation2 + $0x68] sm:$0xff] %vm6144, %v6075
        %6159 = vst.msk [vmem:[#allocation2 + $0x70] sm:$0xff] %vm6144, %v6077
        %6160 = vst.msk [vmem:[#allocation2 + $0x78] sm:$0xff] %vm6144, %v6079
        %6161 = vst.msk [vmem:[#allocation2 + $0x80] sm:$0xff] %vm6144, %v6081
        %6162 = vst.msk [vmem:[#allocation2 + $0x88] sm:$0xff] %vm6144, %v6083
        %6163 = vst.msk [vmem:[#allocation2 + $0x90] sm:$0xff] %vm6144, %v6085
        %6164 = vst.msk [vmem:[#allocation2 + $0x98] sm:$0xff] %vm6144, %v6087
        %6165 = vst.msk [vmem:[#allocation2 + $0xa0] sm:$0xff] %vm6144, %v6089
        %6166 = vst.msk [vmem:[#allocation2 + $0xa8] sm:$0xff] %vm6144, %v6091
        %6167 = vst.msk [vmem:[#allocation2 + $0xb0] sm:$0xff] %vm6144, %v6093
        %6168 = vst.msk [vmem:[#allocation2 + $0xb8] sm:$0xff] %vm6144, %v6095
        %6169 = vst.msk [vmem:[#allocation2 + $0xc0] sm:$0xff] %vm6144, %v6097
        %6170 = vst.msk [vmem:[#allocation2 + $0xc8] sm:$0xff] %vm6144, %v6099
        %6171 = vst.msk [vmem:[#allocation2 + $0xd0] sm:$0xff] %vm6144, %v6101
        %6172 = vst.msk [vmem:[#allocation2 + $0xd8] sm:$0xff] %vm6144, %v6103
        %6173 = vst.msk [vmem:[#allocation2 + $0xe0] sm:$0xff] %vm6144, %v6105
        %6174 = vst.msk [vmem:[#allocation2 + $0xe8] sm:$0xff] %vm6144, %v6107
        %6175 = vst.msk [vmem:[#allocation2 + $0xf0] sm:$0xff] %vm6144, %v6109
        %6176 = vst.msk [vmem:[#allocation2 + $0xf8] sm:$0xff] %vm6144, %v6111
        %v6177 = vld [vmem:[#allocation2] sm:$0xff]
        %v6178 = vld [vmem:[#allocation2 + $0x8] sm:$0xff]
        %v6179 = vld [vmem:[#allocation2 + $0x10] sm:$0xff]
        %v6180 = vld [vmem:[#allocation2 + $0x18] sm:$0xff]
        %v6181 = vld [vmem:[#allocation2 + $0x20] sm:$0xff]
        %v6182 = vld [vmem:[#allocation2 + $0x28] sm:$0xff]
        %v6183 = vld [vmem:[#allocation2 + $0x30] sm:$0xff]
        %v6184 = vld [vmem:[#allocation2 + $0x38] sm:$0xff]
        %v6185 = vld [vmem:[#allocation2 + $0x40] sm:$0xff]
        %v6186 = vld [vmem:[#allocation2 + $0x48] sm:$0xff]
        %v6187 = vld [vmem:[#allocation2 + $0x50] sm:$0xff]
        %v6188 = vld [vmem:[#allocation2 + $0x58] sm:$0xff]
        %v6189 = vld [vmem:[#allocation2 + $0x60] sm:$0xff]
        %v6190 = vld [vmem:[#allocation2 + $0x68] sm:$0xff]
        %v6191 = vld [vmem:[#allocation2 + $0x70] sm:$0xff]
        %v6192 = vld [vmem:[#allocation2 + $0x78] sm:$0xff]
        %v6193 = vld [vmem:[#allocation2 + $0x80] sm:$0xff]
        %v6194 = vld [vmem:[#allocation2 + $0x88] sm:$0xff]
        %v6195 = vld [vmem:[#allocation2 + $0x90] sm:$0xff]
        %v6196 = vld [vmem:[#allocation2 + $0x98] sm:$0xff]
        %v6197 = vld [vmem:[#allocation2 + $0xa0] sm:$0xff]
        %v6198 = vld [vmem:[#allocation2 + $0xa8] sm:$0xff]
        %v6199 = vld [vmem:[#allocation2 + $0xb0] sm:$0xff]
        %v6200 = vld [vmem:[#allocation2 + $0xb8] sm:$0xff]
        %v6201 = vld [vmem:[#allocation2 + $0xc0] sm:$0xff]
        %v6202 = vld [vmem:[#allocation2 + $0xc8] sm:$0xff]
        %v6203 = vld [vmem:[#allocation2 + $0xd0] sm:$0xff]
        %v6204 = vld [vmem:[#allocation2 + $0xd8] sm:$0xff]
        %v6205 = vld [vmem:[#allocation2 + $0xe0] sm:$0xff]
        %v6206 = vld [vmem:[#allocation2 + $0xe8] sm:$0xff]
        %v6207 = vld [vmem:[#allocation2 + $0xf0] sm:$0xff]
        %v6208 = vld [vmem:[#allocation2 + $0xf8] sm:$0xff]
        %v6209 = vpack.c.bf16 %v6178, %v6177
        %v6210 = vpack.c.bf16 %v6180, %v6179
        %v6211 = vpack.c.bf16 %v6182, %v6181
        %v6212 = vpack.c.bf16 %v6184, %v6183
        %v6213 = vpack.c.bf16 %v6186, %v6185
        %v6214 = vpack.c.bf16 %v6188, %v6187
        %v6215 = vpack.c.bf16 %v6190, %v6189
        %v6216 = vpack.c.bf16 %v6192, %v6191
        %v6217 = vpack.c.bf16 %v6194, %v6193
        %v6218 = vpack.c.bf16 %v6196, %v6195
        %v6219 = vpack.c.bf16 %v6198, %v6197
        %v6220 = vpack.c.bf16 %v6200, %v6199
        %v6221 = vpack.c.bf16 %v6202, %v6201
        %v6222 = vpack.c.bf16 %v6204, %v6203
        %v6223 = vpack.c.bf16 %v6206, %v6205
        %v6224 = vpack.c.bf16 %v6208, %v6207
        %v6225 = vld [vmem:[#allocation8] sm:$0xf]
        %v6226 = vld [vmem:[#allocation8 + $0x4] sm:$0xf]
        %v6227 = vld [vmem:[#allocation8 + $0x8] sm:$0xf]
        %v6228 = vld [vmem:[#allocation8 + $0xc] sm:$0xf]
        %v6229 = vld [vmem:[#allocation8 + $0x10] sm:$0xf]
        %v6230 = vld [vmem:[#allocation8 + $0x14] sm:$0xf]
        %v6231 = vld [vmem:[#allocation8 + $0x18] sm:$0xf]
        %v6232 = vld [vmem:[#allocation8 + $0x1c] sm:$0xf]
        %v6233 = vld [vmem:[#allocation8 + $0x20] sm:$0xf]
        %v6234 = vld [vmem:[#allocation8 + $0x24] sm:$0xf]
        %v6235 = vld [vmem:[#allocation8 + $0x28] sm:$0xf]
        %v6236 = vld [vmem:[#allocation8 + $0x2c] sm:$0xf]
        %v6237 = vld [vmem:[#allocation8 + $0x30] sm:$0xf]
        %v6238 = vld [vmem:[#allocation8 + $0x34] sm:$0xf]
        %v6239 = vld [vmem:[#allocation8 + $0x38] sm:$0xf]
        %v6240 = vld [vmem:[#allocation8 + $0x3c] sm:$0xf]
        %v6241 = vld [vmem:[%s4] sm:$0x1]
        %v6243 = vlaneseq
        %v6244 = vshrl.u32 %v6243, 7
        %v6245 = vsub.s32 0, %v6244
        %v6246 = vrot.slane %v6241, %v6245
        %v6264 = vunpack.c.l.b16 %v6225
        %v6265 = vunpack.c.l.b16 %v6226
        %v6266 = vunpack.c.l.b16 %v6227
        %v6267 = vunpack.c.l.b16 %v6228
        %v6268 = vunpack.c.l.b16 %v6229
        %v6269 = vunpack.c.l.b16 %v6230
        %v6270 = vunpack.c.l.b16 %v6231
        %v6271 = vunpack.c.l.b16 %v6232
        %v6272 = vunpack.c.l.b16 %v6233
        %v6273 = vunpack.c.l.b16 %v6234
        %v6274 = vunpack.c.l.b16 %v6235
        %v6275 = vunpack.c.l.b16 %v6236
        %v6276 = vunpack.c.l.b16 %v6237
        %v6277 = vunpack.c.l.b16 %v6238
        %v6278 = vunpack.c.l.b16 %v6239
        %v6279 = vunpack.c.l.b16 %v6240
        %v6280 = vpack.c.b16 %v6265, %v6264
        %v6281 = vpack.c.b16 %v6267, %v6266
        %v6282 = vpack.c.b16 %v6269, %v6268
        %v6283 = vpack.c.b16 %v6271, %v6270
        %v6284 = vpack.c.b16 %v6273, %v6272
        %v6285 = vpack.c.b16 %v6275, %v6274
        %v6286 = vpack.c.b16 %v6277, %v6276
        %v6287 = vpack.c.b16 %v6279, %v6278
        %6296 = vmatprep.subr.bf16.mxu0 0
        %6297 = vmatpush1.bf16.msra.mxu0 %v6280
        %6298 = vmatprep.subr.bf16.mxu0 0
        %6299 = vmatpush1.bf16.msra.mxu0 %v6281
        %6300 = vmatprep.subr.bf16.mxu0 0
        %6301 = vmatpush1.bf16.msra.mxu0 %v6282
        %6302 = vmatprep.subr.bf16.mxu0 0
        %6303 = vmatpush1.bf16.msra.mxu0 %v6283
        %6304 = vmatprep.subr.bf16.mxu0 0
        %6305 = vmatpush1.bf16.msra.mxu0 %v6284
        %6306 = vmatprep.subr.bf16.mxu0 0
        %6307 = vmatpush1.bf16.msra.mxu0 %v6285
        %6308 = vmatprep.subr.bf16.mxu0 0
        %6309 = vmatpush1.bf16.msra.mxu0 %v6286
        %6310 = vmatprep.subr.bf16.mxu0 0
        %6311 = vmatpush1.bf16.msra.mxu0 %v6287
        %6312 = vmatprep.subr.bf16.mxu0 0
        %6313 = vmatpush1.bf16.msra.mxu0 0
        %6314 = vmatprep.subr.bf16.mxu0 0
        %6315 = vmatpush1.bf16.msra.mxu0 0
        %6316 = vmatprep.subr.bf16.mxu0 0
        %6317 = vmatpush1.bf16.msra.mxu0 0
        %6318 = vmatprep.subr.bf16.mxu0 0
        %6319 = vmatpush1.bf16.msra.mxu0 0
        %6320 = vmatprep.subr.bf16.mxu0 0
        %6321 = vmatpush1.bf16.msra.mxu0 0
        %6322 = vmatprep.subr.bf16.mxu0 0
        %6323 = vmatpush1.bf16.msra.mxu0 0
        %6324 = vmatprep.subr.bf16.mxu0 0
        %6325 = vmatpush1.bf16.msra.mxu0 0
        %6326 = vmatprep.subr.bf16.mxu0 0
        %6327 = vmatpush1.bf16.msra.mxu0 0
        %6328 = vmatprep.mubr.bf16.mxu0 0
        %6329 = vmatmul.mubr.bf16.gmra.mrb[0].mxu0 %v6209
        %v6330 = vpop.f32.mrb[0].mxu0
        %v6331 = vadd.f32 %v6246, %v6330
        %v6332 = vpop.f32.mrb[0].mxu0
        %v6333 = vpop.f32.mrb[0].mxu0
        %v6334 = vadd.f32 %v6246, %v6333
        %v6335 = vpop.f32.mrb[0].mxu0
        %6336 = vmatprep.mubr.bf16.mxu0 0
        %6337 = vmatmul.mubr.bf16.gmra.mrb[0].mxu0 %v6210
        %v6338 = vpop.f32.mrb[0].mxu0
        %v6339 = vadd.f32 %v6246, %v6338
        %v6340 = vpop.f32.mrb[0].mxu0
        %v6341 = vpop.f32.mrb[0].mxu0
        %v6342 = vadd.f32 %v6246, %v6341
        %v6343 = vpop.f32.mrb[0].mxu0
        %6344 = vmatprep.mubr.bf16.mxu0 0
        %6345 = vmatmul.mubr.bf16.gmra.mrb[0].mxu0 %v6211
        %v6346 = vpop.f32.mrb[0].mxu0
        %v6347 = vadd.f32 %v6246, %v6346
        %v6348 = vpop.f32.mrb[0].mxu0
        %v6349 = vpop.f32.mrb[0].mxu0
        %v6350 = vadd.f32 %v6246, %v6349
        %v6351 = vpop.f32.mrb[0].mxu0
        %6352 = vmatprep.mubr.bf16.mxu0 0
        %6353 = vmatmul.mubr.bf16.gmra.mrb[0].mxu0 %v6212
        %v6354 = vpop.f32.mrb[0].mxu0
        %v6355 = vadd.f32 %v6246, %v6354
        %v6356 = vpop.f32.mrb[0].mxu0
        %v6357 = vpop.f32.mrb[0].mxu0
        %v6358 = vadd.f32 %v6246, %v6357
        %v6359 = vpop.f32.mrb[0].mxu0
        %6360 = vmatprep.mubr.bf16.mxu0 0
        %6361 = vmatmul.mubr.bf16.gmra.mrb[0].mxu0 %v6213
        %v6362 = vpop.f32.mrb[0].mxu0
        %v6363 = vadd.f32 %v6246, %v6362
        %v6364 = vpop.f32.mrb[0].mxu0
        %v6365 = vpop.f32.mrb[0].mxu0
        %v6366 = vadd.f32 %v6246, %v6365
        %v6367 = vpop.f32.mrb[0].mxu0
        %6368 = vmatprep.mubr.bf16.mxu0 0
        %6369 = vmatmul.mubr.bf16.gmra.mrb[0].mxu0 %v6214
        %v6370 = vpop.f32.mrb[0].mxu0
        %v6371 = vadd.f32 %v6246, %v6370
        %v6372 = vpop.f32.mrb[0].mxu0
        %v6373 = vpop.f32.mrb[0].mxu0
        %v6374 = vadd.f32 %v6246, %v6373
        %v6375 = vpop.f32.mrb[0].mxu0
        %6376 = vmatprep.mubr.bf16.mxu0 0
        %6377 = vmatmul.mubr.bf16.gmra.mrb[0].mxu0 %v6215
        %v6378 = vpop.f32.mrb[0].mxu0
        %v6379 = vadd.f32 %v6246, %v6378
        %v6380 = vpop.f32.mrb[0].mxu0
        %v6381 = vpop.f32.mrb[0].mxu0
        %v6382 = vadd.f32 %v6246, %v6381
        %v6383 = vpop.f32.mrb[0].mxu0
        %6384 = vmatprep.mubr.bf16.mxu0 0
        %6385 = vmatmul.mubr.bf16.gmra.mrb[0].mxu0 %v6216
        %v6386 = vpop.f32.mrb[0].mxu0
        %v6387 = vadd.f32 %v6246, %v6386
        %v6388 = vpop.f32.mrb[0].mxu0
        %v6389 = vpop.f32.mrb[0].mxu0
        %v6390 = vadd.f32 %v6246, %v6389
        %v6391 = vpop.f32.mrb[0].mxu0
        %6392 = vmatprep.mubr.bf16.mxu0 0
        %6393 = vmatmul.mubr.bf16.gmra.mrb[0].mxu0 %v6217
        %v6394 = vpop.f32.mrb[0].mxu0
        %v6395 = vadd.f32 %v6246, %v6394
        %v6396 = vpop.f32.mrb[0].mxu0
        %v6397 = vpop.f32.mrb[0].mxu0
        %v6398 = vadd.f32 %v6246, %v6397
        %v6399 = vpop.f32.mrb[0].mxu0
        %6400 = vmatprep.mubr.bf16.mxu0 0
        %6401 = vmatmul.mubr.bf16.gmra.mrb[0].mxu0 %v6218
        %v6402 = vpop.f32.mrb[0].mxu0
        %v6403 = vadd.f32 %v6246, %v6402
        %v6404 = vpop.f32.mrb[0].mxu0
        %v6405 = vpop.f32.mrb[0].mxu0
        %v6406 = vadd.f32 %v6246, %v6405
        %v6407 = vpop.f32.mrb[0].mxu0
        %6408 = vmatprep.mubr.bf16.mxu0 0
        %6409 = vmatmul.mubr.bf16.gmra.mrb[0].mxu0 %v6219
        %v6410 = vpop.f32.mrb[0].mxu0
        %v6411 = vadd.f32 %v6246, %v6410
        %v6412 = vpop.f32.mrb[0].mxu0
        %v6413 = vpop.f32.mrb[0].mxu0
        %v6414 = vadd.f32 %v6246, %v6413
        %v6415 = vpop.f32.mrb[0].mxu0
        %6416 = vmatprep.mubr.bf16.mxu0 0
        %6417 = vmatmul.mubr.bf16.gmra.mrb[0].mxu0 %v6220
        %v6418 = vpop.f32.mrb[0].mxu0
        %v6419 = vadd.f32 %v6246, %v6418
        %v6420 = vpop.f32.mrb[0].mxu0
        %v6421 = vpop.f32.mrb[0].mxu0
        %v6422 = vadd.f32 %v6246, %v6421
        %v6423 = vpop.f32.mrb[0].mxu0
        %6424 = vmatprep.mubr.bf16.mxu0 0
        %6425 = vmatmul.mubr.bf16.gmra.mrb[0].mxu0 %v6221
        %v6426 = vpop.f32.mrb[0].mxu0
        %v6427 = vadd.f32 %v6246, %v6426
        %v6428 = vpop.f32.mrb[0].mxu0
        %v6429 = vpop.f32.mrb[0].mxu0
        %v6430 = vadd.f32 %v6246, %v6429
        %v6431 = vpop.f32.mrb[0].mxu0
        %6432 = vmatprep.mubr.bf16.mxu0 0
        %6433 = vmatmul.mubr.bf16.gmra.mrb[0].mxu0 %v6222
        %v6434 = vpop.f32.mrb[0].mxu0
        %v6435 = vadd.f32 %v6246, %v6434
        %v6436 = vpop.f32.mrb[0].mxu0
        %v6437 = vpop.f32.mrb[0].mxu0
        %v6438 = vadd.f32 %v6246, %v6437
        %v6439 = vpop.f32.mrb[0].mxu0
        %6440 = vmatprep.mubr.bf16.mxu0 0
        %6441 = vmatmul.mubr.bf16.gmra.mrb[0].mxu0 %v6223
        %v6442 = vpop.f32.mrb[0].mxu0
        %v6443 = vadd.f32 %v6246, %v6442
        %v6444 = vpop.f32.mrb[0].mxu0
        %v6445 = vpop.f32.mrb[0].mxu0
        %v6446 = vadd.f32 %v6246, %v6445
        %v6447 = vpop.f32.mrb[0].mxu0
        %6448 = vmatprep.mubr.bf16.mxu0 0
        %6449 = vmatmul.mubr.bf16.gmra.mrb[0].mxu0 %v6224
        %v6450 = vpop.f32.mrb[0].mxu0
        %v6451 = vadd.f32 %v6246, %v6450
        %v6452 = vpop.f32.mrb[0].mxu0
        %v6453 = vpop.f32.mrb[0].mxu0
        %v6454 = vadd.f32 %v6246, %v6453
        %v6455 = vpop.f32.mrb[0].mxu0
        %6456 = vdwg.mxu0
        %v6457 = vadd.f32 %v521, %v6331
        %v6458 = vadd.f32 %v522, %v6334
        %v6459 = vadd.f32 %v523, %v6339
        %v6460 = vadd.f32 %v524, %v6342
        %v6461 = vadd.f32 %v525, %v6347
        %v6462 = vadd.f32 %v526, %v6350
        %v6463 = vadd.f32 %v527, %v6355
        %v6464 = vadd.f32 %v528, %v6358
        %v6465 = vadd.f32 %v529, %v6363
        %v6466 = vadd.f32 %v530, %v6366
        %v6467 = vadd.f32 %v531, %v6371
        %v6468 = vadd.f32 %v532, %v6374
        %v6469 = vadd.f32 %v533, %v6379
        %v6470 = vadd.f32 %v534, %v6382
        %v6471 = vadd.f32 %v535, %v6387
        %v6472 = vadd.f32 %v536, %v6390
        %v6473 = vadd.f32 %v537, %v6395
        %v6474 = vadd.f32 %v538, %v6398
        %v6475 = vadd.f32 %v539, %v6403
        %v6476 = vadd.f32 %v540, %v6406
        %v6477 = vadd.f32 %v541, %v6411
        %v6478 = vadd.f32 %v542, %v6414
        %v6479 = vadd.f32 %v543, %v6419
        %v6480 = vadd.f32 %v544, %v6422
        %v6481 = vadd.f32 %v545, %v6427
        %v6482 = vadd.f32 %v546, %v6430
        %v6483 = vadd.f32 %v547, %v6435
        %v6484 = vadd.f32 %v548, %v6438
        %v6485 = vadd.f32 %v549, %v6443
        %v6486 = vadd.f32 %v550, %v6446
        %v6487 = vadd.f32 %v551, %v6451
        %v6488 = vadd.f32 %v552, %v6454
        %v6489 = vld [vmem:[%s5] sm:$0x1]
        %v6490 = vld [vmem:[%s6] sm:$0x1]
        %6491 = vadd.xlane.f32.xlu0 %v6457
        %v6492 = vpop.xlane.xlu0 %6491
        %6493 = vadd.xlane.f32.xlu0 %v6458
        %v6494 = vpop.xlane.xlu0 %6493
        %6495 = vadd.xlane.f32.xlu0 %v6459
        %v6496 = vpop.xlane.xlu0 %6495
        %6497 = vadd.xlane.f32.xlu0 %v6460
        %v6498 = vpop.xlane.xlu0 %6497
        %6499 = vadd.xlane.f32.xlu0 %v6461
        %v6500 = vpop.xlane.xlu0 %6499
        %6501 = vadd.xlane.f32.xlu0 %v6462
        %v6502 = vpop.xlane.xlu0 %6501
        %6503 = vadd.xlane.f32.xlu0 %v6463
        %v6504 = vpop.xlane.xlu0 %6503
        %6505 = vadd.xlane.f32.xlu0 %v6464
        %v6506 = vpop.xlane.xlu0 %6505
        %6507 = vadd.xlane.f32.xlu0 %v6465
        %v6508 = vpop.xlane.xlu0 %6507
        %6509 = vadd.xlane.f32.xlu0 %v6466
        %v6510 = vpop.xlane.xlu0 %6509
        %6511 = vadd.xlane.f32.xlu0 %v6467
        %v6512 = vpop.xlane.xlu0 %6511
        %6513 = vadd.xlane.f32.xlu0 %v6468
        %v6514 = vpop.xlane.xlu0 %6513
        %6515 = vadd.xlane.f32.xlu0 %v6469
        %v6516 = vpop.xlane.xlu0 %6515
        %6517 = vadd.xlane.f32.xlu0 %v6470
        %v6518 = vpop.xlane.xlu0 %6517
        %6519 = vadd.xlane.f32.xlu0 %v6471
        %v6520 = vpop.xlane.xlu0 %6519
        %6521 = vadd.xlane.f32.xlu0 %v6472
        %v6522 = vpop.xlane.xlu0 %6521
        %6523 = vadd.xlane.f32.xlu0 %v6473
        %v6524 = vpop.xlane.xlu0 %6523
        %6525 = vadd.xlane.f32.xlu0 %v6474
        %v6526 = vpop.xlane.xlu0 %6525
        %6527 = vadd.xlane.f32.xlu0 %v6475
        %v6528 = vpop.xlane.xlu0 %6527
        %6529 = vadd.xlane.f32.xlu0 %v6476
        %v6530 = vpop.xlane.xlu0 %6529
        %6531 = vadd.xlane.f32.xlu0 %v6477
        %v6532 = vpop.xlane.xlu0 %6531
        %6533 = vadd.xlane.f32.xlu0 %v6478
        %v6534 = vpop.xlane.xlu0 %6533
        %6535 = vadd.xlane.f32.xlu0 %v6479
        %v6536 = vpop.xlane.xlu0 %6535
        %6537 = vadd.xlane.f32.xlu0 %v6480
        %v6538 = vpop.xlane.xlu0 %6537
        %6539 = vadd.xlane.f32.xlu0 %v6481
        %v6540 = vpop.xlane.xlu0 %6539
        %6541 = vadd.xlane.f32.xlu0 %v6482
        %v6542 = vpop.xlane.xlu0 %6541
        %6543 = vadd.xlane.f32.xlu0 %v6483
        %v6544 = vpop.xlane.xlu0 %6543
        %6545 = vadd.xlane.f32.xlu0 %v6484
        %v6546 = vpop.xlane.xlu0 %6545
        %6547 = vadd.xlane.f32.xlu0 %v6485
        %v6548 = vpop.xlane.xlu0 %6547
        %6549 = vadd.xlane.f32.xlu0 %v6486
        %v6550 = vpop.xlane.xlu0 %6549
        %6551 = vadd.xlane.f32.xlu0 %v6487
        %v6552 = vpop.xlane.xlu0 %6551
        %6553 = vadd.xlane.f32.xlu0 %v6488
        %v6554 = vpop.xlane.xlu0 %6553
        %v6555 = vrcp.pop 128.0
        %v6556 = vmul.f32 %v6492, %v6555
        %v6557 = vmul.f32 %v6494, %v6555
        %v6558 = vmul.f32 %v6496, %v6555
        %v6559 = vmul.f32 %v6498, %v6555
        %v6560 = vmul.f32 %v6500, %v6555
        %v6561 = vmul.f32 %v6502, %v6555
        %v6562 = vmul.f32 %v6504, %v6555
        %v6563 = vmul.f32 %v6506, %v6555
        %v6564 = vmul.f32 %v6508, %v6555
        %v6565 = vmul.f32 %v6510, %v6555
        %v6566 = vmul.f32 %v6512, %v6555
        %v6567 = vmul.f32 %v6514, %v6555
        %v6568 = vmul.f32 %v6516, %v6555
        %v6569 = vmul.f32 %v6518, %v6555
        %v6570 = vmul.f32 %v6520, %v6555
        %v6571 = vmul.f32 %v6522, %v6555
        %v6572 = vmul.f32 %v6524, %v6555
        %v6573 = vmul.f32 %v6526, %v6555
        %v6574 = vmul.f32 %v6528, %v6555
        %v6575 = vmul.f32 %v6530, %v6555
        %v6576 = vmul.f32 %v6532, %v6555
        %v6577 = vmul.f32 %v6534, %v6555
        %v6578 = vmul.f32 %v6536, %v6555
        %v6579 = vmul.f32 %v6538, %v6555
        %v6580 = vmul.f32 %v6540, %v6555
        %v6581 = vmul.f32 %v6542, %v6555
        %v6582 = vmul.f32 %v6544, %v6555
        %v6583 = vmul.f32 %v6546, %v6555
        %v6584 = vmul.f32 %v6548, %v6555
        %v6585 = vmul.f32 %v6550, %v6555
        %v6586 = vmul.f32 %v6552, %v6555
        %v6587 = vmul.f32 %v6554, %v6555
        %v6588 = vsub.f32 %v6457, %v6556
        %v6589 = vsub.f32 %v6458, %v6557
        %v6590 = vsub.f32 %v6459, %v6558
        %v6591 = vsub.f32 %v6460, %v6559
        %v6592 = vsub.f32 %v6461, %v6560
        %v6593 = vsub.f32 %v6462, %v6561
        %v6594 = vsub.f32 %v6463, %v6562
        %v6595 = vsub.f32 %v6464, %v6563
        %v6596 = vsub.f32 %v6465, %v6564
        %v6597 = vsub.f32 %v6466, %v6565
        %v6598 = vsub.f32 %v6467, %v6566
        %v6599 = vsub.f32 %v6468, %v6567
        %v6600 = vsub.f32 %v6469, %v6568
        %v6601 = vsub.f32 %v6470, %v6569
        %v6602 = vsub.f32 %v6471, %v6570
        %v6603 = vsub.f32 %v6472, %v6571
        %v6604 = vsub.f32 %v6473, %v6572
        %v6605 = vsub.f32 %v6474, %v6573
        %v6606 = vsub.f32 %v6475, %v6574
        %v6607 = vsub.f32 %v6476, %v6575
        %v6608 = vsub.f32 %v6477, %v6576
        %v6609 = vsub.f32 %v6478, %v6577
        %v6610 = vsub.f32 %v6479, %v6578
        %v6611 = vsub.f32 %v6480, %v6579
        %v6612 = vsub.f32 %v6481, %v6580
        %v6613 = vsub.f32 %v6482, %v6581
        %v6614 = vsub.f32 %v6483, %v6582
        %v6615 = vsub.f32 %v6484, %v6583
        %v6616 = vsub.f32 %v6485, %v6584
        %v6617 = vsub.f32 %v6486, %v6585
        %v6618 = vsub.f32 %v6487, %v6586
        %v6619 = vsub.f32 %v6488, %v6587
        %v6620 = vmul.f32 %v6588, %v6588
        %v6621 = vmul.f32 %v6589, %v6589
        %v6622 = vmul.f32 %v6590, %v6590
        %v6623 = vmul.f32 %v6591, %v6591
        %v6624 = vmul.f32 %v6592, %v6592
        %v6625 = vmul.f32 %v6593, %v6593
        %v6626 = vmul.f32 %v6594, %v6594
        %v6627 = vmul.f32 %v6595, %v6595
        %v6628 = vmul.f32 %v6596, %v6596
        %v6629 = vmul.f32 %v6597, %v6597
        %v6630 = vmul.f32 %v6598, %v6598
        %v6631 = vmul.f32 %v6599, %v6599
        %v6632 = vmul.f32 %v6600, %v6600
        %v6633 = vmul.f32 %v6601, %v6601
        %v6634 = vmul.f32 %v6602, %v6602
        %v6635 = vmul.f32 %v6603, %v6603
        %v6636 = vmul.f32 %v6604, %v6604
        %v6637 = vmul.f32 %v6605, %v6605
        %v6638 = vmul.f32 %v6606, %v6606
        %v6639 = vmul.f32 %v6607, %v6607
        %v6640 = vmul.f32 %v6608, %v6608
        %v6641 = vmul.f32 %v6609, %v6609
        %v6642 = vmul.f32 %v6610, %v6610
        %v6643 = vmul.f32 %v6611, %v6611
        %v6644 = vmul.f32 %v6612, %v6612
        %v6645 = vmul.f32 %v6613, %v6613
        %v6646 = vmul.f32 %v6614, %v6614
        %v6647 = vmul.f32 %v6615, %v6615
        %v6648 = vmul.f32 %v6616, %v6616
        %v6649 = vmul.f32 %v6617, %v6617
        %v6650 = vmul.f32 %v6618, %v6618
        %v6651 = vmul.f32 %v6619, %v6619
        %6652 = vadd.xlane.f32.xlu0 %v6620
        %v6653 = vpop.xlane.xlu0 %6652
        %6654 = vadd.xlane.f32.xlu0 %v6621
        %v6655 = vpop.xlane.xlu0 %6654
        %6656 = vadd.xlane.f32.xlu0 %v6622
        %v6657 = vpop.xlane.xlu0 %6656
        %6658 = vadd.xlane.f32.xlu0 %v6623
        %v6659 = vpop.xlane.xlu0 %6658
        %6660 = vadd.xlane.f32.xlu0 %v6624
        %v6661 = vpop.xlane.xlu0 %6660
        %6662 = vadd.xlane.f32.xlu0 %v6625
        %v6663 = vpop.xlane.xlu0 %6662
        %6664 = vadd.xlane.f32.xlu0 %v6626
        %v6665 = vpop.xlane.xlu0 %6664
        %6666 = vadd.xlane.f32.xlu0 %v6627
        %v6667 = vpop.xlane.xlu0 %6666
        %6668 = vadd.xlane.f32.xlu0 %v6628
        %v6669 = vpop.xlane.xlu0 %6668
        %6670 = vadd.xlane.f32.xlu0 %v6629
        %v6671 = vpop.xlane.xlu0 %6670
        %6672 = vadd.xlane.f32.xlu0 %v6630
        %v6673 = vpop.xlane.xlu0 %6672
        %6674 = vadd.xlane.f32.xlu0 %v6631
        %v6675 = vpop.xlane.xlu0 %6674
        %6676 = vadd.xlane.f32.xlu0 %v6632
        %v6677 = vpop.xlane.xlu0 %6676
        %6678 = vadd.xlane.f32.xlu0 %v6633
        %v6679 = vpop.xlane.xlu0 %6678
        %6680 = vadd.xlane.f32.xlu0 %v6634
        %v6681 = vpop.xlane.xlu0 %6680
        %6682 = vadd.xlane.f32.xlu0 %v6635
        %v6683 = vpop.xlane.xlu0 %6682
        %6684 = vadd.xlane.f32.xlu0 %v6636
        %v6685 = vpop.xlane.xlu0 %6684
        %6686 = vadd.xlane.f32.xlu0 %v6637
        %v6687 = vpop.xlane.xlu0 %6686
        %6688 = vadd.xlane.f32.xlu0 %v6638
        %v6689 = vpop.xlane.xlu0 %6688
        %6690 = vadd.xlane.f32.xlu0 %v6639
        %v6691 = vpop.xlane.xlu0 %6690
        %6692 = vadd.xlane.f32.xlu0 %v6640
        %v6693 = vpop.xlane.xlu0 %6692
        %6694 = vadd.xlane.f32.xlu0 %v6641
        %v6695 = vpop.xlane.xlu0 %6694
        %6696 = vadd.xlane.f32.xlu0 %v6642
        %v6697 = vpop.xlane.xlu0 %6696
        %6698 = vadd.xlane.f32.xlu0 %v6643
        %v6699 = vpop.xlane.xlu0 %6698
        %6700 = vadd.xlane.f32.xlu0 %v6644
        %v6701 = vpop.xlane.xlu0 %6700
        %6702 = vadd.xlane.f32.xlu0 %v6645
        %v6703 = vpop.xlane.xlu0 %6702
        %6704 = vadd.xlane.f32.xlu0 %v6646
        %v6705 = vpop.xlane.xlu0 %6704
        %6706 = vadd.xlane.f32.xlu0 %v6647
        %v6707 = vpop.xlane.xlu0 %6706
        %6708 = vadd.xlane.f32.xlu0 %v6648
        %v6709 = vpop.xlane.xlu0 %6708
        %6710 = vadd.xlane.f32.xlu0 %v6649
        %v6711 = vpop.xlane.xlu0 %6710
        %6712 = vadd.xlane.f32.xlu0 %v6650
        %v6713 = vpop.xlane.xlu0 %6712
        %6714 = vadd.xlane.f32.xlu0 %v6651
        %v6715 = vpop.xlane.xlu0 %6714
        %v6716 = vmul.f32 %v6653, %v6555
        %v6717 = vmul.f32 %v6655, %v6555
        %v6718 = vmul.f32 %v6657, %v6555
        %v6719 = vmul.f32 %v6659, %v6555
        %v6720 = vmul.f32 %v6661, %v6555
        %v6721 = vmul.f32 %v6663, %v6555
        %v6722 = vmul.f32 %v6665, %v6555
        %v6723 = vmul.f32 %v6667, %v6555
        %v6724 = vmul.f32 %v6669, %v6555
        %v6725 = vmul.f32 %v6671, %v6555
        %v6726 = vmul.f32 %v6673, %v6555
        %v6727 = vmul.f32 %v6675, %v6555
        %v6728 = vmul.f32 %v6677, %v6555
        %v6729 = vmul.f32 %v6679, %v6555
        %v6730 = vmul.f32 %v6681, %v6555
        %v6731 = vmul.f32 %v6683, %v6555
        %v6732 = vmul.f32 %v6685, %v6555
        %v6733 = vmul.f32 %v6687, %v6555
        %v6734 = vmul.f32 %v6689, %v6555
        %v6735 = vmul.f32 %v6691, %v6555
        %v6736 = vmul.f32 %v6693, %v6555
        %v6737 = vmul.f32 %v6695, %v6555
        %v6738 = vmul.f32 %v6697, %v6555
        %v6739 = vmul.f32 %v6699, %v6555
        %v6740 = vmul.f32 %v6701, %v6555
        %v6741 = vmul.f32 %v6703, %v6555
        %v6742 = vmul.f32 %v6705, %v6555
        %v6743 = vmul.f32 %v6707, %v6555
        %v6744 = vmul.f32 %v6709, %v6555
        %v6745 = vmul.f32 %v6711, %v6555
        %v6746 = vmul.f32 %v6713, %v6555
        %v6747 = vmul.f32 %v6715, %v6555
        %v6748 = vadd.f32 %v6716, 1e-05
        %v6749 = vadd.f32 %v6717, 1e-05
        %v6750 = vadd.f32 %v6718, 1e-05
        %v6751 = vadd.f32 %v6719, 1e-05
        %v6752 = vadd.f32 %v6720, 1e-05
        %v6753 = vadd.f32 %v6721, 1e-05
        %v6754 = vadd.f32 %v6722, 1e-05
        %v6755 = vadd.f32 %v6723, 1e-05
        %v6756 = vadd.f32 %v6724, 1e-05
        %v6757 = vadd.f32 %v6725, 1e-05
        %v6758 = vadd.f32 %v6726, 1e-05
        %v6759 = vadd.f32 %v6727, 1e-05
        %v6760 = vadd.f32 %v6728, 1e-05
        %v6761 = vadd.f32 %v6729, 1e-05
        %v6762 = vadd.f32 %v6730, 1e-05
        %v6763 = vadd.f32 %v6731, 1e-05
        %v6764 = vadd.f32 %v6732, 1e-05
        %v6765 = vadd.f32 %v6733, 1e-05
        %v6766 = vadd.f32 %v6734, 1e-05
        %v6767 = vadd.f32 %v6735, 1e-05
        %v6768 = vadd.f32 %v6736, 1e-05
        %v6769 = vadd.f32 %v6737, 1e-05
        %v6770 = vadd.f32 %v6738, 1e-05
        %v6771 = vadd.f32 %v6739, 1e-05
        %v6772 = vadd.f32 %v6740, 1e-05
        %v6773 = vadd.f32 %v6741, 1e-05
        %v6774 = vadd.f32 %v6742, 1e-05
        %v6775 = vadd.f32 %v6743, 1e-05
        %v6776 = vadd.f32 %v6744, 1e-05
        %v6777 = vadd.f32 %v6745, 1e-05
        %v6778 = vadd.f32 %v6746, 1e-05
        %v6779 = vadd.f32 %v6747, 1e-05
        %v6780 = vrsqrt.pop %v6748
        %v6781 = vrsqrt.pop %v6749
        %v6782 = vrsqrt.pop %v6750
        %v6783 = vrsqrt.pop %v6751
        %v6784 = vrsqrt.pop %v6752
        %v6785 = vrsqrt.pop %v6753
        %v6786 = vrsqrt.pop %v6754
        %v6787 = vrsqrt.pop %v6755
        %v6788 = vrsqrt.pop %v6756
        %v6789 = vrsqrt.pop %v6757
        %v6790 = vrsqrt.pop %v6758
        %v6791 = vrsqrt.pop %v6759
        %v6792 = vrsqrt.pop %v6760
        %v6793 = vrsqrt.pop %v6761
        %v6794 = vrsqrt.pop %v6762
        %v6795 = vrsqrt.pop %v6763
        %v6796 = vrsqrt.pop %v6764
        %v6797 = vrsqrt.pop %v6765
        %v6798 = vrsqrt.pop %v6766
        %v6799 = vrsqrt.pop %v6767
        %v6800 = vrsqrt.pop %v6768
        %v6801 = vrsqrt.pop %v6769
        %v6802 = vrsqrt.pop %v6770
        %v6803 = vrsqrt.pop %v6771
        %v6804 = vrsqrt.pop %v6772
        %v6805 = vrsqrt.pop %v6773
        %v6806 = vrsqrt.pop %v6774
        %v6807 = vrsqrt.pop %v6775
        %v6808 = vrsqrt.pop %v6776
        %v6809 = vrsqrt.pop %v6777
        %v6810 = vrsqrt.pop %v6778
        %v6811 = vrsqrt.pop %v6779
        %v6812 = vmul.f32 %v6588, %v6780
        %v6813 = vmul.f32 %v6589, %v6781
        %v6814 = vmul.f32 %v6590, %v6782
        %v6815 = vmul.f32 %v6591, %v6783
        %v6816 = vmul.f32 %v6592, %v6784
        %v6817 = vmul.f32 %v6593, %v6785
        %v6818 = vmul.f32 %v6594, %v6786
        %v6819 = vmul.f32 %v6595, %v6787
        %v6820 = vmul.f32 %v6596, %v6788
        %v6821 = vmul.f32 %v6597, %v6789
        %v6822 = vmul.f32 %v6598, %v6790
        %v6823 = vmul.f32 %v6599, %v6791
        %v6824 = vmul.f32 %v6600, %v6792
        %v6825 = vmul.f32 %v6601, %v6793
        %v6826 = vmul.f32 %v6602, %v6794
        %v6827 = vmul.f32 %v6603, %v6795
        %v6828 = vmul.f32 %v6604, %v6796
        %v6829 = vmul.f32 %v6605, %v6797
        %v6830 = vmul.f32 %v6606, %v6798
        %v6831 = vmul.f32 %v6607, %v6799
        %v6832 = vmul.f32 %v6608, %v6800
        %v6833 = vmul.f32 %v6609, %v6801
        %v6834 = vmul.f32 %v6610, %v6802
        %v6835 = vmul.f32 %v6611, %v6803
        %v6836 = vmul.f32 %v6612, %v6804
        %v6837 = vmul.f32 %v6613, %v6805
        %v6838 = vmul.f32 %v6614, %v6806
        %v6839 = vmul.f32 %v6615, %v6807
        %v6840 = vmul.f32 %v6616, %v6808
        %v6841 = vmul.f32 %v6617, %v6809
        %v6842 = vmul.f32 %v6618, %v6810
        %v6843 = vmul.f32 %v6619, %v6811
        %v6845 = vlaneseq
        %v6846 = vshrl.u32 %v6845, 7
        %v6847 = vsub.s32 0, %v6846
        %v6848 = vrot.slane %v6489, %v6847
        %v6850 = vmul.f32 %v6812, %v6848
        %v6851 = vmul.f32 %v6813, %v6848
        %v6852 = vmul.f32 %v6814, %v6848
        %v6853 = vmul.f32 %v6815, %v6848
        %v6854 = vmul.f32 %v6816, %v6848
        %v6855 = vmul.f32 %v6817, %v6848
        %v6856 = vmul.f32 %v6818, %v6848
        %v6857 = vmul.f32 %v6819, %v6848
        %v6858 = vmul.f32 %v6820, %v6848
        %v6859 = vmul.f32 %v6821, %v6848
        %v6860 = vmul.f32 %v6822, %v6848
        %v6861 = vmul.f32 %v6823, %v6848
        %v6862 = vmul.f32 %v6824, %v6848
        %v6863 = vmul.f32 %v6825, %v6848
        %v6864 = vmul.f32 %v6826, %v6848
        %v6865 = vmul.f32 %v6827, %v6848
        %v6866 = vmul.f32 %v6828, %v6848
        %v6867 = vmul.f32 %v6829, %v6848
        %v6868 = vmul.f32 %v6830, %v6848
        %v6869 = vmul.f32 %v6831, %v6848
        %v6870 = vmul.f32 %v6832, %v6848
        %v6871 = vmul.f32 %v6833, %v6848
        %v6872 = vmul.f32 %v6834, %v6848
        %v6873 = vmul.f32 %v6835, %v6848
        %v6874 = vmul.f32 %v6836, %v6848
        %v6875 = vmul.f32 %v6837, %v6848
        %v6876 = vmul.f32 %v6838, %v6848
        %v6877 = vmul.f32 %v6839, %v6848
        %v6878 = vmul.f32 %v6840, %v6848
        %v6879 = vmul.f32 %v6841, %v6848
        %v6880 = vmul.f32 %v6842, %v6848
        %v6881 = vmul.f32 %v6843, %v6848
        %v6883 = vlaneseq
        %v6884 = vshrl.u32 %v6883, 7
        %v6885 = vsub.s32 0, %v6884
        %v6886 = vrot.slane %v6490, %v6885
        %v6888 = vadd.f32 %v6850, %v6886
        %v6889 = vadd.f32 %v6851, %v6886
        %v6890 = vadd.f32 %v6852, %v6886
        %v6891 = vadd.f32 %v6853, %v6886
        %v6892 = vadd.f32 %v6854, %v6886
        %v6893 = vadd.f32 %v6855, %v6886
        %v6894 = vadd.f32 %v6856, %v6886
        %v6895 = vadd.f32 %v6857, %v6886
        %v6896 = vadd.f32 %v6858, %v6886
        %v6897 = vadd.f32 %v6859, %v6886
        %v6898 = vadd.f32 %v6860, %v6886
        %v6899 = vadd.f32 %v6861, %v6886
        %v6900 = vadd.f32 %v6862, %v6886
        %v6901 = vadd.f32 %v6863, %v6886
        %v6902 = vadd.f32 %v6864, %v6886
        %v6903 = vadd.f32 %v6865, %v6886
        %v6904 = vadd.f32 %v6866, %v6886
        %v6905 = vadd.f32 %v6867, %v6886
        %v6906 = vadd.f32 %v6868, %v6886
        %v6907 = vadd.f32 %v6869, %v6886
        %v6908 = vadd.f32 %v6870, %v6886
        %v6909 = vadd.f32 %v6871, %v6886
        %v6910 = vadd.f32 %v6872, %v6886
        %v6911 = vadd.f32 %v6873, %v6886
        %v6912 = vadd.f32 %v6874, %v6886
        %v6913 = vadd.f32 %v6875, %v6886
        %v6914 = vadd.f32 %v6876, %v6886
        %v6915 = vadd.f32 %v6877, %v6886
        %v6916 = vadd.f32 %v6878, %v6886
        %v6917 = vadd.f32 %v6879, %v6886
        %v6918 = vadd.f32 %v6880, %v6886
        %v6919 = vadd.f32 %v6881, %v6886
        %v6920 = vpack.c.bf16 %v6889, %v6888
        %v6921 = vpack.c.bf16 %v6891, %v6890
        %v6922 = vpack.c.bf16 %v6893, %v6892
        %v6923 = vpack.c.bf16 %v6895, %v6894
        %v6924 = vpack.c.bf16 %v6897, %v6896
        %v6925 = vpack.c.bf16 %v6899, %v6898
        %v6926 = vpack.c.bf16 %v6901, %v6900
        %v6927 = vpack.c.bf16 %v6903, %v6902
        %v6928 = vpack.c.bf16 %v6905, %v6904
        %v6929 = vpack.c.bf16 %v6907, %v6906
        %v6930 = vpack.c.bf16 %v6909, %v6908
        %v6931 = vpack.c.bf16 %v6911, %v6910
        %v6932 = vpack.c.bf16 %v6913, %v6912
        %v6933 = vpack.c.bf16 %v6915, %v6914
        %v6934 = vpack.c.bf16 %v6917, %v6916
        %v6935 = vpack.c.bf16 %v6919, %v6918
        %v6936 = vld [vmem:[#allocation9] sm:$0xff]
        %v6937 = vld [vmem:[#allocation9 + $0x8] sm:$0xff]
        %v6938 = vld [vmem:[#allocation9 + $0x10] sm:$0xff]
        %v6939 = vld [vmem:[#allocation9 + $0x18] sm:$0xff]
        %v6940 = vld [vmem:[#allocation9 + $0x20] sm:$0xff]
        %v6941 = vld [vmem:[#allocation9 + $0x28] sm:$0xff]
        %v6942 = vld [vmem:[#allocation9 + $0x30] sm:$0xff]
        %v6943 = vld [vmem:[#allocation9 + $0x38] sm:$0xff]
        %v6944 = vld [vmem:[#allocation9 + $0x40] sm:$0xff]
        %v6945 = vld [vmem:[#allocation9 + $0x48] sm:$0xff]
        %v6946 = vld [vmem:[#allocation9 + $0x50] sm:$0xff]
        %v6947 = vld [vmem:[#allocation9 + $0x58] sm:$0xff]
        %v6948 = vld [vmem:[#allocation9 + $0x60] sm:$0xff]
        %v6949 = vld [vmem:[#allocation9 + $0x68] sm:$0xff]
        %v6950 = vld [vmem:[#allocation9 + $0x70] sm:$0xff]
        %v6951 = vld [vmem:[#allocation9 + $0x78] sm:$0xff]
        %v6952 = vld [vmem:[#allocation9 + $0x80] sm:$0xff]
        %v6953 = vld [vmem:[#allocation9 + $0x88] sm:$0xff]
        %v6954 = vld [vmem:[#allocation9 + $0x90] sm:$0xff]
        %v6955 = vld [vmem:[#allocation9 + $0x98] sm:$0xff]
        %v6956 = vld [vmem:[#allocation9 + $0xa0] sm:$0xff]
        %v6957 = vld [vmem:[#allocation9 + $0xa8] sm:$0xff]
        %v6958 = vld [vmem:[#allocation9 + $0xb0] sm:$0xff]
        %v6959 = vld [vmem:[#allocation9 + $0xb8] sm:$0xff]
        %v6960 = vld [vmem:[#allocation9 + $0xc0] sm:$0xff]
        %v6961 = vld [vmem:[#allocation9 + $0xc8] sm:$0xff]
        %v6962 = vld [vmem:[#allocation9 + $0xd0] sm:$0xff]
        %v6963 = vld [vmem:[#allocation9 + $0xd8] sm:$0xff]
        %v6964 = vld [vmem:[#allocation9 + $0xe0] sm:$0xff]
        %v6965 = vld [vmem:[#allocation9 + $0xe8] sm:$0xff]
        %v6966 = vld [vmem:[#allocation9 + $0xf0] sm:$0xff]
        %v6967 = vld [vmem:[#allocation9 + $0xf8] sm:$0xff]
        %v6968 = vld [vmem:[%s8] sm:$0xf]
        %v6970 = vlaneseq
        %v6971 = vshrl.u32 %v6970, 7
        %v6972 = vsub.s32 0, %v6971
        %v6973 = vrot.slane %v6968, %v6972
        %v6974 = vlaneseq
        %v6975 = vshrl.u32 %v6974, 7
        %v6976 = vsub.s32 1, %v6975
        %v6977 = vrot.slane %v6968, %v6976
        %v6978 = vlaneseq
        %v6979 = vshrl.u32 %v6978, 7
        %v6980 = vsub.s32 2, %v6979
        %v6981 = vrot.slane %v6968, %v6980
        %v6982 = vlaneseq
        %v6983 = vshrl.u32 %v6982, 7
        %v6984 = vsub.s32 3, %v6983
        %v6985 = vrot.slane %v6968, %v6984
        %v7022 = vunpack.c.l.b16 %v6936
        %v7023 = vunpack.c.h.b16 %v6936
        %v7024 = vunpack.c.l.b16 %v6937
        %v7025 = vunpack.c.h.b16 %v6937
        %v7026 = vunpack.c.l.b16 %v6938
        %v7027 = vunpack.c.h.b16 %v6938
        %v7028 = vunpack.c.l.b16 %v6939
        %v7029 = vunpack.c.h.b16 %v6939
        %v7030 = vunpack.c.l.b16 %v6940
        %v7031 = vunpack.c.h.b16 %v6940
        %v7032 = vunpack.c.l.b16 %v6941
        %v7033 = vunpack.c.h.b16 %v6941
        %v7034 = vunpack.c.l.b16 %v6942
        %v7035 = vunpack.c.h.b16 %v6942
        %v7036 = vunpack.c.l.b16 %v6943
        %v7037 = vunpack.c.h.b16 %v6943
        %v7038 = vunpack.c.l.b16 %v6944
        %v7039 = vunpack.c.h.b16 %v6944
        %v7040 = vunpack.c.l.b16 %v6945
        %v7041 = vunpack.c.h.b16 %v6945
        %v7042 = vunpack.c.l.b16 %v6946
        %v7043 = vunpack.c.h.b16 %v6946
        %v7044 = vunpack.c.l.b16 %v6947
        %v7045 = vunpack.c.h.b16 %v6947
        %v7046 = vunpack.c.l.b16 %v6948
        %v7047 = vunpack.c.h.b16 %v6948
        %v7048 = vunpack.c.l.b16 %v6949
        %v7049 = vunpack.c.h.b16 %v6949
        %v7050 = vunpack.c.l.b16 %v6950
        %v7051 = vunpack.c.h.b16 %v6950
        %v7052 = vunpack.c.l.b16 %v6951
        %v7053 = vunpack.c.h.b16 %v6951
        %v7054 = vunpack.c.l.b16 %v6952
        %v7055 = vunpack.c.h.b16 %v6952
        %v7056 = vunpack.c.l.b16 %v6953
        %v7057 = vunpack.c.h.b16 %v6953
        %v7058 = vunpack.c.l.b16 %v6954
        %v7059 = vunpack.c.h.b16 %v6954
        %v7060 = vunpack.c.l.b16 %v6955
        %v7061 = vunpack.c.h.b16 %v6955
        %v7062 = vunpack.c.l.b16 %v6956
        %v7063 = vunpack.c.h.b16 %v6956
        %v7064 = vunpack.c.l.b16 %v6957
        %v7065 = vunpack.c.h.b16 %v6957
        %v7066 = vunpack.c.l.b16 %v6958
        %v7067 = vunpack.c.h.b16 %v6958
        %v7068 = vunpack.c.l.b16 %v6959
        %v7069 = vunpack.c.h.b16 %v6959
        %v7070 = vunpack.c.l.b16 %v6960
        %v7071 = vunpack.c.h.b16 %v6960
        %v7072 = vunpack.c.l.b16 %v6961
        %v7073 = vunpack.c.h.b16 %v6961
        %v7074 = vunpack.c.l.b16 %v6962
        %v7075 = vunpack.c.h.b16 %v6962
        %v7076 = vunpack.c.l.b16 %v6963
        %v7077 = vunpack.c.h.b16 %v6963
        %v7078 = vunpack.c.l.b16 %v6964
        %v7079 = vunpack.c.h.b16 %v6964
        %v7080 = vunpack.c.l.b16 %v6965
        %v7081 = vunpack.c.h.b16 %v6965
        %v7082 = vunpack.c.l.b16 %v6966
        %v7083 = vunpack.c.h.b16 %v6966
        %v7084 = vunpack.c.l.b16 %v6967
        %v7085 = vunpack.c.h.b16 %v6967
        %v7086 = vpack.c.b16 %v7026, %v7022
        %v7087 = vpack.c.b16 %v7027, %v7023
        %v7088 = vpack.c.b16 %v7028, %v7024
        %v7089 = vpack.c.b16 %v7029, %v7025
        %v7090 = vpack.c.b16 %v7034, %v7030
        %v7091 = vpack.c.b16 %v7035, %v7031
        %v7092 = vpack.c.b16 %v7036, %v7032
        %v7093 = vpack.c.b16 %v7037, %v7033
        %v7094 = vpack.c.b16 %v7042, %v7038
        %v7095 = vpack.c.b16 %v7043, %v7039
        %v7096 = vpack.c.b16 %v7044, %v7040
        %v7097 = vpack.c.b16 %v7045, %v7041
        %v7098 = vpack.c.b16 %v7050, %v7046
        %v7099 = vpack.c.b16 %v7051, %v7047
        %v7100 = vpack.c.b16 %v7052, %v7048
        %v7101 = vpack.c.b16 %v7053, %v7049
        %v7102 = vpack.c.b16 %v7058, %v7054
        %v7103 = vpack.c.b16 %v7059, %v7055
        %v7104 = vpack.c.b16 %v7060, %v7056
        %v7105 = vpack.c.b16 %v7061, %v7057
        %v7106 = vpack.c.b16 %v7066, %v7062
        %v7107 = vpack.c.b16 %v7067, %v7063
        %v7108 = vpack.c.b16 %v7068, %v7064
        %v7109 = vpack.c.b16 %v7069, %v7065
        %v7110 = vpack.c.b16 %v7074, %v7070
        %v7111 = vpack.c.b16 %v7075, %v7071
        %v7112 = vpack.c.b16 %v7076, %v7072
        %v7113 = vpack.c.b16 %v7077, %v7073
        %v7114 = vpack.c.b16 %v7082, %v7078
        %v7115 = vpack.c.b16 %v7083, %v7079
        %v7116 = vpack.c.b16 %v7084, %v7080
        %v7117 = vpack.c.b16 %v7085, %v7081
        %7150 = vmatprep.subr.bf16.mxu0 %v7087
        %7151 = vmatpush1.bf16.msra.mxu0 %v7086
        %7152 = vmatprep.subr.bf16.mxu0 %v7091
        %7153 = vmatpush1.bf16.msra.mxu0 %v7090
        %7154 = vmatprep.subr.bf16.mxu0 %v7095
        %7155 = vmatpush1.bf16.msra.mxu0 %v7094
        %7156 = vmatprep.subr.bf16.mxu0 %v7099
        %7157 = vmatpush1.bf16.msra.mxu0 %v7098
        %7158 = vmatprep.subr.bf16.mxu0 %v7103
        %7159 = vmatpush1.bf16.msra.mxu0 %v7102
        %7160 = vmatprep.subr.bf16.mxu0 %v7107
        %7161 = vmatpush1.bf16.msra.mxu0 %v7106
        %7162 = vmatprep.subr.bf16.mxu0 %v7111
        %7163 = vmatpush1.bf16.msra.mxu0 %v7110
        %7164 = vmatprep.subr.bf16.mxu0 %v7115
        %7165 = vmatpush1.bf16.msra.mxu0 %v7114
        %7166 = vmatprep.subr.bf16.mxu0 0
        %7167 = vmatpush1.bf16.msra.mxu0 0
        %7168 = vmatprep.subr.bf16.mxu0 0
        %7169 = vmatpush1.bf16.msra.mxu0 0
        %7170 = vmatprep.subr.bf16.mxu0 0
        %7171 = vmatpush1.bf16.msra.mxu0 0
        %7172 = vmatprep.subr.bf16.mxu0 0
        %7173 = vmatpush1.bf16.msra.mxu0 0
        %7174 = vmatprep.subr.bf16.mxu0 0
        %7175 = vmatpush1.bf16.msra.mxu0 0
        %7176 = vmatprep.subr.bf16.mxu0 0
        %7177 = vmatpush1.bf16.msra.mxu0 0
        %7178 = vmatprep.subr.bf16.mxu0 0
        %7179 = vmatpush1.bf16.msra.mxu0 0
        %7180 = vmatprep.subr.bf16.mxu0 0
        %7181 = vmatpush1.bf16.msra.mxu0 0
        %7182 = vmatprep.mubr.bf16.mxu0 0
        %7183 = vmatmul.mubr.bf16.gmra.mrb[0].mxu0 %v6920
        %v7184 = vpop.f32.mrb[0].mxu0
        %v7185 = vadd.f32 %v6973, %v7184
        %v7186 = vpop.f32.mrb[0].mxu0
        %v7187 = vadd.f32 %v6977, %v7186
        %v7188 = vpop.f32.mrb[0].mxu0
        %v7189 = vadd.f32 %v6973, %v7188
        %v7190 = vpop.f32.mrb[0].mxu0
        %v7191 = vadd.f32 %v6977, %v7190
        %7192 = vmatprep.mubr.bf16.mxu0 0
        %7193 = vmatmul.mubr.bf16.gmra.mrb[0].mxu0 %v6921
        %v7194 = vpop.f32.mrb[0].mxu0
        %v7195 = vadd.f32 %v6973, %v7194
        %v7196 = vpop.f32.mrb[0].mxu0
        %v7197 = vadd.f32 %v6977, %v7196
        %v7198 = vpop.f32.mrb[0].mxu0
        %v7199 = vadd.f32 %v6973, %v7198
        %v7200 = vpop.f32.mrb[0].mxu0
        %v7201 = vadd.f32 %v6977, %v7200
        %7202 = vmatprep.mubr.bf16.mxu0 0
        %7203 = vmatmul.mubr.bf16.gmra.mrb[0].mxu0 %v6922
        %v7204 = vpop.f32.mrb[0].mxu0
        %v7205 = vadd.f32 %v6973, %v7204
        %v7206 = vpop.f32.mrb[0].mxu0
        %v7207 = vadd.f32 %v6977, %v7206
        %v7208 = vpop.f32.mrb[0].mxu0
        %v7209 = vadd.f32 %v6973, %v7208
        %v7210 = vpop.f32.mrb[0].mxu0
        %v7211 = vadd.f32 %v6977, %v7210
        %7212 = vmatprep.mubr.bf16.mxu0 0
        %7213 = vmatmul.mubr.bf16.gmra.mrb[0].mxu0 %v6923
        %v7214 = vpop.f32.mrb[0].mxu0
        %v7215 = vadd.f32 %v6973, %v7214
        %v7216 = vpop.f32.mrb[0].mxu0
        %v7217 = vadd.f32 %v6977, %v7216
        %v7218 = vpop.f32.mrb[0].mxu0
        %v7219 = vadd.f32 %v6973, %v7218
        %v7220 = vpop.f32.mrb[0].mxu0
        %v7221 = vadd.f32 %v6977, %v7220
        %7222 = vmatprep.mubr.bf16.mxu0 0
        %7223 = vmatmul.mubr.bf16.gmra.mrb[0].mxu0 %v6924
        %v7224 = vpop.f32.mrb[0].mxu0
        %v7225 = vadd.f32 %v6973, %v7224
        %v7226 = vpop.f32.mrb[0].mxu0
        %v7227 = vadd.f32 %v6977, %v7226
        %v7228 = vpop.f32.mrb[0].mxu0
        %v7229 = vadd.f32 %v6973, %v7228
        %v7230 = vpop.f32.mrb[0].mxu0
        %v7231 = vadd.f32 %v6977, %v7230
        %7232 = vmatprep.mubr.bf16.mxu0 0
        %7233 = vmatmul.mubr.bf16.gmra.mrb[0].mxu0 %v6925
        %v7234 = vpop.f32.mrb[0].mxu0
        %v7235 = vadd.f32 %v6973, %v7234
        %v7236 = vpop.f32.mrb[0].mxu0
        %v7237 = vadd.f32 %v6977, %v7236
        %v7238 = vpop.f32.mrb[0].mxu0
        %v7239 = vadd.f32 %v6973, %v7238
        %v7240 = vpop.f32.mrb[0].mxu0
        %v7241 = vadd.f32 %v6977, %v7240
        %7242 = vmatprep.mubr.bf16.mxu0 0
        %7243 = vmatmul.mubr.bf16.gmra.mrb[0].mxu0 %v6926
        %v7244 = vpop.f32.mrb[0].mxu0
        %v7245 = vadd.f32 %v6973, %v7244
        %v7246 = vpop.f32.mrb[0].mxu0
        %v7247 = vadd.f32 %v6977, %v7246
        %v7248 = vpop.f32.mrb[0].mxu0
        %v7249 = vadd.f32 %v6973, %v7248
        %v7250 = vpop.f32.mrb[0].mxu0
        %v7251 = vadd.f32 %v6977, %v7250
        %7252 = vmatprep.mubr.bf16.mxu0 0
        %7253 = vmatmul.mubr.bf16.gmra.mrb[0].mxu0 %v6927
        %v7254 = vpop.f32.mrb[0].mxu0
        %v7255 = vadd.f32 %v6973, %v7254
        %v7256 = vpop.f32.mrb[0].mxu0
        %v7257 = vadd.f32 %v6977, %v7256
        %v7258 = vpop.f32.mrb[0].mxu0
        %v7259 = vadd.f32 %v6973, %v7258
        %v7260 = vpop.f32.mrb[0].mxu0
        %v7261 = vadd.f32 %v6977, %v7260
        %7262 = vmatprep.mubr.bf16.mxu0 0
        %7263 = vmatmul.mubr.bf16.gmra.mrb[0].mxu0 %v6928
        %v7264 = vpop.f32.mrb[0].mxu0
        %v7265 = vadd.f32 %v6973, %v7264
        %v7266 = vpop.f32.mrb[0].mxu0
        %v7267 = vadd.f32 %v6977, %v7266
        %v7268 = vpop.f32.mrb[0].mxu0
        %v7269 = vadd.f32 %v6973, %v7268
        %v7270 = vpop.f32.mrb[0].mxu0
        %v7271 = vadd.f32 %v6977, %v7270
        %7272 = vmatprep.mubr.bf16.mxu0 0
        %7273 = vmatmul.mubr.bf16.gmra.mrb[0].mxu0 %v6929
        %v7274 = vpop.f32.mrb[0].mxu0
        %v7275 = vadd.f32 %v6973, %v7274
        %v7276 = vpop.f32.mrb[0].mxu0
        %v7277 = vadd.f32 %v6977, %v7276
        %v7278 = vpop.f32.mrb[0].mxu0
        %v7279 = vadd.f32 %v6973, %v7278
        %v7280 = vpop.f32.mrb[0].mxu0
        %v7281 = vadd.f32 %v6977, %v7280
        %7282 = vmatprep.mubr.bf16.mxu0 0
        %7283 = vmatmul.mubr.bf16.gmra.mrb[0].mxu0 %v6930
        %v7284 = vpop.f32.mrb[0].mxu0
        %v7285 = vadd.f32 %v6973, %v7284
        %v7286 = vpop.f32.mrb[0].mxu0
        %v7287 = vadd.f32 %v6977, %v7286
        %v7288 = vpop.f32.mrb[0].mxu0
        %v7289 = vadd.f32 %v6973, %v7288
        %v7290 = vpop.f32.mrb[0].mxu0
        %v7291 = vadd.f32 %v6977, %v7290
        %7292 = vmatprep.mubr.bf16.mxu0 0
        %7293 = vmatmul.mubr.bf16.gmra.mrb[0].mxu0 %v6931
        %v7294 = vpop.f32.mrb[0].mxu0
        %v7295 = vadd.f32 %v6973, %v7294
        %v7296 = vpop.f32.mrb[0].mxu0
        %v7297 = vadd.f32 %v6977, %v7296
        %v7298 = vpop.f32.mrb[0].mxu0
        %v7299 = vadd.f32 %v6973, %v7298
        %v7300 = vpop.f32.mrb[0].mxu0
        %v7301 = vadd.f32 %v6977, %v7300
        %7302 = vmatprep.mubr.bf16.mxu0 0
        %7303 = vmatmul.mubr.bf16.gmra.mrb[0].mxu0 %v6932
        %v7304 = vpop.f32.mrb[0].mxu0
        %v7305 = vadd.f32 %v6973, %v7304
        %v7306 = vpop.f32.mrb[0].mxu0
        %v7307 = vadd.f32 %v6977, %v7306
        %v7308 = vpop.f32.mrb[0].mxu0
        %v7309 = vadd.f32 %v6973, %v7308
        %v7310 = vpop.f32.mrb[0].mxu0
        %v7311 = vadd.f32 %v6977, %v7310
        %7312 = vmatprep.mubr.bf16.mxu0 0
        %7313 = vmatmul.mubr.bf16.gmra.mrb[0].mxu0 %v6933
        %v7314 = vpop.f32.mrb[0].mxu0
        %v7315 = vadd.f32 %v6973, %v7314
        %v7316 = vpop.f32.mrb[0].mxu0
        %v7317 = vadd.f32 %v6977, %v7316
        %v7318 = vpop.f32.mrb[0].mxu0
        %v7319 = vadd.f32 %v6973, %v7318
        %v7320 = vpop.f32.mrb[0].mxu0
        %v7321 = vadd.f32 %v6977, %v7320
        %7322 = vmatprep.mubr.bf16.mxu0 0
        %7323 = vmatmul.mubr.bf16.gmra.mrb[0].mxu0 %v6934
        %v7324 = vpop.f32.mrb[0].mxu0
        %v7325 = vadd.f32 %v6973, %v7324
        %v7326 = vpop.f32.mrb[0].mxu0
        %v7327 = vadd.f32 %v6977, %v7326
        %v7328 = vpop.f32.mrb[0].mxu0
        %v7329 = vadd.f32 %v6973, %v7328
        %v7330 = vpop.f32.mrb[0].mxu0
        %v7331 = vadd.f32 %v6977, %v7330
        %7332 = vmatprep.mubr.bf16.mxu0 0
        %7333 = vmatmul.mubr.bf16.gmra.mrb[0].mxu0 %v6935
        %v7334 = vpop.f32.mrb[0].mxu0
        %v7335 = vadd.f32 %v6973, %v7334
        %v7336 = vpop.f32.mrb[0].mxu0
        %v7337 = vadd.f32 %v6977, %v7336
        %v7338 = vpop.f32.mrb[0].mxu0
        %v7339 = vadd.f32 %v6973, %v7338
        %v7340 = vpop.f32.mrb[0].mxu0
        %v7341 = vadd.f32 %v6977, %v7340
        %7342 = vdwg.mxu0
        %7343 = vmatprep.subr.bf16.mxu0 %v7089
        %7344 = vmatpush1.bf16.msra.mxu0 %v7088
        %7345 = vmatprep.subr.bf16.mxu0 %v7093
        %7346 = vmatpush1.bf16.msra.mxu0 %v7092
        %7347 = vmatprep.subr.bf16.mxu0 %v7097
        %7348 = vmatpush1.bf16.msra.mxu0 %v7096
        %7349 = vmatprep.subr.bf16.mxu0 %v7101
        %7350 = vmatpush1.bf16.msra.mxu0 %v7100
        %7351 = vmatprep.subr.bf16.mxu0 %v7105
        %7352 = vmatpush1.bf16.msra.mxu0 %v7104
        %7353 = vmatprep.subr.bf16.mxu0 %v7109
        %7354 = vmatpush1.bf16.msra.mxu0 %v7108
        %7355 = vmatprep.subr.bf16.mxu0 %v7113
        %7356 = vmatpush1.bf16.msra.mxu0 %v7112
        %7357 = vmatprep.subr.bf16.mxu0 %v7117
        %7358 = vmatpush1.bf16.msra.mxu0 %v7116
        %7359 = vmatprep.subr.bf16.mxu0 0
        %7360 = vmatpush1.bf16.msra.mxu0 0
        %7361 = vmatprep.subr.bf16.mxu0 0
        %7362 = vmatpush1.bf16.msra.mxu0 0
        %7363 = vmatprep.subr.bf16.mxu0 0
        %7364 = vmatpush1.bf16.msra.mxu0 0
        %7365 = vmatprep.subr.bf16.mxu0 0
        %7366 = vmatpush1.bf16.msra.mxu0 0
        %7367 = vmatprep.subr.bf16.mxu0 0
        %7368 = vmatpush1.bf16.msra.mxu0 0
        %7369 = vmatprep.subr.bf16.mxu0 0
        %7370 = vmatpush1.bf16.msra.mxu0 0
        %7371 = vmatprep.subr.bf16.mxu0 0
        %7372 = vmatpush1.bf16.msra.mxu0 0
        %7373 = vmatprep.subr.bf16.mxu0 0
        %7374 = vmatpush1.bf16.msra.mxu0 0
        %7375 = vmatprep.mubr.bf16.mxu0 0
        %7376 = vmatmul.mubr.bf16.gmra.mrb[0].mxu0 %v6920
        %v7377 = vpop.f32.mrb[0].mxu0
        %v7378 = vadd.f32 %v6981, %v7377
        %v7379 = vpop.f32.mrb[0].mxu0
        %v7380 = vadd.f32 %v6985, %v7379
        %v7381 = vpop.f32.mrb[0].mxu0
        %v7382 = vadd.f32 %v6981, %v7381
        %v7383 = vpop.f32.mrb[0].mxu0
        %v7384 = vadd.f32 %v6985, %v7383
        %7385 = vmatprep.mubr.bf16.mxu0 0
        %7386 = vmatmul.mubr.bf16.gmra.mrb[0].mxu0 %v6921
        %v7387 = vpop.f32.mrb[0].mxu0
        %v7388 = vadd.f32 %v6981, %v7387
        %v7389 = vpop.f32.mrb[0].mxu0
        %v7390 = vadd.f32 %v6985, %v7389
        %v7391 = vpop.f32.mrb[0].mxu0
        %v7392 = vadd.f32 %v6981, %v7391
        %v7393 = vpop.f32.mrb[0].mxu0
        %v7394 = vadd.f32 %v6985, %v7393
        %7395 = vmatprep.mubr.bf16.mxu0 0
        %7396 = vmatmul.mubr.bf16.gmra.mrb[0].mxu0 %v6922
        %v7397 = vpop.f32.mrb[0].mxu0
        %v7398 = vadd.f32 %v6981, %v7397
        %v7399 = vpop.f32.mrb[0].mxu0
        %v7400 = vadd.f32 %v6985, %v7399
        %v7401 = vpop.f32.mrb[0].mxu0
        %v7402 = vadd.f32 %v6981, %v7401
        %v7403 = vpop.f32.mrb[0].mxu0
        %v7404 = vadd.f32 %v6985, %v7403
        %7405 = vmatprep.mubr.bf16.mxu0 0
        %7406 = vmatmul.mubr.bf16.gmra.mrb[0].mxu0 %v6923
        %v7407 = vpop.f32.mrb[0].mxu0
        %v7408 = vadd.f32 %v6981, %v7407
        %v7409 = vpop.f32.mrb[0].mxu0
        %v7410 = vadd.f32 %v6985, %v7409
        %v7411 = vpop.f32.mrb[0].mxu0
        %v7412 = vadd.f32 %v6981, %v7411
        %v7413 = vpop.f32.mrb[0].mxu0
        %v7414 = vadd.f32 %v6985, %v7413
        %7415 = vmatprep.mubr.bf16.mxu0 0
        %7416 = vmatmul.mubr.bf16.gmra.mrb[0].mxu0 %v6924
        %v7417 = vpop.f32.mrb[0].mxu0
        %v7418 = vadd.f32 %v6981, %v7417
        %v7419 = vpop.f32.mrb[0].mxu0
        %v7420 = vadd.f32 %v6985, %v7419
        %v7421 = vpop.f32.mrb[0].mxu0
        %v7422 = vadd.f32 %v6981, %v7421
        %v7423 = vpop.f32.mrb[0].mxu0
        %v7424 = vadd.f32 %v6985, %v7423
        %7425 = vmatprep.mubr.bf16.mxu0 0
        %7426 = vmatmul.mubr.bf16.gmra.mrb[0].mxu0 %v6925
        %v7427 = vpop.f32.mrb[0].mxu0
        %v7428 = vadd.f32 %v6981, %v7427
        %v7429 = vpop.f32.mrb[0].mxu0
        %v7430 = vadd.f32 %v6985, %v7429
        %v7431 = vpop.f32.mrb[0].mxu0
        %v7432 = vadd.f32 %v6981, %v7431
        %v7433 = vpop.f32.mrb[0].mxu0
        %v7434 = vadd.f32 %v6985, %v7433
        %7435 = vmatprep.mubr.bf16.mxu0 0
        %7436 = vmatmul.mubr.bf16.gmra.mrb[0].mxu0 %v6926
        %v7437 = vpop.f32.mrb[0].mxu0
        %v7438 = vadd.f32 %v6981, %v7437
        %v7439 = vpop.f32.mrb[0].mxu0
        %v7440 = vadd.f32 %v6985, %v7439
        %v7441 = vpop.f32.mrb[0].mxu0
        %v7442 = vadd.f32 %v6981, %v7441
        %v7443 = vpop.f32.mrb[0].mxu0
        %v7444 = vadd.f32 %v6985, %v7443
        %7445 = vmatprep.mubr.bf16.mxu0 0
        %7446 = vmatmul.mubr.bf16.gmra.mrb[0].mxu0 %v6927
        %v7447 = vpop.f32.mrb[0].mxu0
        %v7448 = vadd.f32 %v6981, %v7447
        %v7449 = vpop.f32.mrb[0].mxu0
        %v7450 = vadd.f32 %v6985, %v7449
        %v7451 = vpop.f32.mrb[0].mxu0
        %v7452 = vadd.f32 %v6981, %v7451
        %v7453 = vpop.f32.mrb[0].mxu0
        %v7454 = vadd.f32 %v6985, %v7453
        %7455 = vmatprep.mubr.bf16.mxu0 0
        %7456 = vmatmul.mubr.bf16.gmra.mrb[0].mxu0 %v6928
        %v7457 = vpop.f32.mrb[0].mxu0
        %v7458 = vadd.f32 %v6981, %v7457
        %v7459 = vpop.f32.mrb[0].mxu0
        %v7460 = vadd.f32 %v6985, %v7459
        %v7461 = vpop.f32.mrb[0].mxu0
        %v7462 = vadd.f32 %v6981, %v7461
        %v7463 = vpop.f32.mrb[0].mxu0
        %v7464 = vadd.f32 %v6985, %v7463
        %7465 = vmatprep.mubr.bf16.mxu0 0
        %7466 = vmatmul.mubr.bf16.gmra.mrb[0].mxu0 %v6929
        %v7467 = vpop.f32.mrb[0].mxu0
        %v7468 = vadd.f32 %v6981, %v7467
        %v7469 = vpop.f32.mrb[0].mxu0
        %v7470 = vadd.f32 %v6985, %v7469
        %v7471 = vpop.f32.mrb[0].mxu0
        %v7472 = vadd.f32 %v6981, %v7471
        %v7473 = vpop.f32.mrb[0].mxu0
        %v7474 = vadd.f32 %v6985, %v7473
        %7475 = vmatprep.mubr.bf16.mxu0 0
        %7476 = vmatmul.mubr.bf16.gmra.mrb[0].mxu0 %v6930
        %v7477 = vpop.f32.mrb[0].mxu0
        %v7478 = vadd.f32 %v6981, %v7477
        %v7479 = vpop.f32.mrb[0].mxu0
        %v7480 = vadd.f32 %v6985, %v7479
        %v7481 = vpop.f32.mrb[0].mxu0
        %v7482 = vadd.f32 %v6981, %v7481
        %v7483 = vpop.f32.mrb[0].mxu0
        %v7484 = vadd.f32 %v6985, %v7483
        %7485 = vmatprep.mubr.bf16.mxu0 0
        %7486 = vmatmul.mubr.bf16.gmra.mrb[0].mxu0 %v6931
        %v7487 = vpop.f32.mrb[0].mxu0
        %v7488 = vadd.f32 %v6981, %v7487
        %v7489 = vpop.f32.mrb[0].mxu0
        %v7490 = vadd.f32 %v6985, %v7489
        %v7491 = vpop.f32.mrb[0].mxu0
        %v7492 = vadd.f32 %v6981, %v7491
        %v7493 = vpop.f32.mrb[0].mxu0
        %v7494 = vadd.f32 %v6985, %v7493
        %7495 = vmatprep.mubr.bf16.mxu0 0
        %7496 = vmatmul.mubr.bf16.gmra.mrb[0].mxu0 %v6932
        %v7497 = vpop.f32.mrb[0].mxu0
        %v7498 = vadd.f32 %v6981, %v7497
        %v7499 = vpop.f32.mrb[0].mxu0
        %v7500 = vadd.f32 %v6985, %v7499
        %v7501 = vpop.f32.mrb[0].mxu0
        %v7502 = vadd.f32 %v6981, %v7501
        %v7503 = vpop.f32.mrb[0].mxu0
        %v7504 = vadd.f32 %v6985, %v7503
        %7505 = vmatprep.mubr.bf16.mxu0 0
        %7506 = vmatmul.mubr.bf16.gmra.mrb[0].mxu0 %v6933
        %v7507 = vpop.f32.mrb[0].mxu0
        %v7508 = vadd.f32 %v6981, %v7507
        %v7509 = vpop.f32.mrb[0].mxu0
        %v7510 = vadd.f32 %v6985, %v7509
        %v7511 = vpop.f32.mrb[0].mxu0
        %v7512 = vadd.f32 %v6981, %v7511
        %v7513 = vpop.f32.mrb[0].mxu0
        %v7514 = vadd.f32 %v6985, %v7513
        %7515 = vmatprep.mubr.bf16.mxu0 0
        %7516 = vmatmul.mubr.bf16.gmra.mrb[0].mxu0 %v6934
        %v7517 = vpop.f32.mrb[0].mxu0
        %v7518 = vadd.f32 %v6981, %v7517
        %v7519 = vpop.f32.mrb[0].mxu0
        %v7520 = vadd.f32 %v6985, %v7519
        %v7521 = vpop.f32.mrb[0].mxu0
        %v7522 = vadd.f32 %v6981, %v7521
        %v7523 = vpop.f32.mrb[0].mxu0
        %v7524 = vadd.f32 %v6985, %v7523
        %7525 = vmatprep.mubr.bf16.mxu0 0
        %7526 = vmatmul.mubr.bf16.gmra.mrb[0].mxu0 %v6935
        %v7527 = vpop.f32.mrb[0].mxu0
        %v7528 = vadd.f32 %v6981, %v7527
        %v7529 = vpop.f32.mrb[0].mxu0
        %v7530 = vadd.f32 %v6985, %v7529
        %v7531 = vpop.f32.mrb[0].mxu0
        %v7532 = vadd.f32 %v6981, %v7531
        %v7533 = vpop.f32.mrb[0].mxu0
        %v7534 = vadd.f32 %v6985, %v7533
        %7535 = vdwg.mxu0
        %v7536 = vmax.f32 %v7185, 0.0
        %v7537 = vmax.f32 %v7187, 0.0
        %v7538 = vmax.f32 %v7378, 0.0
        %v7539 = vmax.f32 %v7380, 0.0
        %v7540 = vmax.f32 %v7189, 0.0
        %v7541 = vmax.f32 %v7191, 0.0
        %v7542 = vmax.f32 %v7382, 0.0
        %v7543 = vmax.f32 %v7384, 0.0
        %v7544 = vmax.f32 %v7195, 0.0
        %v7545 = vmax.f32 %v7197, 0.0
        %v7546 = vmax.f32 %v7388, 0.0
        %v7547 = vmax.f32 %v7390, 0.0
        %v7548 = vmax.f32 %v7199, 0.0
        %v7549 = vmax.f32 %v7201, 0.0
        %v7550 = vmax.f32 %v7392, 0.0
        %v7551 = vmax.f32 %v7394, 0.0
        %v7552 = vmax.f32 %v7205, 0.0
        %v7553 = vmax.f32 %v7207, 0.0
        %v7554 = vmax.f32 %v7398, 0.0
        %v7555 = vmax.f32 %v7400, 0.0
        %v7556 = vmax.f32 %v7209, 0.0
        %v7557 = vmax.f32 %v7211, 0.0
        %v7558 = vmax.f32 %v7402, 0.0
        %v7559 = vmax.f32 %v7404, 0.0
        %v7560 = vmax.f32 %v7215, 0.0
        %v7561 = vmax.f32 %v7217, 0.0
        %v7562 = vmax.f32 %v7408, 0.0
        %v7563 = vmax.f32 %v7410, 0.0
        %v7564 = vmax.f32 %v7219, 0.0
        %v7565 = vmax.f32 %v7221, 0.0
        %v7566 = vmax.f32 %v7412, 0.0
        %v7567 = vmax.f32 %v7414, 0.0
        %v7568 = vmax.f32 %v7225, 0.0
        %v7569 = vmax.f32 %v7227, 0.0
        %v7570 = vmax.f32 %v7418, 0.0
        %v7571 = vmax.f32 %v7420, 0.0
        %v7572 = vmax.f32 %v7229, 0.0
        %v7573 = vmax.f32 %v7231, 0.0
        %v7574 = vmax.f32 %v7422, 0.0
        %v7575 = vmax.f32 %v7424, 0.0
        %v7576 = vmax.f32 %v7235, 0.0
        %v7577 = vmax.f32 %v7237, 0.0
        %v7578 = vmax.f32 %v7428, 0.0
        %v7579 = vmax.f32 %v7430, 0.0
        %v7580 = vmax.f32 %v7239, 0.0
        %v7581 = vmax.f32 %v7241, 0.0
        %v7582 = vmax.f32 %v7432, 0.0
        %v7583 = vmax.f32 %v7434, 0.0
        %v7584 = vmax.f32 %v7245, 0.0
        %v7585 = vmax.f32 %v7247, 0.0
        %v7586 = vmax.f32 %v7438, 0.0
        %v7587 = vmax.f32 %v7440, 0.0
        %v7588 = vmax.f32 %v7249, 0.0
        %v7589 = vmax.f32 %v7251, 0.0
        %v7590 = vmax.f32 %v7442, 0.0
        %v7591 = vmax.f32 %v7444, 0.0
        %v7592 = vmax.f32 %v7255, 0.0
        %v7593 = vmax.f32 %v7257, 0.0
        %v7594 = vmax.f32 %v7448, 0.0
        %v7595 = vmax.f32 %v7450, 0.0
        %v7596 = vmax.f32 %v7259, 0.0
        %v7597 = vmax.f32 %v7261, 0.0
        %v7598 = vmax.f32 %v7452, 0.0
        %v7599 = vmax.f32 %v7454, 0.0
        %v7600 = vmax.f32 %v7265, 0.0
        %v7601 = vmax.f32 %v7267, 0.0
        %v7602 = vmax.f32 %v7458, 0.0
        %v7603 = vmax.f32 %v7460, 0.0
        %v7604 = vmax.f32 %v7269, 0.0
        %v7605 = vmax.f32 %v7271, 0.0
        %v7606 = vmax.f32 %v7462, 0.0
        %v7607 = vmax.f32 %v7464, 0.0
        %v7608 = vmax.f32 %v7275, 0.0
        %v7609 = vmax.f32 %v7277, 0.0
        %v7610 = vmax.f32 %v7468, 0.0
        %v7611 = vmax.f32 %v7470, 0.0
        %v7612 = vmax.f32 %v7279, 0.0
        %v7613 = vmax.f32 %v7281, 0.0
        %v7614 = vmax.f32 %v7472, 0.0
        %v7615 = vmax.f32 %v7474, 0.0
        %v7616 = vmax.f32 %v7285, 0.0
        %v7617 = vmax.f32 %v7287, 0.0
        %v7618 = vmax.f32 %v7478, 0.0
        %v7619 = vmax.f32 %v7480, 0.0
        %v7620 = vmax.f32 %v7289, 0.0
        %v7621 = vmax.f32 %v7291, 0.0
        %v7622 = vmax.f32 %v7482, 0.0
        %v7623 = vmax.f32 %v7484, 0.0
        %v7624 = vmax.f32 %v7295, 0.0
        %v7625 = vmax.f32 %v7297, 0.0
        %v7626 = vmax.f32 %v7488, 0.0
        %v7627 = vmax.f32 %v7490, 0.0
        %v7628 = vmax.f32 %v7299, 0.0
        %v7629 = vmax.f32 %v7301, 0.0
        %v7630 = vmax.f32 %v7492, 0.0
        %v7631 = vmax.f32 %v7494, 0.0
        %v7632 = vmax.f32 %v7305, 0.0
        %v7633 = vmax.f32 %v7307, 0.0
        %v7634 = vmax.f32 %v7498, 0.0
        %v7635 = vmax.f32 %v7500, 0.0
        %v7636 = vmax.f32 %v7309, 0.0
        %v7637 = vmax.f32 %v7311, 0.0
        %v7638 = vmax.f32 %v7502, 0.0
        %v7639 = vmax.f32 %v7504, 0.0
        %v7640 = vmax.f32 %v7315, 0.0
        %v7641 = vmax.f32 %v7317, 0.0
        %v7642 = vmax.f32 %v7508, 0.0
        %v7643 = vmax.f32 %v7510, 0.0
        %v7644 = vmax.f32 %v7319, 0.0
        %v7645 = vmax.f32 %v7321, 0.0
        %v7646 = vmax.f32 %v7512, 0.0
        %v7647 = vmax.f32 %v7514, 0.0
        %v7648 = vmax.f32 %v7325, 0.0
        %v7649 = vmax.f32 %v7327, 0.0
        %v7650 = vmax.f32 %v7518, 0.0
        %v7651 = vmax.f32 %v7520, 0.0
        %v7652 = vmax.f32 %v7329, 0.0
        %v7653 = vmax.f32 %v7331, 0.0
        %v7654 = vmax.f32 %v7522, 0.0
        %v7655 = vmax.f32 %v7524, 0.0
        %v7656 = vmax.f32 %v7335, 0.0
        %v7657 = vmax.f32 %v7337, 0.0
        %v7658 = vmax.f32 %v7528, 0.0
        %v7659 = vmax.f32 %v7530, 0.0
        %v7660 = vmax.f32 %v7339, 0.0
        %v7661 = vmax.f32 %v7341, 0.0
        %v7662 = vmax.f32 %v7532, 0.0
        %v7663 = vmax.f32 %v7534, 0.0
        %v7664 = vpack.c.bf16 %v7540, %v7536
        %v7665 = vpack.c.bf16 %v7541, %v7537
        %v7666 = vpack.c.bf16 %v7542, %v7538
        %v7667 = vpack.c.bf16 %v7543, %v7539
        %v7668 = vpack.c.bf16 %v7548, %v7544
        %v7669 = vpack.c.bf16 %v7549, %v7545
        %v7670 = vpack.c.bf16 %v7550, %v7546
        %v7671 = vpack.c.bf16 %v7551, %v7547
        %v7672 = vpack.c.bf16 %v7556, %v7552
        %v7673 = vpack.c.bf16 %v7557, %v7553
        %v7674 = vpack.c.bf16 %v7558, %v7554
        %v7675 = vpack.c.bf16 %v7559, %v7555
        %v7676 = vpack.c.bf16 %v7564, %v7560
        %v7677 = vpack.c.bf16 %v7565, %v7561
        %v7678 = vpack.c.bf16 %v7566, %v7562
        %v7679 = vpack.c.bf16 %v7567, %v7563
        %v7680 = vpack.c.bf16 %v7572, %v7568
        %v7681 = vpack.c.bf16 %v7573, %v7569
        %v7682 = vpack.c.bf16 %v7574, %v7570
        %v7683 = vpack.c.bf16 %v7575, %v7571
        %v7684 = vpack.c.bf16 %v7580, %v7576
        %v7685 = vpack.c.bf16 %v7581, %v7577
        %v7686 = vpack.c.bf16 %v7582, %v7578
        %v7687 = vpack.c.bf16 %v7583, %v7579
        %v7688 = vpack.c.bf16 %v7588, %v7584
        %v7689 = vpack.c.bf16 %v7589, %v7585
        %v7690 = vpack.c.bf16 %v7590, %v7586
        %v7691 = vpack.c.bf16 %v7591, %v7587
        %v7692 = vpack.c.bf16 %v7596, %v7592
        %v7693 = vpack.c.bf16 %v7597, %v7593
        %v7694 = vpack.c.bf16 %v7598, %v7594
        %v7695 = vpack.c.bf16 %v7599, %v7595
        %v7696 = vpack.c.bf16 %v7604, %v7600
        %v7697 = vpack.c.bf16 %v7605, %v7601
        %v7698 = vpack.c.bf16 %v7606, %v7602
        %v7699 = vpack.c.bf16 %v7607, %v7603
        %v7700 = vpack.c.bf16 %v7612, %v7608
        %v7701 = vpack.c.bf16 %v7613, %v7609
        %v7702 = vpack.c.bf16 %v7614, %v7610
        %v7703 = vpack.c.bf16 %v7615, %v7611
        %v7704 = vpack.c.bf16 %v7620, %v7616
        %v7705 = vpack.c.bf16 %v7621, %v7617
        %v7706 = vpack.c.bf16 %v7622, %v7618
        %v7707 = vpack.c.bf16 %v7623, %v7619
        %v7708 = vpack.c.bf16 %v7628, %v7624
        %v7709 = vpack.c.bf16 %v7629, %v7625
        %v7710 = vpack.c.bf16 %v7630, %v7626
        %v7711 = vpack.c.bf16 %v7631, %v7627
        %v7712 = vpack.c.bf16 %v7636, %v7632
        %v7713 = vpack.c.bf16 %v7637, %v7633
        %v7714 = vpack.c.bf16 %v7638, %v7634
        %v7715 = vpack.c.bf16 %v7639, %v7635
        %v7716 = vpack.c.bf16 %v7644, %v7640
        %v7717 = vpack.c.bf16 %v7645, %v7641
        %v7718 = vpack.c.bf16 %v7646, %v7642
        %v7719 = vpack.c.bf16 %v7647, %v7643
        %v7720 = vpack.c.bf16 %v7652, %v7648
        %v7721 = vpack.c.bf16 %v7653, %v7649
        %v7722 = vpack.c.bf16 %v7654, %v7650
        %v7723 = vpack.c.bf16 %v7655, %v7651
        %v7724 = vpack.c.bf16 %v7660, %v7656
        %v7725 = vpack.c.bf16 %v7661, %v7657
        %v7726 = vpack.c.bf16 %v7662, %v7658
        %v7727 = vpack.c.bf16 %v7663, %v7659
        %v7728 = vld [vmem:[#allocation11] sm:$0xf]
        %v7729 = vld [vmem:[#allocation11 + $0x4] sm:$0xf]
        %v7730 = vld [vmem:[#allocation11 + $0x8] sm:$0xf]
        %v7731 = vld [vmem:[#allocation11 + $0xc] sm:$0xf]
        %v7732 = vld [vmem:[#allocation11 + $0x10] sm:$0xf]
        %v7733 = vld [vmem:[#allocation11 + $0x14] sm:$0xf]
        %v7734 = vld [vmem:[#allocation11 + $0x18] sm:$0xf]
        %v7735 = vld [vmem:[#allocation11 + $0x1c] sm:$0xf]
        %v7736 = vld [vmem:[#allocation11 + $0x20] sm:$0xf]
        %v7737 = vld [vmem:[#allocation11 + $0x24] sm:$0xf]
        %v7738 = vld [vmem:[#allocation11 + $0x28] sm:$0xf]
        %v7739 = vld [vmem:[#allocation11 + $0x2c] sm:$0xf]
        %v7740 = vld [vmem:[#allocation11 + $0x30] sm:$0xf]
        %v7741 = vld [vmem:[#allocation11 + $0x34] sm:$0xf]
        %v7742 = vld [vmem:[#allocation11 + $0x38] sm:$0xf]
        %v7743 = vld [vmem:[#allocation11 + $0x3c] sm:$0xf]
        %v7744 = vld [vmem:[#allocation11 + $0x40] sm:$0xf]
        %v7745 = vld [vmem:[#allocation11 + $0x44] sm:$0xf]
        %v7746 = vld [vmem:[#allocation11 + $0x48] sm:$0xf]
        %v7747 = vld [vmem:[#allocation11 + $0x4c] sm:$0xf]
        %v7748 = vld [vmem:[#allocation11 + $0x50] sm:$0xf]
        %v7749 = vld [vmem:[#allocation11 + $0x54] sm:$0xf]
        %v7750 = vld [vmem:[#allocation11 + $0x58] sm:$0xf]
        %v7751 = vld [vmem:[#allocation11 + $0x5c] sm:$0xf]
        %v7752 = vld [vmem:[#allocation11 + $0x60] sm:$0xf]
        %v7753 = vld [vmem:[#allocation11 + $0x64] sm:$0xf]
        %v7754 = vld [vmem:[#allocation11 + $0x68] sm:$0xf]
        %v7755 = vld [vmem:[#allocation11 + $0x6c] sm:$0xf]
        %v7756 = vld [vmem:[#allocation11 + $0x70] sm:$0xf]
        %v7757 = vld [vmem:[#allocation11 + $0x74] sm:$0xf]
        %v7758 = vld [vmem:[#allocation11 + $0x78] sm:$0xf]
        %v7759 = vld [vmem:[#allocation11 + $0x7c] sm:$0xf]
        %v7760 = vld [vmem:[#allocation11 + $0x80] sm:$0xf]
        %v7761 = vld [vmem:[#allocation11 + $0x84] sm:$0xf]
        %v7762 = vld [vmem:[#allocation11 + $0x88] sm:$0xf]
        %v7763 = vld [vmem:[#allocation11 + $0x8c] sm:$0xf]
        %v7764 = vld [vmem:[#allocation11 + $0x90] sm:$0xf]
        %v7765 = vld [vmem:[#allocation11 + $0x94] sm:$0xf]
        %v7766 = vld [vmem:[#allocation11 + $0x98] sm:$0xf]
        %v7767 = vld [vmem:[#allocation11 + $0x9c] sm:$0xf]
        %v7768 = vld [vmem:[#allocation11 + $0xa0] sm:$0xf]
        %v7769 = vld [vmem:[#allocation11 + $0xa4] sm:$0xf]
        %v7770 = vld [vmem:[#allocation11 + $0xa8] sm:$0xf]
        %v7771 = vld [vmem:[#allocation11 + $0xac] sm:$0xf]
        %v7772 = vld [vmem:[#allocation11 + $0xb0] sm:$0xf]
        %v7773 = vld [vmem:[#allocation11 + $0xb4] sm:$0xf]
        %v7774 = vld [vmem:[#allocation11 + $0xb8] sm:$0xf]
        %v7775 = vld [vmem:[#allocation11 + $0xbc] sm:$0xf]
        %v7776 = vld [vmem:[#allocation11 + $0xc0] sm:$0xf]
        %v7777 = vld [vmem:[#allocation11 + $0xc4] sm:$0xf]
        %v7778 = vld [vmem:[#allocation11 + $0xc8] sm:$0xf]
        %v7779 = vld [vmem:[#allocation11 + $0xcc] sm:$0xf]
        %v7780 = vld [vmem:[#allocation11 + $0xd0] sm:$0xf]
        %v7781 = vld [vmem:[#allocation11 + $0xd4] sm:$0xf]
        %v7782 = vld [vmem:[#allocation11 + $0xd8] sm:$0xf]
        %v7783 = vld [vmem:[#allocation11 + $0xdc] sm:$0xf]
        %v7784 = vld [vmem:[#allocation11 + $0xe0] sm:$0xf]
        %v7785 = vld [vmem:[#allocation11 + $0xe4] sm:$0xf]
        %v7786 = vld [vmem:[#allocation11 + $0xe8] sm:$0xf]
        %v7787 = vld [vmem:[#allocation11 + $0xec] sm:$0xf]
        %v7788 = vld [vmem:[#allocation11 + $0xf0] sm:$0xf]
        %v7789 = vld [vmem:[#allocation11 + $0xf4] sm:$0xf]
        %v7790 = vld [vmem:[#allocation11 + $0xf8] sm:$0xf]
        %v7791 = vld [vmem:[#allocation11 + $0xfc] sm:$0xf]
        %v7792 = vld [vmem:[%s10] sm:$0x1]
        %v7794 = vlaneseq
        %v7795 = vshrl.u32 %v7794, 7
        %v7796 = vsub.s32 0, %v7795
        %v7797 = vrot.slane %v7792, %v7796
        %v7863 = vunpack.c.l.b16 %v7728
        %v7864 = vunpack.c.l.b16 %v7729
        %v7865 = vunpack.c.l.b16 %v7730
        %v7866 = vunpack.c.l.b16 %v7731
        %v7867 = vunpack.c.l.b16 %v7732
        %v7868 = vunpack.c.l.b16 %v7733
        %v7869 = vunpack.c.l.b16 %v7734
        %v7870 = vunpack.c.l.b16 %v7735
        %v7871 = vunpack.c.l.b16 %v7736
        %v7872 = vunpack.c.l.b16 %v7737
        %v7873 = vunpack.c.l.b16 %v7738
        %v7874 = vunpack.c.l.b16 %v7739
        %v7875 = vunpack.c.l.b16 %v7740
        %v7876 = vunpack.c.l.b16 %v7741
        %v7877 = vunpack.c.l.b16 %v7742
        %v7878 = vunpack.c.l.b16 %v7743
        %v7879 = vunpack.c.l.b16 %v7744
        %v7880 = vunpack.c.l.b16 %v7745
        %v7881 = vunpack.c.l.b16 %v7746
        %v7882 = vunpack.c.l.b16 %v7747
        %v7883 = vunpack.c.l.b16 %v7748
        %v7884 = vunpack.c.l.b16 %v7749
        %v7885 = vunpack.c.l.b16 %v7750
        %v7886 = vunpack.c.l.b16 %v7751
        %v7887 = vunpack.c.l.b16 %v7752
        %v7888 = vunpack.c.l.b16 %v7753
        %v7889 = vunpack.c.l.b16 %v7754
        %v7890 = vunpack.c.l.b16 %v7755
        %v7891 = vunpack.c.l.b16 %v7756
        %v7892 = vunpack.c.l.b16 %v7757
        %v7893 = vunpack.c.l.b16 %v7758
        %v7894 = vunpack.c.l.b16 %v7759
        %v7895 = vunpack.c.l.b16 %v7760
        %v7896 = vunpack.c.l.b16 %v7761
        %v7897 = vunpack.c.l.b16 %v7762
        %v7898 = vunpack.c.l.b16 %v7763
        %v7899 = vunpack.c.l.b16 %v7764
        %v7900 = vunpack.c.l.b16 %v7765
        %v7901 = vunpack.c.l.b16 %v7766
        %v7902 = vunpack.c.l.b16 %v7767
        %v7903 = vunpack.c.l.b16 %v7768
        %v7904 = vunpack.c.l.b16 %v7769
        %v7905 = vunpack.c.l.b16 %v7770
        %v7906 = vunpack.c.l.b16 %v7771
        %v7907 = vunpack.c.l.b16 %v7772
        %v7908 = vunpack.c.l.b16 %v7773
        %v7909 = vunpack.c.l.b16 %v7774
        %v7910 = vunpack.c.l.b16 %v7775
        %v7911 = vunpack.c.l.b16 %v7776
        %v7912 = vunpack.c.l.b16 %v7777
        %v7913 = vunpack.c.l.b16 %v7778
        %v7914 = vunpack.c.l.b16 %v7779
        %v7915 = vunpack.c.l.b16 %v7780
        %v7916 = vunpack.c.l.b16 %v7781
        %v7917 = vunpack.c.l.b16 %v7782
        %v7918 = vunpack.c.l.b16 %v7783
        %v7919 = vunpack.c.l.b16 %v7784
        %v7920 = vunpack.c.l.b16 %v7785
        %v7921 = vunpack.c.l.b16 %v7786
        %v7922 = vunpack.c.l.b16 %v7787
        %v7923 = vunpack.c.l.b16 %v7788
        %v7924 = vunpack.c.l.b16 %v7789
        %v7925 = vunpack.c.l.b16 %v7790
        %v7926 = vunpack.c.l.b16 %v7791
        %v7927 = vpack.c.b16 %v7864, %v7863
        %v7928 = vpack.c.b16 %v7866, %v7865
        %v7929 = vpack.c.b16 %v7868, %v7867
        %v7930 = vpack.c.b16 %v7870, %v7869
        %v7931 = vpack.c.b16 %v7872, %v7871
        %v7932 = vpack.c.b16 %v7874, %v7873
        %v7933 = vpack.c.b16 %v7876, %v7875
        %v7934 = vpack.c.b16 %v7878, %v7877
        %v7935 = vpack.c.b16 %v7880, %v7879
        %v7936 = vpack.c.b16 %v7882, %v7881
        %v7937 = vpack.c.b16 %v7884, %v7883
        %v7938 = vpack.c.b16 %v7886, %v7885
        %v7939 = vpack.c.b16 %v7888, %v7887
        %v7940 = vpack.c.b16 %v7890, %v7889
        %v7941 = vpack.c.b16 %v7892, %v7891
        %v7942 = vpack.c.b16 %v7894, %v7893
        %v7943 = vpack.c.b16 %v7896, %v7895
        %v7944 = vpack.c.b16 %v7898, %v7897
        %v7945 = vpack.c.b16 %v7900, %v7899
        %v7946 = vpack.c.b16 %v7902, %v7901
        %v7947 = vpack.c.b16 %v7904, %v7903
        %v7948 = vpack.c.b16 %v7906, %v7905
        %v7949 = vpack.c.b16 %v7908, %v7907
        %v7950 = vpack.c.b16 %v7910, %v7909
        %v7951 = vpack.c.b16 %v7912, %v7911
        %v7952 = vpack.c.b16 %v7914, %v7913
        %v7953 = vpack.c.b16 %v7916, %v7915
        %v7954 = vpack.c.b16 %v7918, %v7917
        %v7955 = vpack.c.b16 %v7920, %v7919
        %v7956 = vpack.c.b16 %v7922, %v7921
        %v7957 = vpack.c.b16 %v7924, %v7923
        %v7958 = vpack.c.b16 %v7926, %v7925
        %7991 = vmatprep.subr.bf16.mxu0 0
        %7992 = vmatpush1.bf16.msra.mxu0 %v7927
        %7993 = vmatprep.subr.bf16.mxu0 0
        %7994 = vmatpush1.bf16.msra.mxu0 %v7928
        %7995 = vmatprep.subr.bf16.mxu0 0
        %7996 = vmatpush1.bf16.msra.mxu0 %v7929
        %7997 = vmatprep.subr.bf16.mxu0 0
        %7998 = vmatpush1.bf16.msra.mxu0 %v7930
        %7999 = vmatprep.subr.bf16.mxu0 0
        %8000 = vmatpush1.bf16.msra.mxu0 %v7931
        %8001 = vmatprep.subr.bf16.mxu0 0
        %8002 = vmatpush1.bf16.msra.mxu0 %v7932
        %8003 = vmatprep.subr.bf16.mxu0 0
        %8004 = vmatpush1.bf16.msra.mxu0 %v7933
        %8005 = vmatprep.subr.bf16.mxu0 0
        %8006 = vmatpush1.bf16.msra.mxu0 %v7934
        %8007 = vmatprep.subr.bf16.mxu0 0
        %8008 = vmatpush1.bf16.msra.mxu0 %v7935
        %8009 = vmatprep.subr.bf16.mxu0 0
        %8010 = vmatpush1.bf16.msra.mxu0 %v7936
        %8011 = vmatprep.subr.bf16.mxu0 0
        %8012 = vmatpush1.bf16.msra.mxu0 %v7937
        %8013 = vmatprep.subr.bf16.mxu0 0
        %8014 = vmatpush1.bf16.msra.mxu0 %v7938
        %8015 = vmatprep.subr.bf16.mxu0 0
        %8016 = vmatpush1.bf16.msra.mxu0 %v7939
        %8017 = vmatprep.subr.bf16.mxu0 0
        %8018 = vmatpush1.bf16.msra.mxu0 %v7940
        %8019 = vmatprep.subr.bf16.mxu0 0
        %8020 = vmatpush1.bf16.msra.mxu0 %v7941
        %8021 = vmatprep.subr.bf16.mxu0 0
        %8022 = vmatpush1.bf16.msra.mxu0 %v7942
        %8023 = vmatprep.mubr.bf16.mxu0 %v7665
        %8024 = vmatmul.mubr.bf16.gmra.mrb[0].mxu0 %v7664
        %v8025 = vpop.f32.mrb[0].mxu0
        %v8026 = vadd.f32 %v7797, %v8025
        %v8027 = vpop.f32.mrb[0].mxu0
        %v8028 = vpop.f32.mrb[0].mxu0
        %v8029 = vadd.f32 %v7797, %v8028
        %v8030 = vpop.f32.mrb[0].mxu0
        %8031 = vmatprep.mubr.bf16.mxu0 %v7669
        %8032 = vmatmul.mubr.bf16.gmra.mrb[0].mxu0 %v7668
        %v8033 = vpop.f32.mrb[0].mxu0
        %v8034 = vadd.f32 %v7797, %v8033
        %v8035 = vpop.f32.mrb[0].mxu0
        %v8036 = vpop.f32.mrb[0].mxu0
        %v8037 = vadd.f32 %v7797, %v8036
        %v8038 = vpop.f32.mrb[0].mxu0
        %8039 = vmatprep.mubr.bf16.mxu0 %v7673
        %8040 = vmatmul.mubr.bf16.gmra.mrb[0].mxu0 %v7672
        %v8041 = vpop.f32.mrb[0].mxu0
        %v8042 = vadd.f32 %v7797, %v8041
        %v8043 = vpop.f32.mrb[0].mxu0
        %v8044 = vpop.f32.mrb[0].mxu0
        %v8045 = vadd.f32 %v7797, %v8044
        %v8046 = vpop.f32.mrb[0].mxu0
        %8047 = vmatprep.mubr.bf16.mxu0 %v7677
        %8048 = vmatmul.mubr.bf16.gmra.mrb[0].mxu0 %v7676
        %v8049 = vpop.f32.mrb[0].mxu0
        %v8050 = vadd.f32 %v7797, %v8049
        %v8051 = vpop.f32.mrb[0].mxu0
        %v8052 = vpop.f32.mrb[0].mxu0
        %v8053 = vadd.f32 %v7797, %v8052
        %v8054 = vpop.f32.mrb[0].mxu0
        %8055 = vmatprep.mubr.bf16.mxu0 %v7681
        %8056 = vmatmul.mubr.bf16.gmra.mrb[0].mxu0 %v7680
        %v8057 = vpop.f32.mrb[0].mxu0
        %v8058 = vadd.f32 %v7797, %v8057
        %v8059 = vpop.f32.mrb[0].mxu0
        %v8060 = vpop.f32.mrb[0].mxu0
        %v8061 = vadd.f32 %v7797, %v8060
        %v8062 = vpop.f32.mrb[0].mxu0
        %8063 = vmatprep.mubr.bf16.mxu0 %v7685
        %8064 = vmatmul.mubr.bf16.gmra.mrb[0].mxu0 %v7684
        %v8065 = vpop.f32.mrb[0].mxu0
        %v8066 = vadd.f32 %v7797, %v8065
        %v8067 = vpop.f32.mrb[0].mxu0
        %v8068 = vpop.f32.mrb[0].mxu0
        %v8069 = vadd.f32 %v7797, %v8068
        %v8070 = vpop.f32.mrb[0].mxu0
        %8071 = vmatprep.mubr.bf16.mxu0 %v7689
        %8072 = vmatmul.mubr.bf16.gmra.mrb[0].mxu0 %v7688
        %v8073 = vpop.f32.mrb[0].mxu0
        %v8074 = vadd.f32 %v7797, %v8073
        %v8075 = vpop.f32.mrb[0].mxu0
        %v8076 = vpop.f32.mrb[0].mxu0
        %v8077 = vadd.f32 %v7797, %v8076
        %v8078 = vpop.f32.mrb[0].mxu0
        %8079 = vmatprep.mubr.bf16.mxu0 %v7693
        %8080 = vmatmul.mubr.bf16.gmra.mrb[0].mxu0 %v7692
        %v8081 = vpop.f32.mrb[0].mxu0
        %v8082 = vadd.f32 %v7797, %v8081
        %v8083 = vpop.f32.mrb[0].mxu0
        %v8084 = vpop.f32.mrb[0].mxu0
        %v8085 = vadd.f32 %v7797, %v8084
        %v8086 = vpop.f32.mrb[0].mxu0
        %8087 = vmatprep.mubr.bf16.mxu0 %v7697
        %8088 = vmatmul.mubr.bf16.gmra.mrb[0].mxu0 %v7696
        %v8089 = vpop.f32.mrb[0].mxu0
        %v8090 = vadd.f32 %v7797, %v8089
        %v8091 = vpop.f32.mrb[0].mxu0
        %v8092 = vpop.f32.mrb[0].mxu0
        %v8093 = vadd.f32 %v7797, %v8092
        %v8094 = vpop.f32.mrb[0].mxu0
        %8095 = vmatprep.mubr.bf16.mxu0 %v7701
        %8096 = vmatmul.mubr.bf16.gmra.mrb[0].mxu0 %v7700
        %v8097 = vpop.f32.mrb[0].mxu0
        %v8098 = vadd.f32 %v7797, %v8097
        %v8099 = vpop.f32.mrb[0].mxu0
        %v8100 = vpop.f32.mrb[0].mxu0
        %v8101 = vadd.f32 %v7797, %v8100
        %v8102 = vpop.f32.mrb[0].mxu0
        %8103 = vmatprep.mubr.bf16.mxu0 %v7705
        %8104 = vmatmul.mubr.bf16.gmra.mrb[0].mxu0 %v7704
        %v8105 = vpop.f32.mrb[0].mxu0
        %v8106 = vadd.f32 %v7797, %v8105
        %v8107 = vpop.f32.mrb[0].mxu0
        %v8108 = vpop.f32.mrb[0].mxu0
        %v8109 = vadd.f32 %v7797, %v8108
        %v8110 = vpop.f32.mrb[0].mxu0
        %8111 = vmatprep.mubr.bf16.mxu0 %v7709
        %8112 = vmatmul.mubr.bf16.gmra.mrb[0].mxu0 %v7708
        %v8113 = vpop.f32.mrb[0].mxu0
        %v8114 = vadd.f32 %v7797, %v8113
        %v8115 = vpop.f32.mrb[0].mxu0
        %v8116 = vpop.f32.mrb[0].mxu0
        %v8117 = vadd.f32 %v7797, %v8116
        %v8118 = vpop.f32.mrb[0].mxu0
        %8119 = vmatprep.mubr.bf16.mxu0 %v7713
        %8120 = vmatmul.mubr.bf16.gmra.mrb[0].mxu0 %v7712
        %v8121 = vpop.f32.mrb[0].mxu0
        %v8122 = vadd.f32 %v7797, %v8121
        %v8123 = vpop.f32.mrb[0].mxu0
        %v8124 = vpop.f32.mrb[0].mxu0
        %v8125 = vadd.f32 %v7797, %v8124
        %v8126 = vpop.f32.mrb[0].mxu0
        %8127 = vmatprep.mubr.bf16.mxu0 %v7717
        %8128 = vmatmul.mubr.bf16.gmra.mrb[0].mxu0 %v7716
        %v8129 = vpop.f32.mrb[0].mxu0
        %v8130 = vadd.f32 %v7797, %v8129
        %v8131 = vpop.f32.mrb[0].mxu0
        %v8132 = vpop.f32.mrb[0].mxu0
        %v8133 = vadd.f32 %v7797, %v8132
        %v8134 = vpop.f32.mrb[0].mxu0
        %8135 = vmatprep.mubr.bf16.mxu0 %v7721
        %8136 = vmatmul.mubr.bf16.gmra.mrb[0].mxu0 %v7720
        %v8137 = vpop.f32.mrb[0].mxu0
        %v8138 = vadd.f32 %v7797, %v8137
        %v8139 = vpop.f32.mrb[0].mxu0
        %v8140 = vpop.f32.mrb[0].mxu0
        %v8141 = vadd.f32 %v7797, %v8140
        %v8142 = vpop.f32.mrb[0].mxu0
        %8143 = vmatprep.mubr.bf16.mxu0 %v7725
        %8144 = vmatmul.mubr.bf16.gmra.mrb[0].mxu0 %v7724
        %v8145 = vpop.f32.mrb[0].mxu0
        %v8146 = vadd.f32 %v7797, %v8145
        %v8147 = vpop.f32.mrb[0].mxu0
        %v8148 = vpop.f32.mrb[0].mxu0
        %v8149 = vadd.f32 %v7797, %v8148
        %v8150 = vpop.f32.mrb[0].mxu0
        %8151 = vdwg.mxu0
        %8152 = vmatprep.subr.bf16.mxu0 0
        %8153 = vmatpush1.bf16.msra.mxu0 %v7943
        %8154 = vmatprep.subr.bf16.mxu0 0
        %8155 = vmatpush1.bf16.msra.mxu0 %v7944
        %8156 = vmatprep.subr.bf16.mxu0 0
        %8157 = vmatpush1.bf16.msra.mxu0 %v7945
        %8158 = vmatprep.subr.bf16.mxu0 0
        %8159 = vmatpush1.bf16.msra.mxu0 %v7946
        %8160 = vmatprep.subr.bf16.mxu0 0
        %8161 = vmatpush1.bf16.msra.mxu0 %v7947
        %8162 = vmatprep.subr.bf16.mxu0 0
        %8163 = vmatpush1.bf16.msra.mxu0 %v7948
        %8164 = vmatprep.subr.bf16.mxu0 0
        %8165 = vmatpush1.bf16.msra.mxu0 %v7949
        %8166 = vmatprep.subr.bf16.mxu0 0
        %8167 = vmatpush1.bf16.msra.mxu0 %v7950
        %8168 = vmatprep.subr.bf16.mxu0 0
        %8169 = vmatpush1.bf16.msra.mxu0 %v7951
        %8170 = vmatprep.subr.bf16.mxu0 0
        %8171 = vmatpush1.bf16.msra.mxu0 %v7952
        %8172 = vmatprep.subr.bf16.mxu0 0
        %8173 = vmatpush1.bf16.msra.mxu0 %v7953
        %8174 = vmatprep.subr.bf16.mxu0 0
        %8175 = vmatpush1.bf16.msra.mxu0 %v7954
        %8176 = vmatprep.subr.bf16.mxu0 0
        %8177 = vmatpush1.bf16.msra.mxu0 %v7955
        %8178 = vmatprep.subr.bf16.mxu0 0
        %8179 = vmatpush1.bf16.msra.mxu0 %v7956
        %8180 = vmatprep.subr.bf16.mxu0 0
        %8181 = vmatpush1.bf16.msra.mxu0 %v7957
        %8182 = vmatprep.subr.bf16.mxu0 0
        %8183 = vmatpush1.bf16.msra.mxu0 %v7958
        %8184 = vmatprep.mubr.bf16.mxu0 %v7667
        %8185 = vmatmul.mubr.bf16.gmra.mrb[0].mxu0 %v7666
        %v8186 = vpop.f32.mrb[0].mxu0
        %v8187 = vadd.f32 %v8026, %v8186
        %v8188 = vpop.f32.mrb[0].mxu0
        %v8189 = vpop.f32.mrb[0].mxu0
        %v8190 = vadd.f32 %v8029, %v8189
        %v8191 = vpop.f32.mrb[0].mxu0
        %8192 = vmatprep.mubr.bf16.mxu0 %v7671
        %8193 = vmatmul.mubr.bf16.gmra.mrb[0].mxu0 %v7670
        %v8194 = vpop.f32.mrb[0].mxu0
        %v8195 = vadd.f32 %v8034, %v8194
        %v8196 = vpop.f32.mrb[0].mxu0
        %v8197 = vpop.f32.mrb[0].mxu0
        %v8198 = vadd.f32 %v8037, %v8197
        %v8199 = vpop.f32.mrb[0].mxu0
        %8200 = vmatprep.mubr.bf16.mxu0 %v7675
        %8201 = vmatmul.mubr.bf16.gmra.mrb[0].mxu0 %v7674
        %v8202 = vpop.f32.mrb[0].mxu0
        %v8203 = vadd.f32 %v8042, %v8202
        %v8204 = vpop.f32.mrb[0].mxu0
        %v8205 = vpop.f32.mrb[0].mxu0
        %v8206 = vadd.f32 %v8045, %v8205
        %v8207 = vpop.f32.mrb[0].mxu0
        %8208 = vmatprep.mubr.bf16.mxu0 %v7679
        %8209 = vmatmul.mubr.bf16.gmra.mrb[0].mxu0 %v7678
        %v8210 = vpop.f32.mrb[0].mxu0
        %v8211 = vadd.f32 %v8050, %v8210
        %v8212 = vpop.f32.mrb[0].mxu0
        %v8213 = vpop.f32.mrb[0].mxu0
        %v8214 = vadd.f32 %v8053, %v8213
        %v8215 = vpop.f32.mrb[0].mxu0
        %8216 = vmatprep.mubr.bf16.mxu0 %v7683
        %8217 = vmatmul.mubr.bf16.gmra.mrb[0].mxu0 %v7682
        %v8218 = vpop.f32.mrb[0].mxu0
        %v8219 = vadd.f32 %v8058, %v8218
        %v8220 = vpop.f32.mrb[0].mxu0
        %v8221 = vpop.f32.mrb[0].mxu0
        %v8222 = vadd.f32 %v8061, %v8221
        %v8223 = vpop.f32.mrb[0].mxu0
        %8224 = vmatprep.mubr.bf16.mxu0 %v7687
        %8225 = vmatmul.mubr.bf16.gmra.mrb[0].mxu0 %v7686
        %v8226 = vpop.f32.mrb[0].mxu0
        %v8227 = vadd.f32 %v8066, %v8226
        %v8228 = vpop.f32.mrb[0].mxu0
        %v8229 = vpop.f32.mrb[0].mxu0
        %v8230 = vadd.f32 %v8069, %v8229
        %v8231 = vpop.f32.mrb[0].mxu0
        %8232 = vmatprep.mubr.bf16.mxu0 %v7691
        %8233 = vmatmul.mubr.bf16.gmra.mrb[0].mxu0 %v7690
        %v8234 = vpop.f32.mrb[0].mxu0
        %v8235 = vadd.f32 %v8074, %v8234
        %v8236 = vpop.f32.mrb[0].mxu0
        %v8237 = vpop.f32.mrb[0].mxu0
        %v8238 = vadd.f32 %v8077, %v8237
        %v8239 = vpop.f32.mrb[0].mxu0
        %8240 = vmatprep.mubr.bf16.mxu0 %v7695
        %8241 = vmatmul.mubr.bf16.gmra.mrb[0].mxu0 %v7694
        %v8242 = vpop.f32.mrb[0].mxu0
        %v8243 = vadd.f32 %v8082, %v8242
        %v8244 = vpop.f32.mrb[0].mxu0
        %v8245 = vpop.f32.mrb[0].mxu0
        %v8246 = vadd.f32 %v8085, %v8245
        %v8247 = vpop.f32.mrb[0].mxu0
        %8248 = vmatprep.mubr.bf16.mxu0 %v7699
        %8249 = vmatmul.mubr.bf16.gmra.mrb[0].mxu0 %v7698
        %v8250 = vpop.f32.mrb[0].mxu0
        %v8251 = vadd.f32 %v8090, %v8250
        %v8252 = vpop.f32.mrb[0].mxu0
        %v8253 = vpop.f32.mrb[0].mxu0
        %v8254 = vadd.f32 %v8093, %v8253
        %v8255 = vpop.f32.mrb[0].mxu0
        %8256 = vmatprep.mubr.bf16.mxu0 %v7703
        %8257 = vmatmul.mubr.bf16.gmra.mrb[0].mxu0 %v7702
        %v8258 = vpop.f32.mrb[0].mxu0
        %v8259 = vadd.f32 %v8098, %v8258
        %v8260 = vpop.f32.mrb[0].mxu0
        %v8261 = vpop.f32.mrb[0].mxu0
        %v8262 = vadd.f32 %v8101, %v8261
        %v8263 = vpop.f32.mrb[0].mxu0
        %8264 = vmatprep.mubr.bf16.mxu0 %v7707
        %8265 = vmatmul.mubr.bf16.gmra.mrb[0].mxu0 %v7706
        %v8266 = vpop.f32.mrb[0].mxu0
        %v8267 = vadd.f32 %v8106, %v8266
        %v8268 = vpop.f32.mrb[0].mxu0
        %v8269 = vpop.f32.mrb[0].mxu0
        %v8270 = vadd.f32 %v8109, %v8269
        %v8271 = vpop.f32.mrb[0].mxu0
        %8272 = vmatprep.mubr.bf16.mxu0 %v7711
        %8273 = vmatmul.mubr.bf16.gmra.mrb[0].mxu0 %v7710
        %v8274 = vpop.f32.mrb[0].mxu0
        %v8275 = vadd.f32 %v8114, %v8274
        %v8276 = vpop.f32.mrb[0].mxu0
        %v8277 = vpop.f32.mrb[0].mxu0
        %v8278 = vadd.f32 %v8117, %v8277
        %v8279 = vpop.f32.mrb[0].mxu0
        %8280 = vmatprep.mubr.bf16.mxu0 %v7715
        %8281 = vmatmul.mubr.bf16.gmra.mrb[0].mxu0 %v7714
        %v8282 = vpop.f32.mrb[0].mxu0
        %v8283 = vadd.f32 %v8122, %v8282
        %v8284 = vpop.f32.mrb[0].mxu0
        %v8285 = vpop.f32.mrb[0].mxu0
        %v8286 = vadd.f32 %v8125, %v8285
        %v8287 = vpop.f32.mrb[0].mxu0
        %8288 = vmatprep.mubr.bf16.mxu0 %v7719
        %8289 = vmatmul.mubr.bf16.gmra.mrb[0].mxu0 %v7718
        %v8290 = vpop.f32.mrb[0].mxu0
        %v8291 = vadd.f32 %v8130, %v8290
        %v8292 = vpop.f32.mrb[0].mxu0
        %v8293 = vpop.f32.mrb[0].mxu0
        %v8294 = vadd.f32 %v8133, %v8293
        %v8295 = vpop.f32.mrb[0].mxu0
        %8296 = vmatprep.mubr.bf16.mxu0 %v7723
        %8297 = vmatmul.mubr.bf16.gmra.mrb[0].mxu0 %v7722
        %v8298 = vpop.f32.mrb[0].mxu0
        %v8299 = vadd.f32 %v8138, %v8298
        %v8300 = vpop.f32.mrb[0].mxu0
        %v8301 = vpop.f32.mrb[0].mxu0
        %v8302 = vadd.f32 %v8141, %v8301
        %v8303 = vpop.f32.mrb[0].mxu0
        %8304 = vmatprep.mubr.bf16.mxu0 %v7727
        %8305 = vmatmul.mubr.bf16.gmra.mrb[0].mxu0 %v7726
        %v8306 = vpop.f32.mrb[0].mxu0
        %v8307 = vadd.f32 %v8146, %v8306
        %v8308 = vpop.f32.mrb[0].mxu0
        %v8309 = vpop.f32.mrb[0].mxu0
        %v8310 = vadd.f32 %v8149, %v8309
        %v8311 = vpop.f32.mrb[0].mxu0
        %8312 = vdwg.mxu0
        %v8313 = vadd.f32 %v6888, %v8187
        %v8314 = vadd.f32 %v6889, %v8190
        %v8315 = vadd.f32 %v6890, %v8195
        %v8316 = vadd.f32 %v6891, %v8198
        %v8317 = vadd.f32 %v6892, %v8203
        %v8318 = vadd.f32 %v6893, %v8206
        %v8319 = vadd.f32 %v6894, %v8211
        %v8320 = vadd.f32 %v6895, %v8214
        %v8321 = vadd.f32 %v6896, %v8219
        %v8322 = vadd.f32 %v6897, %v8222
        %v8323 = vadd.f32 %v6898, %v8227
        %v8324 = vadd.f32 %v6899, %v8230
        %v8325 = vadd.f32 %v6900, %v8235
        %v8326 = vadd.f32 %v6901, %v8238
        %v8327 = vadd.f32 %v6902, %v8243
        %v8328 = vadd.f32 %v6903, %v8246
        %v8329 = vadd.f32 %v6904, %v8251
        %v8330 = vadd.f32 %v6905, %v8254
        %v8331 = vadd.f32 %v6906, %v8259
        %v8332 = vadd.f32 %v6907, %v8262
        %v8333 = vadd.f32 %v6908, %v8267
        %v8334 = vadd.f32 %v6909, %v8270
        %v8335 = vadd.f32 %v6910, %v8275
        %v8336 = vadd.f32 %v6911, %v8278
        %v8337 = vadd.f32 %v6912, %v8283
        %v8338 = vadd.f32 %v6913, %v8286
        %v8339 = vadd.f32 %v6914, %v8291
        %v8340 = vadd.f32 %v6915, %v8294
        %v8341 = vadd.f32 %v6916, %v8299
        %v8342 = vadd.f32 %v6917, %v8302
        %v8343 = vadd.f32 %v6918, %v8307
        %v8344 = vadd.f32 %v6919, %v8310
        %v8345 = vld [vmem:[%s11] sm:$0x1]
        %v8346 = vld [vmem:[%s12] sm:$0x1]
        %8347 = vadd.xlane.f32.xlu0 %v8313
        %v8348 = vpop.xlane.xlu0 %8347
        %8349 = vadd.xlane.f32.xlu0 %v8314
        %v8350 = vpop.xlane.xlu0 %8349
        %8351 = vadd.xlane.f32.xlu0 %v8315
        %v8352 = vpop.xlane.xlu0 %8351
        %8353 = vadd.xlane.f32.xlu0 %v8316
        %v8354 = vpop.xlane.xlu0 %8353
        %8355 = vadd.xlane.f32.xlu0 %v8317
        %v8356 = vpop.xlane.xlu0 %8355
        %8357 = vadd.xlane.f32.xlu0 %v8318
        %v8358 = vpop.xlane.xlu0 %8357
        %8359 = vadd.xlane.f32.xlu0 %v8319
        %v8360 = vpop.xlane.xlu0 %8359
        %8361 = vadd.xlane.f32.xlu0 %v8320
        %v8362 = vpop.xlane.xlu0 %8361
        %8363 = vadd.xlane.f32.xlu0 %v8321
        %v8364 = vpop.xlane.xlu0 %8363
        %8365 = vadd.xlane.f32.xlu0 %v8322
        %v8366 = vpop.xlane.xlu0 %8365
        %8367 = vadd.xlane.f32.xlu0 %v8323
        %v8368 = vpop.xlane.xlu0 %8367
        %8369 = vadd.xlane.f32.xlu0 %v8324
        %v8370 = vpop.xlane.xlu0 %8369
        %8371 = vadd.xlane.f32.xlu0 %v8325
        %v8372 = vpop.xlane.xlu0 %8371
        %8373 = vadd.xlane.f32.xlu0 %v8326
        %v8374 = vpop.xlane.xlu0 %8373
        %8375 = vadd.xlane.f32.xlu0 %v8327
        %v8376 = vpop.xlane.xlu0 %8375
        %8377 = vadd.xlane.f32.xlu0 %v8328
        %v8378 = vpop.xlane.xlu0 %8377
        %8379 = vadd.xlane.f32.xlu0 %v8329
        %v8380 = vpop.xlane.xlu0 %8379
        %8381 = vadd.xlane.f32.xlu0 %v8330
        %v8382 = vpop.xlane.xlu0 %8381
        %8383 = vadd.xlane.f32.xlu0 %v8331
        %v8384 = vpop.xlane.xlu0 %8383
        %8385 = vadd.xlane.f32.xlu0 %v8332
        %v8386 = vpop.xlane.xlu0 %8385
        %8387 = vadd.xlane.f32.xlu0 %v8333
        %v8388 = vpop.xlane.xlu0 %8387
        %8389 = vadd.xlane.f32.xlu0 %v8334
        %v8390 = vpop.xlane.xlu0 %8389
        %8391 = vadd.xlane.f32.xlu0 %v8335
        %v8392 = vpop.xlane.xlu0 %8391
        %8393 = vadd.xlane.f32.xlu0 %v8336
        %v8394 = vpop.xlane.xlu0 %8393
        %8395 = vadd.xlane.f32.xlu0 %v8337
        %v8396 = vpop.xlane.xlu0 %8395
        %8397 = vadd.xlane.f32.xlu0 %v8338
        %v8398 = vpop.xlane.xlu0 %8397
        %8399 = vadd.xlane.f32.xlu0 %v8339
        %v8400 = vpop.xlane.xlu0 %8399
        %8401 = vadd.xlane.f32.xlu0 %v8340
        %v8402 = vpop.xlane.xlu0 %8401
        %8403 = vadd.xlane.f32.xlu0 %v8341
        %v8404 = vpop.xlane.xlu0 %8403
        %8405 = vadd.xlane.f32.xlu0 %v8342
        %v8406 = vpop.xlane.xlu0 %8405
        %8407 = vadd.xlane.f32.xlu0 %v8343
        %v8408 = vpop.xlane.xlu0 %8407
        %8409 = vadd.xlane.f32.xlu0 %v8344
        %v8410 = vpop.xlane.xlu0 %8409
        %v8411 = vmul.f32 %v8348, %v6555
        %v8412 = vmul.f32 %v8350, %v6555
        %v8413 = vmul.f32 %v8352, %v6555
        %v8414 = vmul.f32 %v8354, %v6555
        %v8415 = vmul.f32 %v8356, %v6555
        %v8416 = vmul.f32 %v8358, %v6555
        %v8417 = vmul.f32 %v8360, %v6555
        %v8418 = vmul.f32 %v8362, %v6555
        %v8419 = vmul.f32 %v8364, %v6555
        %v8420 = vmul.f32 %v8366, %v6555
        %v8421 = vmul.f32 %v8368, %v6555
        %v8422 = vmul.f32 %v8370, %v6555
        %v8423 = vmul.f32 %v8372, %v6555
        %v8424 = vmul.f32 %v8374, %v6555
        %v8425 = vmul.f32 %v8376, %v6555
        %v8426 = vmul.f32 %v8378, %v6555
        %v8427 = vmul.f32 %v8380, %v6555
        %v8428 = vmul.f32 %v8382, %v6555
        %v8429 = vmul.f32 %v8384, %v6555
        %v8430 = vmul.f32 %v8386, %v6555
        %v8431 = vmul.f32 %v8388, %v6555
        %v8432 = vmul.f32 %v8390, %v6555
        %v8433 = vmul.f32 %v8392, %v6555
        %v8434 = vmul.f32 %v8394, %v6555
        %v8435 = vmul.f32 %v8396, %v6555
        %v8436 = vmul.f32 %v8398, %v6555
        %v8437 = vmul.f32 %v8400, %v6555
        %v8438 = vmul.f32 %v8402, %v6555
        %v8439 = vmul.f32 %v8404, %v6555
        %v8440 = vmul.f32 %v8406, %v6555
        %v8441 = vmul.f32 %v8408, %v6555
        %v8442 = vmul.f32 %v8410, %v6555
        %v8443 = vsub.f32 %v8313, %v8411
        %v8444 = vsub.f32 %v8314, %v8412
        %v8445 = vsub.f32 %v8315, %v8413
        %v8446 = vsub.f32 %v8316, %v8414
        %v8447 = vsub.f32 %v8317, %v8415
        %v8448 = vsub.f32 %v8318, %v8416
        %v8449 = vsub.f32 %v8319, %v8417
        %v8450 = vsub.f32 %v8320, %v8418
        %v8451 = vsub.f32 %v8321, %v8419
        %v8452 = vsub.f32 %v8322, %v8420
        %v8453 = vsub.f32 %v8323, %v8421
        %v8454 = vsub.f32 %v8324, %v8422
        %v8455 = vsub.f32 %v8325, %v8423
        %v8456 = vsub.f32 %v8326, %v8424
        %v8457 = vsub.f32 %v8327, %v8425
        %v8458 = vsub.f32 %v8328, %v8426
        %v8459 = vsub.f32 %v8329, %v8427
        %v8460 = vsub.f32 %v8330, %v8428
        %v8461 = vsub.f32 %v8331, %v8429
        %v8462 = vsub.f32 %v8332, %v8430
        %v8463 = vsub.f32 %v8333, %v8431
        %v8464 = vsub.f32 %v8334, %v8432
        %v8465 = vsub.f32 %v8335, %v8433
        %v8466 = vsub.f32 %v8336, %v8434
        %v8467 = vsub.f32 %v8337, %v8435
        %v8468 = vsub.f32 %v8338, %v8436
        %v8469 = vsub.f32 %v8339, %v8437
        %v8470 = vsub.f32 %v8340, %v8438
        %v8471 = vsub.f32 %v8341, %v8439
        %v8472 = vsub.f32 %v8342, %v8440
        %v8473 = vsub.f32 %v8343, %v8441
        %v8474 = vsub.f32 %v8344, %v8442
        %v8475 = vmul.f32 %v8443, %v8443
        %v8476 = vmul.f32 %v8444, %v8444
        %v8477 = vmul.f32 %v8445, %v8445
        %v8478 = vmul.f32 %v8446, %v8446
        %v8479 = vmul.f32 %v8447, %v8447
        %v8480 = vmul.f32 %v8448, %v8448
        %v8481 = vmul.f32 %v8449, %v8449
        %v8482 = vmul.f32 %v8450, %v8450
        %v8483 = vmul.f32 %v8451, %v8451
        %v8484 = vmul.f32 %v8452, %v8452
        %v8485 = vmul.f32 %v8453, %v8453
        %v8486 = vmul.f32 %v8454, %v8454
        %v8487 = vmul.f32 %v8455, %v8455
        %v8488 = vmul.f32 %v8456, %v8456
        %v8489 = vmul.f32 %v8457, %v8457
        %v8490 = vmul.f32 %v8458, %v8458
        %v8491 = vmul.f32 %v8459, %v8459
        %v8492 = vmul.f32 %v8460, %v8460
        %v8493 = vmul.f32 %v8461, %v8461
        %v8494 = vmul.f32 %v8462, %v8462
        %v8495 = vmul.f32 %v8463, %v8463
        %v8496 = vmul.f32 %v8464, %v8464
        %v8497 = vmul.f32 %v8465, %v8465
        %v8498 = vmul.f32 %v8466, %v8466
        %v8499 = vmul.f32 %v8467, %v8467
        %v8500 = vmul.f32 %v8468, %v8468
        %v8501 = vmul.f32 %v8469, %v8469
        %v8502 = vmul.f32 %v8470, %v8470
        %v8503 = vmul.f32 %v8471, %v8471
        %v8504 = vmul.f32 %v8472, %v8472
        %v8505 = vmul.f32 %v8473, %v8473
        %v8506 = vmul.f32 %v8474, %v8474
        %8507 = vadd.xlane.f32.xlu0 %v8475
        %v8508 = vpop.xlane.xlu0 %8507
        %8509 = vadd.xlane.f32.xlu0 %v8476
        %v8510 = vpop.xlane.xlu0 %8509
        %8511 = vadd.xlane.f32.xlu0 %v8477
        %v8512 = vpop.xlane.xlu0 %8511
        %8513 = vadd.xlane.f32.xlu0 %v8478
        %v8514 = vpop.xlane.xlu0 %8513
        %8515 = vadd.xlane.f32.xlu0 %v8479
        %v8516 = vpop.xlane.xlu0 %8515
        %8517 = vadd.xlane.f32.xlu0 %v8480
        %v8518 = vpop.xlane.xlu0 %8517
        %8519 = vadd.xlane.f32.xlu0 %v8481
        %v8520 = vpop.xlane.xlu0 %8519
        %8521 = vadd.xlane.f32.xlu0 %v8482
        %v8522 = vpop.xlane.xlu0 %8521
        %8523 = vadd.xlane.f32.xlu0 %v8483
        %v8524 = vpop.xlane.xlu0 %8523
        %8525 = vadd.xlane.f32.xlu0 %v8484
        %v8526 = vpop.xlane.xlu0 %8525
        %8527 = vadd.xlane.f32.xlu0 %v8485
        %v8528 = vpop.xlane.xlu0 %8527
        %8529 = vadd.xlane.f32.xlu0 %v8486
        %v8530 = vpop.xlane.xlu0 %8529
        %8531 = vadd.xlane.f32.xlu0 %v8487
        %v8532 = vpop.xlane.xlu0 %8531
        %8533 = vadd.xlane.f32.xlu0 %v8488
        %v8534 = vpop.xlane.xlu0 %8533
        %8535 = vadd.xlane.f32.xlu0 %v8489
        %v8536 = vpop.xlane.xlu0 %8535
        %8537 = vadd.xlane.f32.xlu0 %v8490
        %v8538 = vpop.xlane.xlu0 %8537
        %8539 = vadd.xlane.f32.xlu0 %v8491
        %v8540 = vpop.xlane.xlu0 %8539
        %8541 = vadd.xlane.f32.xlu0 %v8492
        %v8542 = vpop.xlane.xlu0 %8541
        %8543 = vadd.xlane.f32.xlu0 %v8493
        %v8544 = vpop.xlane.xlu0 %8543
        %8545 = vadd.xlane.f32.xlu0 %v8494
        %v8546 = vpop.xlane.xlu0 %8545
        %8547 = vadd.xlane.f32.xlu0 %v8495
        %v8548 = vpop.xlane.xlu0 %8547
        %8549 = vadd.xlane.f32.xlu0 %v8496
        %v8550 = vpop.xlane.xlu0 %8549
        %8551 = vadd.xlane.f32.xlu0 %v8497
        %v8552 = vpop.xlane.xlu0 %8551
        %8553 = vadd.xlane.f32.xlu0 %v8498
        %v8554 = vpop.xlane.xlu0 %8553
        %8555 = vadd.xlane.f32.xlu0 %v8499
        %v8556 = vpop.xlane.xlu0 %8555
        %8557 = vadd.xlane.f32.xlu0 %v8500
        %v8558 = vpop.xlane.xlu0 %8557
        %8559 = vadd.xlane.f32.xlu0 %v8501
        %v8560 = vpop.xlane.xlu0 %8559
        %8561 = vadd.xlane.f32.xlu0 %v8502
        %v8562 = vpop.xlane.xlu0 %8561
        %8563 = vadd.xlane.f32.xlu0 %v8503
        %v8564 = vpop.xlane.xlu0 %8563
        %8565 = vadd.xlane.f32.xlu0 %v8504
        %v8566 = vpop.xlane.xlu0 %8565
        %8567 = vadd.xlane.f32.xlu0 %v8505
        %v8568 = vpop.xlane.xlu0 %8567
        %8569 = vadd.xlane.f32.xlu0 %v8506
        %v8570 = vpop.xlane.xlu0 %8569
        %v8571 = vmul.f32 %v8508, %v6555
        %v8572 = vmul.f32 %v8510, %v6555
        %v8573 = vmul.f32 %v8512, %v6555
        %v8574 = vmul.f32 %v8514, %v6555
        %v8575 = vmul.f32 %v8516, %v6555
        %v8576 = vmul.f32 %v8518, %v6555
        %v8577 = vmul.f32 %v8520, %v6555
        %v8578 = vmul.f32 %v8522, %v6555
        %v8579 = vmul.f32 %v8524, %v6555
        %v8580 = vmul.f32 %v8526, %v6555
        %v8581 = vmul.f32 %v8528, %v6555
        %v8582 = vmul.f32 %v8530, %v6555
        %v8583 = vmul.f32 %v8532, %v6555
        %v8584 = vmul.f32 %v8534, %v6555
        %v8585 = vmul.f32 %v8536, %v6555
        %v8586 = vmul.f32 %v8538, %v6555
        %v8587 = vmul.f32 %v8540, %v6555
        %v8588 = vmul.f32 %v8542, %v6555
        %v8589 = vmul.f32 %v8544, %v6555
        %v8590 = vmul.f32 %v8546, %v6555
        %v8591 = vmul.f32 %v8548, %v6555
        %v8592 = vmul.f32 %v8550, %v6555
        %v8593 = vmul.f32 %v8552, %v6555
        %v8594 = vmul.f32 %v8554, %v6555
        %v8595 = vmul.f32 %v8556, %v6555
        %v8596 = vmul.f32 %v8558, %v6555
        %v8597 = vmul.f32 %v8560, %v6555
        %v8598 = vmul.f32 %v8562, %v6555
        %v8599 = vmul.f32 %v8564, %v6555
        %v8600 = vmul.f32 %v8566, %v6555
        %v8601 = vmul.f32 %v8568, %v6555
        %v8602 = vmul.f32 %v8570, %v6555
        %v8603 = vadd.f32 %v8571, 1e-05
        %v8604 = vadd.f32 %v8572, 1e-05
        %v8605 = vadd.f32 %v8573, 1e-05
        %v8606 = vadd.f32 %v8574, 1e-05
        %v8607 = vadd.f32 %v8575, 1e-05
        %v8608 = vadd.f32 %v8576, 1e-05
        %v8609 = vadd.f32 %v8577, 1e-05
        %v8610 = vadd.f32 %v8578, 1e-05
        %v8611 = vadd.f32 %v8579, 1e-05
        %v8612 = vadd.f32 %v8580, 1e-05
        %v8613 = vadd.f32 %v8581, 1e-05
        %v8614 = vadd.f32 %v8582, 1e-05
        %v8615 = vadd.f32 %v8583, 1e-05
        %v8616 = vadd.f32 %v8584, 1e-05
        %v8617 = vadd.f32 %v8585, 1e-05
        %v8618 = vadd.f32 %v8586, 1e-05
        %v8619 = vadd.f32 %v8587, 1e-05
        %v8620 = vadd.f32 %v8588, 1e-05
        %v8621 = vadd.f32 %v8589, 1e-05
        %v8622 = vadd.f32 %v8590, 1e-05
        %v8623 = vadd.f32 %v8591, 1e-05
        %v8624 = vadd.f32 %v8592, 1e-05
        %v8625 = vadd.f32 %v8593, 1e-05
        %v8626 = vadd.f32 %v8594, 1e-05
        %v8627 = vadd.f32 %v8595, 1e-05
        %v8628 = vadd.f32 %v8596, 1e-05
        %v8629 = vadd.f32 %v8597, 1e-05
        %v8630 = vadd.f32 %v8598, 1e-05
        %v8631 = vadd.f32 %v8599, 1e-05
        %v8632 = vadd.f32 %v8600, 1e-05
        %v8633 = vadd.f32 %v8601, 1e-05
        %v8634 = vadd.f32 %v8602, 1e-05
        %v8635 = vrsqrt.pop %v8603
        %v8636 = vrsqrt.pop %v8604
        %v8637 = vrsqrt.pop %v8605
        %v8638 = vrsqrt.pop %v8606
        %v8639 = vrsqrt.pop %v8607
        %v8640 = vrsqrt.pop %v8608
        %v8641 = vrsqrt.pop %v8609
        %v8642 = vrsqrt.pop %v8610
        %v8643 = vrsqrt.pop %v8611
        %v8644 = vrsqrt.pop %v8612
        %v8645 = vrsqrt.pop %v8613
        %v8646 = vrsqrt.pop %v8614
        %v8647 = vrsqrt.pop %v8615
        %v8648 = vrsqrt.pop %v8616
        %v8649 = vrsqrt.pop %v8617
        %v8650 = vrsqrt.pop %v8618
        %v8651 = vrsqrt.pop %v8619
        %v8652 = vrsqrt.pop %v8620
        %v8653 = vrsqrt.pop %v8621
        %v8654 = vrsqrt.pop %v8622
        %v8655 = vrsqrt.pop %v8623
        %v8656 = vrsqrt.pop %v8624
        %v8657 = vrsqrt.pop %v8625
        %v8658 = vrsqrt.pop %v8626
        %v8659 = vrsqrt.pop %v8627
        %v8660 = vrsqrt.pop %v8628
        %v8661 = vrsqrt.pop %v8629
        %v8662 = vrsqrt.pop %v8630
        %v8663 = vrsqrt.pop %v8631
        %v8664 = vrsqrt.pop %v8632
        %v8665 = vrsqrt.pop %v8633
        %v8666 = vrsqrt.pop %v8634
        %v8667 = vmul.f32 %v8443, %v8635
        %v8668 = vmul.f32 %v8444, %v8636
        %v8669 = vmul.f32 %v8445, %v8637
        %v8670 = vmul.f32 %v8446, %v8638
        %v8671 = vmul.f32 %v8447, %v8639
        %v8672 = vmul.f32 %v8448, %v8640
        %v8673 = vmul.f32 %v8449, %v8641
        %v8674 = vmul.f32 %v8450, %v8642
        %v8675 = vmul.f32 %v8451, %v8643
        %v8676 = vmul.f32 %v8452, %v8644
        %v8677 = vmul.f32 %v8453, %v8645
        %v8678 = vmul.f32 %v8454, %v8646
        %v8679 = vmul.f32 %v8455, %v8647
        %v8680 = vmul.f32 %v8456, %v8648
        %v8681 = vmul.f32 %v8457, %v8649
        %v8682 = vmul.f32 %v8458, %v8650
        %v8683 = vmul.f32 %v8459, %v8651
        %v8684 = vmul.f32 %v8460, %v8652
        %v8685 = vmul.f32 %v8461, %v8653
        %v8686 = vmul.f32 %v8462, %v8654
        %v8687 = vmul.f32 %v8463, %v8655
        %v8688 = vmul.f32 %v8464, %v8656
        %v8689 = vmul.f32 %v8465, %v8657
        %v8690 = vmul.f32 %v8466, %v8658
        %v8691 = vmul.f32 %v8467, %v8659
        %v8692 = vmul.f32 %v8468, %v8660
        %v8693 = vmul.f32 %v8469, %v8661
        %v8694 = vmul.f32 %v8470, %v8662
        %v8695 = vmul.f32 %v8471, %v8663
        %v8696 = vmul.f32 %v8472, %v8664
        %v8697 = vmul.f32 %v8473, %v8665
        %v8698 = vmul.f32 %v8474, %v8666
        %v8700 = vlaneseq
        %v8701 = vshrl.u32 %v8700, 7
        %v8702 = vsub.s32 0, %v8701
        %v8703 = vrot.slane %v8345, %v8702
        %v8705 = vmul.f32 %v8667, %v8703
        %v8706 = vmul.f32 %v8668, %v8703
        %v8707 = vmul.f32 %v8669, %v8703
        %v8708 = vmul.f32 %v8670, %v8703
        %v8709 = vmul.f32 %v8671, %v8703
        %v8710 = vmul.f32 %v8672, %v8703
        %v8711 = vmul.f32 %v8673, %v8703
        %v8712 = vmul.f32 %v8674, %v8703
        %v8713 = vmul.f32 %v8675, %v8703
        %v8714 = vmul.f32 %v8676, %v8703
        %v8715 = vmul.f32 %v8677, %v8703
        %v8716 = vmul.f32 %v8678, %v8703
        %v8717 = vmul.f32 %v8679, %v8703
        %v8718 = vmul.f32 %v8680, %v8703
        %v8719 = vmul.f32 %v8681, %v8703
        %v8720 = vmul.f32 %v8682, %v8703
        %v8721 = vmul.f32 %v8683, %v8703
        %v8722 = vmul.f32 %v8684, %v8703
        %v8723 = vmul.f32 %v8685, %v8703
        %v8724 = vmul.f32 %v8686, %v8703
        %v8725 = vmul.f32 %v8687, %v8703
        %v8726 = vmul.f32 %v8688, %v8703
        %v8727 = vmul.f32 %v8689, %v8703
        %v8728 = vmul.f32 %v8690, %v8703
        %v8729 = vmul.f32 %v8691, %v8703
        %v8730 = vmul.f32 %v8692, %v8703
        %v8731 = vmul.f32 %v8693, %v8703
        %v8732 = vmul.f32 %v8694, %v8703
        %v8733 = vmul.f32 %v8695, %v8703
        %v8734 = vmul.f32 %v8696, %v8703
        %v8735 = vmul.f32 %v8697, %v8703
        %v8736 = vmul.f32 %v8698, %v8703
        %v8738 = vlaneseq
        %v8739 = vshrl.u32 %v8738, 7
        %v8740 = vsub.s32 0, %v8739
        %v8741 = vrot.slane %v8346, %v8740
        %v8743 = vadd.f32 %v8705, %v8741
        %v8744 = vadd.f32 %v8706, %v8741
        %v8745 = vadd.f32 %v8707, %v8741
        %v8746 = vadd.f32 %v8708, %v8741
        %v8747 = vadd.f32 %v8709, %v8741
        %v8748 = vadd.f32 %v8710, %v8741
        %v8749 = vadd.f32 %v8711, %v8741
        %v8750 = vadd.f32 %v8712, %v8741
        %v8751 = vadd.f32 %v8713, %v8741
        %v8752 = vadd.f32 %v8714, %v8741
        %v8753 = vadd.f32 %v8715, %v8741
        %v8754 = vadd.f32 %v8716, %v8741
        %v8755 = vadd.f32 %v8717, %v8741
        %v8756 = vadd.f32 %v8718, %v8741
        %v8757 = vadd.f32 %v8719, %v8741
        %v8758 = vadd.f32 %v8720, %v8741
        %v8759 = vadd.f32 %v8721, %v8741
        %v8760 = vadd.f32 %v8722, %v8741
        %v8761 = vadd.f32 %v8723, %v8741
        %v8762 = vadd.f32 %v8724, %v8741
        %v8763 = vadd.f32 %v8725, %v8741
        %v8764 = vadd.f32 %v8726, %v8741
        %v8765 = vadd.f32 %v8727, %v8741
        %v8766 = vadd.f32 %v8728, %v8741
        %v8767 = vadd.f32 %v8729, %v8741
        %v8768 = vadd.f32 %v8730, %v8741
        %v8769 = vadd.f32 %v8731, %v8741
        %v8770 = vadd.f32 %v8732, %v8741
        %v8771 = vadd.f32 %v8733, %v8741
        %v8772 = vadd.f32 %v8734, %v8741
        %v8773 = vadd.f32 %v8735, %v8741
        %v8774 = vadd.f32 %v8736, %v8741
        %8775 = vst [vmem:[%s517] sm:$0xff] %v8743
        %8776 = vst [vmem:[%s517 + $0x8] sm:$0xff] %v8744
        %8777 = vst [vmem:[%s517 + $0x10] sm:$0xff] %v8745
        %8778 = vst [vmem:[%s517 + $0x18] sm:$0xff] %v8746
        %8779 = vst [vmem:[%s517 + $0x20] sm:$0xff] %v8747
        %8780 = vst [vmem:[%s517 + $0x28] sm:$0xff] %v8748
        %8781 = vst [vmem:[%s517 + $0x30] sm:$0xff] %v8749
        %8782 = vst [vmem:[%s517 + $0x38] sm:$0xff] %v8750
        %8783 = vst [vmem:[%s517 + $0x40] sm:$0xff] %v8751
        %8784 = vst [vmem:[%s517 + $0x48] sm:$0xff] %v8752
        %8785 = vst [vmem:[%s517 + $0x50] sm:$0xff] %v8753
        %8786 = vst [vmem:[%s517 + $0x58] sm:$0xff] %v8754
        %8787 = vst [vmem:[%s517 + $0x60] sm:$0xff] %v8755
        %8788 = vst [vmem:[%s517 + $0x68] sm:$0xff] %v8756
        %8789 = vst [vmem:[%s517 + $0x70] sm:$0xff] %v8757
        %8790 = vst [vmem:[%s517 + $0x78] sm:$0xff] %v8758
        %8791 = vst [vmem:[%s517 + $0x80] sm:$0xff] %v8759
        %8792 = vst [vmem:[%s517 + $0x88] sm:$0xff] %v8760
        %8793 = vst [vmem:[%s517 + $0x90] sm:$0xff] %v8761
        %8794 = vst [vmem:[%s517 + $0x98] sm:$0xff] %v8762
        %8795 = vst [vmem:[%s517 + $0xa0] sm:$0xff] %v8763
        %8796 = vst [vmem:[%s517 + $0xa8] sm:$0xff] %v8764
        %8797 = vst [vmem:[%s517 + $0xb0] sm:$0xff] %v8765
        %8798 = vst [vmem:[%s517 + $0xb8] sm:$0xff] %v8766
        %8799 = vst [vmem:[%s517 + $0xc0] sm:$0xff] %v8767
        %8800 = vst [vmem:[%s517 + $0xc8] sm:$0xff] %v8768
        %8801 = vst [vmem:[%s517 + $0xd0] sm:$0xff] %v8769
        %8802 = vst [vmem:[%s517 + $0xd8] sm:$0xff] %v8770
        %8803 = vst [vmem:[%s517 + $0xe0] sm:$0xff] %v8771
        %8804 = vst [vmem:[%s517 + $0xe8] sm:$0xff] %v8772
        %8805 = vst [vmem:[%s517 + $0xf0] sm:$0xff] %v8773
        %8806 = vst [vmem:[%s517 + $0xf8] sm:$0xff] %v8774
        %s8807 = sand.u32 %s318, 1
        %s8808 = scalar_lea.sflag [#allocation5], %s8807
        %s8809 = sand.u32 %s318, 1
        %s8810 = smul.addr %s8809, 256
        %s8811 = scalar_lea.vmem [#allocation12], %s8810
        // Predicated region
        $region93: #{tpu_custom_call.1} parent=71 // pred_check
          %p8812 = pneg %p328
        $region94: #{tpu_custom_call.1} parent=71 // pred_check_branch
          %8814 = sbr.rel (%p8812) target = $region96
        $region95: #{tpu_custom_call.1} parent=71 // pred_region
          %s8815 = smul.u32 4, %s32
          %s8817 = ssub.s32 4096, 4096
          %8818 = vsyncadd %s8808, %s8817
          %s8819 = smul.addr %s8815, 8
          %s8820 = smul.addr %s8819, 128
          %s8821 = scalar_lea.hbm %s13, %s8820
          %s8822 = sshll.u32 %s8811, 4
          %s8823 = int_to_ptr.vmem [resolvable:$true] %s8822
          %8828 = dma.vmem_to_hbm [thread:$0]  %s8823, 4096, %s8821, %s8808, 128, 128, 8
        $region96: #{tpu_custom_call.1} parent=71 // pred_fallthru
          _
      $region72: #{tpu_custom_call.1} parent=5 // pred_fallthru
        _
      %p8829 = scmp.le.s32.totalorder 2, %s27
      // Predicated region
      $region97: #{tpu_custom_call.1} parent=5 // pred_check
        %p8830 = pneg %p8829
      $region98: #{tpu_custom_call.1} parent=5 // pred_check_branch
        %8832 = sbr.rel (%p8830) target = $region100
      $region99: #{tpu_custom_call.1} parent=5 // pred_region
        %s8833 = ssub.s32 %s27, 2
        // Predicated region
        $region101: #{tpu_custom_call.1} parent=99 // pred_check
          %p8834 = pneg %p334
        $region102: #{tpu_custom_call.1} parent=99 // pred_check_branch
          %8836 = sbr.rel (%p8834) target = $region104
        $region103: #{tpu_custom_call.1} parent=99 // pred_region
          %s8837 = sand.u32 %s319, 1
          %s8838 = scalar_lea.sflag [#allocation5], %s8837
          %s8839 = sand.u32 %s319, 1
          %s8840 = smul.addr %s8839, 256
          %s8841 = scalar_lea.vmem [#allocation12], %s8840
          %8842 = dma.done %s8838, 4096
        $region104: #{tpu_custom_call.1} parent=99 // pred_fallthru
          _
      $region100: #{tpu_custom_call.1} parent=5 // pred_fallthru
        _
    $region6: #{tpu_custom_call.1} parent=1 // loop_footer
      %s31 = sadd.s32 1, %s27
    $region7: #{tpu_custom_call.1} parent=1 // loop_footer_branch
      %26 = sbr.rel target = $region3
    $region8: #{tpu_custom_call.1} parent=1 // loop_exit
      _
    %8843 = vsyncpa [#allocation4], 1
    %s8844 = scalar_lea.sflag [#allocation4], 1
    %8845 = vsyncpa %s8844, 1
    %8846 = vsyncpa [#allocation7], 1
    %8847 = vsyncpa [#allocation10], 1
    %8848 = vsyncpa [#allocation5], 1
    %s8849 = scalar_lea.sflag [#allocation5], 1
    %8850 = vsyncpa %s8849, 1

</llo_original>
